<compile_context>
chip_gen: v7x
topology: tpu7x:2x2x1
jax: 0.10.0
libtpu: 0.0.40
codegen_flags: <defaults>
</compile_context>

<pallas_src>
import functools
import numpy as np
import jax
import jax.numpy as jnp
from jax.scipy.linalg import block_diag
from jax.experimental import pallas as pl
from jax.experimental.pallas import tpu as pltpu


# ----------------------------- Pallas kernels ------------------------------

def _linear_kernel(x_ref, w_ref, b_ref, o_ref):
    """y = x @ w + b  (single block, no activation)."""
    o_ref[...] = (jnp.dot(x_ref[...], w_ref[...],
                          preferred_element_type=jnp.float32) + b_ref[...])


def pallas_linear(x, w, b):
    """x: (N, Din), w: (Din, Dout), b: (1, Dout) -> (N, Dout).  One block."""
    n, din = x.shape
    dout = w.shape[1]
    return pl.pallas_call(
        _linear_kernel,
        out_shape=jax.ShapeDtypeStruct((n, dout), jnp.float32),
        grid=(1,),
        in_specs=[pl.BlockSpec((n, din), lambda i: (0, 0)),
                  pl.BlockSpec((din, dout), lambda i: (0, 0)),
                  pl.BlockSpec((1, dout), lambda i: (0, 0))],
        out_specs=pl.BlockSpec((n, dout), lambda i: (0, 0)),
        compiler_params=pltpu.CompilerParams(dimension_semantics=("arbitrary",)),
    )(x, w, b)


def _graph_layer_kernel(
        v_cat_ref, e_cat_ref, m_ref,
        ei_ref, ej_ref, sel_ref, selt_ref, r_ref,
        w_vpe_ref, b_vpe_ref, w_epe_ref, b_epe_ref,
        w_ev1_ref, b_ev1_ref, w_ev2_ref, b_ev2_ref,
        w_q_ref, b_q_ref, w_k_ref, b_k_ref,
        w_s_ref, b_s_ref, w_no_ref, b_no_ref,
        v_out_ref, e_out_ref,
        *, v_in, e_out, inv_scale):
    """One GraphLayer for one batch element.  All operands are small 2D tiles."""
    f32 = jnp.float32

    def dot(a, b):
        return jnp.dot(a, b, preferred_element_type=f32)

    def silu(x):
        return x * jax.nn.sigmoid(x)

    # --- positional / timestep embedding binding (SiLU) ---
    v1 = silu(dot(v_cat_ref[0], w_vpe_ref[...]) + b_vpe_ref[...])      # (K, v_in)
    e1 = silu(dot(e_cat_ref[0], w_epe_ref[...]) + b_epe_ref[...])      # (KK, e_in)

    ei = ei_ref[...]   # (KK, K): row (i*K + j) -> node i (self)
    ej = ej_ref[...]   # (KK, K): row (i*K + j) -> node j (neighbor)

    # --- edge value: SiLU(Linear([v_i, v_j, e_ij])) -> Linear ---
    # (v_i/v_j expansions done as node-level matmuls then EI/EJ expansion.)
    w_ev1 = w_ev1_ref[...]
    a_self = dot(v1, w_ev1[:v_in, :])                                   # (K, e_out)
    a_nb = dot(v1, w_ev1[v_in:2 * v_in, :])                             # (K, e_out)
    ev = (dot(ei, a_self) + dot(ej, a_nb)
          + dot(e1, w_ev1[2 * v_in:, :]) + b_ev1_ref[...])              # (KK, e_out)
    e_value = dot(silu(ev), w_ev2_ref[...]) + b_ev2_ref[...]            # (KK, e_out)

    # --- per-head sigmoid attention over neighbors ---
    q = dot(v1, w_q_ref[...]) + b_q_ref[...]                            # (K, e_out)
    k = dot(v1, w_k_ref[...]) + b_k_ref[...]
    qk = dot(ei, q) * dot(ej, k)                                        # (KK, e_out)
    # sel sums channels within each head group (== torch reshape(...,-1,H).sum(-1))
    attg = jax.nn.sigmoid(dot(qk, sel_ref[...]) * inv_scale)            # (KK, G)
    attg = attg * m_ref[0]                                              # e_agg_mask
    denom = dot(ei, dot(r_ref[...], attg))                              # sum over neighbors j
    attg = attg * pl.reciprocal(denom + 1e-6, approx=True)
    att_full = dot(attg, selt_ref[...])                                 # back to (KK, e_out)
    agg = dot(r_ref[...], att_full * e_value)                           # (K, e_out)

    # --- self path + node output MLP ---
    sv = silu(dot(v1, w_s_ref[...]) + b_s_ref[...])                     # (K, e_out)
    vn = agg + sv
    vpool = jnp.max(vn, axis=0, keepdims=True)                          # max pooling (v_agg_mask=None)
    w_no = w_no_ref[...]
    vo = dot(vn, w_no[:e_out, :]) + dot(vpool, w_no[e_out:, :]) + b_no_ref[...]
    v_out_ref[0] = silu(vo)                                             # (K, v_out)
    e_out_ref[0] = e_value


def _out_heads_kernel(base_ref, aux_ref,
                      w_wide_ref, b_wide_ref,
                      w1f_ref, w1a_ref, b1_ref,
                      w2_ref, b2_ref,
                      wof_ref, woa_ref, woh1_ref, woh2_ref, bo_ref,
                      o_ref):
    """wide_fc + all NaiveMLP heads (block-diagonally packed) in one kernel."""
    f32 = jnp.float32

    def dot(a, b):
        return jnp.dot(a, b, preferred_element_type=f32)

    def leaky(x):
        return jnp.where(x >= 0, x, 0.01 * x)

    feat = dot(base_ref[...], w_wide_ref[...]) + b_wide_ref[...]        # wide fc (no act)
    aux = aux_ref[...]
    h1 = leaky(dot(feat, w1f_ref[...]) + dot(aux, w1a_ref[...]) + b1_ref[...])
    h2 = leaky(dot(h1, w2_ref[...]) + b2_ref[...])
    o_ref[...] = (dot(feat, wof_ref[...]) + dot(aux, woa_ref[...])
                  + dot(h1, woh1_ref[...]) + dot(h2, woh2_ref[...]) + bo_ref[...])


# ----------------------------- kernel wrappers ------------------------------

def _graph_consts(K, e_out, n_head):
    assert e_out % n_head == 0
    G = e_out // n_head
    EI = np.kron(np.eye(K, dtype=np.float32), np.ones((K, 1), np.float32))   # (KK, K)
    EJ = np.kron(np.ones((K, 1), np.float32), np.eye(K, dtype=np.float32))   # (KK, K)
    SEL = np.zeros((e_out, G), np.float32)
    SEL[np.arange(e_out), np.arange(e_out) // n_head] = 1.0  # matches torch reshape(-1,H).sum(-1)
    SELT = np.ascontiguousarray(SEL.T)
    R = np.kron(np.eye(K, dtype=np.float32), np.ones((1, K), np.float32))    # (K, KK)
    return [jnp.asarray(EI), jnp.asarray(EJ), jnp.asarray(SEL),
            jnp.asarray(SELT), jnp.asarray(R)]


def graph_layer_fused(layer, v_f, e_f, p_pe_b, t_pe_b, e_mask, n_head):
    B, K, _ = v_f.shape
    KK = e_f.shape[1]
    v_in, e_out, v_out = layer["v_in"], layer["e_out"], layer["v_out"]
    t_dim = t_pe_b.shape[-1]
    t_v = jnp.broadcast_to(t_pe_b[:, None, :], (B, K, t_dim))
    t_e = jnp.broadcast_to(t_pe_b[:, None, :], (B, KK, t_dim))
    v_cat = jnp.concatenate([v_f, p_pe_b, t_v], -1)   # reference cat order [v, p_pe, t]
    e_cat = jnp.concatenate([e_f, t_e], -1)           # reference cat order [e, t]
    m = e_mask.reshape(B, KK, 1)

    consts = _graph_consts(K, e_out, n_head)
    weights = layer["flat"]
    inv_scale = 1.0 / float(np.sqrt(n_head * 3.0))
    kernel = functools.partial(_graph_layer_kernel, v_in=v_in, e_out=e_out,
                               inv_scale=inv_scale)

    in_specs = ([pl.BlockSpec((1, K, v_cat.shape[-1]), lambda b: (b, 0, 0)),
                 pl.BlockSpec((1, KK, e_cat.shape[-1]), lambda b: (b, 0, 0)),
                 pl.BlockSpec((1, KK, 1), lambda b: (b, 0, 0))]
                + [pl.BlockSpec(a.shape, lambda b: (0, 0)) for a in consts + weights])
    out_specs = (pl.BlockSpec((1, K, v_out), lambda b: (b, 0, 0)),
                 pl.BlockSpec((1, KK, e_out), lambda b: (b, 0, 0)))
    out_shape = (jax.ShapeDtypeStruct((B, K, v_out), jnp.float32),
                 jax.ShapeDtypeStruct((B, KK, e_out), jnp.float32))
    return pl.pallas_call(
        kernel, grid=(B,), out_shape=out_shape,
        in_specs=in_specs, out_specs=out_specs,
        compiler_params=pltpu.CompilerParams(dimension_semantics=("parallel",)),
    )(v_cat, e_cat, m, *consts, *weights)


def out_heads(g, base, aux):
    n = base.shape[0]
    dout = g["bo"].shape[1]
    args = [base, aux, g["w_wide"], g["b_wide"], g["w1_f"], g["w1_a"], g["b1"],
            g["w2"], g["b2"], g["wo_f"], g["wo_a"], g["wo_h1"], g["wo_h2"], g["bo"]]
    in_specs = [pl.BlockSpec(a.shape, lambda i: (0, 0)) for a in args]
    return pl.pallas_call(
        _out_heads_kernel,
        out_shape=jax.ShapeDtypeStruct((n, dout), jnp.float32),
        grid=(1,),
        in_specs=in_specs,
        out_specs=pl.BlockSpec((n, dout), lambda i: (0, 0)),
        compiler_params=pltpu.CompilerParams(dimension_semantics=("arbitrary",)),
    )(*args)


# ------------------------- model definition / params -----------------------

CFG = dict(
    K=8, M=16,
    V_dims=[1, 3, 3, 16],
    E_sym_dims=[6, 4], E_dir_dim=3,
    v_conv_dims=[32, 48, 32], e_conv_dims=[64, 64, 64],
    p_pe_dim=16, t_pe_dim=8,
    c_atten_head=8,
    v_out_hidden_dims=[32, 32], e_out_hidden_dims=[32, 16],
    edge_guide_factor=10.0,
)


def sinusoidal_embedding(n, d):
    emb = np.zeros((n, d), np.float32)
    wk = np.array([1.0 / 10000 ** (2 * j / d) for j in range(d)], np.float32).reshape(1, d)
    t = np.arange(n).reshape(n, 1)
    emb[:, 0::2] = np.sin(t * wk[:, 0::2])
    emb[:, 1::2] = np.cos(t * wk[:, 0::2])
    return jnp.asarray(emb)


def tri_full_ind(K):
    return jnp.asarray([i * K + j for i in range(K) for j in range(K) if i < j],
                       dtype=jnp.int32)


def _init_linear(kg, din, dout):
    bound = 1.0 / np.sqrt(din)
    w = jax.random.uniform(kg(), (din, dout), jnp.float32, -bound, bound)
    b = jax.random.uniform(kg(), (dout,), jnp.float32, -bound, bound)
    return {"w": w, "b": b}


def init_params(cfg, seed=0):
    key_holder = [jax.random.PRNGKey(seed)]

    def kg():
        key_holder[0], sub = jax.random.split(key_holder[0])
        return sub

    p = {}
    v0, e0 = cfg["v_conv_dims"][0], cfg["e_conv_dims"][0]
    p["v_in"] = [_init_linear(kg, c, v0) for c in cfg["V_dims"]]
    p["e_in"] = [_init_linear(kg, c, e0) for c in [cfg["E_dir_dim"]] + cfg["E_sym_dims"]]
    p["layers"] = []
    v_in, e_in = v0, e0
    v_wide, e_wide = v_in, e_in
    for v_out, e_out in zip(cfg["v_conv_dims"][1:], cfg["e_conv_dims"][1:]):
        lp = {
            "v_pe": _init_linear(kg, v_in + cfg["t_pe_dim"] + cfg["p_pe_dim"], v_in),
            "e_pe": _init_linear(kg, e_in + cfg["t_pe_dim"], e_in),
            "edge_value_1": _init_linear(kg, e_in + 2 * v_in, e_out),
            "edge_value_2": _init_linear(kg, e_out, e_out),
            "node_query": _init_linear(kg, v_in, e_out),
            "node_key": _init_linear(kg, v_in, e_out),
            "node_self": _init_linear(kg, v_in, e_out),
            "node_out": _init_linear(kg, 2 * e_out, v_out),
        }
        p["layers"].append(lp)
        v_in, e_in = v_out, e_out
        v_wide += v_in
        e_wide += e_in
    p["v_wide"] = _init_linear(kg, v_wide, cfg["v_conv_dims"][-1])
    p["e_wide"] = _init_linear(kg, e_wide, cfg["e_conv_dims"][-1])

    def init_mlp(z, out, hidden):
        layers, c_in, wide = [], z, z
        for c_out in hidden:
            layers.append(_init_linear(kg, c_in, c_out))
            wide += c_out
            c_in = c_out
        return {"layers": layers, "out": _init_linear(kg, wide, out)}

    p["v_out"] = [init_mlp(cfg["v_conv_dims"][-1] + c, c, cfg["v_out_hidden_dims"])
                  for c in cfg["V_dims"]]
    p["e_out"] = [init_mlp(cfg["e_conv_dims"][-1] + c, c, cfg["e_out_hidden_dims"])
                  for c in [cfg["E_dir_dim"]] + cfg["E_sym_dims"]]
    p["t_pe"] = sinusoidal_embedding(cfg["M"], cfg["t_pe_dim"])
    p["p_pe"] = sinusoidal_embedding(cfg["K"], cfg["p_pe_dim"])
    p["full_ind"] = tri_full_ind(cfg["K"])
    return p


def pack_params(p, cfg):
    """Repack parameters into fused / stacked / block-diagonal matrices."""
    V_dims = cfg["V_dims"]
    E_heads = [cfg["E_dir_dim"]] + cfg["E_sym_dims"]
    pk = {}

    # Input projections: summed per-slice linears == one matmul with weights
    # stacked along Din and summed biases.
    pk["v_in_w"] = jnp.concatenate([lp["w"] for lp in p["v_in"]], axis=0)
    pk["v_in_b"] = sum(lp["b"] for lp in p["v_in"]).reshape(1, -1)
    pk["e_in_w"] = jnp.concatenate([lp["w"] for lp in p["e_in"]], axis=0)
    pk["e_in_b"] = sum(lp["b"] for lp in p["e_in"]).reshape(1, -1)

    # Graph layers: flat [w, b, w, b, ...] list (biases as (1, Dout) rows).
    pk["layers"] = []
    names = ["v_pe", "e_pe", "edge_value_1", "edge_value_2",
             "node_query", "node_key", "node_self", "node_out"]
    for lp in p["layers"]:
        flat = []
        for nm in names:
            flat.append(lp[nm]["w"])
            flat.append(lp[nm]["b"].reshape(1, -1))
        pk["layers"].append({
            "flat": flat,
            "v_in": lp["node_query"]["w"].shape[0],
            "e_out": lp["edge_value_2"]["w"].shape[1],
            "v_out": lp["node_out"]["w"].shape[1],
        })

    # Output heads: wide fc + NaiveMLPs packed with block-diag weights so every
    # head runs inside one lane-dense matmul chain.
    def pack_group(wide, heads, aux_dims, hidden_dims):
        assert len(hidden_dims) == 2
        dwide = wide["w"].shape[1]
        h1d, h2d = hidden_dims
        g = {"w_wide": wide["w"], "b_wide": wide["b"].reshape(1, -1)}
        g["w1_f"] = jnp.concatenate([h["layers"][0]["w"][:dwide] for h in heads], axis=1)
        g["w1_a"] = block_diag(*[h["layers"][0]["w"][dwide:] for h in heads])
        g["b1"] = jnp.concatenate([h["layers"][0]["b"] for h in heads]).reshape(1, -1)
        g["w2"] = block_diag(*[h["layers"][1]["w"] for h in heads])
        g["b2"] = jnp.concatenate([h["layers"][1]["b"] for h in heads]).reshape(1, -1)
        wof, woa, woh1, woh2 = [], [], [], []
        for h, ca in zip(heads, aux_dims):
            w = h["out"]["w"]          # rows: [feat(dwide), aux(ca), h1, h2]
            wof.append(w[:dwide])
            woa.append(w[dwide:dwide + ca])
            woh1.append(w[dwide + ca:dwide + ca + h1d])
            woh2.append(w[dwide + ca + h1d:])
        g["wo_f"] = jnp.concatenate(wof, axis=1)
        g["wo_a"] = block_diag(*woa)
        g["wo_h1"] = block_diag(*woh1)
        g["wo_h2"] = block_diag(*woh2)
        g["bo"] = jnp.concatenate([h["out"]["b"] for h in heads]).reshape(1, -1)
        return g

    pk["v_group"] = pack_group(p["v_wide"], p["v_out"], V_dims, cfg["v_out_hidden_dims"])
    pk["e_group"] = pack_group(p["e_wide"], p["e_out"], E_heads, cfg["e_out_hidden_dims"])
    return pk


# ------------------------------ forward pass --------------------------------

def scatter_trilist_to_mtx(buf, full_ind, K):
    B, _, F = buf.shape
    out = jnp.zeros((B, K * K, F), buf.dtype).at[:, full_ind, :].set(buf)
    return out.reshape(B, K, K, F)


def forward(params, packed, cfg, V_noisy, E_noisy, t):
    B, K, _ = V_noisy.shape
    KK = K * K
    full_ind = params["full_ind"]

    # --- edge preprocessing (tiny scatter / elementwise ops; plain XLA) ---
    E_sym = scatter_trilist_to_mtx(E_noisy[..., 3:], full_ind, K)
    E_sym = E_sym + jnp.transpose(E_sym, (0, 2, 1, 3))
    E_dir = scatter_trilist_to_mtx(E_noisy[..., :3], full_ind, K)
    E_dir_neg = E_dir[..., jnp.array([0, 2, 1])]           # dir_handling=True
    E_dir = E_dir + jnp.transpose(E_dir_neg, (0, 2, 1, 3))
    # E_guidance=True -> soft connectivity mask used as e_agg_mask.
    E_cur = 1.0 - E_dir[..., 0]
    diag = jnp.eye(K, dtype=jnp.float32)[None]
    E_cur = jax.nn.sigmoid((E_cur - 0.5) * cfg["edge_guide_factor"]) * (1.0 - diag)

    E_sym2 = E_sym.reshape(B, KK, -1)
    E_dir2 = E_dir.reshape(B, KK, -1)
    emb_t = params["t_pe"][t]                               # (B, t_pe)
    emb_p = jnp.broadcast_to(params["p_pe"][None], (B, K, cfg["p_pe_dim"]))

    # --- fused input projections (one pallas_call each) ---
    node_f = pallas_linear(V_noisy.reshape(B * K, -1),
                           packed["v_in_w"], packed["v_in_b"]).reshape(B, K, -1)
    # NOTE: replicates the reference exactly -- `cur` is never advanced in the
    # original E_sym loop, so every symmetric-edge head reads E_sym[..., 3:3+c].
    e_in_cat = jnp.concatenate(
        [E_dir2] + [E_sym2[..., 3:3 + c] for c in cfg["E_sym_dims"]], -1)
    edge_f = pallas_linear(e_in_cat.reshape(B * KK, -1),
                           packed["e_in_w"], packed["e_in_b"]).reshape(B, KK, -1)

    # --- fused graph layers (one pallas_call each, grid over batch) ---
    node_list, edge_list = [node_f], [edge_f]
    for layer in packed["layers"]:
        node_f, edge_f = graph_layer_fused(layer, node_f, edge_f, emb_p, emb_t,
                                           E_cur, cfg["c_atten_head"])
        node_list.append(node_f)
        edge_list.append(edge_f)

    node_cat = jnp.concatenate(node_list, -1)               # (B, K, 112)
    edge_cat = jnp.concatenate(edge_list, -1)               # (B, KK, 192)
    # e_wide_fc is row-wise, so gather the upper-tri rows first and fold the wide
    # fc into the fused output-head kernel.  (edge_f_sym of the reference is
    # computed but never used, so it is skipped.)
    edge_cat_tri = edge_cat[:, full_ind, :]                 # (B, n_tri, 192)
    n_tri = edge_cat_tri.shape[1]

    # --- fused output heads (one pallas_call per group) ---
    v_pred = out_heads(packed["v_group"], node_cat.reshape(B * K, -1),
                       V_noisy.reshape(B * K, -1)).reshape(B, K, -1)
    e_pred = out_heads(packed["e_group"], edge_cat_tri.reshape(B * n_tri, -1),
                       E_noisy.reshape(B * n_tri, -1)).reshape(B, n_tri, -1)
    return v_pred, e_pred


# ----------------------------------- main ------------------------------------

if __name__ == "__main__":
    cfg = CFG
    params = init_params(cfg, seed=0)
    packed = pack_params(params, cfg)

    B, K = 2, cfg["K"]
    n_tri = K * (K - 1) // 2
    v_dim = sum(cfg["V_dims"])
    e_dim = cfg["E_dir_dim"] + sum(cfg["E_sym_dims"])

    key = jax.random.PRNGKey(0)
    k1, k2, k3 = jax.random.split(key, 3)
    V_noisy = jax.random.normal(k1, (B, K, v_dim), jnp.float32)
    E_noisy = jax.random.normal(k2, (B, n_tri, e_dim), jnp.float32)
    t = jax.random.randint(k3, (B,), 0, cfg["M"])

    fwd = jax.jit(lambda V, E, tt: forward(params, packed, cfg, V, E, tt))
    v_pred, e_pred = fwd(V_noisy, E_noisy, t)
    jax.block_until_ready((v_pred, e_pred))
    assert v_pred.shape == (B, K, v_dim) and v_pred.dtype == jnp.float32
    assert e_pred.shape == (B, n_tri, e_dim) and e_pred.dtype == jnp.float32
    print("KERNEL_OK")
</pallas_src>

<mosaic_0001>
module attributes {stable_mosaic.version = 11 : i64} {
  func.func @_linear_kernel(%arg0: i32, %arg1: memref<128x13xf32, #tpu.memory_space<vmem>>, %arg2: memref<13x64xf32, #tpu.memory_space<vmem>>, %arg3: memref<1x64xf32, #tpu.memory_space<vmem>>, %arg4: memref<128x64xf32, #tpu.memory_space<vmem>>) attributes {dimension_semantics = [#tpu.dimension_semantics<arbitrary>], iteration_bounds = array<i64: 1>, scalar_prefetch = 0 : i64, scratch_operands = 0 : i64, tpu.core_type = #tpu.core_type<tc>, window_params = [{pipeline_mode = #tpu.pipeline_mode<synchronous>, transform_indices = @transform_0, window_bounds = array<i64: 128, 13>}, {pipeline_mode = #tpu.pipeline_mode<synchronous>, transform_indices = @transform_1, window_bounds = array<i64: 13, 64>}, {pipeline_mode = #tpu.pipeline_mode<synchronous>, transform_indices = @transform_2, window_bounds = array<i64: 1, 64>}, {pipeline_mode = #tpu.pipeline_mode<synchronous>, transform_indices = @transform_3, window_bounds = array<i64: 128, 64>}]} {
    %c0 = arith.constant 0 : index
    %c0_0 = arith.constant 0 : index
    %0 = vector.load %arg1[%c0, %c0_0] : memref<128x13xf32, #tpu.memory_space<vmem>>, vector<128x13xf32>
    %c0_1 = arith.constant 0 : index
    %c0_2 = arith.constant 0 : index
    %1 = vector.load %arg2[%c0_1, %c0_2] : memref<13x64xf32, #tpu.memory_space<vmem>>, vector<13x64xf32>
    %cst = arith.constant dense<0.000000e+00> : vector<128x64xf32>
    %2 = tpu.matmul %0, %1, %cst {dimension_numbers = #tpu.dot_dimension_numbers<[1], [0], [0], [1], [0, 0, 1, 1], [], []>} : vector<128x13xf32>, vector<13x64xf32>, vector<128x64xf32> -> vector<128x64xf32>
    %c0_3 = arith.constant 0 : index
    %c0_4 = arith.constant 0 : index
    %3 = vector.load %arg3[%c0_3, %c0_4] : memref<1x64xf32, #tpu.memory_space<vmem>>, vector<1x64xf32>
    %4 = vector.broadcast %3 : vector<1x64xf32> to vector<128x64xf32>
    %5 = arith.addf %2, %4 : vector<128x64xf32>
    %c0_5 = arith.constant 0 : index
    %c0_6 = arith.constant 0 : index
    %6 = vector.load %arg4[%c0_5, %c0_6] : memref<128x64xf32, #tpu.memory_space<vmem>>, vector<128x64xf32>
    tpu.vector_store %arg4[%c0_5, %c0_6], %5 {strides = array<i32>} : memref<128x64xf32, #tpu.memory_space<vmem>>, vector<128x64xf32>,
    return
  }
  func.func @transform_0(%arg0: i32) -> (i32, i32) {
    %c0_i32 = arith.constant 0 : i32
    %c0_i32_0 = arith.constant 0 : i32
    %c0_i32_1 = arith.constant 0 : i32
    return %c0_i32, %c0_i32_0 : i32, i32
  }
  func.func @transform_1(%arg0: i32) -> (i32, i32) {
    %c0_i32 = arith.constant 0 : i32
    %c0_i32_0 = arith.constant 0 : i32
    %c0_i32_1 = arith.constant 0 : i32
    return %c0_i32, %c0_i32_0 : i32, i32
  }
  func.func @transform_2(%arg0: i32) -> (i32, i32) {
    %c0_i32 = arith.constant 0 : i32
    %c0_i32_0 = arith.constant 0 : i32
    %c0_i32_1 = arith.constant 0 : i32
    return %c0_i32, %c0_i32_0 : i32, i32
  }
  func.func @transform_3(%arg0: i32) -> (i32, i32) {
    %c0_i32 = arith.constant 0 : i32
    %c0_i32_0 = arith.constant 0 : i32
    %c0_i32_1 = arith.constant 0 : i32
    return %c0_i32, %c0_i32_0 : i32, i32
  }
}

module attributes {stable_mosaic.version = 11 : i64} {
  func.func @_linear_kernel(%arg0: i32, %arg1: memref<16x23xf32, #tpu.memory_space<vmem>>, %arg2: memref<23x32xf32, #tpu.memory_space<vmem>>, %arg3: memref<1x32xf32, #tpu.memory_space<vmem>>, %arg4: memref<16x32xf32, #tpu.memory_space<vmem>>) attributes {dimension_semantics = [#tpu.dimension_semantics<arbitrary>], iteration_bounds = array<i64: 1>, scalar_prefetch = 0 : i64, scratch_operands = 0 : i64, tpu.core_type = #tpu.core_type<tc>, window_params = [{pipeline_mode = #tpu.pipeline_mode<synchronous>, transform_indices = @transform_0, window_bounds = array<i64: 16, 23>}, {pipeline_mode = #tpu.pipeline_mode<synchronous>, transform_indices = @transform_1, window_bounds = array<i64: 23, 32>}, {pipeline_mode = #tpu.pipeline_mode<synchronous>, transform_indices = @transform_2, window_bounds = array<i64: 1, 32>}, {pipeline_mode = #tpu.pipeline_mode<synchronous>, transform_indices = @transform_3, window_bounds = array<i64: 16, 32>}]} {
    %c0 = arith.constant 0 : index
    %c0_0 = arith.constant 0 : index
    %0 = vector.load %arg1[%c0, %c0_0] : memref<16x23xf32, #tpu.memory_space<vmem>>, vector<16x23xf32>
    %c0_1 = arith.constant 0 : index
    %c0_2 = arith.constant 0 : index
    %1 = vector.load %arg2[%c0_1, %c0_2] : memref<23x32xf32, #tpu.memory_space<vmem>>, vector<23x32xf32>
    %cst = arith.constant dense<0.000000e+00> : vector<16x32xf32>
    %2 = tpu.matmul %0, %1, %cst {dimension_numbers = #tpu.dot_dimension_numbers<[1], [0], [0], [1], [0, 0, 1, 1], [], []>} : vector<16x23xf32>, vector<23x32xf32>, vector<16x32xf32> -> vector<16x32xf32>
    %c0_3 = arith.constant 0 : index
    %c0_4 = arith.constant 0 : index
    %3 = vector.load %arg3[%c0_3, %c0_4] : memref<1x32xf32, #tpu.memory_space<vmem>>, vector<1x32xf32>
    %4 = vector.broadcast %3 : vector<1x32xf32> to vector<16x32xf32>
    %5 = arith.addf %2, %4 : vector<16x32xf32>
    %c0_5 = arith.constant 0 : index
    %c0_6 = arith.constant 0 : index
    %6 = vector.load %arg4[%c0_5, %c0_6] : memref<16x32xf32, #tpu.memory_space<vmem>>, vector<16x32xf32>
    tpu.vector_store %arg4[%c0_5, %c0_6], %5 {strides = array<i32>} : memref<16x32xf32, #tpu.memory_space<vmem>>, vector<16x32xf32>,
    return
  }
  func.func @transform_0(%arg0: i32) -> (i32, i32) {
    %c0_i32 = arith.constant 0 : i32
    %c0_i32_0 = arith.constant 0 : i32
    %c0_i32_1 = arith.constant 0 : i32
    return %c0_i32, %c0_i32_0 : i32, i32
  }
  func.func @transform_1(%arg0: i32) -> (i32, i32) {
    %c0_i32 = arith.constant 0 : i32
    %c0_i32_0 = arith.constant 0 : i32
    %c0_i32_1 = arith.constant 0 : i32
    return %c0_i32, %c0_i32_0 : i32, i32
  }
  func.func @transform_2(%arg0: i32) -> (i32, i32) {
    %c0_i32 = arith.constant 0 : i32
    %c0_i32_0 = arith.constant 0 : i32
    %c0_i32_1 = arith.constant 0 : i32
    return %c0_i32, %c0_i32_0 : i32, i32
  }
  func.func @transform_3(%arg0: i32) -> (i32, i32) {
    %c0_i32 = arith.constant 0 : i32
    %c0_i32_0 = arith.constant 0 : i32
    %c0_i32_1 = arith.constant 0 : i32
    return %c0_i32, %c0_i32_0 : i32, i32
  }
}

module attributes {stable_mosaic.version = 11 : i64} {
  func.func @_graph_layer_kernel(%arg0: i32, %arg1: memref<1x8x56xf32, #tpu.memory_space<vmem>>, %arg2: memref<1x64x72xf32, #tpu.memory_space<vmem>>, %arg3: memref<1x64x1xf32, #tpu.memory_space<vmem>>, %arg4: memref<64x8xf32, #tpu.memory_space<vmem>>, %arg5: memref<64x8xf32, #tpu.memory_space<vmem>>, %arg6: memref<64x8xf32, #tpu.memory_space<vmem>>, %arg7: memref<8x64xf32, #tpu.memory_space<vmem>>, %arg8: memref<8x64xf32, #tpu.memory_space<vmem>>, %arg9: memref<56x32xf32, #tpu.memory_space<vmem>>, %arg10: memref<1x32xf32, #tpu.memory_space<vmem>>, %arg11: memref<72x64xf32, #tpu.memory_space<vmem>>, %arg12: memref<1x64xf32, #tpu.memory_space<vmem>>, %arg13: memref<128x64xf32, #tpu.memory_space<vmem>>, %arg14: memref<1x64xf32, #tpu.memory_space<vmem>>, %arg15: memref<64x64xf32, #tpu.memory_space<vmem>>, %arg16: memref<1x64xf32, #tpu.memory_space<vmem>>, %arg17: memref<32x64xf32, #tpu.memory_space<vmem>>, %arg18: memref<1x64xf32, #tpu.memory_space<vmem>>, %arg19: memref<32x64xf32, #tpu.memory_space<vmem>>, %arg20: memref<1x64xf32, #tpu.memory_space<vmem>>, %arg21: memref<32x64xf32, #tpu.memory_space<vmem>>, %arg22: memref<1x64xf32, #tpu.memory_space<vmem>>, %arg23: memref<128x48xf32, #tpu.memory_space<vmem>>, %arg24: memref<1x48xf32, #tpu.memory_space<vmem>>, %arg25: memref<1x8x48xf32, #tpu.memory_space<vmem>>, %arg26: memref<1x64x64xf32, #tpu.memory_space<vmem>>) attributes {dimension_semantics = [#tpu.dimension_semantics<parallel>], iteration_bounds = array<i64: 2>, scalar_prefetch = 0 : i64, scratch_operands = 0 : i64, tpu.core_type = #tpu.core_type<tc>, window_params = [{transform_indices = @transform_0, window_bounds = array<i64: 1, 8, 56>}, {transform_indices = @transform_1, window_bounds = array<i64: 1, 64, 72>}, {transform_indices = @transform_2, window_bounds = array<i64: 1, 64, 1>}, {pipeline_mode = #tpu.pipeline_mode<synchronous>, transform_indices = @transform_3, window_bounds = array<i64: 64, 8>}, {pipeline_mode = #tpu.pipeline_mode<synchronous>, transform_indices = @transform_4, window_bounds = array<i64: 64, 8>}, {pipeline_mode = #tpu.pipeline_mode<synchronous>, transform_indices = @transform_5, window_bounds = array<i64: 64, 8>}, {pipeline_mode = #tpu.pipeline_mode<synchronous>, transform_indices = @transform_6, window_bounds = array<i64: 8, 64>}, {pipeline_mode = #tpu.pipeline_mode<synchronous>, transform_indices = @transform_7, window_bounds = array<i64: 8, 64>}, {pipeline_mode = #tpu.pipeline_mode<synchronous>, transform_indices = @transform_8, window_bounds = array<i64: 56, 32>}, {pipeline_mode = #tpu.pipeline_mode<synchronous>, transform_indices = @transform_9, window_bounds = array<i64: 1, 32>}, {pipeline_mode = #tpu.pipeline_mode<synchronous>, transform_indices = @transform_10, window_bounds = array<i64: 72, 64>}, {pipeline_mode = #tpu.pipeline_mode<synchronous>, transform_indices = @transform_11, window_bounds = array<i64: 1, 64>}, {pipeline_mode = #tpu.pipeline_mode<synchronous>, transform_indices = @transform_12, window_bounds = array<i64: 128, 64>}, {pipeline_mode = #tpu.pipeline_mode<synchronous>, transform_indices = @transform_13, window_bounds = array<i64: 1, 64>}, {pipeline_mode = #tpu.pipeline_mode<synchronous>, transform_indices = @transform_14, window_bounds = array<i64: 64, 64>}, {pipeline_mode = #tpu.pipeline_mode<synchronous>, transform_indices = @transform_15, window_bounds = array<i64: 1, 64>}, {pipeline_mode = #tpu.pipeline_mode<synchronous>, transform_indices = @transform_16, window_bounds = array<i64: 32, 64>}, {pipeline_mode = #tpu.pipeline_mode<synchronous>, transform_indices = @transform_17, window_bounds = array<i64: 1, 64>}, {pipeline_mode = #tpu.pipeline_mode<synchronous>, transform_indices = @transform_18, window_bounds = array<i64: 32, 64>}, {pipeline_mode = #tpu.pipeline_mode<synchronous>, transform_indices = @transform_19, window_bounds = array<i64: 1, 64>}, {pipeline_mode = #tpu.pipeline_mode<synchronous>, transform_indices = @transform_20, window_bounds = array<i64: 32, 64>}, {pipeline_mode = #tpu.pipeline_mode<synchronous>, transform_indices = @transform_21, window_bounds = array<i64: 1, 64>}, {pipeline_mode = #tpu.pipeline_mode<synchronous>, transform_indices = @transform_22, window_bounds = array<i64: 128, 48>}, {pipeline_mode = #tpu.pipeline_mode<synchronous>, transform_indices = @transform_23, window_bounds = array<i64: 1, 48>}, {transform_indices = @transform_24, window_bounds = array<i64: 1, 8, 48>}, {transform_indices = @transform_25, window_bounds = array<i64: 1, 64, 64>}]} {
    %c0 = arith.constant 0 : index
    %c0_0 = arith.constant 0 : index
    %c0_1 = arith.constant 0 : index
    %0 = vector.load %arg1[%c0, %c0_0, %c0_1] : memref<1x8x56xf32, #tpu.memory_space<vmem>>, vector<1x8x56xf32>
    %1 = vector.shape_cast %0 : vector<1x8x56xf32> to vector<8x56xf32>
    %c0_2 = arith.constant 0 : index
    %c0_3 = arith.constant 0 : index
    %2 = vector.load %arg9[%c0_2, %c0_3] : memref<56x32xf32, #tpu.memory_space<vmem>>, vector<56x32xf32>
    %cst = arith.constant dense<0.000000e+00> : vector<8x32xf32>
    %3 = tpu.matmul %1, %2, %cst {dimension_numbers = #tpu.dot_dimension_numbers<[1], [0], [0], [1], [0, 0, 1, 1], [], []>} : vector<8x56xf32>, vector<56x32xf32>, vector<8x32xf32> -> vector<8x32xf32>
    %c0_4 = arith.constant 0 : index
    %c0_5 = arith.constant 0 : index
    %4 = vector.load %arg10[%c0_4, %c0_5] : memref<1x32xf32, #tpu.memory_space<vmem>>, vector<1x32xf32>
    %5 = vector.broadcast %4 : vector<1x32xf32> to vector<8x32xf32>
    %6 = arith.addf %3, %5 : vector<8x32xf32>
    %7 = arith.negf %6 : vector<8x32xf32>
    %8 = math.exp %7 : vector<8x32xf32>
    %cst_6 = arith.constant 1.000000e+00 : f32
    %9 = vector.broadcast %cst_6 : f32 to vector<8x32xf32>
    %10 = arith.addf %9, %8 : vector<8x32xf32>
    %11 = arith.divf %9, %10 : vector<8x32xf32>
    %12 = arith.mulf %6, %11 : vector<8x32xf32>
    %c0_7 = arith.constant 0 : index
    %c0_8 = arith.constant 0 : index
    %c0_9 = arith.constant 0 : index
    %13 = vector.load %arg2[%c0_7, %c0_8, %c0_9] : memref<1x64x72xf32, #tpu.memory_space<vmem>>, vector<1x64x72xf32>
    %14 = vector.shape_cast %13 : vector<1x64x72xf32> to vector<64x72xf32>
    %c0_10 = arith.constant 0 : index
    %c0_11 = arith.constant 0 : index
    %15 = vector.load %arg11[%c0_10, %c0_11] : memref<72x64xf32, #tpu.memory_space<vmem>>, vector<72x64xf32>
    %cst_12 = arith.constant dense<0.000000e+00> : vector<64x64xf32>
    %16 = tpu.matmul %14, %15, %cst_12 {dimension_numbers = #tpu.dot_dimension_numbers<[1], [0], [0], [1], [0, 0, 1, 1], [], []>} : vector<64x72xf32>, vector<72x64xf32>, vector<64x64xf32> -> vector<64x64xf32>
    %c0_13 = arith.constant 0 : index
    %c0_14 = arith.constant 0 : index
    %17 = vector.load %arg12[%c0_13, %c0_14] : memref<1x64xf32, #tpu.memory_space<vmem>>, vector<1x64xf32>
    %18 = vector.broadcast %17 : vector<1x64xf32> to vector<64x64xf32>
    %19 = arith.addf %16, %18 : vector<64x64xf32>
    %20 = arith.negf %19 : vector<64x64xf32>
    %21 = math.exp %20 : vector<64x64xf32>
    %cst_15 = arith.constant 1.000000e+00 : f32
    %22 = vector.broadcast %cst_15 : f32 to vector<64x64xf32>
    %23 = arith.addf %22, %21 : vector<64x64xf32>
    %24 = arith.divf %22, %23 : vector<64x64xf32>
    %25 = arith.mulf %19, %24 : vector<64x64xf32>
    %c0_16 = arith.constant 0 : index
    %c0_17 = arith.constant 0 : index
    %26 = vector.load %arg4[%c0_16, %c0_17] : memref<64x8xf32, #tpu.memory_space<vmem>>, vector<64x8xf32>
    %c0_18 = arith.constant 0 : index
    %c0_19 = arith.constant 0 : index
    %27 = vector.load %arg5[%c0_18, %c0_19] : memref<64x8xf32, #tpu.memory_space<vmem>>, vector<64x8xf32>
    %c0_20 = arith.constant 0 : index
    %c0_21 = arith.constant 0 : index
    %28 = vector.load %arg13[%c0_20, %c0_21] : memref<128x64xf32, #tpu.memory_space<vmem>>, vector<128x64xf32>
    %29 = vector.extract_strided_slice %28 {offsets = [0, 0], sizes = [32, 64], strides = [1, 1]} : vector<128x64xf32> to vector<32x64xf32>
    %cst_22 = arith.constant dense<0.000000e+00> : vector<8x64xf32>
    %30 = tpu.matmul %12, %29, %cst_22 {dimension_numbers = #tpu.dot_dimension_numbers<[1], [0], [0], [1], [0, 0, 1, 1], [], []>} : vector<8x32xf32>, vector<32x64xf32>, vector<8x64xf32> -> vector<8x64xf32>
    %31 = vector.extract_strided_slice %28 {offsets = [32, 0], sizes = [32, 64], strides = [1, 1]} : vector<128x64xf32> to vector<32x64xf32>
    %cst_23 = arith.constant dense<0.000000e+00> : vector<8x64xf32>
    %32 = tpu.matmul %12, %31, %cst_23 {dimension_numbers = #tpu.dot_dimension_numbers<[1], [0], [0], [1], [0, 0, 1, 1], [], []>} : vector<8x32xf32>, vector<32x64xf32>, vector<8x64xf32> -> vector<8x64xf32>
    %cst_24 = arith.constant dense<0.000000e+00> : vector<64x64xf32>
    %33 = tpu.matmul %26, %30, %cst_24 {dimension_numbers = #tpu.dot_dimension_numbers<[1], [0], [0], [1], [0, 0, 1, 1], [], []>} : vector<64x8xf32>, vector<8x64xf32>, vector<64x64xf32> -> vector<64x64xf32>
    %cst_25 = arith.constant dense<0.000000e+00> : vector<64x64xf32>
    %34 = tpu.matmul %27, %32, %cst_25 {dimension_numbers = #tpu.dot_dimension_numbers<[1], [0], [0], [1], [0, 0, 1, 1], [], []>} : vector<64x8xf32>, vector<8x64xf32>, vector<64x64xf32> -> vector<64x64xf32>
    %35 = arith.addf %33, %34 : vector<64x64xf32>
    %36 = vector.extract_strided_slice %28 {offsets = [64, 0], sizes = [64, 64], strides = [1, 1]} : vector<128x64xf32> to vector<64x64xf32>
    %cst_26 = arith.constant dense<0.000000e+00> : vector<64x64xf32>
    %37 = tpu.matmul %25, %36, %cst_26 {dimension_numbers = #tpu.dot_dimension_numbers<[1], [0], [0], [1], [0, 0, 1, 1], [], []>} : vector<64x64xf32>, vector<64x64xf32>, vector<64x64xf32> -> vector<64x64xf32>
    %38 = arith.addf %35, %37 : vector<64x64xf32>
    %c0_27 = arith.constant 0 : index
    %c0_28 = arith.constant 0 : index
    %39 = vector.load %arg14[%c0_27, %c0_28] : memref<1x64xf32, #tpu.memory_space<vmem>>, vector<1x64xf32>
    %40 = vector.broadcast %39 : vector<1x64xf32> to vector<64x64xf32>
    %41 = arith.addf %38, %40 : vector<64x64xf32>
    %42 = arith.negf %41 : vector<64x64xf32>
    %43 = math.exp %42 : vector<64x64xf32>
    %cst_29 = arith.constant 1.000000e+00 : f32
    %44 = vector.broadcast %cst_29 : f32 to vector<64x64xf32>
    %45 = arith.addf %44, %43 : vector<64x64xf32>
    %46 = arith.divf %44, %45 : vector<64x64xf32>
    %47 = arith.mulf %41, %46 : vector<64x64xf32>
    %c0_30 = arith.constant 0 : index
    %c0_31 = arith.constant 0 : index
    %48 = vector.load %arg15[%c0_30, %c0_31] : memref<64x64xf32, #tpu.memory_space<vmem>>, vector<64x64xf32>
    %cst_32 = arith.constant dense<0.000000e+00> : vector<64x64xf32>
    %49 = tpu.matmul %47, %48, %cst_32 {dimension_numbers = #tpu.dot_dimension_numbers<[1], [0], [0], [1], [0, 0, 1, 1], [], []>} : vector<64x64xf32>, vector<64x64xf32>, vector<64x64xf32> -> vector<64x64xf32>
    %c0_33 = arith.constant 0 : index
    %c0_34 = arith.constant 0 : index
    %50 = vector.load %arg16[%c0_33, %c0_34] : memref<1x64xf32, #tpu.memory_space<vmem>>, vector<1x64xf32>
    %51 = vector.broadcast %50 : vector<1x64xf32> to vector<64x64xf32>
    %52 = arith.addf %49, %51 : vector<64x64xf32>
    %c0_35 = arith.constant 0 : index
    %c0_36 = arith.constant 0 : index
    %53 = vector.load %arg17[%c0_35, %c0_36] : memref<32x64xf32, #tpu.memory_space<vmem>>, vector<32x64xf32>
    %cst_37 = arith.constant dense<0.000000e+00> : vector<8x64xf32>
    %54 = tpu.matmul %12, %53, %cst_37 {dimension_numbers = #tpu.dot_dimension_numbers<[1], [0], [0], [1], [0, 0, 1, 1], [], []>} : vector<8x32xf32>, vector<32x64xf32>, vector<8x64xf32> -> vector<8x64xf32>
    %c0_38 = arith.constant 0 : index
    %c0_39 = arith.constant 0 : index
    %55 = vector.load %arg18[%c0_38, %c0_39] : memref<1x64xf32, #tpu.memory_space<vmem>>, vector<1x64xf32>
    %56 = vector.broadcast %55 : vector<1x64xf32> to vector<8x64xf32>
    %57 = arith.addf %54, %56 : vector<8x64xf32>
    %c0_40 = arith.constant 0 : index
    %c0_41 = arith.constant 0 : index
    %58 = vector.load %arg19[%c0_40, %c0_41] : memref<32x64xf32, #tpu.memory_space<vmem>>, vector<32x64xf32>
    %cst_42 = arith.constant dense<0.000000e+00> : vector<8x64xf32>
    %59 = tpu.matmul %12, %58, %cst_42 {dimension_numbers = #tpu.dot_dimension_numbers<[1], [0], [0], [1], [0, 0, 1, 1], [], []>} : vector<8x32xf32>, vector<32x64xf32>, vector<8x64xf32> -> vector<8x64xf32>
    %c0_43 = arith.constant 0 : index
    %c0_44 = arith.constant 0 : index
    %60 = vector.load %arg20[%c0_43, %c0_44] : memref<1x64xf32, #tpu.memory_space<vmem>>, vector<1x64xf32>
    %61 = vector.broadcast %60 : vector<1x64xf32> to vector<8x64xf32>
    %62 = arith.addf %59, %61 : vector<8x64xf32>
    %cst_45 = arith.constant dense<0.000000e+00> : vector<64x64xf32>
    %63 = tpu.matmul %26, %57, %cst_45 {dimension_numbers = #tpu.dot_dimension_numbers<[1], [0], [0], [1], [0, 0, 1, 1], [], []>} : vector<64x8xf32>, vector<8x64xf32>, vector<64x64xf32> -> vector<64x64xf32>
    %cst_46 = arith.constant dense<0.000000e+00> : vector<64x64xf32>
    %64 = tpu.matmul %27, %62, %cst_46 {dimension_numbers = #tpu.dot_dimension_numbers<[1], [0], [0], [1], [0, 0, 1, 1], [], []>} : vector<64x8xf32>, vector<8x64xf32>, vector<64x64xf32> -> vector<64x64xf32>
    %65 = arith.mulf %63, %64 : vector<64x64xf32>
    %c0_47 = arith.constant 0 : index
    %c0_48 = arith.constant 0 : index
    %66 = vector.load %arg6[%c0_47, %c0_48] : memref<64x8xf32, #tpu.memory_space<vmem>>, vector<64x8xf32>
    %cst_49 = arith.constant dense<0.000000e+00> : vector<64x8xf32>
    %67 = tpu.matmul %65, %66, %cst_49 {dimension_numbers = #tpu.dot_dimension_numbers<[1], [0], [0], [1], [0, 0, 1, 1], [], []>} : vector<64x64xf32>, vector<64x8xf32>, vector<64x8xf32> -> vector<64x8xf32>
    %cst_50 = arith.constant 0.204124153 : f32
    %68 = vector.broadcast %cst_50 : f32 to vector<64x8xf32>
    %69 = arith.mulf %67, %68 : vector<64x8xf32>
    %70 = arith.negf %69 : vector<64x8xf32>
    %71 = math.exp %70 : vector<64x8xf32>
    %cst_51 = arith.constant 1.000000e+00 : f32
    %72 = vector.broadcast %cst_51 : f32 to vector<64x8xf32>
    %73 = arith.addf %72, %71 : vector<64x8xf32>
    %74 = arith.divf %72, %73 : vector<64x8xf32>
    %c0_52 = arith.constant 0 : index
    %c0_53 = arith.constant 0 : index
    %c0_54 = arith.constant 0 : index
    %75 = vector.load %arg3[%c0_52, %c0_53, %c0_54] : memref<1x64x1xf32, #tpu.memory_space<vmem>>, vector<1x64x1xf32>
    %76 = vector.shape_cast %75 : vector<1x64x1xf32> to vector<64x1xf32>
    %77 = vector.broadcast %76 : vector<64x1xf32> to vector<64x8xf32>
    %78 = arith.mulf %74, %77 : vector<64x8xf32>
    %c0_55 = arith.constant 0 : index
    %c0_56 = arith.constant 0 : index
    %79 = vector.load %arg8[%c0_55, %c0_56] : memref<8x64xf32, #tpu.memory_space<vmem>>, vector<8x64xf32>
    %cst_57 = arith.constant dense<0.000000e+00> : vector<8x8xf32>
    %80 = tpu.matmul %79, %78, %cst_57 {dimension_numbers = #tpu.dot_dimension_numbers<[1], [0], [0], [1], [0, 0, 1, 1], [], []>} : vector<8x64xf32>, vector<64x8xf32>, vector<8x8xf32> -> vector<8x8xf32>
    %cst_58 = arith.constant dense<0.000000e+00> : vector<64x8xf32>
    %81 = tpu.matmul %26, %80, %cst_58 {dimension_numbers = #tpu.dot_dimension_numbers<[1], [0], [0], [1], [0, 0, 1, 1], [], []>} : vector<64x8xf32>, vector<8x8xf32>, vector<64x8xf32> -> vector<64x8xf32>
    %cst_59 = arith.constant 9.99999997E-7 : f32
    %82 = vector.broadcast %cst_59 : f32 to vector<64x8xf32>
    %83 = arith.addf %81, %82 : vector<64x8xf32>
    %84 = tpu.reciprocal %83 {approx = true} : vector<64x8xf32> -> vector<64x8xf32>
    %85 = arith.mulf %78, %84 : vector<64x8xf32>
    %c0_60 = arith.constant 0 : index
    %c0_61 = arith.constant 0 : index
    %86 = vector.load %arg7[%c0_60, %c0_61] : memref<8x64xf32, #tpu.memory_space<vmem>>, vector<8x64xf32>
    %cst_62 = arith.constant dense<0.000000e+00> : vector<64x64xf32>
    %87 = tpu.matmul %85, %86, %cst_62 {dimension_numbers = #tpu.dot_dimension_numbers<[1], [0], [0], [1], [0, 0, 1, 1], [], []>} : vector<64x8xf32>, vector<8x64xf32>, vector<64x64xf32> -> vector<64x64xf32>
    %c0_63 = arith.constant 0 : index
    %c0_64 = arith.constant 0 : index
    %88 = vector.load %arg8[%c0_63, %c0_64] : memref<8x64xf32, #tpu.memory_space<vmem>>, vector<8x64xf32>
    %89 = arith.mulf %87, %52 : vector<64x64xf32>
    %cst_65 = arith.constant dense<0.000000e+00> : vector<8x64xf32>
    %90 = tpu.matmul %88, %89, %cst_65 {dimension_numbers = #tpu.dot_dimension_numbers<[1], [0], [0], [1], [0, 0, 1, 1], [], []>} : vector<8x64xf32>, vector<64x64xf32>, vector<8x64xf32> -> vector<8x64xf32>
    %c0_66 = arith.constant 0 : index
    %c0_67 = arith.constant 0 : index
    %91 = vector.load %arg21[%c0_66, %c0_67] : memref<32x64xf32, #tpu.memory_space<vmem>>, vector<32x64xf32>
    %cst_68 = arith.constant dense<0.000000e+00> : vector<8x64xf32>
    %92 = tpu.matmul %12, %91, %cst_68 {dimension_numbers = #tpu.dot_dimension_numbers<[1], [0], [0], [1], [0, 0, 1, 1], [], []>} : vector<8x32xf32>, vector<32x64xf32>, vector<8x64xf32> -> vector<8x64xf32>
    %c0_69 = arith.constant 0 : index
    %c0_70 = arith.constant 0 : index
    %93 = vector.load %arg22[%c0_69, %c0_70] : memref<1x64xf32, #tpu.memory_space<vmem>>, vector<1x64xf32>
    %94 = vector.broadcast %93 : vector<1x64xf32> to vector<8x64xf32>
    %95 = arith.addf %92, %94 : vector<8x64xf32>
    %96 = arith.negf %95 : vector<8x64xf32>
    %97 = math.exp %96 : vector<8x64xf32>
    %cst_71 = arith.constant 1.000000e+00 : f32
    %98 = vector.broadcast %cst_71 : f32 to vector<8x64xf32>
    %99 = arith.addf %98, %97 : vector<8x64xf32>
    %100 = arith.divf %98, %99 : vector<8x64xf32>
    %101 = arith.mulf %95, %100 : vector<8x64xf32>
    %102 = arith.addf %90, %101 : vector<8x64xf32>
    %cst_72 = arith.constant dense<0xFF800000> : vector<64xf32>
    %103 = vector.multi_reduction <maximumf>, %102, %cst_72 [0] : vector<8x64xf32> to vector<64xf32>
    %104 = vector.shape_cast %103 : vector<64xf32> to vector<1x64xf32>
    %c0_73 = arith.constant 0 : index
    %c0_74 = arith.constant 0 : index
    %105 = vector.load %arg23[%c0_73, %c0_74] : memref<128x48xf32, #tpu.memory_space<vmem>>, vector<128x48xf32>
    %106 = vector.extract_strided_slice %105 {offsets = [0, 0], sizes = [64, 48], strides = [1, 1]} : vector<128x48xf32> to vector<64x48xf32>
    %cst_75 = arith.constant dense<0.000000e+00> : vector<8x48xf32>
    %107 = tpu.matmul %102, %106, %cst_75 {dimension_numbers = #tpu.dot_dimension_numbers<[1], [0], [0], [1], [0, 0, 1, 1], [], []>} : vector<8x64xf32>, vector<64x48xf32>, vector<8x48xf32> -> vector<8x48xf32>
    %108 = vector.extract_strided_slice %105 {offsets = [64, 0], sizes = [64, 48], strides = [1, 1]} : vector<128x48xf32> to vector<64x48xf32>
    %cst_76 = arith.constant dense<0.000000e+00> : vector<1x48xf32>
    %109 = tpu.matmul %104, %108, %cst_76 {dimension_numbers = #tpu.dot_dimension_numbers<[1], [0], [0], [1], [0, 0, 1, 1], [], []>} : vector<1x64xf32>, vector<64x48xf32>, vector<1x48xf32> -> vector<1x48xf32>
    %110 = vector.broadcast %109 : vector<1x48xf32> to vector<8x48xf32>
    %111 = arith.addf %107, %110 : vector<8x48xf32>
    %c0_77 = arith.constant 0 : index
    %c0_78 = arith.constant 0 : index
    %112 = vector.load %arg24[%c0_77, %c0_78] : memref<1x48xf32, #tpu.memory_space<vmem>>, vector<1x48xf32>
    %113 = vector.broadcast %112 : vector<1x48xf32> to vector<8x48xf32>
    %114 = arith.addf %111, %113 : vector<8x48xf32>
    %115 = arith.negf %114 : vector<8x48xf32>
    %116 = math.exp %115 : vector<8x48xf32>
    %cst_79 = arith.constant 1.000000e+00 : f32
    %117 = vector.broadcast %cst_79 : f32 to vector<8x48xf32>
    %118 = arith.addf %117, %116 : vector<8x48xf32>
    %119 = arith.divf %117, %118 : vector<8x48xf32>
    %120 = arith.mulf %114, %119 : vector<8x48xf32>
    %c0_80 = arith.constant 0 : index
    %c0_81 = arith.constant 0 : index
    %c0_82 = arith.constant 0 : index
    %121 = vector.load %arg25[%c0_80, %c0_81, %c0_82] : memref<1x8x48xf32, #tpu.memory_space<vmem>>, vector<1x8x48xf32>
    %122 = vector.shape_cast %121 : vector<1x8x48xf32> to vector<8x48xf32>
    %123 = vector.shape_cast %120 : vector<8x48xf32> to vector<1x8x48xf32>
    tpu.vector_store %arg25[%c0_80, %c0_81, %c0_82], %123 {strides = array<i32>} : memref<1x8x48xf32, #tpu.memory_space<vmem>>, vector<1x8x48xf32>,
    %c0_83 = arith.constant 0 : index
    %c0_84 = arith.constant 0 : index
    %c0_85 = arith.constant 0 : index
    %124 = vector.load %arg26[%c0_83, %c0_84, %c0_85] : memref<1x64x64xf32, #tpu.memory_space<vmem>>, vector<1x64x64xf32>
    %125 = vector.shape_cast %124 : vector<1x64x64xf32> to vector<64x64xf32>
    %126 = vector.shape_cast %52 : vector<64x64xf32> to vector<1x64x64xf32>
    tpu.vector_store %arg26[%c0_83, %c0_84, %c0_85], %126 {strides = array<i32>} : memref<1x64x64xf32, #tpu.memory_space<vmem>>, vector<1x64x64xf32>,
    return
  }
  func.func @transform_0(%arg0: i32) -> (i32, i32, i32) {
    %c0_i32 = arith.constant 0 : i32
    %c0_i32_0 = arith.constant 0 : i32
    %c0_i32_1 = arith.constant 0 : i32
    return %arg0, %c0_i32, %c0_i32_0 : i32, i32, i32
  }
  func.func @transform_1(%arg0: i32) -> (i32, i32, i32) {
    %c0_i32 = arith.constant 0 : i32
    %c0_i32_0 = arith.constant 0 : i32
    %c0_i32_1 = arith.constant 0 : i32
    return %arg0, %c0_i32, %c0_i32_0 : i32, i32, i32
  }
  func.func @transform_2(%arg0: i32) -> (i32, i32, i32) {
    %c0_i32 = arith.constant 0 : i32
    %c0_i32_0 = arith.constant 0 : i32
    %c0_i32_1 = arith.constant 0 : i32
    return %arg0, %c0_i32, %c0_i32_0 : i32, i32, i32
  }
  func.func @transform_3(%arg0: i32) -> (i32, i32) {
    %c0_i32 = arith.constant 0 : i32
    %c0_i32_0 = arith.constant 0 : i32
    %c0_i32_1 = arith.constant 0 : i32
    return %c0_i32, %c0_i32_0 : i32, i32
  }
  func.func @transform_4(%arg0: i32) -> (i32, i32) {
    %c0_i32 = arith.constant 0 : i32
    %c0_i32_0 = arith.constant 0 : i32
    %c0_i32_1 = arith.constant 0 : i32
    return %c0_i32, %c0_i32_0 : i32, i32
  }
  func.func @transform_5(%arg0: i32) -> (i32, i32) {
    %c0_i32 = arith.constant 0 : i32
    %c0_i32_0 = arith.constant 0 : i32
    %c0_i32_1 = arith.constant 0 : i32
    return %c0_i32, %c0_i32_0 : i32, i32
  }
  func.func @transform_6(%arg0: i32) -> (i32, i32) {
    %c0_i32 = arith.constant 0 : i32
    %c0_i32_0 = arith.constant 0 : i32
    %c0_i32_1 = arith.constant 0 : i32
    return %c0_i32, %c0_i32_0 : i32, i32
  }
  func.func @transform_7(%arg0: i32) -> (i32, i32) {
    %c0_i32 = arith.constant 0 : i32
    %c0_i32_0 = arith.constant 0 : i32
    %c0_i32_1 = arith.constant 0 : i32
    return %c0_i32, %c0_i32_0 : i32, i32
  }
  func.func @transform_8(%arg0: i32) -> (i32, i32) {
    %c0_i32 = arith.constant 0 : i32
    %c0_i32_0 = arith.constant 0 : i32
    %c0_i32_1 = arith.constant 0 : i32
    return %c0_i32, %c0_i32_0 : i32, i32
  }
  func.func @transform_9(%arg0: i32) -> (i32, i32) {
    %c0_i32 = arith.constant 0 : i32
    %c0_i32_0 = arith.constant 0 : i32
    %c0_i32_1 = arith.constant 0 : i32
    return %c0_i32, %c0_i32_0 : i32, i32
  }
  func.func @transform_10(%arg0: i32) -> (i32, i32) {
    %c0_i32 = arith.constant 0 : i32
    %c0_i32_0 = arith.constant 0 : i32
    %c0_i32_1 = arith.constant 0 : i32
    return %c0_i32, %c0_i32_0 : i32, i32
  }
  func.func @transform_11(%arg0: i32) -> (i32, i32) {
    %c0_i32 = arith.constant 0 : i32
    %c0_i32_0 = arith.constant 0 : i32
    %c0_i32_1 = arith.constant 0 : i32
    return %c0_i32, %c0_i32_0 : i32, i32
  }
  func.func @transform_12(%arg0: i32) -> (i32, i32) {
    %c0_i32 = arith.constant 0 : i32
    %c0_i32_0 = arith.constant 0 : i32
    %c0_i32_1 = arith.constant 0 : i32
    return %c0_i32, %c0_i32_0 : i32, i32
  }
  func.func @transform_13(%arg0: i32) -> (i32, i32) {
    %c0_i32 = arith.constant 0 : i32
    %c0_i32_0 = arith.constant 0 : i32
    %c0_i32_1 = arith.constant 0 : i32
    return %c0_i32, %c0_i32_0 : i32, i32
  }
  func.func @transform_14(%arg0: i32) -> (i32, i32) {
    %c0_i32 = arith.constant 0 : i32
    %c0_i32_0 = arith.constant 0 : i32
    %c0_i32_1 = arith.constant 0 : i32
    return %c0_i32, %c0_i32_0 : i32, i32
  }
  func.func @transform_15(%arg0: i32) -> (i32, i32) {
    %c0_i32 = arith.constant 0 : i32
    %c0_i32_0 = arith.constant 0 : i32
    %c0_i32_1 = arith.constant 0 : i32
    return %c0_i32, %c0_i32_0 : i32, i32
  }
  func.func @transform_16(%arg0: i32) -> (i32, i32) {
    %c0_i32 = arith.constant 0 : i32
    %c0_i32_0 = arith.constant 0 : i32
    %c0_i32_1 = arith.constant 0 : i32
    return %c0_i32, %c0_i32_0 : i32, i32
  }
  func.func @transform_17(%arg0: i32) -> (i32, i32) {
    %c0_i32 = arith.constant 0 : i32
    %c0_i32_0 = arith.constant 0 : i32
    %c0_i32_1 = arith.constant 0 : i32
    return %c0_i32, %c0_i32_0 : i32, i32
  }
  func.func @transform_18(%arg0: i32) -> (i32, i32) {
    %c0_i32 = arith.constant 0 : i32
    %c0_i32_0 = arith.constant 0 : i32
    %c0_i32_1 = arith.constant 0 : i32
    return %c0_i32, %c0_i32_0 : i32, i32
  }
  func.func @transform_19(%arg0: i32) -> (i32, i32) {
    %c0_i32 = arith.constant 0 : i32
    %c0_i32_0 = arith.constant 0 : i32
    %c0_i32_1 = arith.constant 0 : i32
    return %c0_i32, %c0_i32_0 : i32, i32
  }
  func.func @transform_20(%arg0: i32) -> (i32, i32) {
    %c0_i32 = arith.constant 0 : i32
    %c0_i32_0 = arith.constant 0 : i32
    %c0_i32_1 = arith.constant 0 : i32
    return %c0_i32, %c0_i32_0 : i32, i32
  }
  func.func @transform_21(%arg0: i32) -> (i32, i32) {
    %c0_i32 = arith.constant 0 : i32
    %c0_i32_0 = arith.constant 0 : i32
    %c0_i32_1 = arith.constant 0 : i32
    return %c0_i32, %c0_i32_0 : i32, i32
  }
  func.func @transform_22(%arg0: i32) -> (i32, i32) {
    %c0_i32 = arith.constant 0 : i32
    %c0_i32_0 = arith.constant 0 : i32
    %c0_i32_1 = arith.constant 0 : i32
    return %c0_i32, %c0_i32_0 : i32, i32
  }
  func.func @transform_23(%arg0: i32) -> (i32, i32) {
    %c0_i32 = arith.constant 0 : i32
    %c0_i32_0 = arith.constant 0 : i32
    %c0_i32_1 = arith.constant 0 : i32
    return %c0_i32, %c0_i32_0 : i32, i32
  }
  func.func @transform_24(%arg0: i32) -> (i32, i32, i32) {
    %c0_i32 = arith.constant 0 : i32
    %c0_i32_0 = arith.constant 0 : i32
    %c0_i32_1 = arith.constant 0 : i32
    return %arg0, %c0_i32, %c0_i32_0 : i32, i32, i32
  }
  func.func @transform_25(%arg0: i32) -> (i32, i32, i32) {
    %c0_i32 = arith.constant 0 : i32
    %c0_i32_0 = arith.constant 0 : i32
    %c0_i32_1 = arith.constant 0 : i32
    return %arg0, %c0_i32, %c0_i32_0 : i32, i32, i32
  }
}

module attributes {stable_mosaic.version = 11 : i64} {
  func.func @_graph_layer_kernel(%arg0: i32, %arg1: memref<1x8x72xf32, #tpu.memory_space<vmem>>, %arg2: memref<1x64x72xf32, #tpu.memory_space<vmem>>, %arg3: memref<1x64x1xf32, #tpu.memory_space<vmem>>, %arg4: memref<64x8xf32, #tpu.memory_space<vmem>>, %arg5: memref<64x8xf32, #tpu.memory_space<vmem>>, %arg6: memref<64x8xf32, #tpu.memory_space<vmem>>, %arg7: memref<8x64xf32, #tpu.memory_space<vmem>>, %arg8: memref<8x64xf32, #tpu.memory_space<vmem>>, %arg9: memref<72x48xf32, #tpu.memory_space<vmem>>, %arg10: memref<1x48xf32, #tpu.memory_space<vmem>>, %arg11: memref<72x64xf32, #tpu.memory_space<vmem>>, %arg12: memref<1x64xf32, #tpu.memory_space<vmem>>, %arg13: memref<160x64xf32, #tpu.memory_space<vmem>>, %arg14: memref<1x64xf32, #tpu.memory_space<vmem>>, %arg15: memref<64x64xf32, #tpu.memory_space<vmem>>, %arg16: memref<1x64xf32, #tpu.memory_space<vmem>>, %arg17: memref<48x64xf32, #tpu.memory_space<vmem>>, %arg18: memref<1x64xf32, #tpu.memory_space<vmem>>, %arg19: memref<48x64xf32, #tpu.memory_space<vmem>>, %arg20: memref<1x64xf32, #tpu.memory_space<vmem>>, %arg21: memref<48x64xf32, #tpu.memory_space<vmem>>, %arg22: memref<1x64xf32, #tpu.memory_space<vmem>>, %arg23: memref<128x32xf32, #tpu.memory_space<vmem>>, %arg24: memref<1x32xf32, #tpu.memory_space<vmem>>, %arg25: memref<1x8x32xf32, #tpu.memory_space<vmem>>, %arg26: memref<1x64x64xf32, #tpu.memory_space<vmem>>) attributes {dimension_semantics = [#tpu.dimension_semantics<parallel>], iteration_bounds = array<i64: 2>, scalar_prefetch = 0 : i64, scratch_operands = 0 : i64, tpu.core_type = #tpu.core_type<tc>, window_params = [{transform_indices = @transform_0, window_bounds = array<i64: 1, 8, 72>}, {transform_indices = @transform_1, window_bounds = array<i64: 1, 64, 72>}, {transform_indices = @transform_2, window_bounds = array<i64: 1, 64, 1>}, {pipeline_mode = #tpu.pipeline_mode<synchronous>, transform_indices = @transform_3, window_bounds = array<i64: 64, 8>}, {pipeline_mode = #tpu.pipeline_mode<synchronous>, transform_indices = @transform_4, window_bounds = array<i64: 64, 8>}, {pipeline_mode = #tpu.pipeline_mode<synchronous>, transform_indices = @transform_5, window_bounds = array<i64: 64, 8>}, {pipeline_mode = #tpu.pipeline_mode<synchronous>, transform_indices = @transform_6, window_bounds = array<i64: 8, 64>}, {pipeline_mode = #tpu.pipeline_mode<synchronous>, transform_indices = @transform_7, window_bounds = array<i64: 8, 64>}, {pipeline_mode = #tpu.pipeline_mode<synchronous>, transform_indices = @transform_8, window_bounds = array<i64: 72, 48>}, {pipeline_mode = #tpu.pipeline_mode<synchronous>, transform_indices = @transform_9, window_bounds = array<i64: 1, 48>}, {pipeline_mode = #tpu.pipeline_mode<synchronous>, transform_indices = @transform_10, window_bounds = array<i64: 72, 64>}, {pipeline_mode = #tpu.pipeline_mode<synchronous>, transform_indices = @transform_11, window_bounds = array<i64: 1, 64>}, {pipeline_mode = #tpu.pipeline_mode<synchronous>, transform_indices = @transform_12, window_bounds = array<i64: 160, 64>}, {pipeline_mode = #tpu.pipeline_mode<synchronous>, transform_indices = @transform_13, window_bounds = array<i64: 1, 64>}, {pipeline_mode = #tpu.pipeline_mode<synchronous>, transform_indices = @transform_14, window_bounds = array<i64: 64, 64>}, {pipeline_mode = #tpu.pipeline_mode<synchronous>, transform_indices = @transform_15, window_bounds = array<i64: 1, 64>}, {pipeline_mode = #tpu.pipeline_mode<synchronous>, transform_indices = @transform_16, window_bounds = array<i64: 48, 64>}, {pipeline_mode = #tpu.pipeline_mode<synchronous>, transform_indices = @transform_17, window_bounds = array<i64: 1, 64>}, {pipeline_mode = #tpu.pipeline_mode<synchronous>, transform_indices = @transform_18, window_bounds = array<i64: 48, 64>}, {pipeline_mode = #tpu.pipeline_mode<synchronous>, transform_indices = @transform_19, window_bounds = array<i64: 1, 64>}, {pipeline_mode = #tpu.pipeline_mode<synchronous>, transform_indices = @transform_20, window_bounds = array<i64: 48, 64>}, {pipeline_mode = #tpu.pipeline_mode<synchronous>, transform_indices = @transform_21, window_bounds = array<i64: 1, 64>}, {pipeline_mode = #tpu.pipeline_mode<synchronous>, transform_indices = @transform_22, window_bounds = array<i64: 128, 32>}, {pipeline_mode = #tpu.pipeline_mode<synchronous>, transform_indices = @transform_23, window_bounds = array<i64: 1, 32>}, {transform_indices = @transform_24, window_bounds = array<i64: 1, 8, 32>}, {transform_indices = @transform_25, window_bounds = array<i64: 1, 64, 64>}]} {
    %c0 = arith.constant 0 : index
    %c0_0 = arith.constant 0 : index
    %c0_1 = arith.constant 0 : index
    %0 = vector.load %arg1[%c0, %c0_0, %c0_1] : memref<1x8x72xf32, #tpu.memory_space<vmem>>, vector<1x8x72xf32>
    %1 = vector.shape_cast %0 : vector<1x8x72xf32> to vector<8x72xf32>
    %c0_2 = arith.constant 0 : index
    %c0_3 = arith.constant 0 : index
    %2 = vector.load %arg9[%c0_2, %c0_3] : memref<72x48xf32, #tpu.memory_space<vmem>>, vector<72x48xf32>
    %cst = arith.constant dense<0.000000e+00> : vector<8x48xf32>
    %3 = tpu.matmul %1, %2, %cst {dimension_numbers = #tpu.dot_dimension_numbers<[1], [0], [0], [1], [0, 0, 1, 1], [], []>} : vector<8x72xf32>, vector<72x48xf32>, vector<8x48xf32> -> vector<8x48xf32>
    %c0_4 = arith.constant 0 : index
    %c0_5 = arith.constant 0 : index
    %4 = vector.load %arg10[%c0_4, %c0_5] : memref<1x48xf32, #tpu.memory_space<vmem>>, vector<1x48xf32>
    %5 = vector.broadcast %4 : vector<1x48xf32> to vector<8x48xf32>
    %6 = arith.addf %3, %5 : vector<8x48xf32>
    %7 = arith.negf %6 : vector<8x48xf32>
    %8 = math.exp %7 : vector<8x48xf32>
    %cst_6 = arith.constant 1.000000e+00 : f32
    %9 = vector.broadcast %cst_6 : f32 to vector<8x48xf32>
    %10 = arith.addf %9, %8 : vector<8x48xf32>
    %11 = arith.divf %9, %10 : vector<8x48xf32>
    %12 = arith.mulf %6, %11 : vector<8x48xf32>
    %c0_7 = arith.constant 0 : index
    %c0_8 = arith.constant 0 : index
    %c0_9 = arith.constant 0 : index
    %13 = vector.load %arg2[%c0_7, %c0_8, %c0_9] : memref<1x64x72xf32, #tpu.memory_space<vmem>>, vector<1x64x72xf32>
    %14 = vector.shape_cast %13 : vector<1x64x72xf32> to vector<64x72xf32>
    %c0_10 = arith.constant 0 : index
    %c0_11 = arith.constant 0 : index
    %15 = vector.load %arg11[%c0_10, %c0_11] : memref<72x64xf32, #tpu.memory_space<vmem>>, vector<72x64xf32>
    %cst_12 = arith.constant dense<0.000000e+00> : vector<64x64xf32>
    %16 = tpu.matmul %14, %15, %cst_12 {dimension_numbers = #tpu.dot_dimension_numbers<[1], [0], [0], [1], [0, 0, 1, 1], [], []>} : vector<64x72xf32>, vector<72x64xf32>, vector<64x64xf32> -> vector<64x64xf32>
    %c0_13 = arith.constant 0 : index
    %c0_14 = arith.constant 0 : index
    %17 = vector.load %arg12[%c0_13, %c0_14] : memref<1x64xf32, #tpu.memory_space<vmem>>, vector<1x64xf32>
    %18 = vector.broadcast %17 : vector<1x64xf32> to vector<64x64xf32>
    %19 = arith.addf %16, %18 : vector<64x64xf32>
    %20 = arith.negf %19 : vector<64x64xf32>
    %21 = math.exp %20 : vector<64x64xf32>
    %cst_15 = arith.constant 1.000000e+00 : f32
    %22 = vector.broadcast %cst_15 : f32 to vector<64x64xf32>
    %23 = arith.addf %22, %21 : vector<64x64xf32>
    %24 = arith.divf %22, %23 : vector<64x64xf32>
    %25 = arith.mulf %19, %24 : vector<64x64xf32>
    %c0_16 = arith.constant 0 : index
    %c0_17 = arith.constant 0 : index
    %26 = vector.load %arg4[%c0_16, %c0_17] : memref<64x8xf32, #tpu.memory_space<vmem>>, vector<64x8xf32>
    %c0_18 = arith.constant 0 : index
    %c0_19 = arith.constant 0 : index
    %27 = vector.load %arg5[%c0_18, %c0_19] : memref<64x8xf32, #tpu.memory_space<vmem>>, vector<64x8xf32>
    %c0_20 = arith.constant 0 : index
    %c0_21 = arith.constant 0 : index
    %28 = vector.load %arg13[%c0_20, %c0_21] : memref<160x64xf32, #tpu.memory_space<vmem>>, vector<160x64xf32>
    %29 = vector.extract_strided_slice %28 {offsets = [0, 0], sizes = [48, 64], strides = [1, 1]} : vector<160x64xf32> to vector<48x64xf32>
    %cst_22 = arith.constant dense<0.000000e+00> : vector<8x64xf32>
    %30 = tpu.matmul %12, %29, %cst_22 {dimension_numbers = #tpu.dot_dimension_numbers<[1], [0], [0], [1], [0, 0, 1, 1], [], []>} : vector<8x48xf32>, vector<48x64xf32>, vector<8x64xf32> -> vector<8x64xf32>
    %31 = vector.extract_strided_slice %28 {offsets = [48, 0], sizes = [48, 64], strides = [1, 1]} : vector<160x64xf32> to vector<48x64xf32>
    %cst_23 = arith.constant dense<0.000000e+00> : vector<8x64xf32>
    %32 = tpu.matmul %12, %31, %cst_23 {dimension_numbers = #tpu.dot_dimension_numbers<[1], [0], [0], [1], [0, 0, 1, 1], [], []>} : vector<8x48xf32>, vector<48x64xf32>, vector<8x64xf32> -> vector<8x64xf32>
    %cst_24 = arith.constant dense<0.000000e+00> : vector<64x64xf32>
    %33 = tpu.matmul %26, %30, %cst_24 {dimension_numbers = #tpu.dot_dimension_numbers<[1], [0], [0], [1], [0, 0, 1, 1], [], []>} : vector<64x8xf32>, vector<8x64xf32>, vector<64x64xf32> -> vector<64x64xf32>
    %cst_25 = arith.constant dense<0.000000e+00> : vector<64x64xf32>
    %34 = tpu.matmul %27, %32, %cst_25 {dimension_numbers = #tpu.dot_dimension_numbers<[1], [0], [0], [1], [0, 0, 1, 1], [], []>} : vector<64x8xf32>, vector<8x64xf32>, vector<64x64xf32> -> vector<64x64xf32>
    %35 = arith.addf %33, %34 : vector<64x64xf32>
    %36 = vector.extract_strided_slice %28 {offsets = [96, 0], sizes = [64, 64], strides = [1, 1]} : vector<160x64xf32> to vector<64x64xf32>
    %cst_26 = arith.constant dense<0.000000e+00> : vector<64x64xf32>
    %37 = tpu.matmul %25, %36, %cst_26 {dimension_numbers = #tpu.dot_dimension_numbers<[1], [0], [0], [1], [0, 0, 1, 1], [], []>} : vector<64x64xf32>, vector<64x64xf32>, vector<64x64xf32> -> vector<64x64xf32>
    %38 = arith.addf %35, %37 : vector<64x64xf32>
    %c0_27 = arith.constant 0 : index
    %c0_28 = arith.constant 0 : index
    %39 = vector.load %arg14[%c0_27, %c0_28] : memref<1x64xf32, #tpu.memory_space<vmem>>, vector<1x64xf32>
    %40 = vector.broadcast %39 : vector<1x64xf32> to vector<64x64xf32>
    %41 = arith.addf %38, %40 : vector<64x64xf32>
    %42 = arith.negf %41 : vector<64x64xf32>
    %43 = math.exp %42 : vector<64x64xf32>
    %cst_29 = arith.constant 1.000000e+00 : f32
    %44 = vector.broadcast %cst_29 : f32 to vector<64x64xf32>
    %45 = arith.addf %44, %43 : vector<64x64xf32>
    %46 = arith.divf %44, %45 : vector<64x64xf32>
    %47 = arith.mulf %41, %46 : vector<64x64xf32>
    %c0_30 = arith.constant 0 : index
    %c0_31 = arith.constant 0 : index
    %48 = vector.load %arg15[%c0_30, %c0_31] : memref<64x64xf32, #tpu.memory_space<vmem>>, vector<64x64xf32>
    %cst_32 = arith.constant dense<0.000000e+00> : vector<64x64xf32>
    %49 = tpu.matmul %47, %48, %cst_32 {dimension_numbers = #tpu.dot_dimension_numbers<[1], [0], [0], [1], [0, 0, 1, 1], [], []>} : vector<64x64xf32>, vector<64x64xf32>, vector<64x64xf32> -> vector<64x64xf32>
    %c0_33 = arith.constant 0 : index
    %c0_34 = arith.constant 0 : index
    %50 = vector.load %arg16[%c0_33, %c0_34] : memref<1x64xf32, #tpu.memory_space<vmem>>, vector<1x64xf32>
    %51 = vector.broadcast %50 : vector<1x64xf32> to vector<64x64xf32>
    %52 = arith.addf %49, %51 : vector<64x64xf32>
    %c0_35 = arith.constant 0 : index
    %c0_36 = arith.constant 0 : index
    %53 = vector.load %arg17[%c0_35, %c0_36] : memref<48x64xf32, #tpu.memory_space<vmem>>, vector<48x64xf32>
    %cst_37 = arith.constant dense<0.000000e+00> : vector<8x64xf32>
    %54 = tpu.matmul %12, %53, %cst_37 {dimension_numbers = #tpu.dot_dimension_numbers<[1], [0], [0], [1], [0, 0, 1, 1], [], []>} : vector<8x48xf32>, vector<48x64xf32>, vector<8x64xf32> -> vector<8x64xf32>
    %c0_38 = arith.constant 0 : index
    %c0_39 = arith.constant 0 : index
    %55 = vector.load %arg18[%c0_38, %c0_39] : memref<1x64xf32, #tpu.memory_space<vmem>>, vector<1x64xf32>
    %56 = vector.broadcast %55 : vector<1x64xf32> to vector<8x64xf32>
    %57 = arith.addf %54, %56 : vector<8x64xf32>
    %c0_40 = arith.constant 0 : index
    %c0_41 = arith.constant 0 : index
    %58 = vector.load %arg19[%c0_40, %c0_41] : memref<48x64xf32, #tpu.memory_space<vmem>>, vector<48x64xf32>
    %cst_42 = arith.constant dense<0.000000e+00> : vector<8x64xf32>
    %59 = tpu.matmul %12, %58, %cst_42 {dimension_numbers = #tpu.dot_dimension_numbers<[1], [0], [0], [1], [0, 0, 1, 1], [], []>} : vector<8x48xf32>, vector<48x64xf32>, vector<8x64xf32> -> vector<8x64xf32>
    %c0_43 = arith.constant 0 : index
    %c0_44 = arith.constant 0 : index
    %60 = vector.load %arg20[%c0_43, %c0_44] : memref<1x64xf32, #tpu.memory_space<vmem>>, vector<1x64xf32>
    %61 = vector.broadcast %60 : vector<1x64xf32> to vector<8x64xf32>
    %62 = arith.addf %59, %61 : vector<8x64xf32>
    %cst_45 = arith.constant dense<0.000000e+00> : vector<64x64xf32>
    %63 = tpu.matmul %26, %57, %cst_45 {dimension_numbers = #tpu.dot_dimension_numbers<[1], [0], [0], [1], [0, 0, 1, 1], [], []>} : vector<64x8xf32>, vector<8x64xf32>, vector<64x64xf32> -> vector<64x64xf32>
    %cst_46 = arith.constant dense<0.000000e+00> : vector<64x64xf32>
    %64 = tpu.matmul %27, %62, %cst_46 {dimension_numbers = #tpu.dot_dimension_numbers<[1], [0], [0], [1], [0, 0, 1, 1], [], []>} : vector<64x8xf32>, vector<8x64xf32>, vector<64x64xf32> -> vector<64x64xf32>
    %65 = arith.mulf %63, %64 : vector<64x64xf32>
    %c0_47 = arith.constant 0 : index
    %c0_48 = arith.constant 0 : index
    %66 = vector.load %arg6[%c0_47, %c0_48] : memref<64x8xf32, #tpu.memory_space<vmem>>, vector<64x8xf32>
    %cst_49 = arith.constant dense<0.000000e+00> : vector<64x8xf32>
    %67 = tpu.matmul %65, %66, %cst_49 {dimension_numbers = #tpu.dot_dimension_numbers<[1], [0], [0], [1], [0, 0, 1, 1], [], []>} : vector<64x64xf32>, vector<64x8xf32>, vector<64x8xf32> -> vector<64x8xf32>
    %cst_50 = arith.constant 0.204124153 : f32
    %68 = vector.broadcast %cst_50 : f32 to vector<64x8xf32>
    %69 = arith.mulf %67, %68 : vector<64x8xf32>
    %70 = arith.negf %69 : vector<64x8xf32>
    %71 = math.exp %70 : vector<64x8xf32>
    %cst_51 = arith.constant 1.000000e+00 : f32
    %72 = vector.broadcast %cst_51 : f32 to vector<64x8xf32>
    %73 = arith.addf %72, %71 : vector<64x8xf32>
    %74 = arith.divf %72, %73 : vector<64x8xf32>
    %c0_52 = arith.constant 0 : index
    %c0_53 = arith.constant 0 : index
    %c0_54 = arith.constant 0 : index
    %75 = vector.load %arg3[%c0_52, %c0_53, %c0_54] : memref<1x64x1xf32, #tpu.memory_space<vmem>>, vector<1x64x1xf32>
    %76 = vector.shape_cast %75 : vector<1x64x1xf32> to vector<64x1xf32>
    %77 = vector.broadcast %76 : vector<64x1xf32> to vector<64x8xf32>
    %78 = arith.mulf %74, %77 : vector<64x8xf32>
    %c0_55 = arith.constant 0 : index
    %c0_56 = arith.constant 0 : index
    %79 = vector.load %arg8[%c0_55, %c0_56] : memref<8x64xf32, #tpu.memory_space<vmem>>, vector<8x64xf32>
    %cst_57 = arith.constant dense<0.000000e+00> : vector<8x8xf32>
    %80 = tpu.matmul %79, %78, %cst_57 {dimension_numbers = #tpu.dot_dimension_numbers<[1], [0], [0], [1], [0, 0, 1, 1], [], []>} : vector<8x64xf32>, vector<64x8xf32>, vector<8x8xf32> -> vector<8x8xf32>
    %cst_58 = arith.constant dense<0.000000e+00> : vector<64x8xf32>
    %81 = tpu.matmul %26, %80, %cst_58 {dimension_numbers = #tpu.dot_dimension_numbers<[1], [0], [0], [1], [0, 0, 1, 1], [], []>} : vector<64x8xf32>, vector<8x8xf32>, vector<64x8xf32> -> vector<64x8xf32>
    %cst_59 = arith.constant 9.99999997E-7 : f32
    %82 = vector.broadcast %cst_59 : f32 to vector<64x8xf32>
    %83 = arith.addf %81, %82 : vector<64x8xf32>
    %84 = tpu.reciprocal %83 {approx = true} : vector<64x8xf32> -> vector<64x8xf32>
    %85 = arith.mulf %78, %84 : vector<64x8xf32>
    %c0_60 = arith.constant 0 : index
    %c0_61 = arith.constant 0 : index
    %86 = vector.load %arg7[%c0_60, %c0_61] : memref<8x64xf32, #tpu.memory_space<vmem>>, vector<8x64xf32>
    %cst_62 = arith.constant dense<0.000000e+00> : vector<64x64xf32>
    %87 = tpu.matmul %85, %86, %cst_62 {dimension_numbers = #tpu.dot_dimension_numbers<[1], [0], [0], [1], [0, 0, 1, 1], [], []>} : vector<64x8xf32>, vector<8x64xf32>, vector<64x64xf32> -> vector<64x64xf32>
    %c0_63 = arith.constant 0 : index
    %c0_64 = arith.constant 0 : index
    %88 = vector.load %arg8[%c0_63, %c0_64] : memref<8x64xf32, #tpu.memory_space<vmem>>, vector<8x64xf32>
    %89 = arith.mulf %87, %52 : vector<64x64xf32>
    %cst_65 = arith.constant dense<0.000000e+00> : vector<8x64xf32>
    %90 = tpu.matmul %88, %89, %cst_65 {dimension_numbers = #tpu.dot_dimension_numbers<[1], [0], [0], [1], [0, 0, 1, 1], [], []>} : vector<8x64xf32>, vector<64x64xf32>, vector<8x64xf32> -> vector<8x64xf32>
    %c0_66 = arith.constant 0 : index
    %c0_67 = arith.constant 0 : index
    %91 = vector.load %arg21[%c0_66, %c0_67] : memref<48x64xf32, #tpu.memory_space<vmem>>, vector<48x64xf32>
    %cst_68 = arith.constant dense<0.000000e+00> : vector<8x64xf32>
    %92 = tpu.matmul %12, %91, %cst_68 {dimension_numbers = #tpu.dot_dimension_numbers<[1], [0], [0], [1], [0, 0, 1, 1], [], []>} : vector<8x48xf32>, vector<48x64xf32>, vector<8x64xf32> -> vector<8x64xf32>
    %c0_69 = arith.constant 0 : index
    %c0_70 = arith.constant 0 : index
    %93 = vector.load %arg22[%c0_69, %c0_70] : memref<1x64xf32, #tpu.memory_space<vmem>>, vector<1x64xf32>
    %94 = vector.broadcast %93 : vector<1x64xf32> to vector<8x64xf32>
    %95 = arith.addf %92, %94 : vector<8x64xf32>
    %96 = arith.negf %95 : vector<8x64xf32>
    %97 = math.exp %96 : vector<8x64xf32>
    %cst_71 = arith.constant 1.000000e+00 : f32
    %98 = vector.broadcast %cst_71 : f32 to vector<8x64xf32>
    %99 = arith.addf %98, %97 : vector<8x64xf32>
    %100 = arith.divf %98, %99 : vector<8x64xf32>
    %101 = arith.mulf %95, %100 : vector<8x64xf32>
    %102 = arith.addf %90, %101 : vector<8x64xf32>
    %cst_72 = arith.constant dense<0xFF800000> : vector<64xf32>
    %103 = vector.multi_reduction <maximumf>, %102, %cst_72 [0] : vector<8x64xf32> to vector<64xf32>
    %104 = vector.shape_cast %103 : vector<64xf32> to vector<1x64xf32>
    %c0_73 = arith.constant 0 : index
    %c0_74 = arith.constant 0 : index
    %105 = vector.load %arg23[%c0_73, %c0_74] : memref<128x32xf32, #tpu.memory_space<vmem>>, vector<128x32xf32>
    %106 = vector.extract_strided_slice %105 {offsets = [0, 0], sizes = [64, 32], strides = [1, 1]} : vector<128x32xf32> to vector<64x32xf32>
    %cst_75 = arith.constant dense<0.000000e+00> : vector<8x32xf32>
    %107 = tpu.matmul %102, %106, %cst_75 {dimension_numbers = #tpu.dot_dimension_numbers<[1], [0], [0], [1], [0, 0, 1, 1], [], []>} : vector<8x64xf32>, vector<64x32xf32>, vector<8x32xf32> -> vector<8x32xf32>
    %108 = vector.extract_strided_slice %105 {offsets = [64, 0], sizes = [64, 32], strides = [1, 1]} : vector<128x32xf32> to vector<64x32xf32>
    %cst_76 = arith.constant dense<0.000000e+00> : vector<1x32xf32>
    %109 = tpu.matmul %104, %108, %cst_76 {dimension_numbers = #tpu.dot_dimension_numbers<[1], [0], [0], [1], [0, 0, 1, 1], [], []>} : vector<1x64xf32>, vector<64x32xf32>, vector<1x32xf32> -> vector<1x32xf32>
    %110 = vector.broadcast %109 : vector<1x32xf32> to vector<8x32xf32>
    %111 = arith.addf %107, %110 : vector<8x32xf32>
    %c0_77 = arith.constant 0 : index
    %c0_78 = arith.constant 0 : index
    %112 = vector.load %arg24[%c0_77, %c0_78] : memref<1x32xf32, #tpu.memory_space<vmem>>, vector<1x32xf32>
    %113 = vector.broadcast %112 : vector<1x32xf32> to vector<8x32xf32>
    %114 = arith.addf %111, %113 : vector<8x32xf32>
    %115 = arith.negf %114 : vector<8x32xf32>
    %116 = math.exp %115 : vector<8x32xf32>
    %cst_79 = arith.constant 1.000000e+00 : f32
    %117 = vector.broadcast %cst_79 : f32 to vector<8x32xf32>
    %118 = arith.addf %117, %116 : vector<8x32xf32>
    %119 = arith.divf %117, %118 : vector<8x32xf32>
    %120 = arith.mulf %114, %119 : vector<8x32xf32>
    %c0_80 = arith.constant 0 : index
    %c0_81 = arith.constant 0 : index
    %c0_82 = arith.constant 0 : index
    %121 = vector.load %arg25[%c0_80, %c0_81, %c0_82] : memref<1x8x32xf32, #tpu.memory_space<vmem>>, vector<1x8x32xf32>
    %122 = vector.shape_cast %121 : vector<1x8x32xf32> to vector<8x32xf32>
    %123 = vector.shape_cast %120 : vector<8x32xf32> to vector<1x8x32xf32>
    tpu.vector_store %arg25[%c0_80, %c0_81, %c0_82], %123 {strides = array<i32>} : memref<1x8x32xf32, #tpu.memory_space<vmem>>, vector<1x8x32xf32>,
    %c0_83 = arith.constant 0 : index
    %c0_84 = arith.constant 0 : index
    %c0_85 = arith.constant 0 : index
    %124 = vector.load %arg26[%c0_83, %c0_84, %c0_85] : memref<1x64x64xf32, #tpu.memory_space<vmem>>, vector<1x64x64xf32>
    %125 = vector.shape_cast %124 : vector<1x64x64xf32> to vector<64x64xf32>
    %126 = vector.shape_cast %52 : vector<64x64xf32> to vector<1x64x64xf32>
    tpu.vector_store %arg26[%c0_83, %c0_84, %c0_85], %126 {strides = array<i32>} : memref<1x64x64xf32, #tpu.memory_space<vmem>>, vector<1x64x64xf32>,
    return
  }
  func.func @transform_0(%arg0: i32) -> (i32, i32, i32) {
    %c0_i32 = arith.constant 0 : i32
    %c0_i32_0 = arith.constant 0 : i32
    %c0_i32_1 = arith.constant 0 : i32
    return %arg0, %c0_i32, %c0_i32_0 : i32, i32, i32
  }
  func.func @transform_1(%arg0: i32) -> (i32, i32, i32) {
    %c0_i32 = arith.constant 0 : i32
    %c0_i32_0 = arith.constant 0 : i32
    %c0_i32_1 = arith.constant 0 : i32
    return %arg0, %c0_i32, %c0_i32_0 : i32, i32, i32
  }
  func.func @transform_2(%arg0: i32) -> (i32, i32, i32) {
    %c0_i32 = arith.constant 0 : i32
    %c0_i32_0 = arith.constant 0 : i32
    %c0_i32_1 = arith.constant 0 : i32
    return %arg0, %c0_i32, %c0_i32_0 : i32, i32, i32
  }
  func.func @transform_3(%arg0: i32) -> (i32, i32) {
    %c0_i32 = arith.constant 0 : i32
    %c0_i32_0 = arith.constant 0 : i32
    %c0_i32_1 = arith.constant 0 : i32
    return %c0_i32, %c0_i32_0 : i32, i32
  }
  func.func @transform_4(%arg0: i32) -> (i32, i32) {
    %c0_i32 = arith.constant 0 : i32
    %c0_i32_0 = arith.constant 0 : i32
    %c0_i32_1 = arith.constant 0 : i32
    return %c0_i32, %c0_i32_0 : i32, i32
  }
  func.func @transform_5(%arg0: i32) -> (i32, i32) {
    %c0_i32 = arith.constant 0 : i32
    %c0_i32_0 = arith.constant 0 : i32
    %c0_i32_1 = arith.constant 0 : i32
    return %c0_i32, %c0_i32_0 : i32, i32
  }
  func.func @transform_6(%arg0: i32) -> (i32, i32) {
    %c0_i32 = arith.constant 0 : i32
    %c0_i32_0 = arith.constant 0 : i32
    %c0_i32_1 = arith.constant 0 : i32
    return %c0_i32, %c0_i32_0 : i32, i32
  }
  func.func @transform_7(%arg0: i32) -> (i32, i32) {
    %c0_i32 = arith.constant 0 : i32
    %c0_i32_0 = arith.constant 0 : i32
    %c0_i32_1 = arith.constant 0 : i32
    return %c0_i32, %c0_i32_0 : i32, i32
  }
  func.func @transform_8(%arg0: i32) -> (i32, i32) {
    %c0_i32 = arith.constant 0 : i32
    %c0_i32_0 = arith.constant 0 : i32
    %c0_i32_1 = arith.constant 0 : i32
    return %c0_i32, %c0_i32_0 : i32, i32
  }
  func.func @transform_9(%arg0: i32) -> (i32, i32) {
    %c0_i32 = arith.constant 0 : i32
    %c0_i32_0 = arith.constant 0 : i32
    %c0_i32_1 = arith.constant 0 : i32
    return %c0_i32, %c0_i32_0 : i32, i32
  }
  func.func @transform_10(%arg0: i32) -> (i32, i32) {
    %c0_i32 = arith.constant 0 : i32
    %c0_i32_0 = arith.constant 0 : i32
    %c0_i32_1 = arith.constant 0 : i32
    return %c0_i32, %c0_i32_0 : i32, i32
  }
  func.func @transform_11(%arg0: i32) -> (i32, i32) {
    %c0_i32 = arith.constant 0 : i32
    %c0_i32_0 = arith.constant 0 : i32
    %c0_i32_1 = arith.constant 0 : i32
    return %c0_i32, %c0_i32_0 : i32, i32
  }
  func.func @transform_12(%arg0: i32) -> (i32, i32) {
    %c0_i32 = arith.constant 0 : i32
    %c0_i32_0 = arith.constant 0 : i32
    %c0_i32_1 = arith.constant 0 : i32
    return %c0_i32, %c0_i32_0 : i32, i32
  }
  func.func @transform_13(%arg0: i32) -> (i32, i32) {
    %c0_i32 = arith.constant 0 : i32
    %c0_i32_0 = arith.constant 0 : i32
    %c0_i32_1 = arith.constant 0 : i32
    return %c0_i32, %c0_i32_0 : i32, i32
  }
  func.func @transform_14(%arg0: i32) -> (i32, i32) {
    %c0_i32 = arith.constant 0 : i32
    %c0_i32_0 = arith.constant 0 : i32
    %c0_i32_1 = arith.constant 0 : i32
    return %c0_i32, %c0_i32_0 : i32, i32
  }
  func.func @transform_15(%arg0: i32) -> (i32, i32) {
    %c0_i32 = arith.constant 0 : i32
    %c0_i32_0 = arith.constant 0 : i32
    %c0_i32_1 = arith.constant 0 : i32
    return %c0_i32, %c0_i32_0 : i32, i32
  }
  func.func @transform_16(%arg0: i32) -> (i32, i32) {
    %c0_i32 = arith.constant 0 : i32
    %c0_i32_0 = arith.constant 0 : i32
    %c0_i32_1 = arith.constant 0 : i32
    return %c0_i32, %c0_i32_0 : i32, i32
  }
  func.func @transform_17(%arg0: i32) -> (i32, i32) {
    %c0_i32 = arith.constant 0 : i32
    %c0_i32_0 = arith.constant 0 : i32
    %c0_i32_1 = arith.constant 0 : i32
    return %c0_i32, %c0_i32_0 : i32, i32
  }
  func.func @transform_18(%arg0: i32) -> (i32, i32) {
    %c0_i32 = arith.constant 0 : i32
    %c0_i32_0 = arith.constant 0 : i32
    %c0_i32_1 = arith.constant 0 : i32
    return %c0_i32, %c0_i32_0 : i32, i32
  }
  func.func @transform_19(%arg0: i32) -> (i32, i32) {
    %c0_i32 = arith.constant 0 : i32
    %c0_i32_0 = arith.constant 0 : i32
    %c0_i32_1 = arith.constant 0 : i32
    return %c0_i32, %c0_i32_0 : i32, i32
  }
  func.func @transform_20(%arg0: i32) -> (i32, i32) {
    %c0_i32 = arith.constant 0 : i32
    %c0_i32_0 = arith.constant 0 : i32
    %c0_i32_1 = arith.constant 0 : i32
    return %c0_i32, %c0_i32_0 : i32, i32
  }
  func.func @transform_21(%arg0: i32) -> (i32, i32) {
    %c0_i32 = arith.constant 0 : i32
    %c0_i32_0 = arith.constant 0 : i32
    %c0_i32_1 = arith.constant 0 : i32
    return %c0_i32, %c0_i32_0 : i32, i32
  }
  func.func @transform_22(%arg0: i32) -> (i32, i32) {
    %c0_i32 = arith.constant 0 : i32
    %c0_i32_0 = arith.constant 0 : i32
    %c0_i32_1 = arith.constant 0 : i32
    return %c0_i32, %c0_i32_0 : i32, i32
  }
  func.func @transform_23(%arg0: i32) -> (i32, i32) {
    %c0_i32 = arith.constant 0 : i32
    %c0_i32_0 = arith.constant 0 : i32
    %c0_i32_1 = arith.constant 0 : i32
    return %c0_i32, %c0_i32_0 : i32, i32
  }
  func.func @transform_24(%arg0: i32) -> (i32, i32, i32) {
    %c0_i32 = arith.constant 0 : i32
    %c0_i32_0 = arith.constant 0 : i32
    %c0_i32_1 = arith.constant 0 : i32
    return %arg0, %c0_i32, %c0_i32_0 : i32, i32, i32
  }
  func.func @transform_25(%arg0: i32) -> (i32, i32, i32) {
    %c0_i32 = arith.constant 0 : i32
    %c0_i32_0 = arith.constant 0 : i32
    %c0_i32_1 = arith.constant 0 : i32
    return %arg0, %c0_i32, %c0_i32_0 : i32, i32, i32
  }
}

module attributes {stable_mosaic.version = 11 : i64} {
  func.func @_out_heads_kernel(%arg0: i32, %arg1: memref<56x192xf32, #tpu.memory_space<vmem>>, %arg2: memref<56x13xf32, #tpu.memory_space<vmem>>, %arg3: memref<192x64xf32, #tpu.memory_space<vmem>>, %arg4: memref<1x64xf32, #tpu.memory_space<vmem>>, %arg5: memref<64x96xf32, #tpu.memory_space<vmem>>, %arg6: memref<13x96xf32, #tpu.memory_space<vmem>>, %arg7: memref<1x96xf32, #tpu.memory_space<vmem>>, %arg8: memref<96x48xf32, #tpu.memory_space<vmem>>, %arg9: memref<1x48xf32, #tpu.memory_space<vmem>>, %arg10: memref<64x13xf32, #tpu.memory_space<vmem>>, %arg11: memref<13x13xf32, #tpu.memory_space<vmem>>, %arg12: memref<96x13xf32, #tpu.memory_space<vmem>>, %arg13: memref<48x13xf32, #tpu.memory_space<vmem>>, %arg14: memref<1x13xf32, #tpu.memory_space<vmem>>, %arg15: memref<56x13xf32, #tpu.memory_space<vmem>>) attributes {dimension_semantics = [#tpu.dimension_semantics<arbitrary>], iteration_bounds = array<i64: 1>, scalar_prefetch = 0 : i64, scratch_operands = 0 : i64, tpu.core_type = #tpu.core_type<tc>, window_params = [{pipeline_mode = #tpu.pipeline_mode<synchronous>, transform_indices = @transform_0, window_bounds = array<i64: 56, 192>}, {pipeline_mode = #tpu.pipeline_mode<synchronous>, transform_indices = @transform_1, window_bounds = array<i64: 56, 13>}, {pipeline_mode = #tpu.pipeline_mode<synchronous>, transform_indices = @transform_2, window_bounds = array<i64: 192, 64>}, {pipeline_mode = #tpu.pipeline_mode<synchronous>, transform_indices = @transform_3, window_bounds = array<i64: 1, 64>}, {pipeline_mode = #tpu.pipeline_mode<synchronous>, transform_indices = @transform_4, window_bounds = array<i64: 64, 96>}, {pipeline_mode = #tpu.pipeline_mode<synchronous>, transform_indices = @transform_5, window_bounds = array<i64: 13, 96>}, {pipeline_mode = #tpu.pipeline_mode<synchronous>, transform_indices = @transform_6, window_bounds = array<i64: 1, 96>}, {pipeline_mode = #tpu.pipeline_mode<synchronous>, transform_indices = @transform_7, window_bounds = array<i64: 96, 48>}, {pipeline_mode = #tpu.pipeline_mode<synchronous>, transform_indices = @transform_8, window_bounds = array<i64: 1, 48>}, {pipeline_mode = #tpu.pipeline_mode<synchronous>, transform_indices = @transform_9, window_bounds = array<i64: 64, 13>}, {pipeline_mode = #tpu.pipeline_mode<synchronous>, transform_indices = @transform_10, window_bounds = array<i64: 13, 13>}, {pipeline_mode = #tpu.pipeline_mode<synchronous>, transform_indices = @transform_11, window_bounds = array<i64: 96, 13>}, {pipeline_mode = #tpu.pipeline_mode<synchronous>, transform_indices = @transform_12, window_bounds = array<i64: 48, 13>}, {pipeline_mode = #tpu.pipeline_mode<synchronous>, transform_indices = @transform_13, window_bounds = array<i64: 1, 13>}, {pipeline_mode = #tpu.pipeline_mode<synchronous>, transform_indices = @transform_14, window_bounds = array<i64: 56, 13>}]} {
    %c0 = arith.constant 0 : index
    %c0_0 = arith.constant 0 : index
    %0 = vector.load %arg1[%c0, %c0_0] : memref<56x192xf32, #tpu.memory_space<vmem>>, vector<56x192xf32>
    %c0_1 = arith.constant 0 : index
    %c0_2 = arith.constant 0 : index
    %1 = vector.load %arg3[%c0_1, %c0_2] : memref<192x64xf32, #tpu.memory_space<vmem>>, vector<192x64xf32>
    %cst = arith.constant dense<0.000000e+00> : vector<56x64xf32>
    %2 = tpu.matmul %0, %1, %cst {dimension_numbers = #tpu.dot_dimension_numbers<[1], [0], [0], [1], [0, 0, 1, 1], [], []>} : vector<56x192xf32>, vector<192x64xf32>, vector<56x64xf32> -> vector<56x64xf32>
    %c0_3 = arith.constant 0 : index
    %c0_4 = arith.constant 0 : index
    %3 = vector.load %arg4[%c0_3, %c0_4] : memref<1x64xf32, #tpu.memory_space<vmem>>, vector<1x64xf32>
    %4 = vector.broadcast %3 : vector<1x64xf32> to vector<56x64xf32>
    %5 = arith.addf %2, %4 : vector<56x64xf32>
    %c0_5 = arith.constant 0 : index
    %c0_6 = arith.constant 0 : index
    %6 = vector.load %arg2[%c0_5, %c0_6] : memref<56x13xf32, #tpu.memory_space<vmem>>, vector<56x13xf32>
    %c0_7 = arith.constant 0 : index
    %c0_8 = arith.constant 0 : index
    %7 = vector.load %arg5[%c0_7, %c0_8] : memref<64x96xf32, #tpu.memory_space<vmem>>, vector<64x96xf32>
    %cst_9 = arith.constant dense<0.000000e+00> : vector<56x96xf32>
    %8 = tpu.matmul %5, %7, %cst_9 {dimension_numbers = #tpu.dot_dimension_numbers<[1], [0], [0], [1], [0, 0, 1, 1], [], []>} : vector<56x64xf32>, vector<64x96xf32>, vector<56x96xf32> -> vector<56x96xf32>
    %c0_10 = arith.constant 0 : index
    %c0_11 = arith.constant 0 : index
    %9 = vector.load %arg6[%c0_10, %c0_11] : memref<13x96xf32, #tpu.memory_space<vmem>>, vector<13x96xf32>
    %cst_12 = arith.constant dense<0.000000e+00> : vector<56x96xf32>
    %10 = tpu.matmul %6, %9, %cst_12 {dimension_numbers = #tpu.dot_dimension_numbers<[1], [0], [0], [1], [0, 0, 1, 1], [], []>} : vector<56x13xf32>, vector<13x96xf32>, vector<56x96xf32> -> vector<56x96xf32>
    %11 = arith.addf %8, %10 : vector<56x96xf32>
    %c0_13 = arith.constant 0 : index
    %c0_14 = arith.constant 0 : index
    %12 = vector.load %arg7[%c0_13, %c0_14] : memref<1x96xf32, #tpu.memory_space<vmem>>, vector<1x96xf32>
    %13 = vector.broadcast %12 : vector<1x96xf32> to vector<56x96xf32>
    %14 = arith.addf %11, %13 : vector<56x96xf32>
    %cst_15 = arith.constant 0.000000e+00 : f32
    %15 = vector.broadcast %cst_15 : f32 to vector<56x96xf32>
    %16 = arith.cmpf oge, %14, %15 : vector<56x96xf32>
    %cst_16 = arith.constant 0.00999999977 : f32
    %17 = vector.broadcast %cst_16 : f32 to vector<56x96xf32>
    %18 = arith.mulf %17, %14 : vector<56x96xf32>
    %19 = arith.select %16, %14, %18 : vector<56x96xi1>, vector<56x96xf32>
    %c0_17 = arith.constant 0 : index
    %c0_18 = arith.constant 0 : index
    %20 = vector.load %arg8[%c0_17, %c0_18] : memref<96x48xf32, #tpu.memory_space<vmem>>, vector<96x48xf32>
    %cst_19 = arith.constant dense<0.000000e+00> : vector<56x48xf32>
    %21 = tpu.matmul %19, %20, %cst_19 {dimension_numbers = #tpu.dot_dimension_numbers<[1], [0], [0], [1], [0, 0, 1, 1], [], []>} : vector<56x96xf32>, vector<96x48xf32>, vector<56x48xf32> -> vector<56x48xf32>
    %c0_20 = arith.constant 0 : index
    %c0_21 = arith.constant 0 : index
    %22 = vector.load %arg9[%c0_20, %c0_21] : memref<1x48xf32, #tpu.memory_space<vmem>>, vector<1x48xf32>
    %23 = vector.broadcast %22 : vector<1x48xf32> to vector<56x48xf32>
    %24 = arith.addf %21, %23 : vector<56x48xf32>
    %cst_22 = arith.constant 0.000000e+00 : f32
    %25 = vector.broadcast %cst_22 : f32 to vector<56x48xf32>
    %26 = arith.cmpf oge, %24, %25 : vector<56x48xf32>
    %cst_23 = arith.constant 0.00999999977 : f32
    %27 = vector.broadcast %cst_23 : f32 to vector<56x48xf32>
    %28 = arith.mulf %27, %24 : vector<56x48xf32>
    %29 = arith.select %26, %24, %28 : vector<56x48xi1>, vector<56x48xf32>
    %c0_24 = arith.constant 0 : index
    %c0_25 = arith.constant 0 : index
    %30 = vector.load %arg10[%c0_24, %c0_25] : memref<64x13xf32, #tpu.memory_space<vmem>>, vector<64x13xf32>
    %cst_26 = arith.constant dense<0.000000e+00> : vector<56x13xf32>
    %31 = tpu.matmul %5, %30, %cst_26 {dimension_numbers = #tpu.dot_dimension_numbers<[1], [0], [0], [1], [0, 0, 1, 1], [], []>} : vector<56x64xf32>, vector<64x13xf32>, vector<56x13xf32> -> vector<56x13xf32>
    %c0_27 = arith.constant 0 : index
    %c0_28 = arith.constant 0 : index
    %32 = vector.load %arg11[%c0_27, %c0_28] : memref<13x13xf32, #tpu.memory_space<vmem>>, vector<13x13xf32>
    %cst_29 = arith.constant dense<0.000000e+00> : vector<56x13xf32>
    %33 = tpu.matmul %6, %32, %cst_29 {dimension_numbers = #tpu.dot_dimension_numbers<[1], [0], [0], [1], [0, 0, 1, 1], [], []>} : vector<56x13xf32>, vector<13x13xf32>, vector<56x13xf32> -> vector<56x13xf32>
    %34 = arith.addf %31, %33 : vector<56x13xf32>
    %c0_30 = arith.constant 0 : index
    %c0_31 = arith.constant 0 : index
    %35 = vector.load %arg12[%c0_30, %c0_31] : memref<96x13xf32, #tpu.memory_space<vmem>>, vector<96x13xf32>
    %cst_32 = arith.constant dense<0.000000e+00> : vector<56x13xf32>
    %36 = tpu.matmul %19, %35, %cst_32 {dimension_numbers = #tpu.dot_dimension_numbers<[1], [0], [0], [1], [0, 0, 1, 1], [], []>} : vector<56x96xf32>, vector<96x13xf32>, vector<56x13xf32> -> vector<56x13xf32>
    %37 = arith.addf %34, %36 : vector<56x13xf32>
    %c0_33 = arith.constant 0 : index
    %c0_34 = arith.constant 0 : index
    %38 = vector.load %arg13[%c0_33, %c0_34] : memref<48x13xf32, #tpu.memory_space<vmem>>, vector<48x13xf32>
    %cst_35 = arith.constant dense<0.000000e+00> : vector<56x13xf32>
    %39 = tpu.matmul %29, %38, %cst_35 {dimension_numbers = #tpu.dot_dimension_numbers<[1], [0], [0], [1], [0, 0, 1, 1], [], []>} : vector<56x48xf32>, vector<48x13xf32>, vector<56x13xf32> -> vector<56x13xf32>
    %40 = arith.addf %37, %39 : vector<56x13xf32>
    %c0_36 = arith.constant 0 : index
    %c0_37 = arith.constant 0 : index
    %41 = vector.load %arg14[%c0_36, %c0_37] : memref<1x13xf32, #tpu.memory_space<vmem>>, vector<1x13xf32>
    %42 = vector.broadcast %41 : vector<1x13xf32> to vector<56x13xf32>
    %43 = arith.addf %40, %42 : vector<56x13xf32>
    %c0_38 = arith.constant 0 : index
    %c0_39 = arith.constant 0 : index
    %44 = vector.load %arg15[%c0_38, %c0_39] : memref<56x13xf32, #tpu.memory_space<vmem>>, vector<56x13xf32>
    tpu.vector_store %arg15[%c0_38, %c0_39], %43 {strides = array<i32>} : memref<56x13xf32, #tpu.memory_space<vmem>>, vector<56x13xf32>,
    return
  }
  func.func @transform_0(%arg0: i32) -> (i32, i32) {
    %c0_i32 = arith.constant 0 : i32
    %c0_i32_0 = arith.constant 0 : i32
    %c0_i32_1 = arith.constant 0 : i32
    return %c0_i32, %c0_i32_0 : i32, i32
  }
  func.func @transform_1(%arg0: i32) -> (i32, i32) {
    %c0_i32 = arith.constant 0 : i32
    %c0_i32_0 = arith.constant 0 : i32
    %c0_i32_1 = arith.constant 0 : i32
    return %c0_i32, %c0_i32_0 : i32, i32
  }
  func.func @transform_2(%arg0: i32) -> (i32, i32) {
    %c0_i32 = arith.constant 0 : i32
    %c0_i32_0 = arith.constant 0 : i32
    %c0_i32_1 = arith.constant 0 : i32
    return %c0_i32, %c0_i32_0 : i32, i32
  }
  func.func @transform_3(%arg0: i32) -> (i32, i32) {
    %c0_i32 = arith.constant 0 : i32
    %c0_i32_0 = arith.constant 0 : i32
    %c0_i32_1 = arith.constant 0 : i32
    return %c0_i32, %c0_i32_0 : i32, i32
  }
  func.func @transform_4(%arg0: i32) -> (i32, i32) {
    %c0_i32 = arith.constant 0 : i32
    %c0_i32_0 = arith.constant 0 : i32
    %c0_i32_1 = arith.constant 0 : i32
    return %c0_i32, %c0_i32_0 : i32, i32
  }
  func.func @transform_5(%arg0: i32) -> (i32, i32) {
    %c0_i32 = arith.constant 0 : i32
    %c0_i32_0 = arith.constant 0 : i32
    %c0_i32_1 = arith.constant 0 : i32
    return %c0_i32, %c0_i32_0 : i32, i32
  }
  func.func @transform_6(%arg0: i32) -> (i32, i32) {
    %c0_i32 = arith.constant 0 : i32
    %c0_i32_0 = arith.constant 0 : i32
    %c0_i32_1 = arith.constant 0 : i32
    return %c0_i32, %c0_i32_0 : i32, i32
  }
  func.func @transform_7(%arg0: i32) -> (i32, i32) {
    %c0_i32 = arith.constant 0 : i32
    %c0_i32_0 = arith.constant 0 : i32
    %c0_i32_1 = arith.constant 0 : i32
    return %c0_i32, %c0_i32_0 : i32, i32
  }
  func.func @transform_8(%arg0: i32) -> (i32, i32) {
    %c0_i32 = arith.constant 0 : i32
    %c0_i32_0 = arith.constant 0 : i32
    %c0_i32_1 = arith.constant 0 : i32
    return %c0_i32, %c0_i32_0 : i32, i32
  }
  func.func @transform_9(%arg0: i32) -> (i32, i32) {
    %c0_i32 = arith.constant 0 : i32
    %c0_i32_0 = arith.constant 0 : i32
    %c0_i32_1 = arith.constant 0 : i32
    return %c0_i32, %c0_i32_0 : i32, i32
  }
  func.func @transform_10(%arg0: i32) -> (i32, i32) {
    %c0_i32 = arith.constant 0 : i32
    %c0_i32_0 = arith.constant 0 : i32
    %c0_i32_1 = arith.constant 0 : i32
    return %c0_i32, %c0_i32_0 : i32, i32
  }
  func.func @transform_11(%arg0: i32) -> (i32, i32) {
    %c0_i32 = arith.constant 0 : i32
    %c0_i32_0 = arith.constant 0 : i32
    %c0_i32_1 = arith.constant 0 : i32
    return %c0_i32, %c0_i32_0 : i32, i32
  }
  func.func @transform_12(%arg0: i32) -> (i32, i32) {
    %c0_i32 = arith.constant 0 : i32
    %c0_i32_0 = arith.constant 0 : i32
    %c0_i32_1 = arith.constant 0 : i32
    return %c0_i32, %c0_i32_0 : i32, i32
  }
  func.func @transform_13(%arg0: i32) -> (i32, i32) {
    %c0_i32 = arith.constant 0 : i32
    %c0_i32_0 = arith.constant 0 : i32
    %c0_i32_1 = arith.constant 0 : i32
    return %c0_i32, %c0_i32_0 : i32, i32
  }
  func.func @transform_14(%arg0: i32) -> (i32, i32) {
    %c0_i32 = arith.constant 0 : i32
    %c0_i32_0 = arith.constant 0 : i32
    %c0_i32_1 = arith.constant 0 : i32
    return %c0_i32, %c0_i32_0 : i32, i32
  }
}

module attributes {stable_mosaic.version = 11 : i64} {
  func.func @_out_heads_kernel(%arg0: i32, %arg1: memref<16x112xf32, #tpu.memory_space<vmem>>, %arg2: memref<16x23xf32, #tpu.memory_space<vmem>>, %arg3: memref<112x32xf32, #tpu.memory_space<vmem>>, %arg4: memref<1x32xf32, #tpu.memory_space<vmem>>, %arg5: memref<32x128xf32, #tpu.memory_space<vmem>>, %arg6: memref<23x128xf32, #tpu.memory_space<vmem>>, %arg7: memref<1x128xf32, #tpu.memory_space<vmem>>, %arg8: memref<128x128xf32, #tpu.memory_space<vmem>>, %arg9: memref<1x128xf32, #tpu.memory_space<vmem>>, %arg10: memref<32x23xf32, #tpu.memory_space<vmem>>, %arg11: memref<23x23xf32, #tpu.memory_space<vmem>>, %arg12: memref<128x23xf32, #tpu.memory_space<vmem>>, %arg13: memref<128x23xf32, #tpu.memory_space<vmem>>, %arg14: memref<1x23xf32, #tpu.memory_space<vmem>>, %arg15: memref<16x23xf32, #tpu.memory_space<vmem>>) attributes {dimension_semantics = [#tpu.dimension_semantics<arbitrary>], iteration_bounds = array<i64: 1>, scalar_prefetch = 0 : i64, scratch_operands = 0 : i64, tpu.core_type = #tpu.core_type<tc>, window_params = [{pipeline_mode = #tpu.pipeline_mode<synchronous>, transform_indices = @transform_0, window_bounds = array<i64: 16, 112>}, {pipeline_mode = #tpu.pipeline_mode<synchronous>, transform_indices = @transform_1, window_bounds = array<i64: 16, 23>}, {pipeline_mode = #tpu.pipeline_mode<synchronous>, transform_indices = @transform_2, window_bounds = array<i64: 112, 32>}, {pipeline_mode = #tpu.pipeline_mode<synchronous>, transform_indices = @transform_3, window_bounds = array<i64: 1, 32>}, {pipeline_mode = #tpu.pipeline_mode<synchronous>, transform_indices = @transform_4, window_bounds = array<i64: 32, 128>}, {pipeline_mode = #tpu.pipeline_mode<synchronous>, transform_indices = @transform_5, window_bounds = array<i64: 23, 128>}, {pipeline_mode = #tpu.pipeline_mode<synchronous>, transform_indices = @transform_6, window_bounds = array<i64: 1, 128>}, {pipeline_mode = #tpu.pipeline_mode<synchronous>, transform_indices = @transform_7, window_bounds = array<i64: 128, 128>}, {pipeline_mode = #tpu.pipeline_mode<synchronous>, transform_indices = @transform_8, window_bounds = array<i64: 1, 128>}, {pipeline_mode = #tpu.pipeline_mode<synchronous>, transform_indices = @transform_9, window_bounds = array<i64: 32, 23>}, {pipeline_mode = #tpu.pipeline_mode<synchronous>, transform_indices = @transform_10, window_bounds = array<i64: 23, 23>}, {pipeline_mode = #tpu.pipeline_mode<synchronous>, transform_indices = @transform_11, window_bounds = array<i64: 128, 23>}, {pipeline_mode = #tpu.pipeline_mode<synchronous>, transform_indices = @transform_12, window_bounds = array<i64: 128, 23>}, {pipeline_mode = #tpu.pipeline_mode<synchronous>, transform_indices = @transform_13, window_bounds = array<i64: 1, 23>}, {pipeline_mode = #tpu.pipeline_mode<synchronous>, transform_indices = @transform_14, window_bounds = array<i64: 16, 23>}]} {
    %c0 = arith.constant 0 : index
    %c0_0 = arith.constant 0 : index
    %0 = vector.load %arg1[%c0, %c0_0] : memref<16x112xf32, #tpu.memory_space<vmem>>, vector<16x112xf32>
    %c0_1 = arith.constant 0 : index
    %c0_2 = arith.constant 0 : index
    %1 = vector.load %arg3[%c0_1, %c0_2] : memref<112x32xf32, #tpu.memory_space<vmem>>, vector<112x32xf32>
    %cst = arith.constant dense<0.000000e+00> : vector<16x32xf32>
    %2 = tpu.matmul %0, %1, %cst {dimension_numbers = #tpu.dot_dimension_numbers<[1], [0], [0], [1], [0, 0, 1, 1], [], []>} : vector<16x112xf32>, vector<112x32xf32>, vector<16x32xf32> -> vector<16x32xf32>
    %c0_3 = arith.constant 0 : index
    %c0_4 = arith.constant 0 : index
    %3 = vector.load %arg4[%c0_3, %c0_4] : memref<1x32xf32, #tpu.memory_space<vmem>>, vector<1x32xf32>
    %4 = vector.broadcast %3 : vector<1x32xf32> to vector<16x32xf32>
    %5 = arith.addf %2, %4 : vector<16x32xf32>
    %c0_5 = arith.constant 0 : index
    %c0_6 = arith.constant 0 : index
    %6 = vector.load %arg2[%c0_5, %c0_6] : memref<16x23xf32, #tpu.memory_space<vmem>>, vector<16x23xf32>
    %c0_7 = arith.constant 0 : index
    %c0_8 = arith.constant 0 : index
    %7 = vector.load %arg5[%c0_7, %c0_8] : memref<32x128xf32, #tpu.memory_space<vmem>>, vector<32x128xf32>
    %cst_9 = arith.constant dense<0.000000e+00> : vector<16x128xf32>
    %8 = tpu.matmul %5, %7, %cst_9 {dimension_numbers = #tpu.dot_dimension_numbers<[1], [0], [0], [1], [0, 0, 1, 1], [], []>} : vector<16x32xf32>, vector<32x128xf32>, vector<16x128xf32> -> vector<16x128xf32>
    %c0_10 = arith.constant 0 : index
    %c0_11 = arith.constant 0 : index
    %9 = vector.load %arg6[%c0_10, %c0_11] : memref<23x128xf32, #tpu.memory_space<vmem>>, vector<23x128xf32>
    %cst_12 = arith.constant dense<0.000000e+00> : vector<16x128xf32>
    %10 = tpu.matmul %6, %9, %cst_12 {dimension_numbers = #tpu.dot_dimension_numbers<[1], [0], [0], [1], [0, 0, 1, 1], [], []>} : vector<16x23xf32>, vector<23x128xf32>, vector<16x128xf32> -> vector<16x128xf32>
    %11 = arith.addf %8, %10 : vector<16x128xf32>
    %c0_13 = arith.constant 0 : index
    %c0_14 = arith.constant 0 : index
    %12 = vector.load %arg7[%c0_13, %c0_14] : memref<1x128xf32, #tpu.memory_space<vmem>>, vector<1x128xf32>
    %13 = vector.broadcast %12 : vector<1x128xf32> to vector<16x128xf32>
    %14 = arith.addf %11, %13 : vector<16x128xf32>
    %cst_15 = arith.constant 0.000000e+00 : f32
    %15 = vector.broadcast %cst_15 : f32 to vector<16x128xf32>
    %16 = arith.cmpf oge, %14, %15 : vector<16x128xf32>
    %cst_16 = arith.constant 0.00999999977 : f32
    %17 = vector.broadcast %cst_16 : f32 to vector<16x128xf32>
    %18 = arith.mulf %17, %14 : vector<16x128xf32>
    %19 = arith.select %16, %14, %18 : vector<16x128xi1>, vector<16x128xf32>
    %c0_17 = arith.constant 0 : index
    %c0_18 = arith.constant 0 : index
    %20 = vector.load %arg8[%c0_17, %c0_18] : memref<128x128xf32, #tpu.memory_space<vmem>>, vector<128x128xf32>
    %cst_19 = arith.constant dense<0.000000e+00> : vector<16x128xf32>
    %21 = tpu.matmul %19, %20, %cst_19 {dimension_numbers = #tpu.dot_dimension_numbers<[1], [0], [0], [1], [0, 0, 1, 1], [], []>} : vector<16x128xf32>, vector<128x128xf32>, vector<16x128xf32> -> vector<16x128xf32>
    %c0_20 = arith.constant 0 : index
    %c0_21 = arith.constant 0 : index
    %22 = vector.load %arg9[%c0_20, %c0_21] : memref<1x128xf32, #tpu.memory_space<vmem>>, vector<1x128xf32>
    %23 = vector.broadcast %22 : vector<1x128xf32> to vector<16x128xf32>
    %24 = arith.addf %21, %23 : vector<16x128xf32>
    %cst_22 = arith.constant 0.000000e+00 : f32
    %25 = vector.broadcast %cst_22 : f32 to vector<16x128xf32>
    %26 = arith.cmpf oge, %24, %25 : vector<16x128xf32>
    %cst_23 = arith.constant 0.00999999977 : f32
    %27 = vector.broadcast %cst_23 : f32 to vector<16x128xf32>
    %28 = arith.mulf %27, %24 : vector<16x128xf32>
    %29 = arith.select %26, %24, %28 : vector<16x128xi1>, vector<16x128xf32>
    %c0_24 = arith.constant 0 : index
    %c0_25 = arith.constant 0 : index
    %30 = vector.load %arg10[%c0_24, %c0_25] : memref<32x23xf32, #tpu.memory_space<vmem>>, vector<32x23xf32>
    %cst_26 = arith.constant dense<0.000000e+00> : vector<16x23xf32>
    %31 = tpu.matmul %5, %30, %cst_26 {dimension_numbers = #tpu.dot_dimension_numbers<[1], [0], [0], [1], [0, 0, 1, 1], [], []>} : vector<16x32xf32>, vector<32x23xf32>, vector<16x23xf32> -> vector<16x23xf32>
    %c0_27 = arith.constant 0 : index
    %c0_28 = arith.constant 0 : index
    %32 = vector.load %arg11[%c0_27, %c0_28] : memref<23x23xf32, #tpu.memory_space<vmem>>, vector<23x23xf32>
    %cst_29 = arith.constant dense<0.000000e+00> : vector<16x23xf32>
    %33 = tpu.matmul %6, %32, %cst_29 {dimension_numbers = #tpu.dot_dimension_numbers<[1], [0], [0], [1], [0, 0, 1, 1], [], []>} : vector<16x23xf32>, vector<23x23xf32>, vector<16x23xf32> -> vector<16x23xf32>
    %34 = arith.addf %31, %33 : vector<16x23xf32>
    %c0_30 = arith.constant 0 : index
    %c0_31 = arith.constant 0 : index
    %35 = vector.load %arg12[%c0_30, %c0_31] : memref<128x23xf32, #tpu.memory_space<vmem>>, vector<128x23xf32>
    %cst_32 = arith.constant dense<0.000000e+00> : vector<16x23xf32>
    %36 = tpu.matmul %19, %35, %cst_32 {dimension_numbers = #tpu.dot_dimension_numbers<[1], [0], [0], [1], [0, 0, 1, 1], [], []>} : vector<16x128xf32>, vector<128x23xf32>, vector<16x23xf32> -> vector<16x23xf32>
    %37 = arith.addf %34, %36 : vector<16x23xf32>
    %c0_33 = arith.constant 0 : index
    %c0_34 = arith.constant 0 : index
    %38 = vector.load %arg13[%c0_33, %c0_34] : memref<128x23xf32, #tpu.memory_space<vmem>>, vector<128x23xf32>
    %cst_35 = arith.constant dense<0.000000e+00> : vector<16x23xf32>
    %39 = tpu.matmul %29, %38, %cst_35 {dimension_numbers = #tpu.dot_dimension_numbers<[1], [0], [0], [1], [0, 0, 1, 1], [], []>} : vector<16x128xf32>, vector<128x23xf32>, vector<16x23xf32> -> vector<16x23xf32>
    %40 = arith.addf %37, %39 : vector<16x23xf32>
    %c0_36 = arith.constant 0 : index
    %c0_37 = arith.constant 0 : index
    %41 = vector.load %arg14[%c0_36, %c0_37] : memref<1x23xf32, #tpu.memory_space<vmem>>, vector<1x23xf32>
    %42 = vector.broadcast %41 : vector<1x23xf32> to vector<16x23xf32>
    %43 = arith.addf %40, %42 : vector<16x23xf32>
    %c0_38 = arith.constant 0 : index
    %c0_39 = arith.constant 0 : index
    %44 = vector.load %arg15[%c0_38, %c0_39] : memref<16x23xf32, #tpu.memory_space<vmem>>, vector<16x23xf32>
    tpu.vector_store %arg15[%c0_38, %c0_39], %43 {strides = array<i32>} : memref<16x23xf32, #tpu.memory_space<vmem>>, vector<16x23xf32>,
    return
  }
  func.func @transform_0(%arg0: i32) -> (i32, i32) {
    %c0_i32 = arith.constant 0 : i32
    %c0_i32_0 = arith.constant 0 : i32
    %c0_i32_1 = arith.constant 0 : i32
    return %c0_i32, %c0_i32_0 : i32, i32
  }
  func.func @transform_1(%arg0: i32) -> (i32, i32) {
    %c0_i32 = arith.constant 0 : i32
    %c0_i32_0 = arith.constant 0 : i32
    %c0_i32_1 = arith.constant 0 : i32
    return %c0_i32, %c0_i32_0 : i32, i32
  }
  func.func @transform_2(%arg0: i32) -> (i32, i32) {
    %c0_i32 = arith.constant 0 : i32
    %c0_i32_0 = arith.constant 0 : i32
    %c0_i32_1 = arith.constant 0 : i32
    return %c0_i32, %c0_i32_0 : i32, i32
  }
  func.func @transform_3(%arg0: i32) -> (i32, i32) {
    %c0_i32 = arith.constant 0 : i32
    %c0_i32_0 = arith.constant 0 : i32
    %c0_i32_1 = arith.constant 0 : i32
    return %c0_i32, %c0_i32_0 : i32, i32
  }
  func.func @transform_4(%arg0: i32) -> (i32, i32) {
    %c0_i32 = arith.constant 0 : i32
    %c0_i32_0 = arith.constant 0 : i32
    %c0_i32_1 = arith.constant 0 : i32
    return %c0_i32, %c0_i32_0 : i32, i32
  }
  func.func @transform_5(%arg0: i32) -> (i32, i32) {
    %c0_i32 = arith.constant 0 : i32
    %c0_i32_0 = arith.constant 0 : i32
    %c0_i32_1 = arith.constant 0 : i32
    return %c0_i32, %c0_i32_0 : i32, i32
  }
  func.func @transform_6(%arg0: i32) -> (i32, i32) {
    %c0_i32 = arith.constant 0 : i32
    %c0_i32_0 = arith.constant 0 : i32
    %c0_i32_1 = arith.constant 0 : i32
    return %c0_i32, %c0_i32_0 : i32, i32
  }
  func.func @transform_7(%arg0: i32) -> (i32, i32) {
    %c0_i32 = arith.constant 0 : i32
    %c0_i32_0 = arith.constant 0 : i32
    %c0_i32_1 = arith.constant 0 : i32
    return %c0_i32, %c0_i32_0 : i32, i32
  }
  func.func @transform_8(%arg0: i32) -> (i32, i32) {
    %c0_i32 = arith.constant 0 : i32
    %c0_i32_0 = arith.constant 0 : i32
    %c0_i32_1 = arith.constant 0 : i32
    return %c0_i32, %c0_i32_0 : i32, i32
  }
  func.func @transform_9(%arg0: i32) -> (i32, i32) {
    %c0_i32 = arith.constant 0 : i32
    %c0_i32_0 = arith.constant 0 : i32
    %c0_i32_1 = arith.constant 0 : i32
    return %c0_i32, %c0_i32_0 : i32, i32
  }
  func.func @transform_10(%arg0: i32) -> (i32, i32) {
    %c0_i32 = arith.constant 0 : i32
    %c0_i32_0 = arith.constant 0 : i32
    %c0_i32_1 = arith.constant 0 : i32
    return %c0_i32, %c0_i32_0 : i32, i32
  }
  func.func @transform_11(%arg0: i32) -> (i32, i32) {
    %c0_i32 = arith.constant 0 : i32
    %c0_i32_0 = arith.constant 0 : i32
    %c0_i32_1 = arith.constant 0 : i32
    return %c0_i32, %c0_i32_0 : i32, i32
  }
  func.func @transform_12(%arg0: i32) -> (i32, i32) {
    %c0_i32 = arith.constant 0 : i32
    %c0_i32_0 = arith.constant 0 : i32
    %c0_i32_1 = arith.constant 0 : i32
    return %c0_i32, %c0_i32_0 : i32, i32
  }
  func.func @transform_13(%arg0: i32) -> (i32, i32) {
    %c0_i32 = arith.constant 0 : i32
    %c0_i32_0 = arith.constant 0 : i32
    %c0_i32_1 = arith.constant 0 : i32
    return %c0_i32, %c0_i32_0 : i32, i32
  }
  func.func @transform_14(%arg0: i32) -> (i32, i32) {
    %c0_i32 = arith.constant 0 : i32
    %c0_i32_0 = arith.constant 0 : i32
    %c0_i32_1 = arith.constant 0 : i32
    return %c0_i32, %c0_i32_0 : i32, i32
  }
}

</mosaic_0001>

<llo_original>
// kernel: _lambda_.6
$region0: #{_lambda_.6}
  #allocation0 [shape = 'u32[]', space=smem, size = 0x4, offset = 0x4, fixed_abs, tag = 'smem constant byte address 0x4 - core index']
  #allocation1 [shape = 'u32[144,128]{1,0:T(1,128)}', space=vmem, size = 0x12000, scoped, tag = 'internal scratch']
  %s0 = inlined_call_operand.vmem [shape: f32[16,23], index: 0, kind: input, shape index: {}]
  %s1 = inlined_call_operand.vmem [shape: f32[23,32], index: 1, kind: input, shape index: {}]
  %s2 = inlined_call_operand.vmem [shape: f32[1,32], index: 2, kind: input, shape index: {}]
  %s3 = inlined_call_operand.vmem [shape: f32[16,32], index: 3, kind: output, shape index: {}]
  %s4 = sld [smem:[#allocation0]]
  $region22: #{_lambda_.6} parent=0
    _
  %s6 = ssub.s32 1, %s4
  %s7 = scalar_select 0, %s6, %s4
  // Predicated region
  $region2: #{_lambda_.6} parent=0 // pred_check
    _
  $region3: #{_lambda_.6} parent=0 // pred_check_branch
    %9 = sbr.rel (0) target = $region5
  $region4: #{_lambda_.6} parent=0 // pred_region
    _
  $region5: #{_lambda_.6} parent=0 // pred_fallthru
    _
  // Predicated region
  $region6: #{_lambda_.6} parent=0 // pred_check
    _
  $region7: #{_lambda_.6} parent=0 // pred_check_branch
    %11 = sbr.rel (0) target = $region9
  $region8: #{_lambda_.6} parent=0 // pred_region
    _
  $region9: #{_lambda_.6} parent=0 // pred_fallthru
    _
  // Predicated region
  $region10: #{_lambda_.6} parent=0 // pred_check
    _
  $region11: #{_lambda_.6} parent=0 // pred_check_branch
    %13 = sbr.rel (0) target = $region13
  $region12: #{_lambda_.6} parent=0 // pred_region
    _
  $region13: #{_lambda_.6} parent=0 // pred_fallthru
    _
  %v14 = vld [vmem:[%s0] sm:$0xff]
  %v15 = vld [vmem:[%s0 + $0x8] sm:$0xff]
  %v16 = vld [vmem:[%s1] sm:$0xff]
  %v17 = vld [vmem:[%s1 + $0x8] sm:$0xff]
  %v18 = vld [vmem:[%s1 + $0x10] sm:$0x7f]
  %v19 = vld [vmem:[%s2] sm:$0x1]
  %v21 = vlaneseq
  %v22 = vshrl.u32 %v21, 7
  %v23 = vsub.s32 0, %v22
  %v24 = vrot.slane %v19, %v23
  %vm26 = vcmask 187392
  %v28 = vsel %vm26, %v14, 0
  %v31 = vsel %vm26, %v15, 0
  %vm33 = vcmask 1046528
  %v35 = vsel %vm33, %v18, 0
  %37 = vmatprep.subr.mxu0 0.0
  %38 = vmatpush1.msra.mxu0 %v16
  %39 = vmatprep.subr.mxu0 0.0
  %40 = vmatpush1.msra.mxu0 %v17
  %41 = vmatprep.subr.mxu0 0.0
  %42 = vmatpush1.msra.mxu0 %v35
  %43 = vmatprep.subr.mxu0 0.0
  %44 = vmatpush1.msra.mxu0 0.0
  %45 = vmatprep.subr.mxu0 0.0
  %46 = vmatpush1.msra.mxu0 0.0
  %47 = vmatprep.subr.mxu0 0.0
  %48 = vmatpush1.msra.mxu0 0.0
  %49 = vmatprep.subr.mxu0 0.0
  %50 = vmatpush1.msra.mxu0 0.0
  %51 = vmatprep.subr.mxu0 0.0
  %52 = vmatpush1.msra.mxu0 0.0
  %53 = vmatprep.subr.mxu0 0.0
  %54 = vmatpush1.msra.mxu0 0.0
  %55 = vmatprep.subr.mxu0 0.0
  %56 = vmatpush1.msra.mxu0 0.0
  %57 = vmatprep.subr.mxu0 0.0
  %58 = vmatpush1.msra.mxu0 0.0
  %59 = vmatprep.subr.mxu0 0.0
  %60 = vmatpush1.msra.mxu0 0.0
  %61 = vmatprep.subr.mxu0 0.0
  %62 = vmatpush1.msra.mxu0 0.0
  %63 = vmatprep.subr.mxu0 0.0
  %64 = vmatpush1.msra.mxu0 0.0
  %65 = vmatprep.subr.mxu0 0.0
  %66 = vmatpush1.msra.mxu0 0.0
  %67 = vmatprep.subr.mxu0 0.0
  %68 = vmatpush1.msra.mxu0 0.0
  %69 = vmatprep.subr.mxu0 0.0
  %70 = vmatpush1.msra.mxu0 0.0
  %71 = vmatprep.subr.mxu0 0.0
  %72 = vmatpush1.msra.mxu0 0.0
  %73 = vmatprep.subr.mxu0 0.0
  %74 = vmatpush1.msra.mxu0 0.0
  %75 = vmatprep.subr.mxu0 0.0
  %76 = vmatpush1.msra.mxu0 0.0
  %77 = vmatprep.subr.mxu0 0.0
  %78 = vmatpush1.msra.mxu0 0.0
  %79 = vmatprep.subr.mxu0 0.0
  %80 = vmatpush1.msra.mxu0 0.0
  %81 = vmatprep.subr.mxu0 0.0
  %82 = vmatpush1.msra.mxu0 0.0
  %83 = vmatprep.subr.mxu0 0.0
  %84 = vmatpush1.msra.mxu0 0.0
  %85 = vmatprep.subr.mxu0 0.0
  %86 = vmatpush1.msra.mxu0 0.0
  %87 = vmatprep.subr.mxu0 0.0
  %88 = vmatpush1.msra.mxu0 0.0
  %89 = vmatprep.subr.mxu0 0.0
  %90 = vmatpush1.msra.mxu0 0.0
  %91 = vmatprep.subr.mxu0 0.0
  %92 = vmatpush1.msra.mxu0 0.0
  %93 = vmatprep.subr.mxu0 0.0
  %94 = vmatpush1.msra.mxu0 0.0
  %95 = vmatprep.subr.mxu0 0.0
  %96 = vmatpush1.msra.mxu0 0.0
  %97 = vmatprep.subr.mxu0 0.0
  %98 = vmatpush1.msra.mxu0 0.0
  %99 = vmatprep.subr.mxu0 0.0
  %100 = vmatpush1.msra.mxu0 0.0
  %101 = vmatprep.mubr.f32.mxu0 0.0
  %102 = vmatmul.mubr.f32.gmra.mrb[0].mxu0 %v28
  %v103 = vpop.f32.mrb[0].mxu0
  %v104 = vadd.f32 %v24, %v103
  %v105 = vpop.f32.mrb[0].mxu0
  %106 = vmatprep.mubr.f32.mxu0 0.0
  %107 = vmatmul.mubr.f32.gmra.mrb[0].mxu0 %v31
  %v108 = vpop.f32.mrb[0].mxu0
  %v109 = vadd.f32 %v24, %v108
  %v110 = vpop.f32.mrb[0].mxu0
  %111 = vdwg.mxu0
  %vm112 = vcmask 261120
  %113 = vst.msk [vmem:[%s3] sm:$0xff] %vm112, %v104
  %114 = vst.msk [vmem:[%s3 + $0x8] sm:$0xff] %vm112, %v109
  // Predicated region
  $region14: #{_lambda_.6} parent=0 // pred_check
    _
  $region15: #{_lambda_.6} parent=0 // pred_check_branch
    %116 = sbr.rel (0) target = $region17
  $region16: #{_lambda_.6} parent=0 // pred_region
    _
  $region17: #{_lambda_.6} parent=0 // pred_fallthru
    _
  // Predicated region
  $region18: #{_lambda_.6} parent=0 // pred_check
    _
  $region19: #{_lambda_.6} parent=0 // pred_check_branch
    %118 = sbr.rel (0) target = $region21
  $region20: #{_lambda_.6} parent=0 // pred_region
    _
  $region21: #{_lambda_.6} parent=0 // pred_fallthru
    _

// kernel: _lambda_.7
$region0: #{_lambda_.7}
  #allocation0 [shape = 'u32[]', space=smem, size = 0x4, offset = 0x4, fixed_abs, tag = 'smem constant byte address 0x4 - core index']
  #allocation1 [shape = 'u32[144,128]{1,0:T(1,128)}', space=vmem, size = 0x12000, scoped, tag = 'internal scratch']
  %s0 = inlined_call_operand.vmem [shape: f32[128,13], index: 0, kind: input, shape index: {}]
  %s1 = inlined_call_operand.vmem [shape: f32[13,64], index: 1, kind: input, shape index: {}]
  %s2 = inlined_call_operand.vmem [shape: f32[1,64], index: 2, kind: input, shape index: {}]
  %s3 = inlined_call_operand.vmem [shape: f32[128,64], index: 3, kind: output, shape index: {}]
  %s4 = sld [smem:[#allocation0]]
  $region22: #{_lambda_.7} parent=0
    _
  %s6 = ssub.s32 1, %s4
  %s7 = scalar_select 0, %s6, %s4
  // Predicated region
  $region2: #{_lambda_.7} parent=0 // pred_check
    _
  $region3: #{_lambda_.7} parent=0 // pred_check_branch
    %9 = sbr.rel (0) target = $region5
  $region4: #{_lambda_.7} parent=0 // pred_region
    _
  $region5: #{_lambda_.7} parent=0 // pred_fallthru
    _
  // Predicated region
  $region6: #{_lambda_.7} parent=0 // pred_check
    _
  $region7: #{_lambda_.7} parent=0 // pred_check_branch
    %11 = sbr.rel (0) target = $region9
  $region8: #{_lambda_.7} parent=0 // pred_region
    _
  $region9: #{_lambda_.7} parent=0 // pred_fallthru
    _
  // Predicated region
  $region10: #{_lambda_.7} parent=0 // pred_check
    _
  $region11: #{_lambda_.7} parent=0 // pred_check_branch
    %13 = sbr.rel (0) target = $region13
  $region12: #{_lambda_.7} parent=0 // pred_region
    _
  $region13: #{_lambda_.7} parent=0 // pred_fallthru
    _
  %v14 = vld [vmem:[%s0] sm:$0xff]
  %v15 = vld [vmem:[%s0 + $0x8] sm:$0xff]
  %v16 = vld [vmem:[%s0 + $0x10] sm:$0xff]
  %v17 = vld [vmem:[%s0 + $0x18] sm:$0xff]
  %v18 = vld [vmem:[%s0 + $0x20] sm:$0xff]
  %v19 = vld [vmem:[%s0 + $0x28] sm:$0xff]
  %v20 = vld [vmem:[%s0 + $0x30] sm:$0xff]
  %v21 = vld [vmem:[%s0 + $0x38] sm:$0xff]
  %v22 = vld [vmem:[%s0 + $0x40] sm:$0xff]
  %v23 = vld [vmem:[%s0 + $0x48] sm:$0xff]
  %v24 = vld [vmem:[%s0 + $0x50] sm:$0xff]
  %v25 = vld [vmem:[%s0 + $0x58] sm:$0xff]
  %v26 = vld [vmem:[%s0 + $0x60] sm:$0xff]
  %v27 = vld [vmem:[%s0 + $0x68] sm:$0xff]
  %v28 = vld [vmem:[%s0 + $0x70] sm:$0xff]
  %v29 = vld [vmem:[%s0 + $0x78] sm:$0xff]
  %v30 = vld [vmem:[%s1] sm:$0xff]
  %v31 = vld [vmem:[%s1 + $0x8] sm:$0x1f]
  %v32 = vld [vmem:[%s2] sm:$0x1]
  %v34 = vlaneseq
  %v35 = vshrl.u32 %v34, 7
  %v36 = vsub.s32 0, %v35
  %v37 = vrot.slane %v32, %v36
  %vm39 = vcmask 105472
  %v41 = vsel %vm39, %v14, 0
  %v44 = vsel %vm39, %v15, 0
  %v47 = vsel %vm39, %v16, 0
  %v50 = vsel %vm39, %v17, 0
  %v53 = vsel %vm39, %v18, 0
  %v56 = vsel %vm39, %v19, 0
  %v59 = vsel %vm39, %v20, 0
  %v62 = vsel %vm39, %v21, 0
  %v65 = vsel %vm39, %v22, 0
  %v68 = vsel %vm39, %v23, 0
  %v71 = vsel %vm39, %v24, 0
  %v74 = vsel %vm39, %v25, 0
  %v77 = vsel %vm39, %v26, 0
  %v80 = vsel %vm39, %v27, 0
  %v83 = vsel %vm39, %v28, 0
  %v86 = vsel %vm39, %v29, 0
  %vm88 = vcmask 1044480
  %v90 = vsel %vm88, %v31, 0
  %92 = vmatprep.subr.mxu0 0.0
  %93 = vmatpush1.msra.mxu0 %v30
  %94 = vmatprep.subr.mxu0 0.0
  %95 = vmatpush1.msra.mxu0 %v90
  %96 = vmatprep.subr.mxu0 0.0
  %97 = vmatpush1.msra.mxu0 0.0
  %98 = vmatprep.subr.mxu0 0.0
  %99 = vmatpush1.msra.mxu0 0.0
  %100 = vmatprep.subr.mxu0 0.0
  %101 = vmatpush1.msra.mxu0 0.0
  %102 = vmatprep.subr.mxu0 0.0
  %103 = vmatpush1.msra.mxu0 0.0
  %104 = vmatprep.subr.mxu0 0.0
  %105 = vmatpush1.msra.mxu0 0.0
  %106 = vmatprep.subr.mxu0 0.0
  %107 = vmatpush1.msra.mxu0 0.0
  %108 = vmatprep.subr.mxu0 0.0
  %109 = vmatpush1.msra.mxu0 0.0
  %110 = vmatprep.subr.mxu0 0.0
  %111 = vmatpush1.msra.mxu0 0.0
  %112 = vmatprep.subr.mxu0 0.0
  %113 = vmatpush1.msra.mxu0 0.0
  %114 = vmatprep.subr.mxu0 0.0
  %115 = vmatpush1.msra.mxu0 0.0
  %116 = vmatprep.subr.mxu0 0.0
  %117 = vmatpush1.msra.mxu0 0.0
  %118 = vmatprep.subr.mxu0 0.0
  %119 = vmatpush1.msra.mxu0 0.0
  %120 = vmatprep.subr.mxu0 0.0
  %121 = vmatpush1.msra.mxu0 0.0
  %122 = vmatprep.subr.mxu0 0.0
  %123 = vmatpush1.msra.mxu0 0.0
  %124 = vmatprep.subr.mxu0 0.0
  %125 = vmatpush1.msra.mxu0 0.0
  %126 = vmatprep.subr.mxu0 0.0
  %127 = vmatpush1.msra.mxu0 0.0
  %128 = vmatprep.subr.mxu0 0.0
  %129 = vmatpush1.msra.mxu0 0.0
  %130 = vmatprep.subr.mxu0 0.0
  %131 = vmatpush1.msra.mxu0 0.0
  %132 = vmatprep.subr.mxu0 0.0
  %133 = vmatpush1.msra.mxu0 0.0
  %134 = vmatprep.subr.mxu0 0.0
  %135 = vmatpush1.msra.mxu0 0.0
  %136 = vmatprep.subr.mxu0 0.0
  %137 = vmatpush1.msra.mxu0 0.0
  %138 = vmatprep.subr.mxu0 0.0
  %139 = vmatpush1.msra.mxu0 0.0
  %140 = vmatprep.subr.mxu0 0.0
  %141 = vmatpush1.msra.mxu0 0.0
  %142 = vmatprep.subr.mxu0 0.0
  %143 = vmatpush1.msra.mxu0 0.0
  %144 = vmatprep.subr.mxu0 0.0
  %145 = vmatpush1.msra.mxu0 0.0
  %146 = vmatprep.subr.mxu0 0.0
  %147 = vmatpush1.msra.mxu0 0.0
  %148 = vmatprep.subr.mxu0 0.0
  %149 = vmatpush1.msra.mxu0 0.0
  %150 = vmatprep.subr.mxu0 0.0
  %151 = vmatpush1.msra.mxu0 0.0
  %152 = vmatprep.subr.mxu0 0.0
  %153 = vmatpush1.msra.mxu0 0.0
  %154 = vmatprep.subr.mxu0 0.0
  %155 = vmatpush1.msra.mxu0 0.0
  %156 = vmatprep.mubr.f32.mxu0 0.0
  %157 = vmatmul.mubr.f32.gmra.mrb[0].mxu0 %v41
  %v158 = vpop.f32.mrb[0].mxu0
  %v159 = vadd.f32 %v37, %v158
  %v160 = vpop.f32.mrb[0].mxu0
  %161 = vmatprep.mubr.f32.mxu0 0.0
  %162 = vmatmul.mubr.f32.gmra.mrb[0].mxu0 %v44
  %v163 = vpop.f32.mrb[0].mxu0
  %v164 = vadd.f32 %v37, %v163
  %v165 = vpop.f32.mrb[0].mxu0
  %166 = vmatprep.mubr.f32.mxu0 0.0
  %167 = vmatmul.mubr.f32.gmra.mrb[0].mxu0 %v47
  %v168 = vpop.f32.mrb[0].mxu0
  %v169 = vadd.f32 %v37, %v168
  %v170 = vpop.f32.mrb[0].mxu0
  %171 = vmatprep.mubr.f32.mxu0 0.0
  %172 = vmatmul.mubr.f32.gmra.mrb[0].mxu0 %v50
  %v173 = vpop.f32.mrb[0].mxu0
  %v174 = vadd.f32 %v37, %v173
  %v175 = vpop.f32.mrb[0].mxu0
  %176 = vmatprep.mubr.f32.mxu0 0.0
  %177 = vmatmul.mubr.f32.gmra.mrb[0].mxu0 %v53
  %v178 = vpop.f32.mrb[0].mxu0
  %v179 = vadd.f32 %v37, %v178
  %v180 = vpop.f32.mrb[0].mxu0
  %181 = vmatprep.mubr.f32.mxu0 0.0
  %182 = vmatmul.mubr.f32.gmra.mrb[0].mxu0 %v56
  %v183 = vpop.f32.mrb[0].mxu0
  %v184 = vadd.f32 %v37, %v183
  %v185 = vpop.f32.mrb[0].mxu0
  %186 = vmatprep.mubr.f32.mxu0 0.0
  %187 = vmatmul.mubr.f32.gmra.mrb[0].mxu0 %v59
  %v188 = vpop.f32.mrb[0].mxu0
  %v189 = vadd.f32 %v37, %v188
  %v190 = vpop.f32.mrb[0].mxu0
  %191 = vmatprep.mubr.f32.mxu0 0.0
  %192 = vmatmul.mubr.f32.gmra.mrb[0].mxu0 %v62
  %v193 = vpop.f32.mrb[0].mxu0
  %v194 = vadd.f32 %v37, %v193
  %v195 = vpop.f32.mrb[0].mxu0
  %196 = vmatprep.mubr.f32.mxu0 0.0
  %197 = vmatmul.mubr.f32.gmra.mrb[0].mxu0 %v65
  %v198 = vpop.f32.mrb[0].mxu0
  %v199 = vadd.f32 %v37, %v198
  %v200 = vpop.f32.mrb[0].mxu0
  %201 = vmatprep.mubr.f32.mxu0 0.0
  %202 = vmatmul.mubr.f32.gmra.mrb[0].mxu0 %v68
  %v203 = vpop.f32.mrb[0].mxu0
  %v204 = vadd.f32 %v37, %v203
  %v205 = vpop.f32.mrb[0].mxu0
  %206 = vmatprep.mubr.f32.mxu0 0.0
  %207 = vmatmul.mubr.f32.gmra.mrb[0].mxu0 %v71
  %v208 = vpop.f32.mrb[0].mxu0
  %v209 = vadd.f32 %v37, %v208
  %v210 = vpop.f32.mrb[0].mxu0
  %211 = vmatprep.mubr.f32.mxu0 0.0
  %212 = vmatmul.mubr.f32.gmra.mrb[0].mxu0 %v74
  %v213 = vpop.f32.mrb[0].mxu0
  %v214 = vadd.f32 %v37, %v213
  %v215 = vpop.f32.mrb[0].mxu0
  %216 = vmatprep.mubr.f32.mxu0 0.0
  %217 = vmatmul.mubr.f32.gmra.mrb[0].mxu0 %v77
  %v218 = vpop.f32.mrb[0].mxu0
  %v219 = vadd.f32 %v37, %v218
  %v220 = vpop.f32.mrb[0].mxu0
  %221 = vmatprep.mubr.f32.mxu0 0.0
  %222 = vmatmul.mubr.f32.gmra.mrb[0].mxu0 %v80
  %v223 = vpop.f32.mrb[0].mxu0
  %v224 = vadd.f32 %v37, %v223
  %v225 = vpop.f32.mrb[0].mxu0
  %226 = vmatprep.mubr.f32.mxu0 0.0
  %227 = vmatmul.mubr.f32.gmra.mrb[0].mxu0 %v83
  %v228 = vpop.f32.mrb[0].mxu0
  %v229 = vadd.f32 %v37, %v228
  %v230 = vpop.f32.mrb[0].mxu0
  %231 = vmatprep.mubr.f32.mxu0 0.0
  %232 = vmatmul.mubr.f32.gmra.mrb[0].mxu0 %v86
  %v233 = vpop.f32.mrb[0].mxu0
  %v234 = vadd.f32 %v37, %v233
  %v235 = vpop.f32.mrb[0].mxu0
  %236 = vdwg.mxu0
  %vm237 = vcmask 523264
  %238 = vst.msk [vmem:[%s3] sm:$0xff] %vm237, %v159
  %239 = vst.msk [vmem:[%s3 + $0x8] sm:$0xff] %vm237, %v164
  %240 = vst.msk [vmem:[%s3 + $0x10] sm:$0xff] %vm237, %v169
  %241 = vst.msk [vmem:[%s3 + $0x18] sm:$0xff] %vm237, %v174
  %242 = vst.msk [vmem:[%s3 + $0x20] sm:$0xff] %vm237, %v179
  %243 = vst.msk [vmem:[%s3 + $0x28] sm:$0xff] %vm237, %v184
  %244 = vst.msk [vmem:[%s3 + $0x30] sm:$0xff] %vm237, %v189
  %245 = vst.msk [vmem:[%s3 + $0x38] sm:$0xff] %vm237, %v194
  %246 = vst.msk [vmem:[%s3 + $0x40] sm:$0xff] %vm237, %v199
  %247 = vst.msk [vmem:[%s3 + $0x48] sm:$0xff] %vm237, %v204
  %248 = vst.msk [vmem:[%s3 + $0x50] sm:$0xff] %vm237, %v209
  %249 = vst.msk [vmem:[%s3 + $0x58] sm:$0xff] %vm237, %v214
  %250 = vst.msk [vmem:[%s3 + $0x60] sm:$0xff] %vm237, %v219
  %251 = vst.msk [vmem:[%s3 + $0x68] sm:$0xff] %vm237, %v224
  %252 = vst.msk [vmem:[%s3 + $0x70] sm:$0xff] %vm237, %v229
  %253 = vst.msk [vmem:[%s3 + $0x78] sm:$0xff] %vm237, %v234
  // Predicated region
  $region14: #{_lambda_.7} parent=0 // pred_check
    _
  $region15: #{_lambda_.7} parent=0 // pred_check_branch
    %255 = sbr.rel (0) target = $region17
  $region16: #{_lambda_.7} parent=0 // pred_region
    _
  $region17: #{_lambda_.7} parent=0 // pred_fallthru
    _
  // Predicated region
  $region18: #{_lambda_.7} parent=0 // pred_check
    _
  $region19: #{_lambda_.7} parent=0 // pred_check_branch
    %257 = sbr.rel (0) target = $region21
  $region20: #{_lambda_.7} parent=0 // pred_region
    _
  $region21: #{_lambda_.7} parent=0 // pred_fallthru
    _

// kernel: _lambda_.9
$region0: #{_lambda_.9}
  #allocation0 [shape = 'u32[]', space=smem, size = 0x4, offset = 0x4, fixed_abs, tag = 'smem constant byte address 0x4 - core index']
  #allocation1 [shape = 'u32[144,128]{1,0:T(1,128)}', space=vmem, size = 0x12000, scoped, tag = 'internal scratch']
  %s0 = inlined_call_operand.vmem [shape: f32[2,8,72], index: 0, kind: input, shape index: {}]
  %s1 = inlined_call_operand.vmem [shape: f32[2,64,72], index: 1, kind: input, shape index: {}]
  %s2 = inlined_call_operand.vmem [shape: f32[2,64,1], index: 2, kind: input, shape index: {}]
  %s3 = inlined_call_operand.vmem [shape: f32[64,8], index: 3, kind: input, shape index: {}, may-alias: {3,5}]
  %s4 = inlined_call_operand.vmem [shape: f32[64,8], index: 4, kind: input, shape index: {}]
  %s5 = inlined_call_operand.vmem [shape: f32[64,8], index: 5, kind: input, shape index: {}, may-alias: {3,5}]
  %s6 = inlined_call_operand.vmem [shape: f32[8,64], index: 6, kind: input, shape index: {}, may-alias: {6,7}]
  %s7 = inlined_call_operand.vmem [shape: f32[8,64], index: 7, kind: input, shape index: {}, may-alias: {6,7}]
  %s8 = inlined_call_operand.vmem [shape: f32[72,48], index: 8, kind: input, shape index: {}]
  %s9 = inlined_call_operand.vmem [shape: f32[1,48], index: 9, kind: input, shape index: {}]
  %s10 = inlined_call_operand.vmem [shape: f32[72,64], index: 10, kind: input, shape index: {}]
  %s11 = inlined_call_operand.vmem [shape: f32[1,64], index: 11, kind: input, shape index: {}]
  %s12 = inlined_call_operand.vmem [shape: f32[160,64], index: 12, kind: input, shape index: {}]
  %s13 = inlined_call_operand.vmem [shape: f32[1,64], index: 13, kind: input, shape index: {}]
  %s14 = inlined_call_operand.vmem [shape: f32[64,64], index: 14, kind: input, shape index: {}]
  %s15 = inlined_call_operand.vmem [shape: f32[1,64], index: 15, kind: input, shape index: {}]
  %s16 = inlined_call_operand.vmem [shape: f32[48,64], index: 16, kind: input, shape index: {}]
  %s17 = inlined_call_operand.vmem [shape: f32[1,64], index: 17, kind: input, shape index: {}]
  %s18 = inlined_call_operand.vmem [shape: f32[48,64], index: 18, kind: input, shape index: {}]
  %s19 = inlined_call_operand.vmem [shape: f32[1,64], index: 19, kind: input, shape index: {}]
  %s20 = inlined_call_operand.vmem [shape: f32[48,64], index: 20, kind: input, shape index: {}]
  %s21 = inlined_call_operand.vmem [shape: f32[1,64], index: 21, kind: input, shape index: {}]
  %s22 = inlined_call_operand.vmem [shape: f32[128,32], index: 22, kind: input, shape index: {}]
  %s23 = inlined_call_operand.vmem [shape: f32[1,32], index: 23, kind: input, shape index: {}]
  %s24 = inlined_call_operand.vmem [shape: f32[2,8,32], index: 24, kind: output, shape index: {0}]
  %s25 = inlined_call_operand.vmem [shape: f32[2,64,64], index: 25, kind: output, shape index: {1}]
  %26 = xla_tuple %s24, %s25
  %s27 = sld [smem:[#allocation0]]
  $region137: #{_lambda_.9} parent=0
    _
  %s29 = ssub.s32 1, %s27
  %s30 = scalar_select 0, %s29, %s27
  loop: start=0, step=1, limit=4
  $region2: #{_lambda_.9} parent=0 // loop_pre_header
    _
  $region3: #{_lambda_.9} parent=0 // loop_header
    %s32 = sphi 0, %s36
    %p33 = scmp.ge.s32.totalorder %s32, 4
    %s42 = sphi 0, %s44
    %s45 = sphi 0, %s42
    %s46 = sphi 0, %s45
    %s62 = sphi 0, %s46
    %s68 = sphi 0, %s70
    %s71 = sphi 0, %s68
    %s72 = sphi 0, %s71
    %s88 = sphi 0, %s72
    %s94 = sphi 0, %s96
    %s97 = sphi 0, %s94
    %s98 = sphi 0, %s97
    %s114 = sphi 0, %s98
    %s118 = sphi 0, %s118
    %s120 = sphi 0, %s118
    %s121 = sphi 0, %s120
    %s135 = sphi 0, %s121
    %s139 = sphi 0, %s139
    %s141 = sphi 0, %s139
    %s142 = sphi 0, %s141
    %s156 = sphi 0, %s142
    %s160 = sphi 0, %s160
    %s162 = sphi 0, %s160
    %s163 = sphi 0, %s162
    %s177 = sphi 0, %s163
    %s181 = sphi 0, %s181
    %s183 = sphi 0, %s181
    %s184 = sphi 0, %s183
    %s198 = sphi 0, %s184
    %s202 = sphi 0, %s202
    %s204 = sphi 0, %s202
    %s205 = sphi 0, %s204
    %s219 = sphi 0, %s205
    %s223 = sphi 0, %s223
    %s225 = sphi 0, %s223
    %s226 = sphi 0, %s225
    %s240 = sphi 0, %s226
    %s244 = sphi 0, %s244
    %s246 = sphi 0, %s244
    %s247 = sphi 0, %s246
    %s261 = sphi 0, %s247
    %s265 = sphi 0, %s265
    %s267 = sphi 0, %s265
    %s268 = sphi 0, %s267
    %s282 = sphi 0, %s268
    %s286 = sphi 0, %s286
    %s288 = sphi 0, %s286
    %s289 = sphi 0, %s288
    %s303 = sphi 0, %s289
    %s307 = sphi 0, %s307
    %s309 = sphi 0, %s307
    %s310 = sphi 0, %s309
    %s324 = sphi 0, %s310
    %s328 = sphi 0, %s328
    %s330 = sphi 0, %s328
    %s331 = sphi 0, %s330
    %s345 = sphi 0, %s331
    %s349 = sphi 0, %s349
    %s351 = sphi 0, %s349
    %s352 = sphi 0, %s351
    %s366 = sphi 0, %s352
    %s370 = sphi 0, %s370
    %s372 = sphi 0, %s370
    %s373 = sphi 0, %s372
    %s387 = sphi 0, %s373
    %s391 = sphi 0, %s391
    %s393 = sphi 0, %s391
    %s394 = sphi 0, %s393
    %s408 = sphi 0, %s394
    %s412 = sphi 0, %s412
    %s414 = sphi 0, %s412
    %s415 = sphi 0, %s414
    %s429 = sphi 0, %s415
    %s433 = sphi 0, %s433
    %s435 = sphi 0, %s433
    %s436 = sphi 0, %s435
    %s450 = sphi 0, %s436
    %s454 = sphi 0, %s454
    %s456 = sphi 0, %s454
    %s457 = sphi 0, %s456
    %s471 = sphi 0, %s457
    %s475 = sphi 0, %s475
    %s477 = sphi 0, %s475
    %s478 = sphi 0, %s477
    %s492 = sphi 0, %s478
    %s496 = sphi 0, %s496
    %s498 = sphi 0, %s496
    %s499 = sphi 0, %s498
    %s513 = sphi 0, %s499
    %s517 = sphi 0, %s517
    %s519 = sphi 0, %s517
    %s520 = sphi 0, %s519
    %s534 = sphi 0, %s520
    %s538 = sphi 0, %s538
    %s540 = sphi 0, %s538
    %s541 = sphi 0, %s540
    %s555 = sphi 0, %s541
    %s561 = sphi 0, %s563
    %s564 = sphi 0, %s561
    %s565 = sphi 0, %s564
    %s581 = sphi 0, %s565
    %s587 = sphi 0, %s589
    %s590 = sphi 0, %s587
    %s591 = sphi 0, %s590
    %s607 = sphi 0, %s591
  $region4: #{_lambda_.9} parent=0 // loop_header_branch
    %35 = sbr.rel (%p33) target = $region8
  $region5: #{_lambda_.9} parent=0 // loop_body
    %s37 = ssub.s32 %s32, 1
    %s38 = ssub.s32 %s32, 2
    %s39 = sadd.s32 %s32, 1
    %s40 = ssub.s32 %s32, %s39
    %p41 = scmp.eq.s32.totalorder %s40, 0
    %s43 = sadd.s32 %s42, 1
    %s44 = scalar_select %p41, %s42, %s43
    %p47 = pneg %p41
    %p48 = scmp.eq.s32.totalorder %s32, 1
    %p49 = por %p47, %p48
    %p50 = scmp.ne.s32.totalorder %s42, %s45
    %p51 = scmp.eq.s32.totalorder %s32, 0
    %p52 = por %p50, %p51
    %p53 = scmp.ne.s32.totalorder %s42, %s45
    %p54 = scmp.eq.s32.totalorder %s37, 1
    %p55 = por %p53, %p54
    %p56 = scmp.ne.s32.totalorder %s45, %s46
    %p57 = scmp.eq.s32.totalorder %s37, 0
    %p58 = por %p56, %p57
    %p59 = scmp.ne.s32.totalorder %s45, %s46
    %p60 = scmp.eq.s32.totalorder %s38, 1
    %p61 = por %p59, %p60
    %p63 = scmp.ne.s32.totalorder %s46, %s62
    %p64 = scmp.eq.s32.totalorder %s38, 0
    %p65 = por %p63, %p64
    %s66 = ssub.s32 %s32, %s39
    %p67 = scmp.eq.s32.totalorder %s66, 0
    %s69 = sadd.s32 %s68, 1
    %s70 = scalar_select %p67, %s68, %s69
    %p73 = pneg %p67
    %p74 = scmp.eq.s32.totalorder %s32, 1
    %p75 = por %p73, %p74
    %p76 = scmp.ne.s32.totalorder %s68, %s71
    %p77 = scmp.eq.s32.totalorder %s32, 0
    %p78 = por %p76, %p77
    %p79 = scmp.ne.s32.totalorder %s68, %s71
    %p80 = scmp.eq.s32.totalorder %s37, 1
    %p81 = por %p79, %p80
    %p82 = scmp.ne.s32.totalorder %s71, %s72
    %p83 = scmp.eq.s32.totalorder %s37, 0
    %p84 = por %p82, %p83
    %p85 = scmp.ne.s32.totalorder %s71, %s72
    %p86 = scmp.eq.s32.totalorder %s38, 1
    %p87 = por %p85, %p86
    %p89 = scmp.ne.s32.totalorder %s72, %s88
    %p90 = scmp.eq.s32.totalorder %s38, 0
    %p91 = por %p89, %p90
    %s92 = ssub.s32 %s32, %s39
    %p93 = scmp.eq.s32.totalorder %s92, 0
    %s95 = sadd.s32 %s94, 1
    %s96 = scalar_select %p93, %s94, %s95
    %p99 = pneg %p93
    %p100 = scmp.eq.s32.totalorder %s32, 1
    %p101 = por %p99, %p100
    %p102 = scmp.ne.s32.totalorder %s94, %s97
    %p103 = scmp.eq.s32.totalorder %s32, 0
    %p104 = por %p102, %p103
    %p105 = scmp.ne.s32.totalorder %s94, %s97
    %p106 = scmp.eq.s32.totalorder %s37, 1
    %p107 = por %p105, %p106
    %p108 = scmp.ne.s32.totalorder %s97, %s98
    %p109 = scmp.eq.s32.totalorder %s37, 0
    %p110 = por %p108, %p109
    %p111 = scmp.ne.s32.totalorder %s97, %s98
    %p112 = scmp.eq.s32.totalorder %s38, 1
    %p113 = por %p111, %p112
    %p115 = scmp.ne.s32.totalorder %s98, %s114
    %p116 = scmp.eq.s32.totalorder %s38, 0
    %p117 = por %p115, %p116
    %s119 = sadd.s32 %s118, 1
    %p122 = scmp.eq.s32.totalorder %s32, 1
    %p123 = scmp.ne.s32.totalorder %s118, %s120
    %p124 = scmp.eq.s32.totalorder %s32, 0
    %p125 = por %p123, %p124
    %p126 = scmp.ne.s32.totalorder %s118, %s120
    %p127 = scmp.eq.s32.totalorder %s37, 1
    %p128 = por %p126, %p127
    %p129 = scmp.ne.s32.totalorder %s120, %s121
    %p130 = scmp.eq.s32.totalorder %s37, 0
    %p131 = por %p129, %p130
    %p132 = scmp.ne.s32.totalorder %s120, %s121
    %p133 = scmp.eq.s32.totalorder %s38, 1
    %p134 = por %p132, %p133
    %p136 = scmp.ne.s32.totalorder %s121, %s135
    %p137 = scmp.eq.s32.totalorder %s38, 0
    %p138 = por %p136, %p137
    %s140 = sadd.s32 %s139, 1
    %p143 = scmp.eq.s32.totalorder %s32, 1
    %p144 = scmp.ne.s32.totalorder %s139, %s141
    %p145 = scmp.eq.s32.totalorder %s32, 0
    %p146 = por %p144, %p145
    %p147 = scmp.ne.s32.totalorder %s139, %s141
    %p148 = scmp.eq.s32.totalorder %s37, 1
    %p149 = por %p147, %p148
    %p150 = scmp.ne.s32.totalorder %s141, %s142
    %p151 = scmp.eq.s32.totalorder %s37, 0
    %p152 = por %p150, %p151
    %p153 = scmp.ne.s32.totalorder %s141, %s142
    %p154 = scmp.eq.s32.totalorder %s38, 1
    %p155 = por %p153, %p154
    %p157 = scmp.ne.s32.totalorder %s142, %s156
    %p158 = scmp.eq.s32.totalorder %s38, 0
    %p159 = por %p157, %p158
    %s161 = sadd.s32 %s160, 1
    %p164 = scmp.eq.s32.totalorder %s32, 1
    %p165 = scmp.ne.s32.totalorder %s160, %s162
    %p166 = scmp.eq.s32.totalorder %s32, 0
    %p167 = por %p165, %p166
    %p168 = scmp.ne.s32.totalorder %s160, %s162
    %p169 = scmp.eq.s32.totalorder %s37, 1
    %p170 = por %p168, %p169
    %p171 = scmp.ne.s32.totalorder %s162, %s163
    %p172 = scmp.eq.s32.totalorder %s37, 0
    %p173 = por %p171, %p172
    %p174 = scmp.ne.s32.totalorder %s162, %s163
    %p175 = scmp.eq.s32.totalorder %s38, 1
    %p176 = por %p174, %p175
    %p178 = scmp.ne.s32.totalorder %s163, %s177
    %p179 = scmp.eq.s32.totalorder %s38, 0
    %p180 = por %p178, %p179
    %s182 = sadd.s32 %s181, 1
    %p185 = scmp.eq.s32.totalorder %s32, 1
    %p186 = scmp.ne.s32.totalorder %s181, %s183
    %p187 = scmp.eq.s32.totalorder %s32, 0
    %p188 = por %p186, %p187
    %p189 = scmp.ne.s32.totalorder %s181, %s183
    %p190 = scmp.eq.s32.totalorder %s37, 1
    %p191 = por %p189, %p190
    %p192 = scmp.ne.s32.totalorder %s183, %s184
    %p193 = scmp.eq.s32.totalorder %s37, 0
    %p194 = por %p192, %p193
    %p195 = scmp.ne.s32.totalorder %s183, %s184
    %p196 = scmp.eq.s32.totalorder %s38, 1
    %p197 = por %p195, %p196
    %p199 = scmp.ne.s32.totalorder %s184, %s198
    %p200 = scmp.eq.s32.totalorder %s38, 0
    %p201 = por %p199, %p200
    %s203 = sadd.s32 %s202, 1
    %p206 = scmp.eq.s32.totalorder %s32, 1
    %p207 = scmp.ne.s32.totalorder %s202, %s204
    %p208 = scmp.eq.s32.totalorder %s32, 0
    %p209 = por %p207, %p208
    %p210 = scmp.ne.s32.totalorder %s202, %s204
    %p211 = scmp.eq.s32.totalorder %s37, 1
    %p212 = por %p210, %p211
    %p213 = scmp.ne.s32.totalorder %s204, %s205
    %p214 = scmp.eq.s32.totalorder %s37, 0
    %p215 = por %p213, %p214
    %p216 = scmp.ne.s32.totalorder %s204, %s205
    %p217 = scmp.eq.s32.totalorder %s38, 1
    %p218 = por %p216, %p217
    %p220 = scmp.ne.s32.totalorder %s205, %s219
    %p221 = scmp.eq.s32.totalorder %s38, 0
    %p222 = por %p220, %p221
    %s224 = sadd.s32 %s223, 1
    %p227 = scmp.eq.s32.totalorder %s32, 1
    %p228 = scmp.ne.s32.totalorder %s223, %s225
    %p229 = scmp.eq.s32.totalorder %s32, 0
    %p230 = por %p228, %p229
    %p231 = scmp.ne.s32.totalorder %s223, %s225
    %p232 = scmp.eq.s32.totalorder %s37, 1
    %p233 = por %p231, %p232
    %p234 = scmp.ne.s32.totalorder %s225, %s226
    %p235 = scmp.eq.s32.totalorder %s37, 0
    %p236 = por %p234, %p235
    %p237 = scmp.ne.s32.totalorder %s225, %s226
    %p238 = scmp.eq.s32.totalorder %s38, 1
    %p239 = por %p237, %p238
    %p241 = scmp.ne.s32.totalorder %s226, %s240
    %p242 = scmp.eq.s32.totalorder %s38, 0
    %p243 = por %p241, %p242
    %s245 = sadd.s32 %s244, 1
    %p248 = scmp.eq.s32.totalorder %s32, 1
    %p249 = scmp.ne.s32.totalorder %s244, %s246
    %p250 = scmp.eq.s32.totalorder %s32, 0
    %p251 = por %p249, %p250
    %p252 = scmp.ne.s32.totalorder %s244, %s246
    %p253 = scmp.eq.s32.totalorder %s37, 1
    %p254 = por %p252, %p253
    %p255 = scmp.ne.s32.totalorder %s246, %s247
    %p256 = scmp.eq.s32.totalorder %s37, 0
    %p257 = por %p255, %p256
    %p258 = scmp.ne.s32.totalorder %s246, %s247
    %p259 = scmp.eq.s32.totalorder %s38, 1
    %p260 = por %p258, %p259
    %p262 = scmp.ne.s32.totalorder %s247, %s261
    %p263 = scmp.eq.s32.totalorder %s38, 0
    %p264 = por %p262, %p263
    %s266 = sadd.s32 %s265, 1
    %p269 = scmp.eq.s32.totalorder %s32, 1
    %p270 = scmp.ne.s32.totalorder %s265, %s267
    %p271 = scmp.eq.s32.totalorder %s32, 0
    %p272 = por %p270, %p271
    %p273 = scmp.ne.s32.totalorder %s265, %s267
    %p274 = scmp.eq.s32.totalorder %s37, 1
    %p275 = por %p273, %p274
    %p276 = scmp.ne.s32.totalorder %s267, %s268
    %p277 = scmp.eq.s32.totalorder %s37, 0
    %p278 = por %p276, %p277
    %p279 = scmp.ne.s32.totalorder %s267, %s268
    %p280 = scmp.eq.s32.totalorder %s38, 1
    %p281 = por %p279, %p280
    %p283 = scmp.ne.s32.totalorder %s268, %s282
    %p284 = scmp.eq.s32.totalorder %s38, 0
    %p285 = por %p283, %p284
    %s287 = sadd.s32 %s286, 1
    %p290 = scmp.eq.s32.totalorder %s32, 1
    %p291 = scmp.ne.s32.totalorder %s286, %s288
    %p292 = scmp.eq.s32.totalorder %s32, 0
    %p293 = por %p291, %p292
    %p294 = scmp.ne.s32.totalorder %s286, %s288
    %p295 = scmp.eq.s32.totalorder %s37, 1
    %p296 = por %p294, %p295
    %p297 = scmp.ne.s32.totalorder %s288, %s289
    %p298 = scmp.eq.s32.totalorder %s37, 0
    %p299 = por %p297, %p298
    %p300 = scmp.ne.s32.totalorder %s288, %s289
    %p301 = scmp.eq.s32.totalorder %s38, 1
    %p302 = por %p300, %p301
    %p304 = scmp.ne.s32.totalorder %s289, %s303
    %p305 = scmp.eq.s32.totalorder %s38, 0
    %p306 = por %p304, %p305
    %s308 = sadd.s32 %s307, 1
    %p311 = scmp.eq.s32.totalorder %s32, 1
    %p312 = scmp.ne.s32.totalorder %s307, %s309
    %p313 = scmp.eq.s32.totalorder %s32, 0
    %p314 = por %p312, %p313
    %p315 = scmp.ne.s32.totalorder %s307, %s309
    %p316 = scmp.eq.s32.totalorder %s37, 1
    %p317 = por %p315, %p316
    %p318 = scmp.ne.s32.totalorder %s309, %s310
    %p319 = scmp.eq.s32.totalorder %s37, 0
    %p320 = por %p318, %p319
    %p321 = scmp.ne.s32.totalorder %s309, %s310
    %p322 = scmp.eq.s32.totalorder %s38, 1
    %p323 = por %p321, %p322
    %p325 = scmp.ne.s32.totalorder %s310, %s324
    %p326 = scmp.eq.s32.totalorder %s38, 0
    %p327 = por %p325, %p326
    %s329 = sadd.s32 %s328, 1
    %p332 = scmp.eq.s32.totalorder %s32, 1
    %p333 = scmp.ne.s32.totalorder %s328, %s330
    %p334 = scmp.eq.s32.totalorder %s32, 0
    %p335 = por %p333, %p334
    %p336 = scmp.ne.s32.totalorder %s328, %s330
    %p337 = scmp.eq.s32.totalorder %s37, 1
    %p338 = por %p336, %p337
    %p339 = scmp.ne.s32.totalorder %s330, %s331
    %p340 = scmp.eq.s32.totalorder %s37, 0
    %p341 = por %p339, %p340
    %p342 = scmp.ne.s32.totalorder %s330, %s331
    %p343 = scmp.eq.s32.totalorder %s38, 1
    %p344 = por %p342, %p343
    %p346 = scmp.ne.s32.totalorder %s331, %s345
    %p347 = scmp.eq.s32.totalorder %s38, 0
    %p348 = por %p346, %p347
    %s350 = sadd.s32 %s349, 1
    %p353 = scmp.eq.s32.totalorder %s32, 1
    %p354 = scmp.ne.s32.totalorder %s349, %s351
    %p355 = scmp.eq.s32.totalorder %s32, 0
    %p356 = por %p354, %p355
    %p357 = scmp.ne.s32.totalorder %s349, %s351
    %p358 = scmp.eq.s32.totalorder %s37, 1
    %p359 = por %p357, %p358
    %p360 = scmp.ne.s32.totalorder %s351, %s352
    %p361 = scmp.eq.s32.totalorder %s37, 0
    %p362 = por %p360, %p361
    %p363 = scmp.ne.s32.totalorder %s351, %s352
    %p364 = scmp.eq.s32.totalorder %s38, 1
    %p365 = por %p363, %p364
    %p367 = scmp.ne.s32.totalorder %s352, %s366
    %p368 = scmp.eq.s32.totalorder %s38, 0
    %p369 = por %p367, %p368
    %s371 = sadd.s32 %s370, 1
    %p374 = scmp.eq.s32.totalorder %s32, 1
    %p375 = scmp.ne.s32.totalorder %s370, %s372
    %p376 = scmp.eq.s32.totalorder %s32, 0
    %p377 = por %p375, %p376
    %p378 = scmp.ne.s32.totalorder %s370, %s372
    %p379 = scmp.eq.s32.totalorder %s37, 1
    %p380 = por %p378, %p379
    %p381 = scmp.ne.s32.totalorder %s372, %s373
    %p382 = scmp.eq.s32.totalorder %s37, 0
    %p383 = por %p381, %p382
    %p384 = scmp.ne.s32.totalorder %s372, %s373
    %p385 = scmp.eq.s32.totalorder %s38, 1
    %p386 = por %p384, %p385
    %p388 = scmp.ne.s32.totalorder %s373, %s387
    %p389 = scmp.eq.s32.totalorder %s38, 0
    %p390 = por %p388, %p389
    %s392 = sadd.s32 %s391, 1
    %p395 = scmp.eq.s32.totalorder %s32, 1
    %p396 = scmp.ne.s32.totalorder %s391, %s393
    %p397 = scmp.eq.s32.totalorder %s32, 0
    %p398 = por %p396, %p397
    %p399 = scmp.ne.s32.totalorder %s391, %s393
    %p400 = scmp.eq.s32.totalorder %s37, 1
    %p401 = por %p399, %p400
    %p402 = scmp.ne.s32.totalorder %s393, %s394
    %p403 = scmp.eq.s32.totalorder %s37, 0
    %p404 = por %p402, %p403
    %p405 = scmp.ne.s32.totalorder %s393, %s394
    %p406 = scmp.eq.s32.totalorder %s38, 1
    %p407 = por %p405, %p406
    %p409 = scmp.ne.s32.totalorder %s394, %s408
    %p410 = scmp.eq.s32.totalorder %s38, 0
    %p411 = por %p409, %p410
    %s413 = sadd.s32 %s412, 1
    %p416 = scmp.eq.s32.totalorder %s32, 1
    %p417 = scmp.ne.s32.totalorder %s412, %s414
    %p418 = scmp.eq.s32.totalorder %s32, 0
    %p419 = por %p417, %p418
    %p420 = scmp.ne.s32.totalorder %s412, %s414
    %p421 = scmp.eq.s32.totalorder %s37, 1
    %p422 = por %p420, %p421
    %p423 = scmp.ne.s32.totalorder %s414, %s415
    %p424 = scmp.eq.s32.totalorder %s37, 0
    %p425 = por %p423, %p424
    %p426 = scmp.ne.s32.totalorder %s414, %s415
    %p427 = scmp.eq.s32.totalorder %s38, 1
    %p428 = por %p426, %p427
    %p430 = scmp.ne.s32.totalorder %s415, %s429
    %p431 = scmp.eq.s32.totalorder %s38, 0
    %p432 = por %p430, %p431
    %s434 = sadd.s32 %s433, 1
    %p437 = scmp.eq.s32.totalorder %s32, 1
    %p438 = scmp.ne.s32.totalorder %s433, %s435
    %p439 = scmp.eq.s32.totalorder %s32, 0
    %p440 = por %p438, %p439
    %p441 = scmp.ne.s32.totalorder %s433, %s435
    %p442 = scmp.eq.s32.totalorder %s37, 1
    %p443 = por %p441, %p442
    %p444 = scmp.ne.s32.totalorder %s435, %s436
    %p445 = scmp.eq.s32.totalorder %s37, 0
    %p446 = por %p444, %p445
    %p447 = scmp.ne.s32.totalorder %s435, %s436
    %p448 = scmp.eq.s32.totalorder %s38, 1
    %p449 = por %p447, %p448
    %p451 = scmp.ne.s32.totalorder %s436, %s450
    %p452 = scmp.eq.s32.totalorder %s38, 0
    %p453 = por %p451, %p452
    %s455 = sadd.s32 %s454, 1
    %p458 = scmp.eq.s32.totalorder %s32, 1
    %p459 = scmp.ne.s32.totalorder %s454, %s456
    %p460 = scmp.eq.s32.totalorder %s32, 0
    %p461 = por %p459, %p460
    %p462 = scmp.ne.s32.totalorder %s454, %s456
    %p463 = scmp.eq.s32.totalorder %s37, 1
    %p464 = por %p462, %p463
    %p465 = scmp.ne.s32.totalorder %s456, %s457
    %p466 = scmp.eq.s32.totalorder %s37, 0
    %p467 = por %p465, %p466
    %p468 = scmp.ne.s32.totalorder %s456, %s457
    %p469 = scmp.eq.s32.totalorder %s38, 1
    %p470 = por %p468, %p469
    %p472 = scmp.ne.s32.totalorder %s457, %s471
    %p473 = scmp.eq.s32.totalorder %s38, 0
    %p474 = por %p472, %p473
    %s476 = sadd.s32 %s475, 1
    %p479 = scmp.eq.s32.totalorder %s32, 1
    %p480 = scmp.ne.s32.totalorder %s475, %s477
    %p481 = scmp.eq.s32.totalorder %s32, 0
    %p482 = por %p480, %p481
    %p483 = scmp.ne.s32.totalorder %s475, %s477
    %p484 = scmp.eq.s32.totalorder %s37, 1
    %p485 = por %p483, %p484
    %p486 = scmp.ne.s32.totalorder %s477, %s478
    %p487 = scmp.eq.s32.totalorder %s37, 0
    %p488 = por %p486, %p487
    %p489 = scmp.ne.s32.totalorder %s477, %s478
    %p490 = scmp.eq.s32.totalorder %s38, 1
    %p491 = por %p489, %p490
    %p493 = scmp.ne.s32.totalorder %s478, %s492
    %p494 = scmp.eq.s32.totalorder %s38, 0
    %p495 = por %p493, %p494
    %s497 = sadd.s32 %s496, 1
    %p500 = scmp.eq.s32.totalorder %s32, 1
    %p501 = scmp.ne.s32.totalorder %s496, %s498
    %p502 = scmp.eq.s32.totalorder %s32, 0
    %p503 = por %p501, %p502
    %p504 = scmp.ne.s32.totalorder %s496, %s498
    %p505 = scmp.eq.s32.totalorder %s37, 1
    %p506 = por %p504, %p505
    %p507 = scmp.ne.s32.totalorder %s498, %s499
    %p508 = scmp.eq.s32.totalorder %s37, 0
    %p509 = por %p507, %p508
    %p510 = scmp.ne.s32.totalorder %s498, %s499
    %p511 = scmp.eq.s32.totalorder %s38, 1
    %p512 = por %p510, %p511
    %p514 = scmp.ne.s32.totalorder %s499, %s513
    %p515 = scmp.eq.s32.totalorder %s38, 0
    %p516 = por %p514, %p515
    %s518 = sadd.s32 %s517, 1
    %p521 = scmp.eq.s32.totalorder %s32, 1
    %p522 = scmp.ne.s32.totalorder %s517, %s519
    %p523 = scmp.eq.s32.totalorder %s32, 0
    %p524 = por %p522, %p523
    %p525 = scmp.ne.s32.totalorder %s517, %s519
    %p526 = scmp.eq.s32.totalorder %s37, 1
    %p527 = por %p525, %p526
    %p528 = scmp.ne.s32.totalorder %s519, %s520
    %p529 = scmp.eq.s32.totalorder %s37, 0
    %p530 = por %p528, %p529
    %p531 = scmp.ne.s32.totalorder %s519, %s520
    %p532 = scmp.eq.s32.totalorder %s38, 1
    %p533 = por %p531, %p532
    %p535 = scmp.ne.s32.totalorder %s520, %s534
    %p536 = scmp.eq.s32.totalorder %s38, 0
    %p537 = por %p535, %p536
    %s539 = sadd.s32 %s538, 1
    %p542 = scmp.eq.s32.totalorder %s32, 1
    %p543 = scmp.ne.s32.totalorder %s538, %s540
    %p544 = scmp.eq.s32.totalorder %s32, 0
    %p545 = por %p543, %p544
    %p546 = scmp.ne.s32.totalorder %s538, %s540
    %p547 = scmp.eq.s32.totalorder %s37, 1
    %p548 = por %p546, %p547
    %p549 = scmp.ne.s32.totalorder %s540, %s541
    %p550 = scmp.eq.s32.totalorder %s37, 0
    %p551 = por %p549, %p550
    %p552 = scmp.ne.s32.totalorder %s540, %s541
    %p553 = scmp.eq.s32.totalorder %s38, 1
    %p554 = por %p552, %p553
    %p556 = scmp.ne.s32.totalorder %s541, %s555
    %p557 = scmp.eq.s32.totalorder %s38, 0
    %p558 = por %p556, %p557
    %s559 = ssub.s32 %s32, %s39
    %p560 = scmp.eq.s32.totalorder %s559, 0
    %s562 = sadd.s32 %s561, 1
    %s563 = scalar_select %p560, %s561, %s562
    %p566 = pneg %p560
    %p567 = scmp.eq.s32.totalorder %s32, 1
    %p568 = por %p566, %p567
    %p569 = scmp.ne.s32.totalorder %s561, %s564
    %p570 = scmp.eq.s32.totalorder %s32, 0
    %p571 = por %p569, %p570
    %p572 = scmp.ne.s32.totalorder %s561, %s564
    %p573 = scmp.eq.s32.totalorder %s37, 1
    %p574 = por %p572, %p573
    %p575 = scmp.ne.s32.totalorder %s564, %s565
    %p576 = scmp.eq.s32.totalorder %s37, 0
    %p577 = por %p575, %p576
    %p578 = scmp.ne.s32.totalorder %s564, %s565
    %p579 = scmp.eq.s32.totalorder %s38, 1
    %p580 = por %p578, %p579
    %p582 = scmp.ne.s32.totalorder %s565, %s581
    %p583 = scmp.eq.s32.totalorder %s38, 0
    %p584 = por %p582, %p583
    %s585 = ssub.s32 %s32, %s39
    %p586 = scmp.eq.s32.totalorder %s585, 0
    %s588 = sadd.s32 %s587, 1
    %s589 = scalar_select %p586, %s587, %s588
    %p592 = pneg %p586
    %p593 = scmp.eq.s32.totalorder %s32, 1
    %p594 = por %p592, %p593
    %p595 = scmp.ne.s32.totalorder %s587, %s590
    %p596 = scmp.eq.s32.totalorder %s32, 0
    %p597 = por %p595, %p596
    %p598 = scmp.ne.s32.totalorder %s587, %s590
    %p599 = scmp.eq.s32.totalorder %s37, 1
    %p600 = por %p598, %p599
    %p601 = scmp.ne.s32.totalorder %s590, %s591
    %p602 = scmp.eq.s32.totalorder %s37, 0
    %p603 = por %p601, %p602
    %p604 = scmp.ne.s32.totalorder %s590, %s591
    %p605 = scmp.eq.s32.totalorder %s38, 1
    %p606 = por %p604, %p605
    %p608 = scmp.ne.s32.totalorder %s591, %s607
    %p609 = scmp.eq.s32.totalorder %s38, 0
    %p610 = por %p608, %p609
    %p611 = scmp.le.s32.totalorder 1, %s32
    %p612 = scmp.lt.s32.totalorder %s32, 3
    %p613 = pnand %p611, %p612
    %p614 = pneg %p613
    // Predicated region
    $region9: #{_lambda_.9} parent=5 // pred_check
      _
    $region10: #{_lambda_.9} parent=5 // pred_check_branch
      %616 = sbr.rel (%p613) target = $region12
    $region11: #{_lambda_.9} parent=5 // pred_region
      %s617 = ssub.s32 %s32, 1
      // Predicated region
      $region13: #{_lambda_.9} parent=11 // pred_check
        %p618 = pneg %p131
      $region14: #{_lambda_.9} parent=11 // pred_check_branch
        %620 = sbr.rel (%p618) target = $region16
      $region15: #{_lambda_.9} parent=11 // pred_region
        _
      $region16: #{_lambda_.9} parent=11 // pred_fallthru
        _
      // Predicated region
      $region17: #{_lambda_.9} parent=11 // pred_check
        %p621 = pneg %p152
      $region18: #{_lambda_.9} parent=11 // pred_check_branch
        %623 = sbr.rel (%p621) target = $region20
      $region19: #{_lambda_.9} parent=11 // pred_region
        _
      $region20: #{_lambda_.9} parent=11 // pred_fallthru
        _
      // Predicated region
      $region21: #{_lambda_.9} parent=11 // pred_check
        %p624 = pneg %p173
      $region22: #{_lambda_.9} parent=11 // pred_check_branch
        %626 = sbr.rel (%p624) target = $region24
      $region23: #{_lambda_.9} parent=11 // pred_region
        _
      $region24: #{_lambda_.9} parent=11 // pred_fallthru
        _
      // Predicated region
      $region25: #{_lambda_.9} parent=11 // pred_check
        %p627 = pneg %p194
      $region26: #{_lambda_.9} parent=11 // pred_check_branch
        %629 = sbr.rel (%p627) target = $region28
      $region27: #{_lambda_.9} parent=11 // pred_region
        _
      $region28: #{_lambda_.9} parent=11 // pred_fallthru
        _
      // Predicated region
      $region29: #{_lambda_.9} parent=11 // pred_check
        %p630 = pneg %p215
      $region30: #{_lambda_.9} parent=11 // pred_check_branch
        %632 = sbr.rel (%p630) target = $region32
      $region31: #{_lambda_.9} parent=11 // pred_region
        _
      $region32: #{_lambda_.9} parent=11 // pred_fallthru
        _
      // Predicated region
      $region33: #{_lambda_.9} parent=11 // pred_check
        %p633 = pneg %p236
      $region34: #{_lambda_.9} parent=11 // pred_check_branch
        %635 = sbr.rel (%p633) target = $region36
      $region35: #{_lambda_.9} parent=11 // pred_region
        _
      $region36: #{_lambda_.9} parent=11 // pred_fallthru
        _
      // Predicated region
      $region37: #{_lambda_.9} parent=11 // pred_check
        %p636 = pneg %p257
      $region38: #{_lambda_.9} parent=11 // pred_check_branch
        %638 = sbr.rel (%p636) target = $region40
      $region39: #{_lambda_.9} parent=11 // pred_region
        _
      $region40: #{_lambda_.9} parent=11 // pred_fallthru
        _
      // Predicated region
      $region41: #{_lambda_.9} parent=11 // pred_check
        %p639 = pneg %p278
      $region42: #{_lambda_.9} parent=11 // pred_check_branch
        %641 = sbr.rel (%p639) target = $region44
      $region43: #{_lambda_.9} parent=11 // pred_region
        _
      $region44: #{_lambda_.9} parent=11 // pred_fallthru
        _
      // Predicated region
      $region45: #{_lambda_.9} parent=11 // pred_check
        %p642 = pneg %p299
      $region46: #{_lambda_.9} parent=11 // pred_check_branch
        %644 = sbr.rel (%p642) target = $region48
      $region47: #{_lambda_.9} parent=11 // pred_region
        _
      $region48: #{_lambda_.9} parent=11 // pred_fallthru
        _
      // Predicated region
      $region49: #{_lambda_.9} parent=11 // pred_check
        %p645 = pneg %p320
      $region50: #{_lambda_.9} parent=11 // pred_check_branch
        %647 = sbr.rel (%p645) target = $region52
      $region51: #{_lambda_.9} parent=11 // pred_region
        _
      $region52: #{_lambda_.9} parent=11 // pred_fallthru
        _
      // Predicated region
      $region53: #{_lambda_.9} parent=11 // pred_check
        %p648 = pneg %p341
      $region54: #{_lambda_.9} parent=11 // pred_check_branch
        %650 = sbr.rel (%p648) target = $region56
      $region55: #{_lambda_.9} parent=11 // pred_region
        _
      $region56: #{_lambda_.9} parent=11 // pred_fallthru
        _
      // Predicated region
      $region57: #{_lambda_.9} parent=11 // pred_check
        %p651 = pneg %p362
      $region58: #{_lambda_.9} parent=11 // pred_check_branch
        %653 = sbr.rel (%p651) target = $region60
      $region59: #{_lambda_.9} parent=11 // pred_region
        _
      $region60: #{_lambda_.9} parent=11 // pred_fallthru
        _
      // Predicated region
      $region61: #{_lambda_.9} parent=11 // pred_check
        %p654 = pneg %p383
      $region62: #{_lambda_.9} parent=11 // pred_check_branch
        %656 = sbr.rel (%p654) target = $region64
      $region63: #{_lambda_.9} parent=11 // pred_region
        _
      $region64: #{_lambda_.9} parent=11 // pred_fallthru
        _
      // Predicated region
      $region65: #{_lambda_.9} parent=11 // pred_check
        %p657 = pneg %p404
      $region66: #{_lambda_.9} parent=11 // pred_check_branch
        %659 = sbr.rel (%p657) target = $region68
      $region67: #{_lambda_.9} parent=11 // pred_region
        _
      $region68: #{_lambda_.9} parent=11 // pred_fallthru
        _
      // Predicated region
      $region69: #{_lambda_.9} parent=11 // pred_check
        %p660 = pneg %p425
      $region70: #{_lambda_.9} parent=11 // pred_check_branch
        %662 = sbr.rel (%p660) target = $region72
      $region71: #{_lambda_.9} parent=11 // pred_region
        _
      $region72: #{_lambda_.9} parent=11 // pred_fallthru
        _
      // Predicated region
      $region73: #{_lambda_.9} parent=11 // pred_check
        %p663 = pneg %p446
      $region74: #{_lambda_.9} parent=11 // pred_check_branch
        %665 = sbr.rel (%p663) target = $region76
      $region75: #{_lambda_.9} parent=11 // pred_region
        _
      $region76: #{_lambda_.9} parent=11 // pred_fallthru
        _
      // Predicated region
      $region77: #{_lambda_.9} parent=11 // pred_check
        %p666 = pneg %p467
      $region78: #{_lambda_.9} parent=11 // pred_check_branch
        %668 = sbr.rel (%p666) target = $region80
      $region79: #{_lambda_.9} parent=11 // pred_region
        _
      $region80: #{_lambda_.9} parent=11 // pred_fallthru
        _
      // Predicated region
      $region81: #{_lambda_.9} parent=11 // pred_check
        %p669 = pneg %p488
      $region82: #{_lambda_.9} parent=11 // pred_check_branch
        %671 = sbr.rel (%p669) target = $region84
      $region83: #{_lambda_.9} parent=11 // pred_region
        _
      $region84: #{_lambda_.9} parent=11 // pred_fallthru
        _
      // Predicated region
      $region85: #{_lambda_.9} parent=11 // pred_check
        %p672 = pneg %p509
      $region86: #{_lambda_.9} parent=11 // pred_check_branch
        %674 = sbr.rel (%p672) target = $region88
      $region87: #{_lambda_.9} parent=11 // pred_region
        _
      $region88: #{_lambda_.9} parent=11 // pred_fallthru
        _
      // Predicated region
      $region89: #{_lambda_.9} parent=11 // pred_check
        %p675 = pneg %p530
      $region90: #{_lambda_.9} parent=11 // pred_check_branch
        %677 = sbr.rel (%p675) target = $region92
      $region91: #{_lambda_.9} parent=11 // pred_region
        _
      $region92: #{_lambda_.9} parent=11 // pred_fallthru
        _
      // Predicated region
      $region93: #{_lambda_.9} parent=11 // pred_check
        %p678 = pneg %p551
      $region94: #{_lambda_.9} parent=11 // pred_check_branch
        %680 = sbr.rel (%p678) target = $region96
      $region95: #{_lambda_.9} parent=11 // pred_region
        _
      $region96: #{_lambda_.9} parent=11 // pred_fallthru
        _
    $region12: #{_lambda_.9} parent=5 // pred_fallthru
      _
    %p681 = scmp.lt.s32.totalorder %s32, 2
    // Predicated region
    $region97: #{_lambda_.9} parent=5 // pred_check
      %p682 = pneg %p681
    $region98: #{_lambda_.9} parent=5 // pred_check_branch
      %684 = sbr.rel (%p682) target = $region100
    $region99: #{_lambda_.9} parent=5 // pred_region
      // Predicated region
      $region101: #{_lambda_.9} parent=99 // pred_check
        %p685 = pneg %p52
      $region102: #{_lambda_.9} parent=99 // pred_check_branch
        %687 = sbr.rel (%p685) target = $region104
      $region103: #{_lambda_.9} parent=99 // pred_region
        %p688 = scmp.lt.s32.totalorder %s32, 1
        %s689 = scalar_select %p688, %s32, 1
        %s690 = smul.addr %s689, 8
        %s691 = scalar_lea.vmem %s0, %s690
      $region104: #{_lambda_.9} parent=99 // pred_fallthru
        _
      // Predicated region
      $region105: #{_lambda_.9} parent=99 // pred_check
        %p692 = pneg %p78
      $region106: #{_lambda_.9} parent=99 // pred_check_branch
        %694 = sbr.rel (%p692) target = $region108
      $region107: #{_lambda_.9} parent=99 // pred_region
        %p695 = scmp.lt.s32.totalorder %s32, 1
        %s696 = scalar_select %p695, %s32, 1
        %s697 = smul.addr %s696, 8
        %s698 = smul.addr %s697, 8
        %s699 = scalar_lea.vmem %s1, %s698
      $region108: #{_lambda_.9} parent=99 // pred_fallthru
        _
      // Predicated region
      $region109: #{_lambda_.9} parent=99 // pred_check
        %p700 = pneg %p104
      $region110: #{_lambda_.9} parent=99 // pred_check_branch
        %702 = sbr.rel (%p700) target = $region112
      $region111: #{_lambda_.9} parent=99 // pred_region
        %p703 = scmp.lt.s32.totalorder %s32, 1
        %s704 = scalar_select %p703, %s32, 1
        %s705 = smul.addr %s704, 8
        %s706 = smul.addr %s705, 8
        %s707 = scalar_lea.vmem %s2, %s706
      $region112: #{_lambda_.9} parent=99 // pred_fallthru
        _
    $region100: #{_lambda_.9} parent=5 // pred_fallthru
      _
    %p708 = scmp.le.s32.totalorder 1, %s32
    %p709 = scmp.lt.s32.totalorder %s32, 3
    %p710 = pnand %p708, %p709
    %p711 = pneg %p710
    // Predicated region
    $region113: #{_lambda_.9} parent=5 // pred_check
      _
    $region114: #{_lambda_.9} parent=5 // pred_check_branch
      %713 = sbr.rel (%p710) target = $region116
    $region115: #{_lambda_.9} parent=5 // pred_region
      %s714 = ssub.s32 %s32, 1
      %p715 = scmp.lt.s32.totalorder %s37, 1
      %s716 = scalar_select %p715, %s37, 1
      %s717 = smul.addr %s716, 8
      %s718 = scalar_lea.vmem %s0, %s717
      %p719 = pneg %p58
      %p720 = pneg %p55
      %p721 = scmp.lt.s32.totalorder %s37, 1
      %s722 = scalar_select %p721, %s37, 1
      %s723 = smul.addr %s722, 8
      %s724 = smul.addr %s723, 8
      %s725 = scalar_lea.vmem %s1, %s724
      %p726 = pneg %p84
      %p727 = pneg %p81
      %p728 = scmp.lt.s32.totalorder %s37, 1
      %s729 = scalar_select %p728, %s37, 1
      %s730 = smul.addr %s729, 8
      %s731 = smul.addr %s730, 8
      %s732 = scalar_lea.vmem %s2, %s731
      %p733 = pneg %p110
      %p734 = pneg %p107
      %p735 = pneg %p131
      %p736 = pneg %p128
      %p737 = pneg %p152
      %p738 = pneg %p149
      %p739 = pneg %p173
      %p740 = pneg %p170
      %p741 = pneg %p194
      %p742 = pneg %p191
      %p743 = pneg %p215
      %p744 = pneg %p212
      %p745 = pneg %p236
      %p746 = pneg %p233
      %p747 = pneg %p257
      %p748 = pneg %p254
      %p749 = pneg %p278
      %p750 = pneg %p275
      %p751 = pneg %p299
      %p752 = pneg %p296
      %p753 = pneg %p320
      %p754 = pneg %p317
      %p755 = pneg %p341
      %p756 = pneg %p338
      %p757 = pneg %p362
      %p758 = pneg %p359
      %p759 = pneg %p383
      %p760 = pneg %p380
      %p761 = pneg %p404
      %p762 = pneg %p401
      %p763 = pneg %p425
      %p764 = pneg %p422
      %p765 = pneg %p446
      %p766 = pneg %p443
      %p767 = pneg %p467
      %p768 = pneg %p464
      %p769 = pneg %p488
      %p770 = pneg %p485
      %p771 = pneg %p509
      %p772 = pneg %p506
      %p773 = pneg %p530
      %p774 = pneg %p527
      %p775 = pneg %p551
      %p776 = pneg %p548
      %p777 = pneg %p577
      %p778 = pneg %p574
      %p779 = scmp.lt.s32.totalorder %s37, 1
      %s780 = scalar_select %p779, %s37, 1
      %s781 = smul.addr %s780, 8
      %s782 = scalar_lea.vmem %s24, %s781
      %p783 = pneg %p603
      %p784 = pneg %p600
      %p785 = scmp.lt.s32.totalorder %s37, 1
      %s786 = scalar_select %p785, %s37, 1
      %s787 = smul.addr %s786, 8
      %s788 = smul.addr %s787, 8
      %s789 = scalar_lea.vmem %s25, %s788
      %p790 = scmp.lt.s32.totalorder %s37, 1
      %s791 = scalar_select %p790, %s37, 1
      %s792 = smul.addr %s791, 8
      %s793 = scalar_lea.vmem %s0, %s792
      %p794 = scmp.lt.s32.totalorder %s37, 1
      %s795 = scalar_select %p794, %s37, 1
      %s796 = smul.addr %s795, 8
      %s797 = smul.addr %s796, 8
      %s798 = scalar_lea.vmem %s1, %s797
      %p799 = scmp.lt.s32.totalorder %s37, 1
      %s800 = scalar_select %p799, %s37, 1
      %s801 = smul.addr %s800, 8
      %s802 = smul.addr %s801, 8
      %s803 = scalar_lea.vmem %s2, %s802
      %p804 = scmp.lt.s32.totalorder %s37, 1
      %s805 = scalar_select %p804, %s37, 1
      %s806 = smul.addr %s805, 8
      %s807 = scalar_lea.vmem %s24, %s806
      %p808 = scmp.lt.s32.totalorder %s37, 1
      %s809 = scalar_select %p808, %s37, 1
      %s810 = smul.addr %s809, 8
      %s811 = smul.addr %s810, 8
      %s812 = scalar_lea.vmem %s25, %s811
      %v813 = vld [vmem:[%s793] sm:$0xff]
      %v814 = vld [vmem:[%s8] sm:$0xff]
      %v815 = vld [vmem:[%s8 + $0x8] sm:$0xff]
      %v816 = vld [vmem:[%s8 + $0x10] sm:$0xff]
      %v817 = vld [vmem:[%s8 + $0x18] sm:$0xff]
      %v818 = vld [vmem:[%s8 + $0x20] sm:$0xff]
      %v819 = vld [vmem:[%s8 + $0x28] sm:$0xff]
      %v820 = vld [vmem:[%s8 + $0x30] sm:$0xff]
      %v821 = vld [vmem:[%s8 + $0x38] sm:$0xff]
      %v822 = vld [vmem:[%s8 + $0x40] sm:$0xff]
      %v823 = vld [vmem:[%s9] sm:$0x1]
      %v825 = vlaneseq
      %v826 = vshrl.u32 %v825, 7
      %v827 = vsub.s32 0, %v826
      %v828 = vrot.slane %v823, %v827
      %vm830 = vcmask 588800
      %v832 = vsel %vm830, %v813, 0
      %834 = vmatprep.subr.mxu0 0.0
      %835 = vmatpush1.msra.mxu0 %v814
      %836 = vmatprep.subr.mxu0 0.0
      %837 = vmatpush1.msra.mxu0 %v815
      %838 = vmatprep.subr.mxu0 0.0
      %839 = vmatpush1.msra.mxu0 %v816
      %840 = vmatprep.subr.mxu0 0.0
      %841 = vmatpush1.msra.mxu0 %v817
      %842 = vmatprep.subr.mxu0 0.0
      %843 = vmatpush1.msra.mxu0 %v818
      %844 = vmatprep.subr.mxu0 0.0
      %845 = vmatpush1.msra.mxu0 %v819
      %846 = vmatprep.subr.mxu0 0.0
      %847 = vmatpush1.msra.mxu0 %v820
      %848 = vmatprep.subr.mxu0 0.0
      %849 = vmatpush1.msra.mxu0 %v821
      %850 = vmatprep.subr.mxu0 0.0
      %851 = vmatpush1.msra.mxu0 %v822
      %852 = vmatprep.subr.mxu0 0.0
      %853 = vmatpush1.msra.mxu0 0.0
      %854 = vmatprep.subr.mxu0 0.0
      %855 = vmatpush1.msra.mxu0 0.0
      %856 = vmatprep.subr.mxu0 0.0
      %857 = vmatpush1.msra.mxu0 0.0
      %858 = vmatprep.subr.mxu0 0.0
      %859 = vmatpush1.msra.mxu0 0.0
      %860 = vmatprep.subr.mxu0 0.0
      %861 = vmatpush1.msra.mxu0 0.0
      %862 = vmatprep.subr.mxu0 0.0
      %863 = vmatpush1.msra.mxu0 0.0
      %864 = vmatprep.subr.mxu0 0.0
      %865 = vmatpush1.msra.mxu0 0.0
      %866 = vmatprep.subr.mxu0 0.0
      %867 = vmatpush1.msra.mxu0 0.0
      %868 = vmatprep.subr.mxu0 0.0
      %869 = vmatpush1.msra.mxu0 0.0
      %870 = vmatprep.subr.mxu0 0.0
      %871 = vmatpush1.msra.mxu0 0.0
      %872 = vmatprep.subr.mxu0 0.0
      %873 = vmatpush1.msra.mxu0 0.0
      %874 = vmatprep.subr.mxu0 0.0
      %875 = vmatpush1.msra.mxu0 0.0
      %876 = vmatprep.subr.mxu0 0.0
      %877 = vmatpush1.msra.mxu0 0.0
      %878 = vmatprep.subr.mxu0 0.0
      %879 = vmatpush1.msra.mxu0 0.0
      %880 = vmatprep.subr.mxu0 0.0
      %881 = vmatpush1.msra.mxu0 0.0
      %882 = vmatprep.subr.mxu0 0.0
      %883 = vmatpush1.msra.mxu0 0.0
      %884 = vmatprep.subr.mxu0 0.0
      %885 = vmatpush1.msra.mxu0 0.0
      %886 = vmatprep.subr.mxu0 0.0
      %887 = vmatpush1.msra.mxu0 0.0
      %888 = vmatprep.subr.mxu0 0.0
      %889 = vmatpush1.msra.mxu0 0.0
      %890 = vmatprep.subr.mxu0 0.0
      %891 = vmatpush1.msra.mxu0 0.0
      %892 = vmatprep.subr.mxu0 0.0
      %893 = vmatpush1.msra.mxu0 0.0
      %894 = vmatprep.subr.mxu0 0.0
      %895 = vmatpush1.msra.mxu0 0.0
      %896 = vmatprep.subr.mxu0 0.0
      %897 = vmatpush1.msra.mxu0 0.0
      %898 = vmatprep.mubr.f32.mxu0 0.0
      %899 = vmatmul.mubr.f32.gmra.mrb[0].mxu0 %v832
      %v900 = vpop.f32.mrb[0].mxu0
      %v901 = vadd.f32 %v828, %v900
      %v902 = vpop.f32.mrb[0].mxu0
      %903 = vdwg.mxu0
      %v904 = vxor.u32 %v901, 2147483648
      %v905 = vmul.f32 %v904, 1.442695
      %v906 = vpow.pop %v905
      %v907 = vadd.f32 %v906, 1.0
      %v908 = vrcp.pop %v907
      %v909 = vmul.f32 1.0, %v908
      %v910 = vmul.f32 %v901, %v909
      %v911 = vld [vmem:[%s798] sm:$0xff]
      %v912 = vld [vmem:[%s798 + $0x8] sm:$0xff]
      %v913 = vld [vmem:[%s798 + $0x10] sm:$0xff]
      %v914 = vld [vmem:[%s798 + $0x18] sm:$0xff]
      %v915 = vld [vmem:[%s798 + $0x20] sm:$0xff]
      %v916 = vld [vmem:[%s798 + $0x28] sm:$0xff]
      %v917 = vld [vmem:[%s798 + $0x30] sm:$0xff]
      %v918 = vld [vmem:[%s798 + $0x38] sm:$0xff]
      %v919 = vld [vmem:[%s10] sm:$0xff]
      %v920 = vld [vmem:[%s10 + $0x8] sm:$0xff]
      %v921 = vld [vmem:[%s10 + $0x10] sm:$0xff]
      %v922 = vld [vmem:[%s10 + $0x18] sm:$0xff]
      %v923 = vld [vmem:[%s10 + $0x20] sm:$0xff]
      %v924 = vld [vmem:[%s10 + $0x28] sm:$0xff]
      %v925 = vld [vmem:[%s10 + $0x30] sm:$0xff]
      %v926 = vld [vmem:[%s10 + $0x38] sm:$0xff]
      %v927 = vld [vmem:[%s10 + $0x40] sm:$0xff]
      %v928 = vld [vmem:[%s11] sm:$0x1]
      %v930 = vlaneseq
      %v931 = vshrl.u32 %v930, 7
      %v932 = vsub.s32 0, %v931
      %v933 = vrot.slane %v928, %v932
      %v936 = vsel %vm830, %v911, 0
      %v939 = vsel %vm830, %v912, 0
      %v942 = vsel %vm830, %v913, 0
      %v945 = vsel %vm830, %v914, 0
      %v948 = vsel %vm830, %v915, 0
      %v951 = vsel %vm830, %v916, 0
      %v954 = vsel %vm830, %v917, 0
      %v957 = vsel %vm830, %v918, 0
      %959 = vmatprep.subr.mxu0 0.0
      %960 = vmatpush1.msra.mxu0 %v919
      %961 = vmatprep.subr.mxu0 0.0
      %962 = vmatpush1.msra.mxu0 %v920
      %963 = vmatprep.subr.mxu0 0.0
      %964 = vmatpush1.msra.mxu0 %v921
      %965 = vmatprep.subr.mxu0 0.0
      %966 = vmatpush1.msra.mxu0 %v922
      %967 = vmatprep.subr.mxu0 0.0
      %968 = vmatpush1.msra.mxu0 %v923
      %969 = vmatprep.subr.mxu0 0.0
      %970 = vmatpush1.msra.mxu0 %v924
      %971 = vmatprep.subr.mxu0 0.0
      %972 = vmatpush1.msra.mxu0 %v925
      %973 = vmatprep.subr.mxu0 0.0
      %974 = vmatpush1.msra.mxu0 %v926
      %975 = vmatprep.subr.mxu0 0.0
      %976 = vmatpush1.msra.mxu0 %v927
      %977 = vmatprep.subr.mxu0 0.0
      %978 = vmatpush1.msra.mxu0 0.0
      %979 = vmatprep.subr.mxu0 0.0
      %980 = vmatpush1.msra.mxu0 0.0
      %981 = vmatprep.subr.mxu0 0.0
      %982 = vmatpush1.msra.mxu0 0.0
      %983 = vmatprep.subr.mxu0 0.0
      %984 = vmatpush1.msra.mxu0 0.0
      %985 = vmatprep.subr.mxu0 0.0
      %986 = vmatpush1.msra.mxu0 0.0
      %987 = vmatprep.subr.mxu0 0.0
      %988 = vmatpush1.msra.mxu0 0.0
      %989 = vmatprep.subr.mxu0 0.0
      %990 = vmatpush1.msra.mxu0 0.0
      %991 = vmatprep.subr.mxu0 0.0
      %992 = vmatpush1.msra.mxu0 0.0
      %993 = vmatprep.subr.mxu0 0.0
      %994 = vmatpush1.msra.mxu0 0.0
      %995 = vmatprep.subr.mxu0 0.0
      %996 = vmatpush1.msra.mxu0 0.0
      %997 = vmatprep.subr.mxu0 0.0
      %998 = vmatpush1.msra.mxu0 0.0
      %999 = vmatprep.subr.mxu0 0.0
      %1000 = vmatpush1.msra.mxu0 0.0
      %1001 = vmatprep.subr.mxu0 0.0
      %1002 = vmatpush1.msra.mxu0 0.0
      %1003 = vmatprep.subr.mxu0 0.0
      %1004 = vmatpush1.msra.mxu0 0.0
      %1005 = vmatprep.subr.mxu0 0.0
      %1006 = vmatpush1.msra.mxu0 0.0
      %1007 = vmatprep.subr.mxu0 0.0
      %1008 = vmatpush1.msra.mxu0 0.0
      %1009 = vmatprep.subr.mxu0 0.0
      %1010 = vmatpush1.msra.mxu0 0.0
      %1011 = vmatprep.subr.mxu0 0.0
      %1012 = vmatpush1.msra.mxu0 0.0
      %1013 = vmatprep.subr.mxu0 0.0
      %1014 = vmatpush1.msra.mxu0 0.0
      %1015 = vmatprep.subr.mxu0 0.0
      %1016 = vmatpush1.msra.mxu0 0.0
      %1017 = vmatprep.subr.mxu0 0.0
      %1018 = vmatpush1.msra.mxu0 0.0
      %1019 = vmatprep.subr.mxu0 0.0
      %1020 = vmatpush1.msra.mxu0 0.0
      %1021 = vmatprep.subr.mxu0 0.0
      %1022 = vmatpush1.msra.mxu0 0.0
      %1023 = vmatprep.mubr.f32.mxu0 0.0
      %1024 = vmatmul.mubr.f32.gmra.mrb[0].mxu0 %v936
      %v1025 = vpop.f32.mrb[0].mxu0
      %v1026 = vadd.f32 %v933, %v1025
      %v1027 = vpop.f32.mrb[0].mxu0
      %1028 = vmatprep.mubr.f32.mxu0 0.0
      %1029 = vmatmul.mubr.f32.gmra.mrb[0].mxu0 %v939
      %v1030 = vpop.f32.mrb[0].mxu0
      %v1031 = vadd.f32 %v933, %v1030
      %v1032 = vpop.f32.mrb[0].mxu0
      %1033 = vmatprep.mubr.f32.mxu0 0.0
      %1034 = vmatmul.mubr.f32.gmra.mrb[0].mxu0 %v942
      %v1035 = vpop.f32.mrb[0].mxu0
      %v1036 = vadd.f32 %v933, %v1035
      %v1037 = vpop.f32.mrb[0].mxu0
      %1038 = vmatprep.mubr.f32.mxu0 0.0
      %1039 = vmatmul.mubr.f32.gmra.mrb[0].mxu0 %v945
      %v1040 = vpop.f32.mrb[0].mxu0
      %v1041 = vadd.f32 %v933, %v1040
      %v1042 = vpop.f32.mrb[0].mxu0
      %1043 = vmatprep.mubr.f32.mxu0 0.0
      %1044 = vmatmul.mubr.f32.gmra.mrb[0].mxu0 %v948
      %v1045 = vpop.f32.mrb[0].mxu0
      %v1046 = vadd.f32 %v933, %v1045
      %v1047 = vpop.f32.mrb[0].mxu0
      %1048 = vmatprep.mubr.f32.mxu0 0.0
      %1049 = vmatmul.mubr.f32.gmra.mrb[0].mxu0 %v951
      %v1050 = vpop.f32.mrb[0].mxu0
      %v1051 = vadd.f32 %v933, %v1050
      %v1052 = vpop.f32.mrb[0].mxu0
      %1053 = vmatprep.mubr.f32.mxu0 0.0
      %1054 = vmatmul.mubr.f32.gmra.mrb[0].mxu0 %v954
      %v1055 = vpop.f32.mrb[0].mxu0
      %v1056 = vadd.f32 %v933, %v1055
      %v1057 = vpop.f32.mrb[0].mxu0
      %1058 = vmatprep.mubr.f32.mxu0 0.0
      %1059 = vmatmul.mubr.f32.gmra.mrb[0].mxu0 %v957
      %v1060 = vpop.f32.mrb[0].mxu0
      %v1061 = vadd.f32 %v933, %v1060
      %v1062 = vpop.f32.mrb[0].mxu0
      %1063 = vdwg.mxu0
      %v1064 = vxor.u32 %v1026, 2147483648
      %v1065 = vxor.u32 %v1031, 2147483648
      %v1066 = vxor.u32 %v1036, 2147483648
      %v1067 = vxor.u32 %v1041, 2147483648
      %v1068 = vxor.u32 %v1046, 2147483648
      %v1069 = vxor.u32 %v1051, 2147483648
      %v1070 = vxor.u32 %v1056, 2147483648
      %v1071 = vxor.u32 %v1061, 2147483648
      %v1072 = vmul.f32 %v1064, 1.442695
      %v1073 = vpow.pop %v1072
      %v1074 = vmul.f32 %v1065, 1.442695
      %v1075 = vpow.pop %v1074
      %v1076 = vmul.f32 %v1066, 1.442695
      %v1077 = vpow.pop %v1076
      %v1078 = vmul.f32 %v1067, 1.442695
      %v1079 = vpow.pop %v1078
      %v1080 = vmul.f32 %v1068, 1.442695
      %v1081 = vpow.pop %v1080
      %v1082 = vmul.f32 %v1069, 1.442695
      %v1083 = vpow.pop %v1082
      %v1084 = vmul.f32 %v1070, 1.442695
      %v1085 = vpow.pop %v1084
      %v1086 = vmul.f32 %v1071, 1.442695
      %v1087 = vpow.pop %v1086
      %v1088 = vadd.f32 %v1073, 1.0
      %v1089 = vadd.f32 %v1075, 1.0
      %v1090 = vadd.f32 %v1077, 1.0
      %v1091 = vadd.f32 %v1079, 1.0
      %v1092 = vadd.f32 %v1081, 1.0
      %v1093 = vadd.f32 %v1083, 1.0
      %v1094 = vadd.f32 %v1085, 1.0
      %v1095 = vadd.f32 %v1087, 1.0
      %v1096 = vrcp.pop %v1088
      %v1097 = vmul.f32 1.0, %v1096
      %v1098 = vrcp.pop %v1089
      %v1099 = vmul.f32 1.0, %v1098
      %v1100 = vrcp.pop %v1090
      %v1101 = vmul.f32 1.0, %v1100
      %v1102 = vrcp.pop %v1091
      %v1103 = vmul.f32 1.0, %v1102
      %v1104 = vrcp.pop %v1092
      %v1105 = vmul.f32 1.0, %v1104
      %v1106 = vrcp.pop %v1093
      %v1107 = vmul.f32 1.0, %v1106
      %v1108 = vrcp.pop %v1094
      %v1109 = vmul.f32 1.0, %v1108
      %v1110 = vrcp.pop %v1095
      %v1111 = vmul.f32 1.0, %v1110
      %v1112 = vmul.f32 %v1026, %v1097
      %v1113 = vmul.f32 %v1031, %v1099
      %v1114 = vmul.f32 %v1036, %v1101
      %v1115 = vmul.f32 %v1041, %v1103
      %v1116 = vmul.f32 %v1046, %v1105
      %v1117 = vmul.f32 %v1051, %v1107
      %v1118 = vmul.f32 %v1056, %v1109
      %v1119 = vmul.f32 %v1061, %v1111
      %v1120 = vld [vmem:[%s3] sm:$0xff]
      %v1121 = vld [vmem:[%s3 + $0x8] sm:$0xff]
      %v1122 = vld [vmem:[%s3 + $0x10] sm:$0xff]
      %v1123 = vld [vmem:[%s3 + $0x18] sm:$0xff]
      %v1124 = vld [vmem:[%s3 + $0x20] sm:$0xff]
      %v1125 = vld [vmem:[%s3 + $0x28] sm:$0xff]
      %v1126 = vld [vmem:[%s3 + $0x30] sm:$0xff]
      %v1127 = vld [vmem:[%s3 + $0x38] sm:$0xff]
      %v1128 = vld [vmem:[%s4] sm:$0xff]
      %v1129 = vld [vmem:[%s4 + $0x8] sm:$0xff]
      %v1130 = vld [vmem:[%s4 + $0x10] sm:$0xff]
      %v1131 = vld [vmem:[%s4 + $0x18] sm:$0xff]
      %v1132 = vld [vmem:[%s4 + $0x20] sm:$0xff]
      %v1133 = vld [vmem:[%s4 + $0x28] sm:$0xff]
      %v1134 = vld [vmem:[%s4 + $0x30] sm:$0xff]
      %v1135 = vld [vmem:[%s4 + $0x38] sm:$0xff]
      %v1136 = vld [vmem:[%s12] sm:$0xff]
      %v1137 = vld [vmem:[%s12 + $0x8] sm:$0xff]
      %v1138 = vld [vmem:[%s12 + $0x10] sm:$0xff]
      %v1139 = vld [vmem:[%s12 + $0x18] sm:$0xff]
      %v1140 = vld [vmem:[%s12 + $0x20] sm:$0xff]
      %v1141 = vld [vmem:[%s12 + $0x28] sm:$0xff]
      %v1142 = vld [vmem:[%s12 + $0x30] sm:$0xff]
      %v1143 = vld [vmem:[%s12 + $0x38] sm:$0xff]
      %v1144 = vld [vmem:[%s12 + $0x40] sm:$0xff]
      %v1145 = vld [vmem:[%s12 + $0x48] sm:$0xff]
      %v1146 = vld [vmem:[%s12 + $0x50] sm:$0xff]
      %v1147 = vld [vmem:[%s12 + $0x58] sm:$0xff]
      %v1148 = vld [vmem:[%s12 + $0x60] sm:$0xff]
      %v1149 = vld [vmem:[%s12 + $0x68] sm:$0xff]
      %v1150 = vld [vmem:[%s12 + $0x70] sm:$0xff]
      %v1151 = vld [vmem:[%s12 + $0x78] sm:$0xff]
      %v1152 = vld [vmem:[%s12 + $0x80] sm:$0xff]
      %v1153 = vld [vmem:[%s12 + $0x88] sm:$0xff]
      %v1154 = vld [vmem:[%s12 + $0x90] sm:$0xff]
      %v1155 = vld [vmem:[%s12 + $0x98] sm:$0xff]
      %vm1156 = vcmask 392192
      %v1158 = vsel %vm1156, %v910, 0
      %1160 = vmatprep.subr.mxu0 0.0
      %1161 = vmatpush1.msra.mxu0 %v1136
      %1162 = vmatprep.subr.mxu0 0.0
      %1163 = vmatpush1.msra.mxu0 %v1137
      %1164 = vmatprep.subr.mxu0 0.0
      %1165 = vmatpush1.msra.mxu0 %v1138
      %1166 = vmatprep.subr.mxu0 0.0
      %1167 = vmatpush1.msra.mxu0 %v1139
      %1168 = vmatprep.subr.mxu0 0.0
      %1169 = vmatpush1.msra.mxu0 %v1140
      %1170 = vmatprep.subr.mxu0 0.0
      %1171 = vmatpush1.msra.mxu0 %v1141
      %1172 = vmatprep.subr.mxu0 0.0
      %1173 = vmatpush1.msra.mxu0 0.0
      %1174 = vmatprep.subr.mxu0 0.0
      %1175 = vmatpush1.msra.mxu0 0.0
      %1176 = vmatprep.subr.mxu0 0.0
      %1177 = vmatpush1.msra.mxu0 0.0
      %1178 = vmatprep.subr.mxu0 0.0
      %1179 = vmatpush1.msra.mxu0 0.0
      %1180 = vmatprep.subr.mxu0 0.0
      %1181 = vmatpush1.msra.mxu0 0.0
      %1182 = vmatprep.subr.mxu0 0.0
      %1183 = vmatpush1.msra.mxu0 0.0
      %1184 = vmatprep.subr.mxu0 0.0
      %1185 = vmatpush1.msra.mxu0 0.0
      %1186 = vmatprep.subr.mxu0 0.0
      %1187 = vmatpush1.msra.mxu0 0.0
      %1188 = vmatprep.subr.mxu0 0.0
      %1189 = vmatpush1.msra.mxu0 0.0
      %1190 = vmatprep.subr.mxu0 0.0
      %1191 = vmatpush1.msra.mxu0 0.0
      %1192 = vmatprep.subr.mxu0 0.0
      %1193 = vmatpush1.msra.mxu0 0.0
      %1194 = vmatprep.subr.mxu0 0.0
      %1195 = vmatpush1.msra.mxu0 0.0
      %1196 = vmatprep.subr.mxu0 0.0
      %1197 = vmatpush1.msra.mxu0 0.0
      %1198 = vmatprep.subr.mxu0 0.0
      %1199 = vmatpush1.msra.mxu0 0.0
      %1200 = vmatprep.subr.mxu0 0.0
      %1201 = vmatpush1.msra.mxu0 0.0
      %1202 = vmatprep.subr.mxu0 0.0
      %1203 = vmatpush1.msra.mxu0 0.0
      %1204 = vmatprep.subr.mxu0 0.0
      %1205 = vmatpush1.msra.mxu0 0.0
      %1206 = vmatprep.subr.mxu0 0.0
      %1207 = vmatpush1.msra.mxu0 0.0
      %1208 = vmatprep.subr.mxu0 0.0
      %1209 = vmatpush1.msra.mxu0 0.0
      %1210 = vmatprep.subr.mxu0 0.0
      %1211 = vmatpush1.msra.mxu0 0.0
      %1212 = vmatprep.subr.mxu0 0.0
      %1213 = vmatpush1.msra.mxu0 0.0
      %1214 = vmatprep.subr.mxu0 0.0
      %1215 = vmatpush1.msra.mxu0 0.0
      %1216 = vmatprep.subr.mxu0 0.0
      %1217 = vmatpush1.msra.mxu0 0.0
      %1218 = vmatprep.subr.mxu0 0.0
      %1219 = vmatpush1.msra.mxu0 0.0
      %1220 = vmatprep.subr.mxu0 0.0
      %1221 = vmatpush1.msra.mxu0 0.0
      %1222 = vmatprep.subr.mxu0 0.0
      %1223 = vmatpush1.msra.mxu0 0.0
      %1224 = vmatprep.mubr.f32.mxu0 0.0
      %1225 = vmatmul.mubr.f32.gmra.mrb[0].mxu0 %v1158
      %v1226 = vpop.f32.mrb[0].mxu0
      %v1227 = vadd.f32 0.0, %v1226
      %v1228 = vpop.f32.mrb[0].mxu0
      %1229 = vdwg.mxu0
      %1230 = vmatprep.subr.mxu0 0.0
      %1231 = vmatpush1.msra.mxu0 %v1142
      %1232 = vmatprep.subr.mxu0 0.0
      %1233 = vmatpush1.msra.mxu0 %v1143
      %1234 = vmatprep.subr.mxu0 0.0
      %1235 = vmatpush1.msra.mxu0 %v1144
      %1236 = vmatprep.subr.mxu0 0.0
      %1237 = vmatpush1.msra.mxu0 %v1145
      %1238 = vmatprep.subr.mxu0 0.0
      %1239 = vmatpush1.msra.mxu0 %v1146
      %1240 = vmatprep.subr.mxu0 0.0
      %1241 = vmatpush1.msra.mxu0 %v1147
      %1242 = vmatprep.subr.mxu0 0.0
      %1243 = vmatpush1.msra.mxu0 0.0
      %1244 = vmatprep.subr.mxu0 0.0
      %1245 = vmatpush1.msra.mxu0 0.0
      %1246 = vmatprep.subr.mxu0 0.0
      %1247 = vmatpush1.msra.mxu0 0.0
      %1248 = vmatprep.subr.mxu0 0.0
      %1249 = vmatpush1.msra.mxu0 0.0
      %1250 = vmatprep.subr.mxu0 0.0
      %1251 = vmatpush1.msra.mxu0 0.0
      %1252 = vmatprep.subr.mxu0 0.0
      %1253 = vmatpush1.msra.mxu0 0.0
      %1254 = vmatprep.subr.mxu0 0.0
      %1255 = vmatpush1.msra.mxu0 0.0
      %1256 = vmatprep.subr.mxu0 0.0
      %1257 = vmatpush1.msra.mxu0 0.0
      %1258 = vmatprep.subr.mxu0 0.0
      %1259 = vmatpush1.msra.mxu0 0.0
      %1260 = vmatprep.subr.mxu0 0.0
      %1261 = vmatpush1.msra.mxu0 0.0
      %1262 = vmatprep.subr.mxu0 0.0
      %1263 = vmatpush1.msra.mxu0 0.0
      %1264 = vmatprep.subr.mxu0 0.0
      %1265 = vmatpush1.msra.mxu0 0.0
      %1266 = vmatprep.subr.mxu0 0.0
      %1267 = vmatpush1.msra.mxu0 0.0
      %1268 = vmatprep.subr.mxu0 0.0
      %1269 = vmatpush1.msra.mxu0 0.0
      %1270 = vmatprep.subr.mxu0 0.0
      %1271 = vmatpush1.msra.mxu0 0.0
      %1272 = vmatprep.subr.mxu0 0.0
      %1273 = vmatpush1.msra.mxu0 0.0
      %1274 = vmatprep.subr.mxu0 0.0
      %1275 = vmatpush1.msra.mxu0 0.0
      %1276 = vmatprep.subr.mxu0 0.0
      %1277 = vmatpush1.msra.mxu0 0.0
      %1278 = vmatprep.subr.mxu0 0.0
      %1279 = vmatpush1.msra.mxu0 0.0
      %1280 = vmatprep.subr.mxu0 0.0
      %1281 = vmatpush1.msra.mxu0 0.0
      %1282 = vmatprep.subr.mxu0 0.0
      %1283 = vmatpush1.msra.mxu0 0.0
      %1284 = vmatprep.subr.mxu0 0.0
      %1285 = vmatpush1.msra.mxu0 0.0
      %1286 = vmatprep.subr.mxu0 0.0
      %1287 = vmatpush1.msra.mxu0 0.0
      %1288 = vmatprep.subr.mxu0 0.0
      %1289 = vmatpush1.msra.mxu0 0.0
      %1290 = vmatprep.subr.mxu0 0.0
      %1291 = vmatpush1.msra.mxu0 0.0
      %1292 = vmatprep.subr.mxu0 0.0
      %1293 = vmatpush1.msra.mxu0 0.0
      %1294 = vmatprep.mubr.f32.mxu0 0.0
      %1295 = vmatmul.mubr.f32.gmra.mrb[0].mxu0 %v1158
      %v1296 = vpop.f32.mrb[0].mxu0
      %v1297 = vadd.f32 0.0, %v1296
      %v1298 = vpop.f32.mrb[0].mxu0
      %1299 = vdwg.mxu0
      %vm1300 = vcmask 64512
      %v1302 = vsel %vm1300, %v1128, 0
      %v1305 = vsel %vm1300, %v1129, 0
      %v1308 = vsel %vm1300, %v1130, 0
      %v1311 = vsel %vm1300, %v1131, 0
      %v1314 = vsel %vm1300, %v1132, 0
      %v1317 = vsel %vm1300, %v1133, 0
      %v1320 = vsel %vm1300, %v1134, 0
      %v1323 = vsel %vm1300, %v1135, 0
      %1325 = vmatprep.subr.mxu0 0.0
      %1326 = vmatpush1.msra.mxu0 %v1297
      %1327 = vmatprep.subr.mxu0 0.0
      %1328 = vmatpush1.msra.mxu0 0.0
      %1329 = vmatprep.subr.mxu0 0.0
      %1330 = vmatpush1.msra.mxu0 0.0
      %1331 = vmatprep.subr.mxu0 0.0
      %1332 = vmatpush1.msra.mxu0 0.0
      %1333 = vmatprep.subr.mxu0 0.0
      %1334 = vmatpush1.msra.mxu0 0.0
      %1335 = vmatprep.subr.mxu0 0.0
      %1336 = vmatpush1.msra.mxu0 0.0
      %1337 = vmatprep.subr.mxu0 0.0
      %1338 = vmatpush1.msra.mxu0 0.0
      %1339 = vmatprep.subr.mxu0 0.0
      %1340 = vmatpush1.msra.mxu0 0.0
      %1341 = vmatprep.subr.mxu0 0.0
      %1342 = vmatpush1.msra.mxu0 0.0
      %1343 = vmatprep.subr.mxu0 0.0
      %1344 = vmatpush1.msra.mxu0 0.0
      %1345 = vmatprep.subr.mxu0 0.0
      %1346 = vmatpush1.msra.mxu0 0.0
      %1347 = vmatprep.subr.mxu0 0.0
      %1348 = vmatpush1.msra.mxu0 0.0
      %1349 = vmatprep.subr.mxu0 0.0
      %1350 = vmatpush1.msra.mxu0 0.0
      %1351 = vmatprep.subr.mxu0 0.0
      %1352 = vmatpush1.msra.mxu0 0.0
      %1353 = vmatprep.subr.mxu0 0.0
      %1354 = vmatpush1.msra.mxu0 0.0
      %1355 = vmatprep.subr.mxu0 0.0
      %1356 = vmatpush1.msra.mxu0 0.0
      %1357 = vmatprep.subr.mxu0 0.0
      %1358 = vmatpush1.msra.mxu0 0.0
      %1359 = vmatprep.subr.mxu0 0.0
      %1360 = vmatpush1.msra.mxu0 0.0
      %1361 = vmatprep.subr.mxu0 0.0
      %1362 = vmatpush1.msra.mxu0 0.0
      %1363 = vmatprep.subr.mxu0 0.0
      %1364 = vmatpush1.msra.mxu0 0.0
      %1365 = vmatprep.subr.mxu0 0.0
      %1366 = vmatpush1.msra.mxu0 0.0
      %1367 = vmatprep.subr.mxu0 0.0
      %1368 = vmatpush1.msra.mxu0 0.0
      %1369 = vmatprep.subr.mxu0 0.0
      %1370 = vmatpush1.msra.mxu0 0.0
      %1371 = vmatprep.subr.mxu0 0.0
      %1372 = vmatpush1.msra.mxu0 0.0
      %1373 = vmatprep.subr.mxu0 0.0
      %1374 = vmatpush1.msra.mxu0 0.0
      %1375 = vmatprep.subr.mxu0 0.0
      %1376 = vmatpush1.msra.mxu0 0.0
      %1377 = vmatprep.subr.mxu0 0.0
      %1378 = vmatpush1.msra.mxu0 0.0
      %1379 = vmatprep.subr.mxu0 0.0
      %1380 = vmatpush1.msra.mxu0 0.0
      %1381 = vmatprep.subr.mxu0 0.0
      %1382 = vmatpush1.msra.mxu0 0.0
      %1383 = vmatprep.subr.mxu0 0.0
      %1384 = vmatpush1.msra.mxu0 0.0
      %1385 = vmatprep.subr.mxu0 0.0
      %1386 = vmatpush1.msra.mxu0 0.0
      %1387 = vmatprep.subr.mxu0 0.0
      %1388 = vmatpush1.msra.mxu0 0.0
      %1389 = vmatprep.mubr.f32.mxu0 0.0
      %1390 = vmatmul.mubr.f32.gmra.mrb[0].mxu0 %v1302
      %v1391 = vpop.f32.mrb[0].mxu0
      %v1392 = vadd.f32 0.0, %v1391
      %v1393 = vpop.f32.mrb[0].mxu0
      %1394 = vmatprep.mubr.f32.mxu0 0.0
      %1395 = vmatmul.mubr.f32.gmra.mrb[0].mxu0 %v1305
      %v1396 = vpop.f32.mrb[0].mxu0
      %v1397 = vadd.f32 0.0, %v1396
      %v1398 = vpop.f32.mrb[0].mxu0
      %1399 = vmatprep.mubr.f32.mxu0 0.0
      %1400 = vmatmul.mubr.f32.gmra.mrb[0].mxu0 %v1308
      %v1401 = vpop.f32.mrb[0].mxu0
      %v1402 = vadd.f32 0.0, %v1401
      %v1403 = vpop.f32.mrb[0].mxu0
      %1404 = vmatprep.mubr.f32.mxu0 0.0
      %1405 = vmatmul.mubr.f32.gmra.mrb[0].mxu0 %v1311
      %v1406 = vpop.f32.mrb[0].mxu0
      %v1407 = vadd.f32 0.0, %v1406
      %v1408 = vpop.f32.mrb[0].mxu0
      %1409 = vmatprep.mubr.f32.mxu0 0.0
      %1410 = vmatmul.mubr.f32.gmra.mrb[0].mxu0 %v1314
      %v1411 = vpop.f32.mrb[0].mxu0
      %v1412 = vadd.f32 0.0, %v1411
      %v1413 = vpop.f32.mrb[0].mxu0
      %1414 = vmatprep.mubr.f32.mxu0 0.0
      %1415 = vmatmul.mubr.f32.gmra.mrb[0].mxu0 %v1317
      %v1416 = vpop.f32.mrb[0].mxu0
      %v1417 = vadd.f32 0.0, %v1416
      %v1418 = vpop.f32.mrb[0].mxu0
      %1419 = vmatprep.mubr.f32.mxu0 0.0
      %1420 = vmatmul.mubr.f32.gmra.mrb[0].mxu0 %v1320
      %v1421 = vpop.f32.mrb[0].mxu0
      %v1422 = vadd.f32 0.0, %v1421
      %v1423 = vpop.f32.mrb[0].mxu0
      %1424 = vmatprep.mubr.f32.mxu0 0.0
      %1425 = vmatmul.mubr.f32.gmra.mrb[0].mxu0 %v1323
      %v1426 = vpop.f32.mrb[0].mxu0
      %v1427 = vadd.f32 0.0, %v1426
      %v1428 = vpop.f32.mrb[0].mxu0
      %1429 = vdwg.mxu0
      %v1431 = vsel %vm1300, %v1120, 0
      %v1434 = vsel %vm1300, %v1121, 0
      %v1437 = vsel %vm1300, %v1122, 0
      %v1440 = vsel %vm1300, %v1123, 0
      %v1443 = vsel %vm1300, %v1124, 0
      %v1446 = vsel %vm1300, %v1125, 0
      %v1449 = vsel %vm1300, %v1126, 0
      %v1452 = vsel %vm1300, %v1127, 0
      %1454 = vmatprep.subr.mxu0 0.0
      %1455 = vmatpush1.msra.mxu0 %v1227
      %1456 = vmatprep.subr.mxu0 0.0
      %1457 = vmatpush1.msra.mxu0 0.0
      %1458 = vmatprep.subr.mxu0 0.0
      %1459 = vmatpush1.msra.mxu0 0.0
      %1460 = vmatprep.subr.mxu0 0.0
      %1461 = vmatpush1.msra.mxu0 0.0
      %1462 = vmatprep.subr.mxu0 0.0
      %1463 = vmatpush1.msra.mxu0 0.0
      %1464 = vmatprep.subr.mxu0 0.0
      %1465 = vmatpush1.msra.mxu0 0.0
      %1466 = vmatprep.subr.mxu0 0.0
      %1467 = vmatpush1.msra.mxu0 0.0
      %1468 = vmatprep.subr.mxu0 0.0
      %1469 = vmatpush1.msra.mxu0 0.0
      %1470 = vmatprep.subr.mxu0 0.0
      %1471 = vmatpush1.msra.mxu0 0.0
      %1472 = vmatprep.subr.mxu0 0.0
      %1473 = vmatpush1.msra.mxu0 0.0
      %1474 = vmatprep.subr.mxu0 0.0
      %1475 = vmatpush1.msra.mxu0 0.0
      %1476 = vmatprep.subr.mxu0 0.0
      %1477 = vmatpush1.msra.mxu0 0.0
      %1478 = vmatprep.subr.mxu0 0.0
      %1479 = vmatpush1.msra.mxu0 0.0
      %1480 = vmatprep.subr.mxu0 0.0
      %1481 = vmatpush1.msra.mxu0 0.0
      %1482 = vmatprep.subr.mxu0 0.0
      %1483 = vmatpush1.msra.mxu0 0.0
      %1484 = vmatprep.subr.mxu0 0.0
      %1485 = vmatpush1.msra.mxu0 0.0
      %1486 = vmatprep.subr.mxu0 0.0
      %1487 = vmatpush1.msra.mxu0 0.0
      %1488 = vmatprep.subr.mxu0 0.0
      %1489 = vmatpush1.msra.mxu0 0.0
      %1490 = vmatprep.subr.mxu0 0.0
      %1491 = vmatpush1.msra.mxu0 0.0
      %1492 = vmatprep.subr.mxu0 0.0
      %1493 = vmatpush1.msra.mxu0 0.0
      %1494 = vmatprep.subr.mxu0 0.0
      %1495 = vmatpush1.msra.mxu0 0.0
      %1496 = vmatprep.subr.mxu0 0.0
      %1497 = vmatpush1.msra.mxu0 0.0
      %1498 = vmatprep.subr.mxu0 0.0
      %1499 = vmatpush1.msra.mxu0 0.0
      %1500 = vmatprep.subr.mxu0 0.0
      %1501 = vmatpush1.msra.mxu0 0.0
      %1502 = vmatprep.subr.mxu0 0.0
      %1503 = vmatpush1.msra.mxu0 0.0
      %1504 = vmatprep.subr.mxu0 0.0
      %1505 = vmatpush1.msra.mxu0 0.0
      %1506 = vmatprep.subr.mxu0 0.0
      %1507 = vmatpush1.msra.mxu0 0.0
      %1508 = vmatprep.subr.mxu0 0.0
      %1509 = vmatpush1.msra.mxu0 0.0
      %1510 = vmatprep.subr.mxu0 0.0
      %1511 = vmatpush1.msra.mxu0 0.0
      %1512 = vmatprep.subr.mxu0 0.0
      %1513 = vmatpush1.msra.mxu0 0.0
      %1514 = vmatprep.subr.mxu0 0.0
      %1515 = vmatpush1.msra.mxu0 0.0
      %1516 = vmatprep.subr.mxu0 0.0
      %1517 = vmatpush1.msra.mxu0 0.0
      %1518 = vmatprep.mubr.f32.mxu0 0.0
      %1519 = vmatmul.mubr.f32.gmra.mrb[0].mxu0 %v1431
      %v1520 = vpop.f32.mrb[0].mxu0
      %v1521 = vadd.f32 %v1392, %v1520
      %v1522 = vpop.f32.mrb[0].mxu0
      %1523 = vmatprep.mubr.f32.mxu0 0.0
      %1524 = vmatmul.mubr.f32.gmra.mrb[0].mxu0 %v1434
      %v1525 = vpop.f32.mrb[0].mxu0
      %v1526 = vadd.f32 %v1397, %v1525
      %v1527 = vpop.f32.mrb[0].mxu0
      %1528 = vmatprep.mubr.f32.mxu0 0.0
      %1529 = vmatmul.mubr.f32.gmra.mrb[0].mxu0 %v1437
      %v1530 = vpop.f32.mrb[0].mxu0
      %v1531 = vadd.f32 %v1402, %v1530
      %v1532 = vpop.f32.mrb[0].mxu0
      %1533 = vmatprep.mubr.f32.mxu0 0.0
      %1534 = vmatmul.mubr.f32.gmra.mrb[0].mxu0 %v1440
      %v1535 = vpop.f32.mrb[0].mxu0
      %v1536 = vadd.f32 %v1407, %v1535
      %v1537 = vpop.f32.mrb[0].mxu0
      %1538 = vmatprep.mubr.f32.mxu0 0.0
      %1539 = vmatmul.mubr.f32.gmra.mrb[0].mxu0 %v1443
      %v1540 = vpop.f32.mrb[0].mxu0
      %v1541 = vadd.f32 %v1412, %v1540
      %v1542 = vpop.f32.mrb[0].mxu0
      %1543 = vmatprep.mubr.f32.mxu0 0.0
      %1544 = vmatmul.mubr.f32.gmra.mrb[0].mxu0 %v1446
      %v1545 = vpop.f32.mrb[0].mxu0
      %v1546 = vadd.f32 %v1417, %v1545
      %v1547 = vpop.f32.mrb[0].mxu0
      %1548 = vmatprep.mubr.f32.mxu0 0.0
      %1549 = vmatmul.mubr.f32.gmra.mrb[0].mxu0 %v1449
      %v1550 = vpop.f32.mrb[0].mxu0
      %v1551 = vadd.f32 %v1422, %v1550
      %v1552 = vpop.f32.mrb[0].mxu0
      %1553 = vmatprep.mubr.f32.mxu0 0.0
      %1554 = vmatmul.mubr.f32.gmra.mrb[0].mxu0 %v1452
      %v1555 = vpop.f32.mrb[0].mxu0
      %v1556 = vadd.f32 %v1427, %v1555
      %v1557 = vpop.f32.mrb[0].mxu0
      %1558 = vdwg.mxu0
      %vm1559 = vcmask 523264
      %v1561 = vsel %vm1559, %v1112, 0
      %v1564 = vsel %vm1559, %v1113, 0
      %v1567 = vsel %vm1559, %v1114, 0
      %v1570 = vsel %vm1559, %v1115, 0
      %v1573 = vsel %vm1559, %v1116, 0
      %v1576 = vsel %vm1559, %v1117, 0
      %v1579 = vsel %vm1559, %v1118, 0
      %v1582 = vsel %vm1559, %v1119, 0
      %1584 = vmatprep.subr.mxu0 0.0
      %1585 = vmatpush1.msra.mxu0 %v1148
      %1586 = vmatprep.subr.mxu0 0.0
      %1587 = vmatpush1.msra.mxu0 %v1149
      %1588 = vmatprep.subr.mxu0 0.0
      %1589 = vmatpush1.msra.mxu0 %v1150
      %1590 = vmatprep.subr.mxu0 0.0
      %1591 = vmatpush1.msra.mxu0 %v1151
      %1592 = vmatprep.subr.mxu0 0.0
      %1593 = vmatpush1.msra.mxu0 %v1152
      %1594 = vmatprep.subr.mxu0 0.0
      %1595 = vmatpush1.msra.mxu0 %v1153
      %1596 = vmatprep.subr.mxu0 0.0
      %1597 = vmatpush1.msra.mxu0 %v1154
      %1598 = vmatprep.subr.mxu0 0.0
      %1599 = vmatpush1.msra.mxu0 %v1155
      %1600 = vmatprep.subr.mxu0 0.0
      %1601 = vmatpush1.msra.mxu0 0.0
      %1602 = vmatprep.subr.mxu0 0.0
      %1603 = vmatpush1.msra.mxu0 0.0
      %1604 = vmatprep.subr.mxu0 0.0
      %1605 = vmatpush1.msra.mxu0 0.0
      %1606 = vmatprep.subr.mxu0 0.0
      %1607 = vmatpush1.msra.mxu0 0.0
      %1608 = vmatprep.subr.mxu0 0.0
      %1609 = vmatpush1.msra.mxu0 0.0
      %1610 = vmatprep.subr.mxu0 0.0
      %1611 = vmatpush1.msra.mxu0 0.0
      %1612 = vmatprep.subr.mxu0 0.0
      %1613 = vmatpush1.msra.mxu0 0.0
      %1614 = vmatprep.subr.mxu0 0.0
      %1615 = vmatpush1.msra.mxu0 0.0
      %1616 = vmatprep.subr.mxu0 0.0
      %1617 = vmatpush1.msra.mxu0 0.0
      %1618 = vmatprep.subr.mxu0 0.0
      %1619 = vmatpush1.msra.mxu0 0.0
      %1620 = vmatprep.subr.mxu0 0.0
      %1621 = vmatpush1.msra.mxu0 0.0
      %1622 = vmatprep.subr.mxu0 0.0
      %1623 = vmatpush1.msra.mxu0 0.0
      %1624 = vmatprep.subr.mxu0 0.0
      %1625 = vmatpush1.msra.mxu0 0.0
      %1626 = vmatprep.subr.mxu0 0.0
      %1627 = vmatpush1.msra.mxu0 0.0
      %1628 = vmatprep.subr.mxu0 0.0
      %1629 = vmatpush1.msra.mxu0 0.0
      %1630 = vmatprep.subr.mxu0 0.0
      %1631 = vmatpush1.msra.mxu0 0.0
      %1632 = vmatprep.subr.mxu0 0.0
      %1633 = vmatpush1.msra.mxu0 0.0
      %1634 = vmatprep.subr.mxu0 0.0
      %1635 = vmatpush1.msra.mxu0 0.0
      %1636 = vmatprep.subr.mxu0 0.0
      %1637 = vmatpush1.msra.mxu0 0.0
      %1638 = vmatprep.subr.mxu0 0.0
      %1639 = vmatpush1.msra.mxu0 0.0
      %1640 = vmatprep.subr.mxu0 0.0
      %1641 = vmatpush1.msra.mxu0 0.0
      %1642 = vmatprep.subr.mxu0 0.0
      %1643 = vmatpush1.msra.mxu0 0.0
      %1644 = vmatprep.subr.mxu0 0.0
      %1645 = vmatpush1.msra.mxu0 0.0
      %1646 = vmatprep.subr.mxu0 0.0
      %1647 = vmatpush1.msra.mxu0 0.0
      %1648 = vmatprep.mubr.f32.mxu0 0.0
      %1649 = vmatmul.mubr.f32.gmra.mrb[0].mxu0 %v1561
      %v1650 = vpop.f32.mrb[0].mxu0
      %v1651 = vadd.f32 0.0, %v1650
      %v1652 = vpop.f32.mrb[0].mxu0
      %1653 = vmatprep.mubr.f32.mxu0 0.0
      %1654 = vmatmul.mubr.f32.gmra.mrb[0].mxu0 %v1564
      %v1655 = vpop.f32.mrb[0].mxu0
      %v1656 = vadd.f32 0.0, %v1655
      %v1657 = vpop.f32.mrb[0].mxu0
      %1658 = vmatprep.mubr.f32.mxu0 0.0
      %1659 = vmatmul.mubr.f32.gmra.mrb[0].mxu0 %v1567
      %v1660 = vpop.f32.mrb[0].mxu0
      %v1661 = vadd.f32 0.0, %v1660
      %v1662 = vpop.f32.mrb[0].mxu0
      %1663 = vmatprep.mubr.f32.mxu0 0.0
      %1664 = vmatmul.mubr.f32.gmra.mrb[0].mxu0 %v1570
      %v1665 = vpop.f32.mrb[0].mxu0
      %v1666 = vadd.f32 0.0, %v1665
      %v1667 = vpop.f32.mrb[0].mxu0
      %1668 = vmatprep.mubr.f32.mxu0 0.0
      %1669 = vmatmul.mubr.f32.gmra.mrb[0].mxu0 %v1573
      %v1670 = vpop.f32.mrb[0].mxu0
      %v1671 = vadd.f32 0.0, %v1670
      %v1672 = vpop.f32.mrb[0].mxu0
      %1673 = vmatprep.mubr.f32.mxu0 0.0
      %1674 = vmatmul.mubr.f32.gmra.mrb[0].mxu0 %v1576
      %v1675 = vpop.f32.mrb[0].mxu0
      %v1676 = vadd.f32 0.0, %v1675
      %v1677 = vpop.f32.mrb[0].mxu0
      %1678 = vmatprep.mubr.f32.mxu0 0.0
      %1679 = vmatmul.mubr.f32.gmra.mrb[0].mxu0 %v1579
      %v1680 = vpop.f32.mrb[0].mxu0
      %v1681 = vadd.f32 0.0, %v1680
      %v1682 = vpop.f32.mrb[0].mxu0
      %1683 = vmatprep.mubr.f32.mxu0 0.0
      %1684 = vmatmul.mubr.f32.gmra.mrb[0].mxu0 %v1582
      %v1685 = vpop.f32.mrb[0].mxu0
      %v1686 = vadd.f32 0.0, %v1685
      %v1687 = vpop.f32.mrb[0].mxu0
      %1688 = vdwg.mxu0
      %v1689 = vadd.f32 %v1521, %v1651
      %v1690 = vadd.f32 %v1526, %v1656
      %v1691 = vadd.f32 %v1531, %v1661
      %v1692 = vadd.f32 %v1536, %v1666
      %v1693 = vadd.f32 %v1541, %v1671
      %v1694 = vadd.f32 %v1546, %v1676
      %v1695 = vadd.f32 %v1551, %v1681
      %v1696 = vadd.f32 %v1556, %v1686
      %v1697 = vld [vmem:[%s13] sm:$0x1]
      %v1699 = vlaneseq
      %v1700 = vshrl.u32 %v1699, 7
      %v1701 = vsub.s32 0, %v1700
      %v1702 = vrot.slane %v1697, %v1701
      %v1704 = vadd.f32 %v1689, %v1702
      %v1705 = vadd.f32 %v1690, %v1702
      %v1706 = vadd.f32 %v1691, %v1702
      %v1707 = vadd.f32 %v1692, %v1702
      %v1708 = vadd.f32 %v1693, %v1702
      %v1709 = vadd.f32 %v1694, %v1702
      %v1710 = vadd.f32 %v1695, %v1702
      %v1711 = vadd.f32 %v1696, %v1702
      %v1712 = vxor.u32 %v1704, 2147483648
      %v1713 = vxor.u32 %v1705, 2147483648
      %v1714 = vxor.u32 %v1706, 2147483648
      %v1715 = vxor.u32 %v1707, 2147483648
      %v1716 = vxor.u32 %v1708, 2147483648
      %v1717 = vxor.u32 %v1709, 2147483648
      %v1718 = vxor.u32 %v1710, 2147483648
      %v1719 = vxor.u32 %v1711, 2147483648
      %v1720 = vmul.f32 %v1712, 1.442695
      %v1721 = vpow.pop %v1720
      %v1722 = vmul.f32 %v1713, 1.442695
      %v1723 = vpow.pop %v1722
      %v1724 = vmul.f32 %v1714, 1.442695
      %v1725 = vpow.pop %v1724
      %v1726 = vmul.f32 %v1715, 1.442695
      %v1727 = vpow.pop %v1726
      %v1728 = vmul.f32 %v1716, 1.442695
      %v1729 = vpow.pop %v1728
      %v1730 = vmul.f32 %v1717, 1.442695
      %v1731 = vpow.pop %v1730
      %v1732 = vmul.f32 %v1718, 1.442695
      %v1733 = vpow.pop %v1732
      %v1734 = vmul.f32 %v1719, 1.442695
      %v1735 = vpow.pop %v1734
      %v1736 = vadd.f32 %v1721, 1.0
      %v1737 = vadd.f32 %v1723, 1.0
      %v1738 = vadd.f32 %v1725, 1.0
      %v1739 = vadd.f32 %v1727, 1.0
      %v1740 = vadd.f32 %v1729, 1.0
      %v1741 = vadd.f32 %v1731, 1.0
      %v1742 = vadd.f32 %v1733, 1.0
      %v1743 = vadd.f32 %v1735, 1.0
      %v1744 = vrcp.pop %v1736
      %v1745 = vmul.f32 1.0, %v1744
      %v1746 = vrcp.pop %v1737
      %v1747 = vmul.f32 1.0, %v1746
      %v1748 = vrcp.pop %v1738
      %v1749 = vmul.f32 1.0, %v1748
      %v1750 = vrcp.pop %v1739
      %v1751 = vmul.f32 1.0, %v1750
      %v1752 = vrcp.pop %v1740
      %v1753 = vmul.f32 1.0, %v1752
      %v1754 = vrcp.pop %v1741
      %v1755 = vmul.f32 1.0, %v1754
      %v1756 = vrcp.pop %v1742
      %v1757 = vmul.f32 1.0, %v1756
      %v1758 = vrcp.pop %v1743
      %v1759 = vmul.f32 1.0, %v1758
      %v1760 = vmul.f32 %v1704, %v1745
      %v1761 = vmul.f32 %v1705, %v1747
      %v1762 = vmul.f32 %v1706, %v1749
      %v1763 = vmul.f32 %v1707, %v1751
      %v1764 = vmul.f32 %v1708, %v1753
      %v1765 = vmul.f32 %v1709, %v1755
      %v1766 = vmul.f32 %v1710, %v1757
      %v1767 = vmul.f32 %v1711, %v1759
      %v1768 = vld [vmem:[%s14] sm:$0xff]
      %v1769 = vld [vmem:[%s14 + $0x8] sm:$0xff]
      %v1770 = vld [vmem:[%s14 + $0x10] sm:$0xff]
      %v1771 = vld [vmem:[%s14 + $0x18] sm:$0xff]
      %v1772 = vld [vmem:[%s14 + $0x20] sm:$0xff]
      %v1773 = vld [vmem:[%s14 + $0x28] sm:$0xff]
      %v1774 = vld [vmem:[%s14 + $0x30] sm:$0xff]
      %v1775 = vld [vmem:[%s14 + $0x38] sm:$0xff]
      %v1776 = vld [vmem:[%s15] sm:$0x1]
      %v1778 = vlaneseq
      %v1779 = vshrl.u32 %v1778, 7
      %v1780 = vsub.s32 0, %v1779
      %v1781 = vrot.slane %v1776, %v1780
      %v1784 = vsel %vm1559, %v1760, 0
      %v1787 = vsel %vm1559, %v1761, 0
      %v1790 = vsel %vm1559, %v1762, 0
      %v1793 = vsel %vm1559, %v1763, 0
      %v1796 = vsel %vm1559, %v1764, 0
      %v1799 = vsel %vm1559, %v1765, 0
      %v1802 = vsel %vm1559, %v1766, 0
      %v1805 = vsel %vm1559, %v1767, 0
      %1807 = vmatprep.subr.mxu0 0.0
      %1808 = vmatpush1.msra.mxu0 %v1768
      %1809 = vmatprep.subr.mxu0 0.0
      %1810 = vmatpush1.msra.mxu0 %v1769
      %1811 = vmatprep.subr.mxu0 0.0
      %1812 = vmatpush1.msra.mxu0 %v1770
      %1813 = vmatprep.subr.mxu0 0.0
      %1814 = vmatpush1.msra.mxu0 %v1771
      %1815 = vmatprep.subr.mxu0 0.0
      %1816 = vmatpush1.msra.mxu0 %v1772
      %1817 = vmatprep.subr.mxu0 0.0
      %1818 = vmatpush1.msra.mxu0 %v1773
      %1819 = vmatprep.subr.mxu0 0.0
      %1820 = vmatpush1.msra.mxu0 %v1774
      %1821 = vmatprep.subr.mxu0 0.0
      %1822 = vmatpush1.msra.mxu0 %v1775
      %1823 = vmatprep.subr.mxu0 0.0
      %1824 = vmatpush1.msra.mxu0 0.0
      %1825 = vmatprep.subr.mxu0 0.0
      %1826 = vmatpush1.msra.mxu0 0.0
      %1827 = vmatprep.subr.mxu0 0.0
      %1828 = vmatpush1.msra.mxu0 0.0
      %1829 = vmatprep.subr.mxu0 0.0
      %1830 = vmatpush1.msra.mxu0 0.0
      %1831 = vmatprep.subr.mxu0 0.0
      %1832 = vmatpush1.msra.mxu0 0.0
      %1833 = vmatprep.subr.mxu0 0.0
      %1834 = vmatpush1.msra.mxu0 0.0
      %1835 = vmatprep.subr.mxu0 0.0
      %1836 = vmatpush1.msra.mxu0 0.0
      %1837 = vmatprep.subr.mxu0 0.0
      %1838 = vmatpush1.msra.mxu0 0.0
      %1839 = vmatprep.subr.mxu0 0.0
      %1840 = vmatpush1.msra.mxu0 0.0
      %1841 = vmatprep.subr.mxu0 0.0
      %1842 = vmatpush1.msra.mxu0 0.0
      %1843 = vmatprep.subr.mxu0 0.0
      %1844 = vmatpush1.msra.mxu0 0.0
      %1845 = vmatprep.subr.mxu0 0.0
      %1846 = vmatpush1.msra.mxu0 0.0
      %1847 = vmatprep.subr.mxu0 0.0
      %1848 = vmatpush1.msra.mxu0 0.0
      %1849 = vmatprep.subr.mxu0 0.0
      %1850 = vmatpush1.msra.mxu0 0.0
      %1851 = vmatprep.subr.mxu0 0.0
      %1852 = vmatpush1.msra.mxu0 0.0
      %1853 = vmatprep.subr.mxu0 0.0
      %1854 = vmatpush1.msra.mxu0 0.0
      %1855 = vmatprep.subr.mxu0 0.0
      %1856 = vmatpush1.msra.mxu0 0.0
      %1857 = vmatprep.subr.mxu0 0.0
      %1858 = vmatpush1.msra.mxu0 0.0
      %1859 = vmatprep.subr.mxu0 0.0
      %1860 = vmatpush1.msra.mxu0 0.0
      %1861 = vmatprep.subr.mxu0 0.0
      %1862 = vmatpush1.msra.mxu0 0.0
      %1863 = vmatprep.subr.mxu0 0.0
      %1864 = vmatpush1.msra.mxu0 0.0
      %1865 = vmatprep.subr.mxu0 0.0
      %1866 = vmatpush1.msra.mxu0 0.0
      %1867 = vmatprep.subr.mxu0 0.0
      %1868 = vmatpush1.msra.mxu0 0.0
      %1869 = vmatprep.subr.mxu0 0.0
      %1870 = vmatpush1.msra.mxu0 0.0
      %1871 = vmatprep.mubr.f32.mxu0 0.0
      %1872 = vmatmul.mubr.f32.gmra.mrb[0].mxu0 %v1784
      %v1873 = vpop.f32.mrb[0].mxu0
      %v1874 = vadd.f32 %v1781, %v1873
      %v1875 = vpop.f32.mrb[0].mxu0
      %1876 = vmatprep.mubr.f32.mxu0 0.0
      %1877 = vmatmul.mubr.f32.gmra.mrb[0].mxu0 %v1787
      %v1878 = vpop.f32.mrb[0].mxu0
      %v1879 = vadd.f32 %v1781, %v1878
      %v1880 = vpop.f32.mrb[0].mxu0
      %1881 = vmatprep.mubr.f32.mxu0 0.0
      %1882 = vmatmul.mubr.f32.gmra.mrb[0].mxu0 %v1790
      %v1883 = vpop.f32.mrb[0].mxu0
      %v1884 = vadd.f32 %v1781, %v1883
      %v1885 = vpop.f32.mrb[0].mxu0
      %1886 = vmatprep.mubr.f32.mxu0 0.0
      %1887 = vmatmul.mubr.f32.gmra.mrb[0].mxu0 %v1793
      %v1888 = vpop.f32.mrb[0].mxu0
      %v1889 = vadd.f32 %v1781, %v1888
      %v1890 = vpop.f32.mrb[0].mxu0
      %1891 = vmatprep.mubr.f32.mxu0 0.0
      %1892 = vmatmul.mubr.f32.gmra.mrb[0].mxu0 %v1796
      %v1893 = vpop.f32.mrb[0].mxu0
      %v1894 = vadd.f32 %v1781, %v1893
      %v1895 = vpop.f32.mrb[0].mxu0
      %1896 = vmatprep.mubr.f32.mxu0 0.0
      %1897 = vmatmul.mubr.f32.gmra.mrb[0].mxu0 %v1799
      %v1898 = vpop.f32.mrb[0].mxu0
      %v1899 = vadd.f32 %v1781, %v1898
      %v1900 = vpop.f32.mrb[0].mxu0
      %1901 = vmatprep.mubr.f32.mxu0 0.0
      %1902 = vmatmul.mubr.f32.gmra.mrb[0].mxu0 %v1802
      %v1903 = vpop.f32.mrb[0].mxu0
      %v1904 = vadd.f32 %v1781, %v1903
      %v1905 = vpop.f32.mrb[0].mxu0
      %1906 = vmatprep.mubr.f32.mxu0 0.0
      %1907 = vmatmul.mubr.f32.gmra.mrb[0].mxu0 %v1805
      %v1908 = vpop.f32.mrb[0].mxu0
      %v1909 = vadd.f32 %v1781, %v1908
      %v1910 = vpop.f32.mrb[0].mxu0
      %1911 = vdwg.mxu0
      %v1912 = vld [vmem:[%s16] sm:$0xff]
      %v1913 = vld [vmem:[%s16 + $0x8] sm:$0xff]
      %v1914 = vld [vmem:[%s16 + $0x10] sm:$0xff]
      %v1915 = vld [vmem:[%s16 + $0x18] sm:$0xff]
      %v1916 = vld [vmem:[%s16 + $0x20] sm:$0xff]
      %v1917 = vld [vmem:[%s16 + $0x28] sm:$0xff]
      %v1918 = vld [vmem:[%s17] sm:$0x1]
      %v1920 = vlaneseq
      %v1921 = vshrl.u32 %v1920, 7
      %v1922 = vsub.s32 0, %v1921
      %v1923 = vrot.slane %v1918, %v1922
      %1925 = vmatprep.subr.mxu0 0.0
      %1926 = vmatpush1.msra.mxu0 %v1912
      %1927 = vmatprep.subr.mxu0 0.0
      %1928 = vmatpush1.msra.mxu0 %v1913
      %1929 = vmatprep.subr.mxu0 0.0
      %1930 = vmatpush1.msra.mxu0 %v1914
      %1931 = vmatprep.subr.mxu0 0.0
      %1932 = vmatpush1.msra.mxu0 %v1915
      %1933 = vmatprep.subr.mxu0 0.0
      %1934 = vmatpush1.msra.mxu0 %v1916
      %1935 = vmatprep.subr.mxu0 0.0
      %1936 = vmatpush1.msra.mxu0 %v1917
      %1937 = vmatprep.subr.mxu0 0.0
      %1938 = vmatpush1.msra.mxu0 0.0
      %1939 = vmatprep.subr.mxu0 0.0
      %1940 = vmatpush1.msra.mxu0 0.0
      %1941 = vmatprep.subr.mxu0 0.0
      %1942 = vmatpush1.msra.mxu0 0.0
      %1943 = vmatprep.subr.mxu0 0.0
      %1944 = vmatpush1.msra.mxu0 0.0
      %1945 = vmatprep.subr.mxu0 0.0
      %1946 = vmatpush1.msra.mxu0 0.0
      %1947 = vmatprep.subr.mxu0 0.0
      %1948 = vmatpush1.msra.mxu0 0.0
      %1949 = vmatprep.subr.mxu0 0.0
      %1950 = vmatpush1.msra.mxu0 0.0
      %1951 = vmatprep.subr.mxu0 0.0
      %1952 = vmatpush1.msra.mxu0 0.0
      %1953 = vmatprep.subr.mxu0 0.0
      %1954 = vmatpush1.msra.mxu0 0.0
      %1955 = vmatprep.subr.mxu0 0.0
      %1956 = vmatpush1.msra.mxu0 0.0
      %1957 = vmatprep.subr.mxu0 0.0
      %1958 = vmatpush1.msra.mxu0 0.0
      %1959 = vmatprep.subr.mxu0 0.0
      %1960 = vmatpush1.msra.mxu0 0.0
      %1961 = vmatprep.subr.mxu0 0.0
      %1962 = vmatpush1.msra.mxu0 0.0
      %1963 = vmatprep.subr.mxu0 0.0
      %1964 = vmatpush1.msra.mxu0 0.0
      %1965 = vmatprep.subr.mxu0 0.0
      %1966 = vmatpush1.msra.mxu0 0.0
      %1967 = vmatprep.subr.mxu0 0.0
      %1968 = vmatpush1.msra.mxu0 0.0
      %1969 = vmatprep.subr.mxu0 0.0
      %1970 = vmatpush1.msra.mxu0 0.0
      %1971 = vmatprep.subr.mxu0 0.0
      %1972 = vmatpush1.msra.mxu0 0.0
      %1973 = vmatprep.subr.mxu0 0.0
      %1974 = vmatpush1.msra.mxu0 0.0
      %1975 = vmatprep.subr.mxu0 0.0
      %1976 = vmatpush1.msra.mxu0 0.0
      %1977 = vmatprep.subr.mxu0 0.0
      %1978 = vmatpush1.msra.mxu0 0.0
      %1979 = vmatprep.subr.mxu0 0.0
      %1980 = vmatpush1.msra.mxu0 0.0
      %1981 = vmatprep.subr.mxu0 0.0
      %1982 = vmatpush1.msra.mxu0 0.0
      %1983 = vmatprep.subr.mxu0 0.0
      %1984 = vmatpush1.msra.mxu0 0.0
      %1985 = vmatprep.subr.mxu0 0.0
      %1986 = vmatpush1.msra.mxu0 0.0
      %1987 = vmatprep.subr.mxu0 0.0
      %1988 = vmatpush1.msra.mxu0 0.0
      %1989 = vmatprep.mubr.f32.mxu0 0.0
      %1990 = vmatmul.mubr.f32.gmra.mrb[0].mxu0 %v1158
      %v1991 = vpop.f32.mrb[0].mxu0
      %v1992 = vadd.f32 %v1923, %v1991
      %v1993 = vpop.f32.mrb[0].mxu0
      %1994 = vdwg.mxu0
      %v1995 = vld [vmem:[%s18] sm:$0xff]
      %v1996 = vld [vmem:[%s18 + $0x8] sm:$0xff]
      %v1997 = vld [vmem:[%s18 + $0x10] sm:$0xff]
      %v1998 = vld [vmem:[%s18 + $0x18] sm:$0xff]
      %v1999 = vld [vmem:[%s18 + $0x20] sm:$0xff]
      %v2000 = vld [vmem:[%s18 + $0x28] sm:$0xff]
      %v2001 = vld [vmem:[%s19] sm:$0x1]
      %v2003 = vlaneseq
      %v2004 = vshrl.u32 %v2003, 7
      %v2005 = vsub.s32 0, %v2004
      %v2006 = vrot.slane %v2001, %v2005
      %2008 = vmatprep.subr.mxu0 0.0
      %2009 = vmatpush1.msra.mxu0 %v1995
      %2010 = vmatprep.subr.mxu0 0.0
      %2011 = vmatpush1.msra.mxu0 %v1996
      %2012 = vmatprep.subr.mxu0 0.0
      %2013 = vmatpush1.msra.mxu0 %v1997
      %2014 = vmatprep.subr.mxu0 0.0
      %2015 = vmatpush1.msra.mxu0 %v1998
      %2016 = vmatprep.subr.mxu0 0.0
      %2017 = vmatpush1.msra.mxu0 %v1999
      %2018 = vmatprep.subr.mxu0 0.0
      %2019 = vmatpush1.msra.mxu0 %v2000
      %2020 = vmatprep.subr.mxu0 0.0
      %2021 = vmatpush1.msra.mxu0 0.0
      %2022 = vmatprep.subr.mxu0 0.0
      %2023 = vmatpush1.msra.mxu0 0.0
      %2024 = vmatprep.subr.mxu0 0.0
      %2025 = vmatpush1.msra.mxu0 0.0
      %2026 = vmatprep.subr.mxu0 0.0
      %2027 = vmatpush1.msra.mxu0 0.0
      %2028 = vmatprep.subr.mxu0 0.0
      %2029 = vmatpush1.msra.mxu0 0.0
      %2030 = vmatprep.subr.mxu0 0.0
      %2031 = vmatpush1.msra.mxu0 0.0
      %2032 = vmatprep.subr.mxu0 0.0
      %2033 = vmatpush1.msra.mxu0 0.0
      %2034 = vmatprep.subr.mxu0 0.0
      %2035 = vmatpush1.msra.mxu0 0.0
      %2036 = vmatprep.subr.mxu0 0.0
      %2037 = vmatpush1.msra.mxu0 0.0
      %2038 = vmatprep.subr.mxu0 0.0
      %2039 = vmatpush1.msra.mxu0 0.0
      %2040 = vmatprep.subr.mxu0 0.0
      %2041 = vmatpush1.msra.mxu0 0.0
      %2042 = vmatprep.subr.mxu0 0.0
      %2043 = vmatpush1.msra.mxu0 0.0
      %2044 = vmatprep.subr.mxu0 0.0
      %2045 = vmatpush1.msra.mxu0 0.0
      %2046 = vmatprep.subr.mxu0 0.0
      %2047 = vmatpush1.msra.mxu0 0.0
      %2048 = vmatprep.subr.mxu0 0.0
      %2049 = vmatpush1.msra.mxu0 0.0
      %2050 = vmatprep.subr.mxu0 0.0
      %2051 = vmatpush1.msra.mxu0 0.0
      %2052 = vmatprep.subr.mxu0 0.0
      %2053 = vmatpush1.msra.mxu0 0.0
      %2054 = vmatprep.subr.mxu0 0.0
      %2055 = vmatpush1.msra.mxu0 0.0
      %2056 = vmatprep.subr.mxu0 0.0
      %2057 = vmatpush1.msra.mxu0 0.0
      %2058 = vmatprep.subr.mxu0 0.0
      %2059 = vmatpush1.msra.mxu0 0.0
      %2060 = vmatprep.subr.mxu0 0.0
      %2061 = vmatpush1.msra.mxu0 0.0
      %2062 = vmatprep.subr.mxu0 0.0
      %2063 = vmatpush1.msra.mxu0 0.0
      %2064 = vmatprep.subr.mxu0 0.0
      %2065 = vmatpush1.msra.mxu0 0.0
      %2066 = vmatprep.subr.mxu0 0.0
      %2067 = vmatpush1.msra.mxu0 0.0
      %2068 = vmatprep.subr.mxu0 0.0
      %2069 = vmatpush1.msra.mxu0 0.0
      %2070 = vmatprep.subr.mxu0 0.0
      %2071 = vmatpush1.msra.mxu0 0.0
      %2072 = vmatprep.mubr.f32.mxu0 0.0
      %2073 = vmatmul.mubr.f32.gmra.mrb[0].mxu0 %v1158
      %v2074 = vpop.f32.mrb[0].mxu0
      %v2075 = vadd.f32 %v2006, %v2074
      %v2076 = vpop.f32.mrb[0].mxu0
      %2077 = vdwg.mxu0
      %2078 = vmatprep.subr.mxu0 0.0
      %2079 = vmatpush1.msra.mxu0 %v1992
      %2080 = vmatprep.subr.mxu0 0.0
      %2081 = vmatpush1.msra.mxu0 0.0
      %2082 = vmatprep.subr.mxu0 0.0
      %2083 = vmatpush1.msra.mxu0 0.0
      %2084 = vmatprep.subr.mxu0 0.0
      %2085 = vmatpush1.msra.mxu0 0.0
      %2086 = vmatprep.subr.mxu0 0.0
      %2087 = vmatpush1.msra.mxu0 0.0
      %2088 = vmatprep.subr.mxu0 0.0
      %2089 = vmatpush1.msra.mxu0 0.0
      %2090 = vmatprep.subr.mxu0 0.0
      %2091 = vmatpush1.msra.mxu0 0.0
      %2092 = vmatprep.subr.mxu0 0.0
      %2093 = vmatpush1.msra.mxu0 0.0
      %2094 = vmatprep.subr.mxu0 0.0
      %2095 = vmatpush1.msra.mxu0 0.0
      %2096 = vmatprep.subr.mxu0 0.0
      %2097 = vmatpush1.msra.mxu0 0.0
      %2098 = vmatprep.subr.mxu0 0.0
      %2099 = vmatpush1.msra.mxu0 0.0
      %2100 = vmatprep.subr.mxu0 0.0
      %2101 = vmatpush1.msra.mxu0 0.0
      %2102 = vmatprep.subr.mxu0 0.0
      %2103 = vmatpush1.msra.mxu0 0.0
      %2104 = vmatprep.subr.mxu0 0.0
      %2105 = vmatpush1.msra.mxu0 0.0
      %2106 = vmatprep.subr.mxu0 0.0
      %2107 = vmatpush1.msra.mxu0 0.0
      %2108 = vmatprep.subr.mxu0 0.0
      %2109 = vmatpush1.msra.mxu0 0.0
      %2110 = vmatprep.subr.mxu0 0.0
      %2111 = vmatpush1.msra.mxu0 0.0
      %2112 = vmatprep.subr.mxu0 0.0
      %2113 = vmatpush1.msra.mxu0 0.0
      %2114 = vmatprep.subr.mxu0 0.0
      %2115 = vmatpush1.msra.mxu0 0.0
      %2116 = vmatprep.subr.mxu0 0.0
      %2117 = vmatpush1.msra.mxu0 0.0
      %2118 = vmatprep.subr.mxu0 0.0
      %2119 = vmatpush1.msra.mxu0 0.0
      %2120 = vmatprep.subr.mxu0 0.0
      %2121 = vmatpush1.msra.mxu0 0.0
      %2122 = vmatprep.subr.mxu0 0.0
      %2123 = vmatpush1.msra.mxu0 0.0
      %2124 = vmatprep.subr.mxu0 0.0
      %2125 = vmatpush1.msra.mxu0 0.0
      %2126 = vmatprep.subr.mxu0 0.0
      %2127 = vmatpush1.msra.mxu0 0.0
      %2128 = vmatprep.subr.mxu0 0.0
      %2129 = vmatpush1.msra.mxu0 0.0
      %2130 = vmatprep.subr.mxu0 0.0
      %2131 = vmatpush1.msra.mxu0 0.0
      %2132 = vmatprep.subr.mxu0 0.0
      %2133 = vmatpush1.msra.mxu0 0.0
      %2134 = vmatprep.subr.mxu0 0.0
      %2135 = vmatpush1.msra.mxu0 0.0
      %2136 = vmatprep.subr.mxu0 0.0
      %2137 = vmatpush1.msra.mxu0 0.0
      %2138 = vmatprep.subr.mxu0 0.0
      %2139 = vmatpush1.msra.mxu0 0.0
      %2140 = vmatprep.subr.mxu0 0.0
      %2141 = vmatpush1.msra.mxu0 0.0
      %2142 = vmatprep.mubr.f32.mxu0 0.0
      %2143 = vmatmul.mubr.f32.gmra.mrb[0].mxu0 %v1431
      %v2144 = vpop.f32.mrb[0].mxu0
      %v2145 = vadd.f32 0.0, %v2144
      %v2146 = vpop.f32.mrb[0].mxu0
      %2147 = vmatprep.mubr.f32.mxu0 0.0
      %2148 = vmatmul.mubr.f32.gmra.mrb[0].mxu0 %v1434
      %v2149 = vpop.f32.mrb[0].mxu0
      %v2150 = vadd.f32 0.0, %v2149
      %v2151 = vpop.f32.mrb[0].mxu0
      %2152 = vmatprep.mubr.f32.mxu0 0.0
      %2153 = vmatmul.mubr.f32.gmra.mrb[0].mxu0 %v1437
      %v2154 = vpop.f32.mrb[0].mxu0
      %v2155 = vadd.f32 0.0, %v2154
      %v2156 = vpop.f32.mrb[0].mxu0
      %2157 = vmatprep.mubr.f32.mxu0 0.0
      %2158 = vmatmul.mubr.f32.gmra.mrb[0].mxu0 %v1440
      %v2159 = vpop.f32.mrb[0].mxu0
      %v2160 = vadd.f32 0.0, %v2159
      %v2161 = vpop.f32.mrb[0].mxu0
      %2162 = vmatprep.mubr.f32.mxu0 0.0
      %2163 = vmatmul.mubr.f32.gmra.mrb[0].mxu0 %v1443
      %v2164 = vpop.f32.mrb[0].mxu0
      %v2165 = vadd.f32 0.0, %v2164
      %v2166 = vpop.f32.mrb[0].mxu0
      %2167 = vmatprep.mubr.f32.mxu0 0.0
      %2168 = vmatmul.mubr.f32.gmra.mrb[0].mxu0 %v1446
      %v2169 = vpop.f32.mrb[0].mxu0
      %v2170 = vadd.f32 0.0, %v2169
      %v2171 = vpop.f32.mrb[0].mxu0
      %2172 = vmatprep.mubr.f32.mxu0 0.0
      %2173 = vmatmul.mubr.f32.gmra.mrb[0].mxu0 %v1449
      %v2174 = vpop.f32.mrb[0].mxu0
      %v2175 = vadd.f32 0.0, %v2174
      %v2176 = vpop.f32.mrb[0].mxu0
      %2177 = vmatprep.mubr.f32.mxu0 0.0
      %2178 = vmatmul.mubr.f32.gmra.mrb[0].mxu0 %v1452
      %v2179 = vpop.f32.mrb[0].mxu0
      %v2180 = vadd.f32 0.0, %v2179
      %v2181 = vpop.f32.mrb[0].mxu0
      %2182 = vdwg.mxu0
      %2183 = vmatprep.subr.mxu0 0.0
      %2184 = vmatpush1.msra.mxu0 %v2075
      %2185 = vmatprep.subr.mxu0 0.0
      %2186 = vmatpush1.msra.mxu0 0.0
      %2187 = vmatprep.subr.mxu0 0.0
      %2188 = vmatpush1.msra.mxu0 0.0
      %2189 = vmatprep.subr.mxu0 0.0
      %2190 = vmatpush1.msra.mxu0 0.0
      %2191 = vmatprep.subr.mxu0 0.0
      %2192 = vmatpush1.msra.mxu0 0.0
      %2193 = vmatprep.subr.mxu0 0.0
      %2194 = vmatpush1.msra.mxu0 0.0
      %2195 = vmatprep.subr.mxu0 0.0
      %2196 = vmatpush1.msra.mxu0 0.0
      %2197 = vmatprep.subr.mxu0 0.0
      %2198 = vmatpush1.msra.mxu0 0.0
      %2199 = vmatprep.subr.mxu0 0.0
      %2200 = vmatpush1.msra.mxu0 0.0
      %2201 = vmatprep.subr.mxu0 0.0
      %2202 = vmatpush1.msra.mxu0 0.0
      %2203 = vmatprep.subr.mxu0 0.0
      %2204 = vmatpush1.msra.mxu0 0.0
      %2205 = vmatprep.subr.mxu0 0.0
      %2206 = vmatpush1.msra.mxu0 0.0
      %2207 = vmatprep.subr.mxu0 0.0
      %2208 = vmatpush1.msra.mxu0 0.0
      %2209 = vmatprep.subr.mxu0 0.0
      %2210 = vmatpush1.msra.mxu0 0.0
      %2211 = vmatprep.subr.mxu0 0.0
      %2212 = vmatpush1.msra.mxu0 0.0
      %2213 = vmatprep.subr.mxu0 0.0
      %2214 = vmatpush1.msra.mxu0 0.0
      %2215 = vmatprep.subr.mxu0 0.0
      %2216 = vmatpush1.msra.mxu0 0.0
      %2217 = vmatprep.subr.mxu0 0.0
      %2218 = vmatpush1.msra.mxu0 0.0
      %2219 = vmatprep.subr.mxu0 0.0
      %2220 = vmatpush1.msra.mxu0 0.0
      %2221 = vmatprep.subr.mxu0 0.0
      %2222 = vmatpush1.msra.mxu0 0.0
      %2223 = vmatprep.subr.mxu0 0.0
      %2224 = vmatpush1.msra.mxu0 0.0
      %2225 = vmatprep.subr.mxu0 0.0
      %2226 = vmatpush1.msra.mxu0 0.0
      %2227 = vmatprep.subr.mxu0 0.0
      %2228 = vmatpush1.msra.mxu0 0.0
      %2229 = vmatprep.subr.mxu0 0.0
      %2230 = vmatpush1.msra.mxu0 0.0
      %2231 = vmatprep.subr.mxu0 0.0
      %2232 = vmatpush1.msra.mxu0 0.0
      %2233 = vmatprep.subr.mxu0 0.0
      %2234 = vmatpush1.msra.mxu0 0.0
      %2235 = vmatprep.subr.mxu0 0.0
      %2236 = vmatpush1.msra.mxu0 0.0
      %2237 = vmatprep.subr.mxu0 0.0
      %2238 = vmatpush1.msra.mxu0 0.0
      %2239 = vmatprep.subr.mxu0 0.0
      %2240 = vmatpush1.msra.mxu0 0.0
      %2241 = vmatprep.subr.mxu0 0.0
      %2242 = vmatpush1.msra.mxu0 0.0
      %2243 = vmatprep.subr.mxu0 0.0
      %2244 = vmatpush1.msra.mxu0 0.0
      %2245 = vmatprep.subr.mxu0 0.0
      %2246 = vmatpush1.msra.mxu0 0.0
      %2247 = vmatprep.mubr.f32.mxu0 0.0
      %2248 = vmatmul.mubr.f32.gmra.mrb[0].mxu0 %v1302
      %v2249 = vpop.f32.mrb[0].mxu0
      %v2250 = vadd.f32 0.0, %v2249
      %v2251 = vpop.f32.mrb[0].mxu0
      %2252 = vmatprep.mubr.f32.mxu0 0.0
      %2253 = vmatmul.mubr.f32.gmra.mrb[0].mxu0 %v1305
      %v2254 = vpop.f32.mrb[0].mxu0
      %v2255 = vadd.f32 0.0, %v2254
      %v2256 = vpop.f32.mrb[0].mxu0
      %2257 = vmatprep.mubr.f32.mxu0 0.0
      %2258 = vmatmul.mubr.f32.gmra.mrb[0].mxu0 %v1308
      %v2259 = vpop.f32.mrb[0].mxu0
      %v2260 = vadd.f32 0.0, %v2259
      %v2261 = vpop.f32.mrb[0].mxu0
      %2262 = vmatprep.mubr.f32.mxu0 0.0
      %2263 = vmatmul.mubr.f32.gmra.mrb[0].mxu0 %v1311
      %v2264 = vpop.f32.mrb[0].mxu0
      %v2265 = vadd.f32 0.0, %v2264
      %v2266 = vpop.f32.mrb[0].mxu0
      %2267 = vmatprep.mubr.f32.mxu0 0.0
      %2268 = vmatmul.mubr.f32.gmra.mrb[0].mxu0 %v1314
      %v2269 = vpop.f32.mrb[0].mxu0
      %v2270 = vadd.f32 0.0, %v2269
      %v2271 = vpop.f32.mrb[0].mxu0
      %2272 = vmatprep.mubr.f32.mxu0 0.0
      %2273 = vmatmul.mubr.f32.gmra.mrb[0].mxu0 %v1317
      %v2274 = vpop.f32.mrb[0].mxu0
      %v2275 = vadd.f32 0.0, %v2274
      %v2276 = vpop.f32.mrb[0].mxu0
      %2277 = vmatprep.mubr.f32.mxu0 0.0
      %2278 = vmatmul.mubr.f32.gmra.mrb[0].mxu0 %v1320
      %v2279 = vpop.f32.mrb[0].mxu0
      %v2280 = vadd.f32 0.0, %v2279
      %v2281 = vpop.f32.mrb[0].mxu0
      %2282 = vmatprep.mubr.f32.mxu0 0.0
      %2283 = vmatmul.mubr.f32.gmra.mrb[0].mxu0 %v1323
      %v2284 = vpop.f32.mrb[0].mxu0
      %v2285 = vadd.f32 0.0, %v2284
      %v2286 = vpop.f32.mrb[0].mxu0
      %2287 = vdwg.mxu0
      %v2288 = vmul.f32 %v2145, %v2250
      %v2289 = vmul.f32 %v2150, %v2255
      %v2290 = vmul.f32 %v2155, %v2260
      %v2291 = vmul.f32 %v2160, %v2265
      %v2292 = vmul.f32 %v2165, %v2270
      %v2293 = vmul.f32 %v2170, %v2275
      %v2294 = vmul.f32 %v2175, %v2280
      %v2295 = vmul.f32 %v2180, %v2285
      %v2296 = vld [vmem:[%s5] sm:$0xff]
      %v2297 = vld [vmem:[%s5 + $0x8] sm:$0xff]
      %v2298 = vld [vmem:[%s5 + $0x10] sm:$0xff]
      %v2299 = vld [vmem:[%s5 + $0x18] sm:$0xff]
      %v2300 = vld [vmem:[%s5 + $0x20] sm:$0xff]
      %v2301 = vld [vmem:[%s5 + $0x28] sm:$0xff]
      %v2302 = vld [vmem:[%s5 + $0x30] sm:$0xff]
      %v2303 = vld [vmem:[%s5 + $0x38] sm:$0xff]
      %v2305 = vsel %vm1559, %v2288, 0
      %v2308 = vsel %vm1559, %v2289, 0
      %v2311 = vsel %vm1559, %v2290, 0
      %v2314 = vsel %vm1559, %v2291, 0
      %v2317 = vsel %vm1559, %v2292, 0
      %v2320 = vsel %vm1559, %v2293, 0
      %v2323 = vsel %vm1559, %v2294, 0
      %v2326 = vsel %vm1559, %v2295, 0
      %2328 = vmatprep.subr.mxu0 0.0
      %2329 = vmatpush1.msra.mxu0 %v2296
      %2330 = vmatprep.subr.mxu0 0.0
      %2331 = vmatpush1.msra.mxu0 %v2297
      %2332 = vmatprep.subr.mxu0 0.0
      %2333 = vmatpush1.msra.mxu0 %v2298
      %2334 = vmatprep.subr.mxu0 0.0
      %2335 = vmatpush1.msra.mxu0 %v2299
      %2336 = vmatprep.subr.mxu0 0.0
      %2337 = vmatpush1.msra.mxu0 %v2300
      %2338 = vmatprep.subr.mxu0 0.0
      %2339 = vmatpush1.msra.mxu0 %v2301
      %2340 = vmatprep.subr.mxu0 0.0
      %2341 = vmatpush1.msra.mxu0 %v2302
      %2342 = vmatprep.subr.mxu0 0.0
      %2343 = vmatpush1.msra.mxu0 %v2303
      %2344 = vmatprep.subr.mxu0 0.0
      %2345 = vmatpush1.msra.mxu0 0.0
      %2346 = vmatprep.subr.mxu0 0.0
      %2347 = vmatpush1.msra.mxu0 0.0
      %2348 = vmatprep.subr.mxu0 0.0
      %2349 = vmatpush1.msra.mxu0 0.0
      %2350 = vmatprep.subr.mxu0 0.0
      %2351 = vmatpush1.msra.mxu0 0.0
      %2352 = vmatprep.subr.mxu0 0.0
      %2353 = vmatpush1.msra.mxu0 0.0
      %2354 = vmatprep.subr.mxu0 0.0
      %2355 = vmatpush1.msra.mxu0 0.0
      %2356 = vmatprep.subr.mxu0 0.0
      %2357 = vmatpush1.msra.mxu0 0.0
      %2358 = vmatprep.subr.mxu0 0.0
      %2359 = vmatpush1.msra.mxu0 0.0
      %2360 = vmatprep.subr.mxu0 0.0
      %2361 = vmatpush1.msra.mxu0 0.0
      %2362 = vmatprep.subr.mxu0 0.0
      %2363 = vmatpush1.msra.mxu0 0.0
      %2364 = vmatprep.subr.mxu0 0.0
      %2365 = vmatpush1.msra.mxu0 0.0
      %2366 = vmatprep.subr.mxu0 0.0
      %2367 = vmatpush1.msra.mxu0 0.0
      %2368 = vmatprep.subr.mxu0 0.0
      %2369 = vmatpush1.msra.mxu0 0.0
      %2370 = vmatprep.subr.mxu0 0.0
      %2371 = vmatpush1.msra.mxu0 0.0
      %2372 = vmatprep.subr.mxu0 0.0
      %2373 = vmatpush1.msra.mxu0 0.0
      %2374 = vmatprep.subr.mxu0 0.0
      %2375 = vmatpush1.msra.mxu0 0.0
      %2376 = vmatprep.subr.mxu0 0.0
      %2377 = vmatpush1.msra.mxu0 0.0
      %2378 = vmatprep.subr.mxu0 0.0
      %2379 = vmatpush1.msra.mxu0 0.0
      %2380 = vmatprep.subr.mxu0 0.0
      %2381 = vmatpush1.msra.mxu0 0.0
      %2382 = vmatprep.subr.mxu0 0.0
      %2383 = vmatpush1.msra.mxu0 0.0
      %2384 = vmatprep.subr.mxu0 0.0
      %2385 = vmatpush1.msra.mxu0 0.0
      %2386 = vmatprep.subr.mxu0 0.0
      %2387 = vmatpush1.msra.mxu0 0.0
      %2388 = vmatprep.subr.mxu0 0.0
      %2389 = vmatpush1.msra.mxu0 0.0
      %2390 = vmatprep.subr.mxu0 0.0
      %2391 = vmatpush1.msra.mxu0 0.0
      %2392 = vmatprep.mubr.f32.mxu0 0.0
      %2393 = vmatmul.mubr.f32.gmra.mrb[0].mxu0 %v2305
      %v2394 = vpop.f32.mrb[0].mxu0
      %v2395 = vadd.f32 0.0, %v2394
      %v2396 = vpop.f32.mrb[0].mxu0
      %2397 = vmatprep.mubr.f32.mxu0 0.0
      %2398 = vmatmul.mubr.f32.gmra.mrb[0].mxu0 %v2308
      %v2399 = vpop.f32.mrb[0].mxu0
      %v2400 = vadd.f32 0.0, %v2399
      %v2401 = vpop.f32.mrb[0].mxu0
      %2402 = vmatprep.mubr.f32.mxu0 0.0
      %2403 = vmatmul.mubr.f32.gmra.mrb[0].mxu0 %v2311
      %v2404 = vpop.f32.mrb[0].mxu0
      %v2405 = vadd.f32 0.0, %v2404
      %v2406 = vpop.f32.mrb[0].mxu0
      %2407 = vmatprep.mubr.f32.mxu0 0.0
      %2408 = vmatmul.mubr.f32.gmra.mrb[0].mxu0 %v2314
      %v2409 = vpop.f32.mrb[0].mxu0
      %v2410 = vadd.f32 0.0, %v2409
      %v2411 = vpop.f32.mrb[0].mxu0
      %2412 = vmatprep.mubr.f32.mxu0 0.0
      %2413 = vmatmul.mubr.f32.gmra.mrb[0].mxu0 %v2317
      %v2414 = vpop.f32.mrb[0].mxu0
      %v2415 = vadd.f32 0.0, %v2414
      %v2416 = vpop.f32.mrb[0].mxu0
      %2417 = vmatprep.mubr.f32.mxu0 0.0
      %2418 = vmatmul.mubr.f32.gmra.mrb[0].mxu0 %v2320
      %v2419 = vpop.f32.mrb[0].mxu0
      %v2420 = vadd.f32 0.0, %v2419
      %v2421 = vpop.f32.mrb[0].mxu0
      %2422 = vmatprep.mubr.f32.mxu0 0.0
      %2423 = vmatmul.mubr.f32.gmra.mrb[0].mxu0 %v2323
      %v2424 = vpop.f32.mrb[0].mxu0
      %v2425 = vadd.f32 0.0, %v2424
      %v2426 = vpop.f32.mrb[0].mxu0
      %2427 = vmatprep.mubr.f32.mxu0 0.0
      %2428 = vmatmul.mubr.f32.gmra.mrb[0].mxu0 %v2326
      %v2429 = vpop.f32.mrb[0].mxu0
      %v2430 = vadd.f32 0.0, %v2429
      %v2431 = vpop.f32.mrb[0].mxu0
      %2432 = vdwg.mxu0
      %v2433 = vmul.f32 %v2395, 0.20412415
      %v2434 = vmul.f32 %v2400, 0.20412415
      %v2435 = vmul.f32 %v2405, 0.20412415
      %v2436 = vmul.f32 %v2410, 0.20412415
      %v2437 = vmul.f32 %v2415, 0.20412415
      %v2438 = vmul.f32 %v2420, 0.20412415
      %v2439 = vmul.f32 %v2425, 0.20412415
      %v2440 = vmul.f32 %v2430, 0.20412415
      %v2441 = vxor.u32 %v2433, 2147483648
      %v2442 = vxor.u32 %v2434, 2147483648
      %v2443 = vxor.u32 %v2435, 2147483648
      %v2444 = vxor.u32 %v2436, 2147483648
      %v2445 = vxor.u32 %v2437, 2147483648
      %v2446 = vxor.u32 %v2438, 2147483648
      %v2447 = vxor.u32 %v2439, 2147483648
      %v2448 = vxor.u32 %v2440, 2147483648
      %v2449 = vmul.f32 %v2441, 1.442695
      %v2450 = vpow.pop %v2449
      %v2451 = vmul.f32 %v2442, 1.442695
      %v2452 = vpow.pop %v2451
      %v2453 = vmul.f32 %v2443, 1.442695
      %v2454 = vpow.pop %v2453
      %v2455 = vmul.f32 %v2444, 1.442695
      %v2456 = vpow.pop %v2455
      %v2457 = vmul.f32 %v2445, 1.442695
      %v2458 = vpow.pop %v2457
      %v2459 = vmul.f32 %v2446, 1.442695
      %v2460 = vpow.pop %v2459
      %v2461 = vmul.f32 %v2447, 1.442695
      %v2462 = vpow.pop %v2461
      %v2463 = vmul.f32 %v2448, 1.442695
      %v2464 = vpow.pop %v2463
      %v2465 = vadd.f32 %v2450, 1.0
      %v2466 = vadd.f32 %v2452, 1.0
      %v2467 = vadd.f32 %v2454, 1.0
      %v2468 = vadd.f32 %v2456, 1.0
      %v2469 = vadd.f32 %v2458, 1.0
      %v2470 = vadd.f32 %v2460, 1.0
      %v2471 = vadd.f32 %v2462, 1.0
      %v2472 = vadd.f32 %v2464, 1.0
      %v2473 = vrcp.pop %v2465
      %v2474 = vmul.f32 1.0, %v2473
      %v2475 = vrcp.pop %v2466
      %v2476 = vmul.f32 1.0, %v2475
      %v2477 = vrcp.pop %v2467
      %v2478 = vmul.f32 1.0, %v2477
      %v2479 = vrcp.pop %v2468
      %v2480 = vmul.f32 1.0, %v2479
      %v2481 = vrcp.pop %v2469
      %v2482 = vmul.f32 1.0, %v2481
      %v2483 = vrcp.pop %v2470
      %v2484 = vmul.f32 1.0, %v2483
      %v2485 = vrcp.pop %v2471
      %v2486 = vmul.f32 1.0, %v2485
      %v2487 = vrcp.pop %v2472
      %v2488 = vmul.f32 1.0, %v2487
      %v2489 = vld [vmem:[%s803] sm:$0xff]
      %v2490 = vld [vmem:[%s803 + $0x8] sm:$0xff]
      %v2491 = vld [vmem:[%s803 + $0x10] sm:$0xff]
      %v2492 = vld [vmem:[%s803 + $0x18] sm:$0xff]
      %v2493 = vld [vmem:[%s803 + $0x20] sm:$0xff]
      %v2494 = vld [vmem:[%s803 + $0x28] sm:$0xff]
      %v2495 = vld [vmem:[%s803 + $0x30] sm:$0xff]
      %v2496 = vld [vmem:[%s803 + $0x38] sm:$0xff]
      %2498 = vset.pattern.permute.xlu0 0
      %2499 = vperm.xlu0 %2498, %v2489
      %v2500 = vpop.permute.xlu0 %2499
      %2503 = vset.pattern.permute.xlu0 0
      %2504 = vperm.xlu0 %2503, %v2490
      %v2505 = vpop.permute.xlu0 %2504
      %2508 = vset.pattern.permute.xlu0 0
      %2509 = vperm.xlu0 %2508, %v2491
      %v2510 = vpop.permute.xlu0 %2509
      %2513 = vset.pattern.permute.xlu0 0
      %2514 = vperm.xlu0 %2513, %v2492
      %v2515 = vpop.permute.xlu0 %2514
      %2518 = vset.pattern.permute.xlu0 0
      %2519 = vperm.xlu0 %2518, %v2493
      %v2520 = vpop.permute.xlu0 %2519
      %2523 = vset.pattern.permute.xlu0 0
      %2524 = vperm.xlu0 %2523, %v2494
      %v2525 = vpop.permute.xlu0 %2524
      %2528 = vset.pattern.permute.xlu0 0
      %2529 = vperm.xlu0 %2528, %v2495
      %v2530 = vpop.permute.xlu0 %2529
      %2533 = vset.pattern.permute.xlu0 0
      %2534 = vperm.xlu0 %2533, %v2496
      %v2535 = vpop.permute.xlu0 %2534
      %v2537 = vmul.f32 %v2474, %v2500
      %v2538 = vmul.f32 %v2476, %v2505
      %v2539 = vmul.f32 %v2478, %v2510
      %v2540 = vmul.f32 %v2480, %v2515
      %v2541 = vmul.f32 %v2482, %v2520
      %v2542 = vmul.f32 %v2484, %v2525
      %v2543 = vmul.f32 %v2486, %v2530
      %v2544 = vmul.f32 %v2488, %v2535
      %v2545 = vld [vmem:[%s7] sm:$0xff]
      %v2547 = vsel %vm1559, %v2545, 0
      %2549 = vmatprep.subr.mxu0 0.0
      %2550 = vmatpush1.msra.mxu0 %v2537
      %2551 = vmatprep.subr.mxu0 0.0
      %2552 = vmatpush1.msra.mxu0 %v2538
      %2553 = vmatprep.subr.mxu0 0.0
      %2554 = vmatpush1.msra.mxu0 %v2539
      %2555 = vmatprep.subr.mxu0 0.0
      %2556 = vmatpush1.msra.mxu0 %v2540
      %2557 = vmatprep.subr.mxu0 0.0
      %2558 = vmatpush1.msra.mxu0 %v2541
      %2559 = vmatprep.subr.mxu0 0.0
      %2560 = vmatpush1.msra.mxu0 %v2542
      %2561 = vmatprep.subr.mxu0 0.0
      %2562 = vmatpush1.msra.mxu0 %v2543
      %2563 = vmatprep.subr.mxu0 0.0
      %2564 = vmatpush1.msra.mxu0 %v2544
      %2565 = vmatprep.subr.mxu0 0.0
      %2566 = vmatpush1.msra.mxu0 0.0
      %2567 = vmatprep.subr.mxu0 0.0
      %2568 = vmatpush1.msra.mxu0 0.0
      %2569 = vmatprep.subr.mxu0 0.0
      %2570 = vmatpush1.msra.mxu0 0.0
      %2571 = vmatprep.subr.mxu0 0.0
      %2572 = vmatpush1.msra.mxu0 0.0
      %2573 = vmatprep.subr.mxu0 0.0
      %2574 = vmatpush1.msra.mxu0 0.0
      %2575 = vmatprep.subr.mxu0 0.0
      %2576 = vmatpush1.msra.mxu0 0.0
      %2577 = vmatprep.subr.mxu0 0.0
      %2578 = vmatpush1.msra.mxu0 0.0
      %2579 = vmatprep.subr.mxu0 0.0
      %2580 = vmatpush1.msra.mxu0 0.0
      %2581 = vmatprep.subr.mxu0 0.0
      %2582 = vmatpush1.msra.mxu0 0.0
      %2583 = vmatprep.subr.mxu0 0.0
      %2584 = vmatpush1.msra.mxu0 0.0
      %2585 = vmatprep.subr.mxu0 0.0
      %2586 = vmatpush1.msra.mxu0 0.0
      %2587 = vmatprep.subr.mxu0 0.0
      %2588 = vmatpush1.msra.mxu0 0.0
      %2589 = vmatprep.subr.mxu0 0.0
      %2590 = vmatpush1.msra.mxu0 0.0
      %2591 = vmatprep.subr.mxu0 0.0
      %2592 = vmatpush1.msra.mxu0 0.0
      %2593 = vmatprep.subr.mxu0 0.0
      %2594 = vmatpush1.msra.mxu0 0.0
      %2595 = vmatprep.subr.mxu0 0.0
      %2596 = vmatpush1.msra.mxu0 0.0
      %2597 = vmatprep.subr.mxu0 0.0
      %2598 = vmatpush1.msra.mxu0 0.0
      %2599 = vmatprep.subr.mxu0 0.0
      %2600 = vmatpush1.msra.mxu0 0.0
      %2601 = vmatprep.subr.mxu0 0.0
      %2602 = vmatpush1.msra.mxu0 0.0
      %2603 = vmatprep.subr.mxu0 0.0
      %2604 = vmatpush1.msra.mxu0 0.0
      %2605 = vmatprep.subr.mxu0 0.0
      %2606 = vmatpush1.msra.mxu0 0.0
      %2607 = vmatprep.subr.mxu0 0.0
      %2608 = vmatpush1.msra.mxu0 0.0
      %2609 = vmatprep.subr.mxu0 0.0
      %2610 = vmatpush1.msra.mxu0 0.0
      %2611 = vmatprep.subr.mxu0 0.0
      %2612 = vmatpush1.msra.mxu0 0.0
      %2613 = vmatprep.mubr.f32.mxu0 0.0
      %2614 = vmatmul.mubr.f32.gmra.mrb[0].mxu0 %v2547
      %v2615 = vpop.f32.mrb[0].mxu0
      %v2616 = vadd.f32 0.0, %v2615
      %v2617 = vpop.f32.mrb[0].mxu0
      %2618 = vdwg.mxu0
      %2619 = vmatprep.subr.mxu0 0.0
      %2620 = vmatpush1.msra.mxu0 %v2616
      %2621 = vmatprep.subr.mxu0 0.0
      %2622 = vmatpush1.msra.mxu0 0.0
      %2623 = vmatprep.subr.mxu0 0.0
      %2624 = vmatpush1.msra.mxu0 0.0
      %2625 = vmatprep.subr.mxu0 0.0
      %2626 = vmatpush1.msra.mxu0 0.0
      %2627 = vmatprep.subr.mxu0 0.0
      %2628 = vmatpush1.msra.mxu0 0.0
      %2629 = vmatprep.subr.mxu0 0.0
      %2630 = vmatpush1.msra.mxu0 0.0
      %2631 = vmatprep.subr.mxu0 0.0
      %2632 = vmatpush1.msra.mxu0 0.0
      %2633 = vmatprep.subr.mxu0 0.0
      %2634 = vmatpush1.msra.mxu0 0.0
      %2635 = vmatprep.subr.mxu0 0.0
      %2636 = vmatpush1.msra.mxu0 0.0
      %2637 = vmatprep.subr.mxu0 0.0
      %2638 = vmatpush1.msra.mxu0 0.0
      %2639 = vmatprep.subr.mxu0 0.0
      %2640 = vmatpush1.msra.mxu0 0.0
      %2641 = vmatprep.subr.mxu0 0.0
      %2642 = vmatpush1.msra.mxu0 0.0
      %2643 = vmatprep.subr.mxu0 0.0
      %2644 = vmatpush1.msra.mxu0 0.0
      %2645 = vmatprep.subr.mxu0 0.0
      %2646 = vmatpush1.msra.mxu0 0.0
      %2647 = vmatprep.subr.mxu0 0.0
      %2648 = vmatpush1.msra.mxu0 0.0
      %2649 = vmatprep.subr.mxu0 0.0
      %2650 = vmatpush1.msra.mxu0 0.0
      %2651 = vmatprep.subr.mxu0 0.0
      %2652 = vmatpush1.msra.mxu0 0.0
      %2653 = vmatprep.subr.mxu0 0.0
      %2654 = vmatpush1.msra.mxu0 0.0
      %2655 = vmatprep.subr.mxu0 0.0
      %2656 = vmatpush1.msra.mxu0 0.0
      %2657 = vmatprep.subr.mxu0 0.0
      %2658 = vmatpush1.msra.mxu0 0.0
      %2659 = vmatprep.subr.mxu0 0.0
      %2660 = vmatpush1.msra.mxu0 0.0
      %2661 = vmatprep.subr.mxu0 0.0
      %2662 = vmatpush1.msra.mxu0 0.0
      %2663 = vmatprep.subr.mxu0 0.0
      %2664 = vmatpush1.msra.mxu0 0.0
      %2665 = vmatprep.subr.mxu0 0.0
      %2666 = vmatpush1.msra.mxu0 0.0
      %2667 = vmatprep.subr.mxu0 0.0
      %2668 = vmatpush1.msra.mxu0 0.0
      %2669 = vmatprep.subr.mxu0 0.0
      %2670 = vmatpush1.msra.mxu0 0.0
      %2671 = vmatprep.subr.mxu0 0.0
      %2672 = vmatpush1.msra.mxu0 0.0
      %2673 = vmatprep.subr.mxu0 0.0
      %2674 = vmatpush1.msra.mxu0 0.0
      %2675 = vmatprep.subr.mxu0 0.0
      %2676 = vmatpush1.msra.mxu0 0.0
      %2677 = vmatprep.subr.mxu0 0.0
      %2678 = vmatpush1.msra.mxu0 0.0
      %2679 = vmatprep.subr.mxu0 0.0
      %2680 = vmatpush1.msra.mxu0 0.0
      %2681 = vmatprep.subr.mxu0 0.0
      %2682 = vmatpush1.msra.mxu0 0.0
      %2683 = vmatprep.mubr.f32.mxu0 0.0
      %2684 = vmatmul.mubr.f32.gmra.mrb[0].mxu0 %v1431
      %v2685 = vpop.f32.mrb[0].mxu0
      %v2686 = vadd.f32 1e-06, %v2685
      %v2687 = vpop.f32.mrb[0].mxu0
      %2688 = vmatprep.mubr.f32.mxu0 0.0
      %2689 = vmatmul.mubr.f32.gmra.mrb[0].mxu0 %v1434
      %v2690 = vpop.f32.mrb[0].mxu0
      %v2691 = vadd.f32 1e-06, %v2690
      %v2692 = vpop.f32.mrb[0].mxu0
      %2693 = vmatprep.mubr.f32.mxu0 0.0
      %2694 = vmatmul.mubr.f32.gmra.mrb[0].mxu0 %v1437
      %v2695 = vpop.f32.mrb[0].mxu0
      %v2696 = vadd.f32 1e-06, %v2695
      %v2697 = vpop.f32.mrb[0].mxu0
      %2698 = vmatprep.mubr.f32.mxu0 0.0
      %2699 = vmatmul.mubr.f32.gmra.mrb[0].mxu0 %v1440
      %v2700 = vpop.f32.mrb[0].mxu0
      %v2701 = vadd.f32 1e-06, %v2700
      %v2702 = vpop.f32.mrb[0].mxu0
      %2703 = vmatprep.mubr.f32.mxu0 0.0
      %2704 = vmatmul.mubr.f32.gmra.mrb[0].mxu0 %v1443
      %v2705 = vpop.f32.mrb[0].mxu0
      %v2706 = vadd.f32 1e-06, %v2705
      %v2707 = vpop.f32.mrb[0].mxu0
      %2708 = vmatprep.mubr.f32.mxu0 0.0
      %2709 = vmatmul.mubr.f32.gmra.mrb[0].mxu0 %v1446
      %v2710 = vpop.f32.mrb[0].mxu0
      %v2711 = vadd.f32 1e-06, %v2710
      %v2712 = vpop.f32.mrb[0].mxu0
      %2713 = vmatprep.mubr.f32.mxu0 0.0
      %2714 = vmatmul.mubr.f32.gmra.mrb[0].mxu0 %v1449
      %v2715 = vpop.f32.mrb[0].mxu0
      %v2716 = vadd.f32 1e-06, %v2715
      %v2717 = vpop.f32.mrb[0].mxu0
      %2718 = vmatprep.mubr.f32.mxu0 0.0
      %2719 = vmatmul.mubr.f32.gmra.mrb[0].mxu0 %v1452
      %v2720 = vpop.f32.mrb[0].mxu0
      %v2721 = vadd.f32 1e-06, %v2720
      %v2722 = vpop.f32.mrb[0].mxu0
      %2723 = vdwg.mxu0
      %v2724 = vrcp.pop %v2686
      %v2725 = vrcp.pop %v2691
      %v2726 = vrcp.pop %v2696
      %v2727 = vrcp.pop %v2701
      %v2728 = vrcp.pop %v2706
      %v2729 = vrcp.pop %v2711
      %v2730 = vrcp.pop %v2716
      %v2731 = vrcp.pop %v2721
      %v2732 = vmul.f32 %v2537, %v2724
      %v2733 = vmul.f32 %v2538, %v2725
      %v2734 = vmul.f32 %v2539, %v2726
      %v2735 = vmul.f32 %v2540, %v2727
      %v2736 = vmul.f32 %v2541, %v2728
      %v2737 = vmul.f32 %v2542, %v2729
      %v2738 = vmul.f32 %v2543, %v2730
      %v2739 = vmul.f32 %v2544, %v2731
      %v2740 = vld [vmem:[%s6] sm:$0xff]
      %v2742 = vsel %vm1300, %v2732, 0
      %v2745 = vsel %vm1300, %v2733, 0
      %v2748 = vsel %vm1300, %v2734, 0
      %v2751 = vsel %vm1300, %v2735, 0
      %v2754 = vsel %vm1300, %v2736, 0
      %v2757 = vsel %vm1300, %v2737, 0
      %v2760 = vsel %vm1300, %v2738, 0
      %v2763 = vsel %vm1300, %v2739, 0
      %2765 = vmatprep.subr.mxu0 0.0
      %2766 = vmatpush1.msra.mxu0 %v2740
      %2767 = vmatprep.subr.mxu0 0.0
      %2768 = vmatpush1.msra.mxu0 0.0
      %2769 = vmatprep.subr.mxu0 0.0
      %2770 = vmatpush1.msra.mxu0 0.0
      %2771 = vmatprep.subr.mxu0 0.0
      %2772 = vmatpush1.msra.mxu0 0.0
      %2773 = vmatprep.subr.mxu0 0.0
      %2774 = vmatpush1.msra.mxu0 0.0
      %2775 = vmatprep.subr.mxu0 0.0
      %2776 = vmatpush1.msra.mxu0 0.0
      %2777 = vmatprep.subr.mxu0 0.0
      %2778 = vmatpush1.msra.mxu0 0.0
      %2779 = vmatprep.subr.mxu0 0.0
      %2780 = vmatpush1.msra.mxu0 0.0
      %2781 = vmatprep.subr.mxu0 0.0
      %2782 = vmatpush1.msra.mxu0 0.0
      %2783 = vmatprep.subr.mxu0 0.0
      %2784 = vmatpush1.msra.mxu0 0.0
      %2785 = vmatprep.subr.mxu0 0.0
      %2786 = vmatpush1.msra.mxu0 0.0
      %2787 = vmatprep.subr.mxu0 0.0
      %2788 = vmatpush1.msra.mxu0 0.0
      %2789 = vmatprep.subr.mxu0 0.0
      %2790 = vmatpush1.msra.mxu0 0.0
      %2791 = vmatprep.subr.mxu0 0.0
      %2792 = vmatpush1.msra.mxu0 0.0
      %2793 = vmatprep.subr.mxu0 0.0
      %2794 = vmatpush1.msra.mxu0 0.0
      %2795 = vmatprep.subr.mxu0 0.0
      %2796 = vmatpush1.msra.mxu0 0.0
      %2797 = vmatprep.subr.mxu0 0.0
      %2798 = vmatpush1.msra.mxu0 0.0
      %2799 = vmatprep.subr.mxu0 0.0
      %2800 = vmatpush1.msra.mxu0 0.0
      %2801 = vmatprep.subr.mxu0 0.0
      %2802 = vmatpush1.msra.mxu0 0.0
      %2803 = vmatprep.subr.mxu0 0.0
      %2804 = vmatpush1.msra.mxu0 0.0
      %2805 = vmatprep.subr.mxu0 0.0
      %2806 = vmatpush1.msra.mxu0 0.0
      %2807 = vmatprep.subr.mxu0 0.0
      %2808 = vmatpush1.msra.mxu0 0.0
      %2809 = vmatprep.subr.mxu0 0.0
      %2810 = vmatpush1.msra.mxu0 0.0
      %2811 = vmatprep.subr.mxu0 0.0
      %2812 = vmatpush1.msra.mxu0 0.0
      %2813 = vmatprep.subr.mxu0 0.0
      %2814 = vmatpush1.msra.mxu0 0.0
      %2815 = vmatprep.subr.mxu0 0.0
      %2816 = vmatpush1.msra.mxu0 0.0
      %2817 = vmatprep.subr.mxu0 0.0
      %2818 = vmatpush1.msra.mxu0 0.0
      %2819 = vmatprep.subr.mxu0 0.0
      %2820 = vmatpush1.msra.mxu0 0.0
      %2821 = vmatprep.subr.mxu0 0.0
      %2822 = vmatpush1.msra.mxu0 0.0
      %2823 = vmatprep.subr.mxu0 0.0
      %2824 = vmatpush1.msra.mxu0 0.0
      %2825 = vmatprep.subr.mxu0 0.0
      %2826 = vmatpush1.msra.mxu0 0.0
      %2827 = vmatprep.subr.mxu0 0.0
      %2828 = vmatpush1.msra.mxu0 0.0
      %2829 = vmatprep.mubr.f32.mxu0 0.0
      %2830 = vmatmul.mubr.f32.gmra.mrb[0].mxu0 %v2742
      %v2831 = vpop.f32.mrb[0].mxu0
      %v2832 = vadd.f32 0.0, %v2831
      %v2833 = vpop.f32.mrb[0].mxu0
      %2834 = vmatprep.mubr.f32.mxu0 0.0
      %2835 = vmatmul.mubr.f32.gmra.mrb[0].mxu0 %v2745
      %v2836 = vpop.f32.mrb[0].mxu0
      %v2837 = vadd.f32 0.0, %v2836
      %v2838 = vpop.f32.mrb[0].mxu0
      %2839 = vmatprep.mubr.f32.mxu0 0.0
      %2840 = vmatmul.mubr.f32.gmra.mrb[0].mxu0 %v2748
      %v2841 = vpop.f32.mrb[0].mxu0
      %v2842 = vadd.f32 0.0, %v2841
      %v2843 = vpop.f32.mrb[0].mxu0
      %2844 = vmatprep.mubr.f32.mxu0 0.0
      %2845 = vmatmul.mubr.f32.gmra.mrb[0].mxu0 %v2751
      %v2846 = vpop.f32.mrb[0].mxu0
      %v2847 = vadd.f32 0.0, %v2846
      %v2848 = vpop.f32.mrb[0].mxu0
      %2849 = vmatprep.mubr.f32.mxu0 0.0
      %2850 = vmatmul.mubr.f32.gmra.mrb[0].mxu0 %v2754
      %v2851 = vpop.f32.mrb[0].mxu0
      %v2852 = vadd.f32 0.0, %v2851
      %v2853 = vpop.f32.mrb[0].mxu0
      %2854 = vmatprep.mubr.f32.mxu0 0.0
      %2855 = vmatmul.mubr.f32.gmra.mrb[0].mxu0 %v2757
      %v2856 = vpop.f32.mrb[0].mxu0
      %v2857 = vadd.f32 0.0, %v2856
      %v2858 = vpop.f32.mrb[0].mxu0
      %2859 = vmatprep.mubr.f32.mxu0 0.0
      %2860 = vmatmul.mubr.f32.gmra.mrb[0].mxu0 %v2760
      %v2861 = vpop.f32.mrb[0].mxu0
      %v2862 = vadd.f32 0.0, %v2861
      %v2863 = vpop.f32.mrb[0].mxu0
      %2864 = vmatprep.mubr.f32.mxu0 0.0
      %2865 = vmatmul.mubr.f32.gmra.mrb[0].mxu0 %v2763
      %v2866 = vpop.f32.mrb[0].mxu0
      %v2867 = vadd.f32 0.0, %v2866
      %v2868 = vpop.f32.mrb[0].mxu0
      %2869 = vdwg.mxu0
      %v2870 = vmul.f32 %v2832, %v1874
      %v2871 = vmul.f32 %v2837, %v1879
      %v2872 = vmul.f32 %v2842, %v1884
      %v2873 = vmul.f32 %v2847, %v1889
      %v2874 = vmul.f32 %v2852, %v1894
      %v2875 = vmul.f32 %v2857, %v1899
      %v2876 = vmul.f32 %v2862, %v1904
      %v2877 = vmul.f32 %v2867, %v1909
      %v2878 = vld [vmem:[%s20] sm:$0xff]
      %v2879 = vld [vmem:[%s20 + $0x8] sm:$0xff]
      %v2880 = vld [vmem:[%s20 + $0x10] sm:$0xff]
      %v2881 = vld [vmem:[%s20 + $0x18] sm:$0xff]
      %v2882 = vld [vmem:[%s20 + $0x20] sm:$0xff]
      %v2883 = vld [vmem:[%s20 + $0x28] sm:$0xff]
      %v2884 = vld [vmem:[%s21] sm:$0x1]
      %v2886 = vlaneseq
      %v2887 = vshrl.u32 %v2886, 7
      %v2888 = vsub.s32 0, %v2887
      %v2889 = vrot.slane %v2884, %v2888
      %2891 = vmatprep.subr.mxu0 0.0
      %2892 = vmatpush1.msra.mxu0 %v2878
      %2893 = vmatprep.subr.mxu0 0.0
      %2894 = vmatpush1.msra.mxu0 %v2879
      %2895 = vmatprep.subr.mxu0 0.0
      %2896 = vmatpush1.msra.mxu0 %v2880
      %2897 = vmatprep.subr.mxu0 0.0
      %2898 = vmatpush1.msra.mxu0 %v2881
      %2899 = vmatprep.subr.mxu0 0.0
      %2900 = vmatpush1.msra.mxu0 %v2882
      %2901 = vmatprep.subr.mxu0 0.0
      %2902 = vmatpush1.msra.mxu0 %v2883
      %2903 = vmatprep.subr.mxu0 0.0
      %2904 = vmatpush1.msra.mxu0 0.0
      %2905 = vmatprep.subr.mxu0 0.0
      %2906 = vmatpush1.msra.mxu0 0.0
      %2907 = vmatprep.subr.mxu0 0.0
      %2908 = vmatpush1.msra.mxu0 0.0
      %2909 = vmatprep.subr.mxu0 0.0
      %2910 = vmatpush1.msra.mxu0 0.0
      %2911 = vmatprep.subr.mxu0 0.0
      %2912 = vmatpush1.msra.mxu0 0.0
      %2913 = vmatprep.subr.mxu0 0.0
      %2914 = vmatpush1.msra.mxu0 0.0
      %2915 = vmatprep.subr.mxu0 0.0
      %2916 = vmatpush1.msra.mxu0 0.0
      %2917 = vmatprep.subr.mxu0 0.0
      %2918 = vmatpush1.msra.mxu0 0.0
      %2919 = vmatprep.subr.mxu0 0.0
      %2920 = vmatpush1.msra.mxu0 0.0
      %2921 = vmatprep.subr.mxu0 0.0
      %2922 = vmatpush1.msra.mxu0 0.0
      %2923 = vmatprep.subr.mxu0 0.0
      %2924 = vmatpush1.msra.mxu0 0.0
      %2925 = vmatprep.subr.mxu0 0.0
      %2926 = vmatpush1.msra.mxu0 0.0
      %2927 = vmatprep.subr.mxu0 0.0
      %2928 = vmatpush1.msra.mxu0 0.0
      %2929 = vmatprep.subr.mxu0 0.0
      %2930 = vmatpush1.msra.mxu0 0.0
      %2931 = vmatprep.subr.mxu0 0.0
      %2932 = vmatpush1.msra.mxu0 0.0
      %2933 = vmatprep.subr.mxu0 0.0
      %2934 = vmatpush1.msra.mxu0 0.0
      %2935 = vmatprep.subr.mxu0 0.0
      %2936 = vmatpush1.msra.mxu0 0.0
      %2937 = vmatprep.subr.mxu0 0.0
      %2938 = vmatpush1.msra.mxu0 0.0
      %2939 = vmatprep.subr.mxu0 0.0
      %2940 = vmatpush1.msra.mxu0 0.0
      %2941 = vmatprep.subr.mxu0 0.0
      %2942 = vmatpush1.msra.mxu0 0.0
      %2943 = vmatprep.subr.mxu0 0.0
      %2944 = vmatpush1.msra.mxu0 0.0
      %2945 = vmatprep.subr.mxu0 0.0
      %2946 = vmatpush1.msra.mxu0 0.0
      %2947 = vmatprep.subr.mxu0 0.0
      %2948 = vmatpush1.msra.mxu0 0.0
      %2949 = vmatprep.subr.mxu0 0.0
      %2950 = vmatpush1.msra.mxu0 0.0
      %2951 = vmatprep.subr.mxu0 0.0
      %2952 = vmatpush1.msra.mxu0 0.0
      %2953 = vmatprep.subr.mxu0 0.0
      %2954 = vmatpush1.msra.mxu0 0.0
      %2955 = vmatprep.mubr.f32.mxu0 0.0
      %2956 = vmatmul.mubr.f32.gmra.mrb[0].mxu0 %v1158
      %v2957 = vpop.f32.mrb[0].mxu0
      %v2958 = vadd.f32 %v2889, %v2957
      %v2959 = vpop.f32.mrb[0].mxu0
      %2960 = vdwg.mxu0
      %v2961 = vxor.u32 %v2958, 2147483648
      %v2962 = vmul.f32 %v2961, 1.442695
      %v2963 = vpow.pop %v2962
      %v2964 = vadd.f32 %v2963, 1.0
      %v2965 = vrcp.pop %v2964
      %v2966 = vmul.f32 1.0, %v2965
      %v2967 = vmul.f32 %v2958, %v2966
      %2968 = vmatprep.subr.mxu0 0.0
      %2969 = vmatpush1.msra.mxu0 %v2870
      %2970 = vmatprep.subr.mxu0 0.0
      %2971 = vmatpush1.msra.mxu0 %v2871
      %2972 = vmatprep.subr.mxu0 0.0
      %2973 = vmatpush1.msra.mxu0 %v2872
      %2974 = vmatprep.subr.mxu0 0.0
      %2975 = vmatpush1.msra.mxu0 %v2873
      %2976 = vmatprep.subr.mxu0 0.0
      %2977 = vmatpush1.msra.mxu0 %v2874
      %2978 = vmatprep.subr.mxu0 0.0
      %2979 = vmatpush1.msra.mxu0 %v2875
      %2980 = vmatprep.subr.mxu0 0.0
      %2981 = vmatpush1.msra.mxu0 %v2876
      %2982 = vmatprep.subr.mxu0 0.0
      %2983 = vmatpush1.msra.mxu0 %v2877
      %2984 = vmatprep.subr.mxu0 0.0
      %2985 = vmatpush1.msra.mxu0 0.0
      %2986 = vmatprep.subr.mxu0 0.0
      %2987 = vmatpush1.msra.mxu0 0.0
      %2988 = vmatprep.subr.mxu0 0.0
      %2989 = vmatpush1.msra.mxu0 0.0
      %2990 = vmatprep.subr.mxu0 0.0
      %2991 = vmatpush1.msra.mxu0 0.0
      %2992 = vmatprep.subr.mxu0 0.0
      %2993 = vmatpush1.msra.mxu0 0.0
      %2994 = vmatprep.subr.mxu0 0.0
      %2995 = vmatpush1.msra.mxu0 0.0
      %2996 = vmatprep.subr.mxu0 0.0
      %2997 = vmatpush1.msra.mxu0 0.0
      %2998 = vmatprep.subr.mxu0 0.0
      %2999 = vmatpush1.msra.mxu0 0.0
      %3000 = vmatprep.subr.mxu0 0.0
      %3001 = vmatpush1.msra.mxu0 0.0
      %3002 = vmatprep.subr.mxu0 0.0
      %3003 = vmatpush1.msra.mxu0 0.0
      %3004 = vmatprep.subr.mxu0 0.0
      %3005 = vmatpush1.msra.mxu0 0.0
      %3006 = vmatprep.subr.mxu0 0.0
      %3007 = vmatpush1.msra.mxu0 0.0
      %3008 = vmatprep.subr.mxu0 0.0
      %3009 = vmatpush1.msra.mxu0 0.0
      %3010 = vmatprep.subr.mxu0 0.0
      %3011 = vmatpush1.msra.mxu0 0.0
      %3012 = vmatprep.subr.mxu0 0.0
      %3013 = vmatpush1.msra.mxu0 0.0
      %3014 = vmatprep.subr.mxu0 0.0
      %3015 = vmatpush1.msra.mxu0 0.0
      %3016 = vmatprep.subr.mxu0 0.0
      %3017 = vmatpush1.msra.mxu0 0.0
      %3018 = vmatprep.subr.mxu0 0.0
      %3019 = vmatpush1.msra.mxu0 0.0
      %3020 = vmatprep.subr.mxu0 0.0
      %3021 = vmatpush1.msra.mxu0 0.0
      %3022 = vmatprep.subr.mxu0 0.0
      %3023 = vmatpush1.msra.mxu0 0.0
      %3024 = vmatprep.subr.mxu0 0.0
      %3025 = vmatpush1.msra.mxu0 0.0
      %3026 = vmatprep.subr.mxu0 0.0
      %3027 = vmatpush1.msra.mxu0 0.0
      %3028 = vmatprep.subr.mxu0 0.0
      %3029 = vmatpush1.msra.mxu0 0.0
      %3030 = vmatprep.subr.mxu0 0.0
      %3031 = vmatpush1.msra.mxu0 0.0
      %3032 = vmatprep.mubr.f32.mxu0 0.0
      %3033 = vmatmul.mubr.f32.gmra.mrb[0].mxu0 %v2547
      %v3034 = vpop.f32.mrb[0].mxu0
      %v3035 = vadd.f32 %v2967, %v3034
      %v3036 = vpop.f32.mrb[0].mxu0
      %3037 = vdwg.mxu0
      %v3038 = vsel %vm1559, %v3035, -inf
      %v3039 = vrot.slane %v3038, 4
      %v3040 = vmax.f32 %v3038, %v3039
      %v3041 = vrot.slane %v3040, 2
      %v3042 = vmax.f32 %v3040, %v3041
      %v3043 = vrot.slane %v3042, 1
      %v3044 = vmax.f32 %v3042, %v3043
      %v3045 = vld [vmem:[%s22] sm:$0xff]
      %v3046 = vld [vmem:[%s22 + $0x8] sm:$0xff]
      %v3047 = vld [vmem:[%s22 + $0x10] sm:$0xff]
      %v3048 = vld [vmem:[%s22 + $0x18] sm:$0xff]
      %v3049 = vld [vmem:[%s22 + $0x20] sm:$0xff]
      %v3050 = vld [vmem:[%s22 + $0x28] sm:$0xff]
      %v3051 = vld [vmem:[%s22 + $0x30] sm:$0xff]
      %v3052 = vld [vmem:[%s22 + $0x38] sm:$0xff]
      %v3053 = vld [vmem:[%s22 + $0x40] sm:$0xff]
      %v3054 = vld [vmem:[%s22 + $0x48] sm:$0xff]
      %v3055 = vld [vmem:[%s22 + $0x50] sm:$0xff]
      %v3056 = vld [vmem:[%s22 + $0x58] sm:$0xff]
      %v3057 = vld [vmem:[%s22 + $0x60] sm:$0xff]
      %v3058 = vld [vmem:[%s22 + $0x68] sm:$0xff]
      %v3059 = vld [vmem:[%s22 + $0x70] sm:$0xff]
      %v3060 = vld [vmem:[%s22 + $0x78] sm:$0xff]
      %v3062 = vsel %vm1559, %v3044, 0
      %3064 = vmatprep.subr.mxu0 0.0
      %3065 = vmatpush1.msra.mxu0 %v3053
      %3066 = vmatprep.subr.mxu0 0.0
      %3067 = vmatpush1.msra.mxu0 %v3054
      %3068 = vmatprep.subr.mxu0 0.0
      %3069 = vmatpush1.msra.mxu0 %v3055
      %3070 = vmatprep.subr.mxu0 0.0
      %3071 = vmatpush1.msra.mxu0 %v3056
      %3072 = vmatprep.subr.mxu0 0.0
      %3073 = vmatpush1.msra.mxu0 %v3057
      %3074 = vmatprep.subr.mxu0 0.0
      %3075 = vmatpush1.msra.mxu0 %v3058
      %3076 = vmatprep.subr.mxu0 0.0
      %3077 = vmatpush1.msra.mxu0 %v3059
      %3078 = vmatprep.subr.mxu0 0.0
      %3079 = vmatpush1.msra.mxu0 %v3060
      %3080 = vmatprep.subr.mxu0 0.0
      %3081 = vmatpush1.msra.mxu0 0.0
      %3082 = vmatprep.subr.mxu0 0.0
      %3083 = vmatpush1.msra.mxu0 0.0
      %3084 = vmatprep.subr.mxu0 0.0
      %3085 = vmatpush1.msra.mxu0 0.0
      %3086 = vmatprep.subr.mxu0 0.0
      %3087 = vmatpush1.msra.mxu0 0.0
      %3088 = vmatprep.subr.mxu0 0.0
      %3089 = vmatpush1.msra.mxu0 0.0
      %3090 = vmatprep.subr.mxu0 0.0
      %3091 = vmatpush1.msra.mxu0 0.0
      %3092 = vmatprep.subr.mxu0 0.0
      %3093 = vmatpush1.msra.mxu0 0.0
      %3094 = vmatprep.subr.mxu0 0.0
      %3095 = vmatpush1.msra.mxu0 0.0
      %3096 = vmatprep.subr.mxu0 0.0
      %3097 = vmatpush1.msra.mxu0 0.0
      %3098 = vmatprep.subr.mxu0 0.0
      %3099 = vmatpush1.msra.mxu0 0.0
      %3100 = vmatprep.subr.mxu0 0.0
      %3101 = vmatpush1.msra.mxu0 0.0
      %3102 = vmatprep.subr.mxu0 0.0
      %3103 = vmatpush1.msra.mxu0 0.0
      %3104 = vmatprep.subr.mxu0 0.0
      %3105 = vmatpush1.msra.mxu0 0.0
      %3106 = vmatprep.subr.mxu0 0.0
      %3107 = vmatpush1.msra.mxu0 0.0
      %3108 = vmatprep.subr.mxu0 0.0
      %3109 = vmatpush1.msra.mxu0 0.0
      %3110 = vmatprep.subr.mxu0 0.0
      %3111 = vmatpush1.msra.mxu0 0.0
      %3112 = vmatprep.subr.mxu0 0.0
      %3113 = vmatpush1.msra.mxu0 0.0
      %3114 = vmatprep.subr.mxu0 0.0
      %3115 = vmatpush1.msra.mxu0 0.0
      %3116 = vmatprep.subr.mxu0 0.0
      %3117 = vmatpush1.msra.mxu0 0.0
      %3118 = vmatprep.subr.mxu0 0.0
      %3119 = vmatpush1.msra.mxu0 0.0
      %3120 = vmatprep.subr.mxu0 0.0
      %3121 = vmatpush1.msra.mxu0 0.0
      %3122 = vmatprep.subr.mxu0 0.0
      %3123 = vmatpush1.msra.mxu0 0.0
      %3124 = vmatprep.subr.mxu0 0.0
      %3125 = vmatpush1.msra.mxu0 0.0
      %3126 = vmatprep.subr.mxu0 0.0
      %3127 = vmatpush1.msra.mxu0 0.0
      %3128 = vmatprep.mubr.f32.mxu0 0.0
      %3129 = vmatmul.mubr.f32.gmra.mrb[0].mxu0 %v3062
      %v3130 = vpop.f32.mrb[0].mxu0
      %v3131 = vadd.f32 0.0, %v3130
      %v3132 = vpop.f32.mrb[0].mxu0
      %3133 = vdwg.mxu0
      %v3134 = vlaneseq
      %v3135 = vshrl.u32 %v3134, 7
      %v3136 = vsub.s32 0, %v3135
      %v3137 = vrot.slane %v3131, %v3136
      %v3139 = vsel %vm1559, %v3035, 0
      %3141 = vmatprep.subr.mxu0 0.0
      %3142 = vmatpush1.msra.mxu0 %v3045
      %3143 = vmatprep.subr.mxu0 0.0
      %3144 = vmatpush1.msra.mxu0 %v3046
      %3145 = vmatprep.subr.mxu0 0.0
      %3146 = vmatpush1.msra.mxu0 %v3047
      %3147 = vmatprep.subr.mxu0 0.0
      %3148 = vmatpush1.msra.mxu0 %v3048
      %3149 = vmatprep.subr.mxu0 0.0
      %3150 = vmatpush1.msra.mxu0 %v3049
      %3151 = vmatprep.subr.mxu0 0.0
      %3152 = vmatpush1.msra.mxu0 %v3050
      %3153 = vmatprep.subr.mxu0 0.0
      %3154 = vmatpush1.msra.mxu0 %v3051
      %3155 = vmatprep.subr.mxu0 0.0
      %3156 = vmatpush1.msra.mxu0 %v3052
      %3157 = vmatprep.subr.mxu0 0.0
      %3158 = vmatpush1.msra.mxu0 0.0
      %3159 = vmatprep.subr.mxu0 0.0
      %3160 = vmatpush1.msra.mxu0 0.0
      %3161 = vmatprep.subr.mxu0 0.0
      %3162 = vmatpush1.msra.mxu0 0.0
      %3163 = vmatprep.subr.mxu0 0.0
      %3164 = vmatpush1.msra.mxu0 0.0
      %3165 = vmatprep.subr.mxu0 0.0
      %3166 = vmatpush1.msra.mxu0 0.0
      %3167 = vmatprep.subr.mxu0 0.0
      %3168 = vmatpush1.msra.mxu0 0.0
      %3169 = vmatprep.subr.mxu0 0.0
      %3170 = vmatpush1.msra.mxu0 0.0
      %3171 = vmatprep.subr.mxu0 0.0
      %3172 = vmatpush1.msra.mxu0 0.0
      %3173 = vmatprep.subr.mxu0 0.0
      %3174 = vmatpush1.msra.mxu0 0.0
      %3175 = vmatprep.subr.mxu0 0.0
      %3176 = vmatpush1.msra.mxu0 0.0
      %3177 = vmatprep.subr.mxu0 0.0
      %3178 = vmatpush1.msra.mxu0 0.0
      %3179 = vmatprep.subr.mxu0 0.0
      %3180 = vmatpush1.msra.mxu0 0.0
      %3181 = vmatprep.subr.mxu0 0.0
      %3182 = vmatpush1.msra.mxu0 0.0
      %3183 = vmatprep.subr.mxu0 0.0
      %3184 = vmatpush1.msra.mxu0 0.0
      %3185 = vmatprep.subr.mxu0 0.0
      %3186 = vmatpush1.msra.mxu0 0.0
      %3187 = vmatprep.subr.mxu0 0.0
      %3188 = vmatpush1.msra.mxu0 0.0
      %3189 = vmatprep.subr.mxu0 0.0
      %3190 = vmatpush1.msra.mxu0 0.0
      %3191 = vmatprep.subr.mxu0 0.0
      %3192 = vmatpush1.msra.mxu0 0.0
      %3193 = vmatprep.subr.mxu0 0.0
      %3194 = vmatpush1.msra.mxu0 0.0
      %3195 = vmatprep.subr.mxu0 0.0
      %3196 = vmatpush1.msra.mxu0 0.0
      %3197 = vmatprep.subr.mxu0 0.0
      %3198 = vmatpush1.msra.mxu0 0.0
      %3199 = vmatprep.subr.mxu0 0.0
      %3200 = vmatpush1.msra.mxu0 0.0
      %3201 = vmatprep.subr.mxu0 0.0
      %3202 = vmatpush1.msra.mxu0 0.0
      %3203 = vmatprep.subr.mxu0 0.0
      %3204 = vmatpush1.msra.mxu0 0.0
      %3205 = vmatprep.mubr.f32.mxu0 0.0
      %3206 = vmatmul.mubr.f32.gmra.mrb[0].mxu0 %v3139
      %v3207 = vpop.f32.mrb[0].mxu0
      %v3208 = vadd.f32 %v3137, %v3207
      %v3209 = vpop.f32.mrb[0].mxu0
      %3210 = vdwg.mxu0
      %v3211 = vld [vmem:[%s23] sm:$0x1]
      %v3213 = vlaneseq
      %v3214 = vshrl.u32 %v3213, 7
      %v3215 = vsub.s32 0, %v3214
      %v3216 = vrot.slane %v3211, %v3215
      %v3218 = vadd.f32 %v3208, %v3216
      %v3219 = vxor.u32 %v3218, 2147483648
      %v3220 = vmul.f32 %v3219, 1.442695
      %v3221 = vpow.pop %v3220
      %v3222 = vadd.f32 %v3221, 1.0
      %v3223 = vrcp.pop %v3222
      %v3224 = vmul.f32 1.0, %v3223
      %v3225 = vmul.f32 %v3218, %v3224
      %vm3226 = vcmask 261120
      %3227 = vst.msk [vmem:[%s807] sm:$0xff] %vm3226, %v3225
      %3228 = vst.msk [vmem:[%s812] sm:$0xff] %vm1559, %v1874
      %3229 = vst.msk [vmem:[%s812 + $0x8] sm:$0xff] %vm1559, %v1879
      %3230 = vst.msk [vmem:[%s812 + $0x10] sm:$0xff] %vm1559, %v1884
      %3231 = vst.msk [vmem:[%s812 + $0x18] sm:$0xff] %vm1559, %v1889
      %3232 = vst.msk [vmem:[%s812 + $0x20] sm:$0xff] %vm1559, %v1894
      %3233 = vst.msk [vmem:[%s812 + $0x28] sm:$0xff] %vm1559, %v1899
      %3234 = vst.msk [vmem:[%s812 + $0x30] sm:$0xff] %vm1559, %v1904
      %3235 = vst.msk [vmem:[%s812 + $0x38] sm:$0xff] %vm1559, %v1909
      %p3236 = scmp.lt.s32.totalorder %s37, 1
      %s3237 = scalar_select %p3236, %s37, 1
      %s3238 = smul.addr %s3237, 8
      %s3239 = scalar_lea.vmem %s24, %s3238
      %p3240 = scmp.lt.s32.totalorder %s37, 1
      %s3241 = scalar_select %p3240, %s37, 1
      %s3242 = smul.addr %s3241, 8
      %s3243 = smul.addr %s3242, 8
      %s3244 = scalar_lea.vmem %s25, %s3243
      // Predicated region
      $region117: #{_lambda_.9} parent=115 // pred_check
        %p3245 = pneg %p574
      $region118: #{_lambda_.9} parent=115 // pred_check_branch
        %3247 = sbr.rel (%p3245) target = $region120
      $region119: #{_lambda_.9} parent=115 // pred_region
        _
      $region120: #{_lambda_.9} parent=115 // pred_fallthru
        _
      // Predicated region
      $region121: #{_lambda_.9} parent=115 // pred_check
        %p3248 = pneg %p600
      $region122: #{_lambda_.9} parent=115 // pred_check_branch
        %3250 = sbr.rel (%p3248) target = $region124
      $region123: #{_lambda_.9} parent=115 // pred_region
        _
      $region124: #{_lambda_.9} parent=115 // pred_fallthru
        _
    $region116: #{_lambda_.9} parent=5 // pred_fallthru
      _
    %p3251 = scmp.le.s32.totalorder 2, %s32
    // Predicated region
    $region125: #{_lambda_.9} parent=5 // pred_check
      %p3252 = pneg %p3251
    $region126: #{_lambda_.9} parent=5 // pred_check_branch
      %3254 = sbr.rel (%p3252) target = $region128
    $region127: #{_lambda_.9} parent=5 // pred_region
      %s3255 = ssub.s32 %s32, 2
      // Predicated region
      $region129: #{_lambda_.9} parent=127 // pred_check
        %p3256 = pneg %p580
      $region130: #{_lambda_.9} parent=127 // pred_check_branch
        %3258 = sbr.rel (%p3256) target = $region132
      $region131: #{_lambda_.9} parent=127 // pred_region
        %p3259 = scmp.lt.s32.totalorder %s38, 1
        %s3260 = scalar_select %p3259, %s38, 1
        %s3261 = smul.addr %s3260, 8
        %s3262 = scalar_lea.vmem %s24, %s3261
      $region132: #{_lambda_.9} parent=127 // pred_fallthru
        _
      // Predicated region
      $region133: #{_lambda_.9} parent=127 // pred_check
        %p3263 = pneg %p606
      $region134: #{_lambda_.9} parent=127 // pred_check_branch
        %3265 = sbr.rel (%p3263) target = $region136
      $region135: #{_lambda_.9} parent=127 // pred_region
        %p3266 = scmp.lt.s32.totalorder %s38, 1
        %s3267 = scalar_select %p3266, %s38, 1
        %s3268 = smul.addr %s3267, 8
        %s3269 = smul.addr %s3268, 8
        %s3270 = scalar_lea.vmem %s25, %s3269
      $region136: #{_lambda_.9} parent=127 // pred_fallthru
        _
    $region128: #{_lambda_.9} parent=5 // pred_fallthru
      _
  $region6: #{_lambda_.9} parent=0 // loop_footer
    %s36 = sadd.s32 1, %s32
  $region7: #{_lambda_.9} parent=0 // loop_footer_branch
    %31 = sbr.rel target = $region3
  $region8: #{_lambda_.9} parent=0 // loop_exit
    _

// kernel: _lambda_.8
$region0: #{_lambda_.8}
  #allocation0 [shape = 'u32[]', space=smem, size = 0x4, offset = 0x4, fixed_abs, tag = 'smem constant byte address 0x4 - core index']
  #allocation1 [shape = 'u32[144,128]{1,0:T(1,128)}', space=vmem, size = 0x12000, scoped, tag = 'internal scratch']
  %s0 = inlined_call_operand.vmem [shape: f32[2,8,56], index: 0, kind: input, shape index: {}]
  %s1 = inlined_call_operand.vmem [shape: f32[2,64,72], index: 1, kind: input, shape index: {}]
  %s2 = inlined_call_operand.vmem [shape: f32[2,64,1], index: 2, kind: input, shape index: {}]
  %s3 = inlined_call_operand.vmem [shape: f32[64,8], index: 3, kind: input, shape index: {}, may-alias: {3,5}]
  %s4 = inlined_call_operand.vmem [shape: f32[64,8], index: 4, kind: input, shape index: {}]
  %s5 = inlined_call_operand.vmem [shape: f32[64,8], index: 5, kind: input, shape index: {}, may-alias: {3,5}]
  %s6 = inlined_call_operand.vmem [shape: f32[8,64], index: 6, kind: input, shape index: {}, may-alias: {6,7}]
  %s7 = inlined_call_operand.vmem [shape: f32[8,64], index: 7, kind: input, shape index: {}, may-alias: {6,7}]
  %s8 = inlined_call_operand.vmem [shape: f32[56,32], index: 8, kind: input, shape index: {}]
  %s9 = inlined_call_operand.vmem [shape: f32[1,32], index: 9, kind: input, shape index: {}]
  %s10 = inlined_call_operand.vmem [shape: f32[72,64], index: 10, kind: input, shape index: {}]
  %s11 = inlined_call_operand.vmem [shape: f32[1,64], index: 11, kind: input, shape index: {}]
  %s12 = inlined_call_operand.vmem [shape: f32[128,64], index: 12, kind: input, shape index: {}]
  %s13 = inlined_call_operand.vmem [shape: f32[1,64], index: 13, kind: input, shape index: {}]
  %s14 = inlined_call_operand.vmem [shape: f32[64,64], index: 14, kind: input, shape index: {}]
  %s15 = inlined_call_operand.vmem [shape: f32[1,64], index: 15, kind: input, shape index: {}]
  %s16 = inlined_call_operand.vmem [shape: f32[32,64], index: 16, kind: input, shape index: {}]
  %s17 = inlined_call_operand.vmem [shape: f32[1,64], index: 17, kind: input, shape index: {}]
  %s18 = inlined_call_operand.vmem [shape: f32[32,64], index: 18, kind: input, shape index: {}]
  %s19 = inlined_call_operand.vmem [shape: f32[1,64], index: 19, kind: input, shape index: {}]
  %s20 = inlined_call_operand.vmem [shape: f32[32,64], index: 20, kind: input, shape index: {}]
  %s21 = inlined_call_operand.vmem [shape: f32[1,64], index: 21, kind: input, shape index: {}]
  %s22 = inlined_call_operand.vmem [shape: f32[128,48], index: 22, kind: input, shape index: {}]
  %s23 = inlined_call_operand.vmem [shape: f32[1,48], index: 23, kind: input, shape index: {}]
  %s24 = inlined_call_operand.vmem [shape: f32[2,8,48], index: 24, kind: output, shape index: {0}]
  %s25 = inlined_call_operand.vmem [shape: f32[2,64,64], index: 25, kind: output, shape index: {1}]
  %26 = xla_tuple %s24, %s25
  %s27 = sld [smem:[#allocation0]]
  $region137: #{_lambda_.8} parent=0
    _
  %s29 = ssub.s32 1, %s27
  %s30 = scalar_select 0, %s29, %s27
  loop: start=0, step=1, limit=4
  $region2: #{_lambda_.8} parent=0 // loop_pre_header
    _
  $region3: #{_lambda_.8} parent=0 // loop_header
    %s32 = sphi 0, %s36
    %p33 = scmp.ge.s32.totalorder %s32, 4
    %s42 = sphi 0, %s44
    %s45 = sphi 0, %s42
    %s46 = sphi 0, %s45
    %s62 = sphi 0, %s46
    %s68 = sphi 0, %s70
    %s71 = sphi 0, %s68
    %s72 = sphi 0, %s71
    %s88 = sphi 0, %s72
    %s94 = sphi 0, %s96
    %s97 = sphi 0, %s94
    %s98 = sphi 0, %s97
    %s114 = sphi 0, %s98
    %s118 = sphi 0, %s118
    %s120 = sphi 0, %s118
    %s121 = sphi 0, %s120
    %s135 = sphi 0, %s121
    %s139 = sphi 0, %s139
    %s141 = sphi 0, %s139
    %s142 = sphi 0, %s141
    %s156 = sphi 0, %s142
    %s160 = sphi 0, %s160
    %s162 = sphi 0, %s160
    %s163 = sphi 0, %s162
    %s177 = sphi 0, %s163
    %s181 = sphi 0, %s181
    %s183 = sphi 0, %s181
    %s184 = sphi 0, %s183
    %s198 = sphi 0, %s184
    %s202 = sphi 0, %s202
    %s204 = sphi 0, %s202
    %s205 = sphi 0, %s204
    %s219 = sphi 0, %s205
    %s223 = sphi 0, %s223
    %s225 = sphi 0, %s223
    %s226 = sphi 0, %s225
    %s240 = sphi 0, %s226
    %s244 = sphi 0, %s244
    %s246 = sphi 0, %s244
    %s247 = sphi 0, %s246
    %s261 = sphi 0, %s247
    %s265 = sphi 0, %s265
    %s267 = sphi 0, %s265
    %s268 = sphi 0, %s267
    %s282 = sphi 0, %s268
    %s286 = sphi 0, %s286
    %s288 = sphi 0, %s286
    %s289 = sphi 0, %s288
    %s303 = sphi 0, %s289
    %s307 = sphi 0, %s307
    %s309 = sphi 0, %s307
    %s310 = sphi 0, %s309
    %s324 = sphi 0, %s310
    %s328 = sphi 0, %s328
    %s330 = sphi 0, %s328
    %s331 = sphi 0, %s330
    %s345 = sphi 0, %s331
    %s349 = sphi 0, %s349
    %s351 = sphi 0, %s349
    %s352 = sphi 0, %s351
    %s366 = sphi 0, %s352
    %s370 = sphi 0, %s370
    %s372 = sphi 0, %s370
    %s373 = sphi 0, %s372
    %s387 = sphi 0, %s373
    %s391 = sphi 0, %s391
    %s393 = sphi 0, %s391
    %s394 = sphi 0, %s393
    %s408 = sphi 0, %s394
    %s412 = sphi 0, %s412
    %s414 = sphi 0, %s412
    %s415 = sphi 0, %s414
    %s429 = sphi 0, %s415
    %s433 = sphi 0, %s433
    %s435 = sphi 0, %s433
    %s436 = sphi 0, %s435
    %s450 = sphi 0, %s436
    %s454 = sphi 0, %s454
    %s456 = sphi 0, %s454
    %s457 = sphi 0, %s456
    %s471 = sphi 0, %s457
    %s475 = sphi 0, %s475
    %s477 = sphi 0, %s475
    %s478 = sphi 0, %s477
    %s492 = sphi 0, %s478
    %s496 = sphi 0, %s496
    %s498 = sphi 0, %s496
    %s499 = sphi 0, %s498
    %s513 = sphi 0, %s499
    %s517 = sphi 0, %s517
    %s519 = sphi 0, %s517
    %s520 = sphi 0, %s519
    %s534 = sphi 0, %s520
    %s538 = sphi 0, %s538
    %s540 = sphi 0, %s538
    %s541 = sphi 0, %s540
    %s555 = sphi 0, %s541
    %s561 = sphi 0, %s563
    %s564 = sphi 0, %s561
    %s565 = sphi 0, %s564
    %s581 = sphi 0, %s565
    %s587 = sphi 0, %s589
    %s590 = sphi 0, %s587
    %s591 = sphi 0, %s590
    %s607 = sphi 0, %s591
  $region4: #{_lambda_.8} parent=0 // loop_header_branch
    %35 = sbr.rel (%p33) target = $region8
  $region5: #{_lambda_.8} parent=0 // loop_body
    %s37 = ssub.s32 %s32, 1
    %s38 = ssub.s32 %s32, 2
    %s39 = sadd.s32 %s32, 1
    %s40 = ssub.s32 %s32, %s39
    %p41 = scmp.eq.s32.totalorder %s40, 0
    %s43 = sadd.s32 %s42, 1
    %s44 = scalar_select %p41, %s42, %s43
    %p47 = pneg %p41
    %p48 = scmp.eq.s32.totalorder %s32, 1
    %p49 = por %p47, %p48
    %p50 = scmp.ne.s32.totalorder %s42, %s45
    %p51 = scmp.eq.s32.totalorder %s32, 0
    %p52 = por %p50, %p51
    %p53 = scmp.ne.s32.totalorder %s42, %s45
    %p54 = scmp.eq.s32.totalorder %s37, 1
    %p55 = por %p53, %p54
    %p56 = scmp.ne.s32.totalorder %s45, %s46
    %p57 = scmp.eq.s32.totalorder %s37, 0
    %p58 = por %p56, %p57
    %p59 = scmp.ne.s32.totalorder %s45, %s46
    %p60 = scmp.eq.s32.totalorder %s38, 1
    %p61 = por %p59, %p60
    %p63 = scmp.ne.s32.totalorder %s46, %s62
    %p64 = scmp.eq.s32.totalorder %s38, 0
    %p65 = por %p63, %p64
    %s66 = ssub.s32 %s32, %s39
    %p67 = scmp.eq.s32.totalorder %s66, 0
    %s69 = sadd.s32 %s68, 1
    %s70 = scalar_select %p67, %s68, %s69
    %p73 = pneg %p67
    %p74 = scmp.eq.s32.totalorder %s32, 1
    %p75 = por %p73, %p74
    %p76 = scmp.ne.s32.totalorder %s68, %s71
    %p77 = scmp.eq.s32.totalorder %s32, 0
    %p78 = por %p76, %p77
    %p79 = scmp.ne.s32.totalorder %s68, %s71
    %p80 = scmp.eq.s32.totalorder %s37, 1
    %p81 = por %p79, %p80
    %p82 = scmp.ne.s32.totalorder %s71, %s72
    %p83 = scmp.eq.s32.totalorder %s37, 0
    %p84 = por %p82, %p83
    %p85 = scmp.ne.s32.totalorder %s71, %s72
    %p86 = scmp.eq.s32.totalorder %s38, 1
    %p87 = por %p85, %p86
    %p89 = scmp.ne.s32.totalorder %s72, %s88
    %p90 = scmp.eq.s32.totalorder %s38, 0
    %p91 = por %p89, %p90
    %s92 = ssub.s32 %s32, %s39
    %p93 = scmp.eq.s32.totalorder %s92, 0
    %s95 = sadd.s32 %s94, 1
    %s96 = scalar_select %p93, %s94, %s95
    %p99 = pneg %p93
    %p100 = scmp.eq.s32.totalorder %s32, 1
    %p101 = por %p99, %p100
    %p102 = scmp.ne.s32.totalorder %s94, %s97
    %p103 = scmp.eq.s32.totalorder %s32, 0
    %p104 = por %p102, %p103
    %p105 = scmp.ne.s32.totalorder %s94, %s97
    %p106 = scmp.eq.s32.totalorder %s37, 1
    %p107 = por %p105, %p106
    %p108 = scmp.ne.s32.totalorder %s97, %s98
    %p109 = scmp.eq.s32.totalorder %s37, 0
    %p110 = por %p108, %p109
    %p111 = scmp.ne.s32.totalorder %s97, %s98
    %p112 = scmp.eq.s32.totalorder %s38, 1
    %p113 = por %p111, %p112
    %p115 = scmp.ne.s32.totalorder %s98, %s114
    %p116 = scmp.eq.s32.totalorder %s38, 0
    %p117 = por %p115, %p116
    %s119 = sadd.s32 %s118, 1
    %p122 = scmp.eq.s32.totalorder %s32, 1
    %p123 = scmp.ne.s32.totalorder %s118, %s120
    %p124 = scmp.eq.s32.totalorder %s32, 0
    %p125 = por %p123, %p124
    %p126 = scmp.ne.s32.totalorder %s118, %s120
    %p127 = scmp.eq.s32.totalorder %s37, 1
    %p128 = por %p126, %p127
    %p129 = scmp.ne.s32.totalorder %s120, %s121
    %p130 = scmp.eq.s32.totalorder %s37, 0
    %p131 = por %p129, %p130
    %p132 = scmp.ne.s32.totalorder %s120, %s121
    %p133 = scmp.eq.s32.totalorder %s38, 1
    %p134 = por %p132, %p133
    %p136 = scmp.ne.s32.totalorder %s121, %s135
    %p137 = scmp.eq.s32.totalorder %s38, 0
    %p138 = por %p136, %p137
    %s140 = sadd.s32 %s139, 1
    %p143 = scmp.eq.s32.totalorder %s32, 1
    %p144 = scmp.ne.s32.totalorder %s139, %s141
    %p145 = scmp.eq.s32.totalorder %s32, 0
    %p146 = por %p144, %p145
    %p147 = scmp.ne.s32.totalorder %s139, %s141
    %p148 = scmp.eq.s32.totalorder %s37, 1
    %p149 = por %p147, %p148
    %p150 = scmp.ne.s32.totalorder %s141, %s142
    %p151 = scmp.eq.s32.totalorder %s37, 0
    %p152 = por %p150, %p151
    %p153 = scmp.ne.s32.totalorder %s141, %s142
    %p154 = scmp.eq.s32.totalorder %s38, 1
    %p155 = por %p153, %p154
    %p157 = scmp.ne.s32.totalorder %s142, %s156
    %p158 = scmp.eq.s32.totalorder %s38, 0
    %p159 = por %p157, %p158
    %s161 = sadd.s32 %s160, 1
    %p164 = scmp.eq.s32.totalorder %s32, 1
    %p165 = scmp.ne.s32.totalorder %s160, %s162
    %p166 = scmp.eq.s32.totalorder %s32, 0
    %p167 = por %p165, %p166
    %p168 = scmp.ne.s32.totalorder %s160, %s162
    %p169 = scmp.eq.s32.totalorder %s37, 1
    %p170 = por %p168, %p169
    %p171 = scmp.ne.s32.totalorder %s162, %s163
    %p172 = scmp.eq.s32.totalorder %s37, 0
    %p173 = por %p171, %p172
    %p174 = scmp.ne.s32.totalorder %s162, %s163
    %p175 = scmp.eq.s32.totalorder %s38, 1
    %p176 = por %p174, %p175
    %p178 = scmp.ne.s32.totalorder %s163, %s177
    %p179 = scmp.eq.s32.totalorder %s38, 0
    %p180 = por %p178, %p179
    %s182 = sadd.s32 %s181, 1
    %p185 = scmp.eq.s32.totalorder %s32, 1
    %p186 = scmp.ne.s32.totalorder %s181, %s183
    %p187 = scmp.eq.s32.totalorder %s32, 0
    %p188 = por %p186, %p187
    %p189 = scmp.ne.s32.totalorder %s181, %s183
    %p190 = scmp.eq.s32.totalorder %s37, 1
    %p191 = por %p189, %p190
    %p192 = scmp.ne.s32.totalorder %s183, %s184
    %p193 = scmp.eq.s32.totalorder %s37, 0
    %p194 = por %p192, %p193
    %p195 = scmp.ne.s32.totalorder %s183, %s184
    %p196 = scmp.eq.s32.totalorder %s38, 1
    %p197 = por %p195, %p196
    %p199 = scmp.ne.s32.totalorder %s184, %s198
    %p200 = scmp.eq.s32.totalorder %s38, 0
    %p201 = por %p199, %p200
    %s203 = sadd.s32 %s202, 1
    %p206 = scmp.eq.s32.totalorder %s32, 1
    %p207 = scmp.ne.s32.totalorder %s202, %s204
    %p208 = scmp.eq.s32.totalorder %s32, 0
    %p209 = por %p207, %p208
    %p210 = scmp.ne.s32.totalorder %s202, %s204
    %p211 = scmp.eq.s32.totalorder %s37, 1
    %p212 = por %p210, %p211
    %p213 = scmp.ne.s32.totalorder %s204, %s205
    %p214 = scmp.eq.s32.totalorder %s37, 0
    %p215 = por %p213, %p214
    %p216 = scmp.ne.s32.totalorder %s204, %s205
    %p217 = scmp.eq.s32.totalorder %s38, 1
    %p218 = por %p216, %p217
    %p220 = scmp.ne.s32.totalorder %s205, %s219
    %p221 = scmp.eq.s32.totalorder %s38, 0
    %p222 = por %p220, %p221
    %s224 = sadd.s32 %s223, 1
    %p227 = scmp.eq.s32.totalorder %s32, 1
    %p228 = scmp.ne.s32.totalorder %s223, %s225
    %p229 = scmp.eq.s32.totalorder %s32, 0
    %p230 = por %p228, %p229
    %p231 = scmp.ne.s32.totalorder %s223, %s225
    %p232 = scmp.eq.s32.totalorder %s37, 1
    %p233 = por %p231, %p232
    %p234 = scmp.ne.s32.totalorder %s225, %s226
    %p235 = scmp.eq.s32.totalorder %s37, 0
    %p236 = por %p234, %p235
    %p237 = scmp.ne.s32.totalorder %s225, %s226
    %p238 = scmp.eq.s32.totalorder %s38, 1
    %p239 = por %p237, %p238
    %p241 = scmp.ne.s32.totalorder %s226, %s240
    %p242 = scmp.eq.s32.totalorder %s38, 0
    %p243 = por %p241, %p242
    %s245 = sadd.s32 %s244, 1
    %p248 = scmp.eq.s32.totalorder %s32, 1
    %p249 = scmp.ne.s32.totalorder %s244, %s246
    %p250 = scmp.eq.s32.totalorder %s32, 0
    %p251 = por %p249, %p250
    %p252 = scmp.ne.s32.totalorder %s244, %s246
    %p253 = scmp.eq.s32.totalorder %s37, 1
    %p254 = por %p252, %p253
    %p255 = scmp.ne.s32.totalorder %s246, %s247
    %p256 = scmp.eq.s32.totalorder %s37, 0
    %p257 = por %p255, %p256
    %p258 = scmp.ne.s32.totalorder %s246, %s247
    %p259 = scmp.eq.s32.totalorder %s38, 1
    %p260 = por %p258, %p259
    %p262 = scmp.ne.s32.totalorder %s247, %s261
    %p263 = scmp.eq.s32.totalorder %s38, 0
    %p264 = por %p262, %p263
    %s266 = sadd.s32 %s265, 1
    %p269 = scmp.eq.s32.totalorder %s32, 1
    %p270 = scmp.ne.s32.totalorder %s265, %s267
    %p271 = scmp.eq.s32.totalorder %s32, 0
    %p272 = por %p270, %p271
    %p273 = scmp.ne.s32.totalorder %s265, %s267
    %p274 = scmp.eq.s32.totalorder %s37, 1
    %p275 = por %p273, %p274
    %p276 = scmp.ne.s32.totalorder %s267, %s268
    %p277 = scmp.eq.s32.totalorder %s37, 0
    %p278 = por %p276, %p277
    %p279 = scmp.ne.s32.totalorder %s267, %s268
    %p280 = scmp.eq.s32.totalorder %s38, 1
    %p281 = por %p279, %p280
    %p283 = scmp.ne.s32.totalorder %s268, %s282
    %p284 = scmp.eq.s32.totalorder %s38, 0
    %p285 = por %p283, %p284
    %s287 = sadd.s32 %s286, 1
    %p290 = scmp.eq.s32.totalorder %s32, 1
    %p291 = scmp.ne.s32.totalorder %s286, %s288
    %p292 = scmp.eq.s32.totalorder %s32, 0
    %p293 = por %p291, %p292
    %p294 = scmp.ne.s32.totalorder %s286, %s288
    %p295 = scmp.eq.s32.totalorder %s37, 1
    %p296 = por %p294, %p295
    %p297 = scmp.ne.s32.totalorder %s288, %s289
    %p298 = scmp.eq.s32.totalorder %s37, 0
    %p299 = por %p297, %p298
    %p300 = scmp.ne.s32.totalorder %s288, %s289
    %p301 = scmp.eq.s32.totalorder %s38, 1
    %p302 = por %p300, %p301
    %p304 = scmp.ne.s32.totalorder %s289, %s303
    %p305 = scmp.eq.s32.totalorder %s38, 0
    %p306 = por %p304, %p305
    %s308 = sadd.s32 %s307, 1
    %p311 = scmp.eq.s32.totalorder %s32, 1
    %p312 = scmp.ne.s32.totalorder %s307, %s309
    %p313 = scmp.eq.s32.totalorder %s32, 0
    %p314 = por %p312, %p313
    %p315 = scmp.ne.s32.totalorder %s307, %s309
    %p316 = scmp.eq.s32.totalorder %s37, 1
    %p317 = por %p315, %p316
    %p318 = scmp.ne.s32.totalorder %s309, %s310
    %p319 = scmp.eq.s32.totalorder %s37, 0
    %p320 = por %p318, %p319
    %p321 = scmp.ne.s32.totalorder %s309, %s310
    %p322 = scmp.eq.s32.totalorder %s38, 1
    %p323 = por %p321, %p322
    %p325 = scmp.ne.s32.totalorder %s310, %s324
    %p326 = scmp.eq.s32.totalorder %s38, 0
    %p327 = por %p325, %p326
    %s329 = sadd.s32 %s328, 1
    %p332 = scmp.eq.s32.totalorder %s32, 1
    %p333 = scmp.ne.s32.totalorder %s328, %s330
    %p334 = scmp.eq.s32.totalorder %s32, 0
    %p335 = por %p333, %p334
    %p336 = scmp.ne.s32.totalorder %s328, %s330
    %p337 = scmp.eq.s32.totalorder %s37, 1
    %p338 = por %p336, %p337
    %p339 = scmp.ne.s32.totalorder %s330, %s331
    %p340 = scmp.eq.s32.totalorder %s37, 0
    %p341 = por %p339, %p340
    %p342 = scmp.ne.s32.totalorder %s330, %s331
    %p343 = scmp.eq.s32.totalorder %s38, 1
    %p344 = por %p342, %p343
    %p346 = scmp.ne.s32.totalorder %s331, %s345
    %p347 = scmp.eq.s32.totalorder %s38, 0
    %p348 = por %p346, %p347
    %s350 = sadd.s32 %s349, 1
    %p353 = scmp.eq.s32.totalorder %s32, 1
    %p354 = scmp.ne.s32.totalorder %s349, %s351
    %p355 = scmp.eq.s32.totalorder %s32, 0
    %p356 = por %p354, %p355
    %p357 = scmp.ne.s32.totalorder %s349, %s351
    %p358 = scmp.eq.s32.totalorder %s37, 1
    %p359 = por %p357, %p358
    %p360 = scmp.ne.s32.totalorder %s351, %s352
    %p361 = scmp.eq.s32.totalorder %s37, 0
    %p362 = por %p360, %p361
    %p363 = scmp.ne.s32.totalorder %s351, %s352
    %p364 = scmp.eq.s32.totalorder %s38, 1
    %p365 = por %p363, %p364
    %p367 = scmp.ne.s32.totalorder %s352, %s366
    %p368 = scmp.eq.s32.totalorder %s38, 0
    %p369 = por %p367, %p368
    %s371 = sadd.s32 %s370, 1
    %p374 = scmp.eq.s32.totalorder %s32, 1
    %p375 = scmp.ne.s32.totalorder %s370, %s372
    %p376 = scmp.eq.s32.totalorder %s32, 0
    %p377 = por %p375, %p376
    %p378 = scmp.ne.s32.totalorder %s370, %s372
    %p379 = scmp.eq.s32.totalorder %s37, 1
    %p380 = por %p378, %p379
    %p381 = scmp.ne.s32.totalorder %s372, %s373
    %p382 = scmp.eq.s32.totalorder %s37, 0
    %p383 = por %p381, %p382
    %p384 = scmp.ne.s32.totalorder %s372, %s373
    %p385 = scmp.eq.s32.totalorder %s38, 1
    %p386 = por %p384, %p385
    %p388 = scmp.ne.s32.totalorder %s373, %s387
    %p389 = scmp.eq.s32.totalorder %s38, 0
    %p390 = por %p388, %p389
    %s392 = sadd.s32 %s391, 1
    %p395 = scmp.eq.s32.totalorder %s32, 1
    %p396 = scmp.ne.s32.totalorder %s391, %s393
    %p397 = scmp.eq.s32.totalorder %s32, 0
    %p398 = por %p396, %p397
    %p399 = scmp.ne.s32.totalorder %s391, %s393
    %p400 = scmp.eq.s32.totalorder %s37, 1
    %p401 = por %p399, %p400
    %p402 = scmp.ne.s32.totalorder %s393, %s394
    %p403 = scmp.eq.s32.totalorder %s37, 0
    %p404 = por %p402, %p403
    %p405 = scmp.ne.s32.totalorder %s393, %s394
    %p406 = scmp.eq.s32.totalorder %s38, 1
    %p407 = por %p405, %p406
    %p409 = scmp.ne.s32.totalorder %s394, %s408
    %p410 = scmp.eq.s32.totalorder %s38, 0
    %p411 = por %p409, %p410
    %s413 = sadd.s32 %s412, 1
    %p416 = scmp.eq.s32.totalorder %s32, 1
    %p417 = scmp.ne.s32.totalorder %s412, %s414
    %p418 = scmp.eq.s32.totalorder %s32, 0
    %p419 = por %p417, %p418
    %p420 = scmp.ne.s32.totalorder %s412, %s414
    %p421 = scmp.eq.s32.totalorder %s37, 1
    %p422 = por %p420, %p421
    %p423 = scmp.ne.s32.totalorder %s414, %s415
    %p424 = scmp.eq.s32.totalorder %s37, 0
    %p425 = por %p423, %p424
    %p426 = scmp.ne.s32.totalorder %s414, %s415
    %p427 = scmp.eq.s32.totalorder %s38, 1
    %p428 = por %p426, %p427
    %p430 = scmp.ne.s32.totalorder %s415, %s429
    %p431 = scmp.eq.s32.totalorder %s38, 0
    %p432 = por %p430, %p431
    %s434 = sadd.s32 %s433, 1
    %p437 = scmp.eq.s32.totalorder %s32, 1
    %p438 = scmp.ne.s32.totalorder %s433, %s435
    %p439 = scmp.eq.s32.totalorder %s32, 0
    %p440 = por %p438, %p439
    %p441 = scmp.ne.s32.totalorder %s433, %s435
    %p442 = scmp.eq.s32.totalorder %s37, 1
    %p443 = por %p441, %p442
    %p444 = scmp.ne.s32.totalorder %s435, %s436
    %p445 = scmp.eq.s32.totalorder %s37, 0
    %p446 = por %p444, %p445
    %p447 = scmp.ne.s32.totalorder %s435, %s436
    %p448 = scmp.eq.s32.totalorder %s38, 1
    %p449 = por %p447, %p448
    %p451 = scmp.ne.s32.totalorder %s436, %s450
    %p452 = scmp.eq.s32.totalorder %s38, 0
    %p453 = por %p451, %p452
    %s455 = sadd.s32 %s454, 1
    %p458 = scmp.eq.s32.totalorder %s32, 1
    %p459 = scmp.ne.s32.totalorder %s454, %s456
    %p460 = scmp.eq.s32.totalorder %s32, 0
    %p461 = por %p459, %p460
    %p462 = scmp.ne.s32.totalorder %s454, %s456
    %p463 = scmp.eq.s32.totalorder %s37, 1
    %p464 = por %p462, %p463
    %p465 = scmp.ne.s32.totalorder %s456, %s457
    %p466 = scmp.eq.s32.totalorder %s37, 0
    %p467 = por %p465, %p466
    %p468 = scmp.ne.s32.totalorder %s456, %s457
    %p469 = scmp.eq.s32.totalorder %s38, 1
    %p470 = por %p468, %p469
    %p472 = scmp.ne.s32.totalorder %s457, %s471
    %p473 = scmp.eq.s32.totalorder %s38, 0
    %p474 = por %p472, %p473
    %s476 = sadd.s32 %s475, 1
    %p479 = scmp.eq.s32.totalorder %s32, 1
    %p480 = scmp.ne.s32.totalorder %s475, %s477
    %p481 = scmp.eq.s32.totalorder %s32, 0
    %p482 = por %p480, %p481
    %p483 = scmp.ne.s32.totalorder %s475, %s477
    %p484 = scmp.eq.s32.totalorder %s37, 1
    %p485 = por %p483, %p484
    %p486 = scmp.ne.s32.totalorder %s477, %s478
    %p487 = scmp.eq.s32.totalorder %s37, 0
    %p488 = por %p486, %p487
    %p489 = scmp.ne.s32.totalorder %s477, %s478
    %p490 = scmp.eq.s32.totalorder %s38, 1
    %p491 = por %p489, %p490
    %p493 = scmp.ne.s32.totalorder %s478, %s492
    %p494 = scmp.eq.s32.totalorder %s38, 0
    %p495 = por %p493, %p494
    %s497 = sadd.s32 %s496, 1
    %p500 = scmp.eq.s32.totalorder %s32, 1
    %p501 = scmp.ne.s32.totalorder %s496, %s498
    %p502 = scmp.eq.s32.totalorder %s32, 0
    %p503 = por %p501, %p502
    %p504 = scmp.ne.s32.totalorder %s496, %s498
    %p505 = scmp.eq.s32.totalorder %s37, 1
    %p506 = por %p504, %p505
    %p507 = scmp.ne.s32.totalorder %s498, %s499
    %p508 = scmp.eq.s32.totalorder %s37, 0
    %p509 = por %p507, %p508
    %p510 = scmp.ne.s32.totalorder %s498, %s499
    %p511 = scmp.eq.s32.totalorder %s38, 1
    %p512 = por %p510, %p511
    %p514 = scmp.ne.s32.totalorder %s499, %s513
    %p515 = scmp.eq.s32.totalorder %s38, 0
    %p516 = por %p514, %p515
    %s518 = sadd.s32 %s517, 1
    %p521 = scmp.eq.s32.totalorder %s32, 1
    %p522 = scmp.ne.s32.totalorder %s517, %s519
    %p523 = scmp.eq.s32.totalorder %s32, 0
    %p524 = por %p522, %p523
    %p525 = scmp.ne.s32.totalorder %s517, %s519
    %p526 = scmp.eq.s32.totalorder %s37, 1
    %p527 = por %p525, %p526
    %p528 = scmp.ne.s32.totalorder %s519, %s520
    %p529 = scmp.eq.s32.totalorder %s37, 0
    %p530 = por %p528, %p529
    %p531 = scmp.ne.s32.totalorder %s519, %s520
    %p532 = scmp.eq.s32.totalorder %s38, 1
    %p533 = por %p531, %p532
    %p535 = scmp.ne.s32.totalorder %s520, %s534
    %p536 = scmp.eq.s32.totalorder %s38, 0
    %p537 = por %p535, %p536
    %s539 = sadd.s32 %s538, 1
    %p542 = scmp.eq.s32.totalorder %s32, 1
    %p543 = scmp.ne.s32.totalorder %s538, %s540
    %p544 = scmp.eq.s32.totalorder %s32, 0
    %p545 = por %p543, %p544
    %p546 = scmp.ne.s32.totalorder %s538, %s540
    %p547 = scmp.eq.s32.totalorder %s37, 1
    %p548 = por %p546, %p547
    %p549 = scmp.ne.s32.totalorder %s540, %s541
    %p550 = scmp.eq.s32.totalorder %s37, 0
    %p551 = por %p549, %p550
    %p552 = scmp.ne.s32.totalorder %s540, %s541
    %p553 = scmp.eq.s32.totalorder %s38, 1
    %p554 = por %p552, %p553
    %p556 = scmp.ne.s32.totalorder %s541, %s555
    %p557 = scmp.eq.s32.totalorder %s38, 0
    %p558 = por %p556, %p557
    %s559 = ssub.s32 %s32, %s39
    %p560 = scmp.eq.s32.totalorder %s559, 0
    %s562 = sadd.s32 %s561, 1
    %s563 = scalar_select %p560, %s561, %s562
    %p566 = pneg %p560
    %p567 = scmp.eq.s32.totalorder %s32, 1
    %p568 = por %p566, %p567
    %p569 = scmp.ne.s32.totalorder %s561, %s564
    %p570 = scmp.eq.s32.totalorder %s32, 0
    %p571 = por %p569, %p570
    %p572 = scmp.ne.s32.totalorder %s561, %s564
    %p573 = scmp.eq.s32.totalorder %s37, 1
    %p574 = por %p572, %p573
    %p575 = scmp.ne.s32.totalorder %s564, %s565
    %p576 = scmp.eq.s32.totalorder %s37, 0
    %p577 = por %p575, %p576
    %p578 = scmp.ne.s32.totalorder %s564, %s565
    %p579 = scmp.eq.s32.totalorder %s38, 1
    %p580 = por %p578, %p579
    %p582 = scmp.ne.s32.totalorder %s565, %s581
    %p583 = scmp.eq.s32.totalorder %s38, 0
    %p584 = por %p582, %p583
    %s585 = ssub.s32 %s32, %s39
    %p586 = scmp.eq.s32.totalorder %s585, 0
    %s588 = sadd.s32 %s587, 1
    %s589 = scalar_select %p586, %s587, %s588
    %p592 = pneg %p586
    %p593 = scmp.eq.s32.totalorder %s32, 1
    %p594 = por %p592, %p593
    %p595 = scmp.ne.s32.totalorder %s587, %s590
    %p596 = scmp.eq.s32.totalorder %s32, 0
    %p597 = por %p595, %p596
    %p598 = scmp.ne.s32.totalorder %s587, %s590
    %p599 = scmp.eq.s32.totalorder %s37, 1
    %p600 = por %p598, %p599
    %p601 = scmp.ne.s32.totalorder %s590, %s591
    %p602 = scmp.eq.s32.totalorder %s37, 0
    %p603 = por %p601, %p602
    %p604 = scmp.ne.s32.totalorder %s590, %s591
    %p605 = scmp.eq.s32.totalorder %s38, 1
    %p606 = por %p604, %p605
    %p608 = scmp.ne.s32.totalorder %s591, %s607
    %p609 = scmp.eq.s32.totalorder %s38, 0
    %p610 = por %p608, %p609
    %p611 = scmp.le.s32.totalorder 1, %s32
    %p612 = scmp.lt.s32.totalorder %s32, 3
    %p613 = pnand %p611, %p612
    %p614 = pneg %p613
    // Predicated region
    $region9: #{_lambda_.8} parent=5 // pred_check
      _
    $region10: #{_lambda_.8} parent=5 // pred_check_branch
      %616 = sbr.rel (%p613) target = $region12
    $region11: #{_lambda_.8} parent=5 // pred_region
      %s617 = ssub.s32 %s32, 1
      // Predicated region
      $region13: #{_lambda_.8} parent=11 // pred_check
        %p618 = pneg %p131
      $region14: #{_lambda_.8} parent=11 // pred_check_branch
        %620 = sbr.rel (%p618) target = $region16
      $region15: #{_lambda_.8} parent=11 // pred_region
        _
      $region16: #{_lambda_.8} parent=11 // pred_fallthru
        _
      // Predicated region
      $region17: #{_lambda_.8} parent=11 // pred_check
        %p621 = pneg %p152
      $region18: #{_lambda_.8} parent=11 // pred_check_branch
        %623 = sbr.rel (%p621) target = $region20
      $region19: #{_lambda_.8} parent=11 // pred_region
        _
      $region20: #{_lambda_.8} parent=11 // pred_fallthru
        _
      // Predicated region
      $region21: #{_lambda_.8} parent=11 // pred_check
        %p624 = pneg %p173
      $region22: #{_lambda_.8} parent=11 // pred_check_branch
        %626 = sbr.rel (%p624) target = $region24
      $region23: #{_lambda_.8} parent=11 // pred_region
        _
      $region24: #{_lambda_.8} parent=11 // pred_fallthru
        _
      // Predicated region
      $region25: #{_lambda_.8} parent=11 // pred_check
        %p627 = pneg %p194
      $region26: #{_lambda_.8} parent=11 // pred_check_branch
        %629 = sbr.rel (%p627) target = $region28
      $region27: #{_lambda_.8} parent=11 // pred_region
        _
      $region28: #{_lambda_.8} parent=11 // pred_fallthru
        _
      // Predicated region
      $region29: #{_lambda_.8} parent=11 // pred_check
        %p630 = pneg %p215
      $region30: #{_lambda_.8} parent=11 // pred_check_branch
        %632 = sbr.rel (%p630) target = $region32
      $region31: #{_lambda_.8} parent=11 // pred_region
        _
      $region32: #{_lambda_.8} parent=11 // pred_fallthru
        _
      // Predicated region
      $region33: #{_lambda_.8} parent=11 // pred_check
        %p633 = pneg %p236
      $region34: #{_lambda_.8} parent=11 // pred_check_branch
        %635 = sbr.rel (%p633) target = $region36
      $region35: #{_lambda_.8} parent=11 // pred_region
        _
      $region36: #{_lambda_.8} parent=11 // pred_fallthru
        _
      // Predicated region
      $region37: #{_lambda_.8} parent=11 // pred_check
        %p636 = pneg %p257
      $region38: #{_lambda_.8} parent=11 // pred_check_branch
        %638 = sbr.rel (%p636) target = $region40
      $region39: #{_lambda_.8} parent=11 // pred_region
        _
      $region40: #{_lambda_.8} parent=11 // pred_fallthru
        _
      // Predicated region
      $region41: #{_lambda_.8} parent=11 // pred_check
        %p639 = pneg %p278
      $region42: #{_lambda_.8} parent=11 // pred_check_branch
        %641 = sbr.rel (%p639) target = $region44
      $region43: #{_lambda_.8} parent=11 // pred_region
        _
      $region44: #{_lambda_.8} parent=11 // pred_fallthru
        _
      // Predicated region
      $region45: #{_lambda_.8} parent=11 // pred_check
        %p642 = pneg %p299
      $region46: #{_lambda_.8} parent=11 // pred_check_branch
        %644 = sbr.rel (%p642) target = $region48
      $region47: #{_lambda_.8} parent=11 // pred_region
        _
      $region48: #{_lambda_.8} parent=11 // pred_fallthru
        _
      // Predicated region
      $region49: #{_lambda_.8} parent=11 // pred_check
        %p645 = pneg %p320
      $region50: #{_lambda_.8} parent=11 // pred_check_branch
        %647 = sbr.rel (%p645) target = $region52
      $region51: #{_lambda_.8} parent=11 // pred_region
        _
      $region52: #{_lambda_.8} parent=11 // pred_fallthru
        _
      // Predicated region
      $region53: #{_lambda_.8} parent=11 // pred_check
        %p648 = pneg %p341
      $region54: #{_lambda_.8} parent=11 // pred_check_branch
        %650 = sbr.rel (%p648) target = $region56
      $region55: #{_lambda_.8} parent=11 // pred_region
        _
      $region56: #{_lambda_.8} parent=11 // pred_fallthru
        _
      // Predicated region
      $region57: #{_lambda_.8} parent=11 // pred_check
        %p651 = pneg %p362
      $region58: #{_lambda_.8} parent=11 // pred_check_branch
        %653 = sbr.rel (%p651) target = $region60
      $region59: #{_lambda_.8} parent=11 // pred_region
        _
      $region60: #{_lambda_.8} parent=11 // pred_fallthru
        _
      // Predicated region
      $region61: #{_lambda_.8} parent=11 // pred_check
        %p654 = pneg %p383
      $region62: #{_lambda_.8} parent=11 // pred_check_branch
        %656 = sbr.rel (%p654) target = $region64
      $region63: #{_lambda_.8} parent=11 // pred_region
        _
      $region64: #{_lambda_.8} parent=11 // pred_fallthru
        _
      // Predicated region
      $region65: #{_lambda_.8} parent=11 // pred_check
        %p657 = pneg %p404
      $region66: #{_lambda_.8} parent=11 // pred_check_branch
        %659 = sbr.rel (%p657) target = $region68
      $region67: #{_lambda_.8} parent=11 // pred_region
        _
      $region68: #{_lambda_.8} parent=11 // pred_fallthru
        _
      // Predicated region
      $region69: #{_lambda_.8} parent=11 // pred_check
        %p660 = pneg %p425
      $region70: #{_lambda_.8} parent=11 // pred_check_branch
        %662 = sbr.rel (%p660) target = $region72
      $region71: #{_lambda_.8} parent=11 // pred_region
        _
      $region72: #{_lambda_.8} parent=11 // pred_fallthru
        _
      // Predicated region
      $region73: #{_lambda_.8} parent=11 // pred_check
        %p663 = pneg %p446
      $region74: #{_lambda_.8} parent=11 // pred_check_branch
        %665 = sbr.rel (%p663) target = $region76
      $region75: #{_lambda_.8} parent=11 // pred_region
        _
      $region76: #{_lambda_.8} parent=11 // pred_fallthru
        _
      // Predicated region
      $region77: #{_lambda_.8} parent=11 // pred_check
        %p666 = pneg %p467
      $region78: #{_lambda_.8} parent=11 // pred_check_branch
        %668 = sbr.rel (%p666) target = $region80
      $region79: #{_lambda_.8} parent=11 // pred_region
        _
      $region80: #{_lambda_.8} parent=11 // pred_fallthru
        _
      // Predicated region
      $region81: #{_lambda_.8} parent=11 // pred_check
        %p669 = pneg %p488
      $region82: #{_lambda_.8} parent=11 // pred_check_branch
        %671 = sbr.rel (%p669) target = $region84
      $region83: #{_lambda_.8} parent=11 // pred_region
        _
      $region84: #{_lambda_.8} parent=11 // pred_fallthru
        _
      // Predicated region
      $region85: #{_lambda_.8} parent=11 // pred_check
        %p672 = pneg %p509
      $region86: #{_lambda_.8} parent=11 // pred_check_branch
        %674 = sbr.rel (%p672) target = $region88
      $region87: #{_lambda_.8} parent=11 // pred_region
        _
      $region88: #{_lambda_.8} parent=11 // pred_fallthru
        _
      // Predicated region
      $region89: #{_lambda_.8} parent=11 // pred_check
        %p675 = pneg %p530
      $region90: #{_lambda_.8} parent=11 // pred_check_branch
        %677 = sbr.rel (%p675) target = $region92
      $region91: #{_lambda_.8} parent=11 // pred_region
        _
      $region92: #{_lambda_.8} parent=11 // pred_fallthru
        _
      // Predicated region
      $region93: #{_lambda_.8} parent=11 // pred_check
        %p678 = pneg %p551
      $region94: #{_lambda_.8} parent=11 // pred_check_branch
        %680 = sbr.rel (%p678) target = $region96
      $region95: #{_lambda_.8} parent=11 // pred_region
        _
      $region96: #{_lambda_.8} parent=11 // pred_fallthru
        _
    $region12: #{_lambda_.8} parent=5 // pred_fallthru
      _
    %p681 = scmp.lt.s32.totalorder %s32, 2
    // Predicated region
    $region97: #{_lambda_.8} parent=5 // pred_check
      %p682 = pneg %p681
    $region98: #{_lambda_.8} parent=5 // pred_check_branch
      %684 = sbr.rel (%p682) target = $region100
    $region99: #{_lambda_.8} parent=5 // pred_region
      // Predicated region
      $region101: #{_lambda_.8} parent=99 // pred_check
        %p685 = pneg %p52
      $region102: #{_lambda_.8} parent=99 // pred_check_branch
        %687 = sbr.rel (%p685) target = $region104
      $region103: #{_lambda_.8} parent=99 // pred_region
        %p688 = scmp.lt.s32.totalorder %s32, 1
        %s689 = scalar_select %p688, %s32, 1
        %s690 = smul.addr %s689, 8
        %s691 = scalar_lea.vmem %s0, %s690
      $region104: #{_lambda_.8} parent=99 // pred_fallthru
        _
      // Predicated region
      $region105: #{_lambda_.8} parent=99 // pred_check
        %p692 = pneg %p78
      $region106: #{_lambda_.8} parent=99 // pred_check_branch
        %694 = sbr.rel (%p692) target = $region108
      $region107: #{_lambda_.8} parent=99 // pred_region
        %p695 = scmp.lt.s32.totalorder %s32, 1
        %s696 = scalar_select %p695, %s32, 1
        %s697 = smul.addr %s696, 8
        %s698 = smul.addr %s697, 8
        %s699 = scalar_lea.vmem %s1, %s698
      $region108: #{_lambda_.8} parent=99 // pred_fallthru
        _
      // Predicated region
      $region109: #{_lambda_.8} parent=99 // pred_check
        %p700 = pneg %p104
      $region110: #{_lambda_.8} parent=99 // pred_check_branch
        %702 = sbr.rel (%p700) target = $region112
      $region111: #{_lambda_.8} parent=99 // pred_region
        %p703 = scmp.lt.s32.totalorder %s32, 1
        %s704 = scalar_select %p703, %s32, 1
        %s705 = smul.addr %s704, 8
        %s706 = smul.addr %s705, 8
        %s707 = scalar_lea.vmem %s2, %s706
      $region112: #{_lambda_.8} parent=99 // pred_fallthru
        _
    $region100: #{_lambda_.8} parent=5 // pred_fallthru
      _
    %p708 = scmp.le.s32.totalorder 1, %s32
    %p709 = scmp.lt.s32.totalorder %s32, 3
    %p710 = pnand %p708, %p709
    %p711 = pneg %p710
    // Predicated region
    $region113: #{_lambda_.8} parent=5 // pred_check
      _
    $region114: #{_lambda_.8} parent=5 // pred_check_branch
      %713 = sbr.rel (%p710) target = $region116
    $region115: #{_lambda_.8} parent=5 // pred_region
      %s714 = ssub.s32 %s32, 1
      %p715 = scmp.lt.s32.totalorder %s37, 1
      %s716 = scalar_select %p715, %s37, 1
      %s717 = smul.addr %s716, 8
      %s718 = scalar_lea.vmem %s0, %s717
      %p719 = pneg %p58
      %p720 = pneg %p55
      %p721 = scmp.lt.s32.totalorder %s37, 1
      %s722 = scalar_select %p721, %s37, 1
      %s723 = smul.addr %s722, 8
      %s724 = smul.addr %s723, 8
      %s725 = scalar_lea.vmem %s1, %s724
      %p726 = pneg %p84
      %p727 = pneg %p81
      %p728 = scmp.lt.s32.totalorder %s37, 1
      %s729 = scalar_select %p728, %s37, 1
      %s730 = smul.addr %s729, 8
      %s731 = smul.addr %s730, 8
      %s732 = scalar_lea.vmem %s2, %s731
      %p733 = pneg %p110
      %p734 = pneg %p107
      %p735 = pneg %p131
      %p736 = pneg %p128
      %p737 = pneg %p152
      %p738 = pneg %p149
      %p739 = pneg %p173
      %p740 = pneg %p170
      %p741 = pneg %p194
      %p742 = pneg %p191
      %p743 = pneg %p215
      %p744 = pneg %p212
      %p745 = pneg %p236
      %p746 = pneg %p233
      %p747 = pneg %p257
      %p748 = pneg %p254
      %p749 = pneg %p278
      %p750 = pneg %p275
      %p751 = pneg %p299
      %p752 = pneg %p296
      %p753 = pneg %p320
      %p754 = pneg %p317
      %p755 = pneg %p341
      %p756 = pneg %p338
      %p757 = pneg %p362
      %p758 = pneg %p359
      %p759 = pneg %p383
      %p760 = pneg %p380
      %p761 = pneg %p404
      %p762 = pneg %p401
      %p763 = pneg %p425
      %p764 = pneg %p422
      %p765 = pneg %p446
      %p766 = pneg %p443
      %p767 = pneg %p467
      %p768 = pneg %p464
      %p769 = pneg %p488
      %p770 = pneg %p485
      %p771 = pneg %p509
      %p772 = pneg %p506
      %p773 = pneg %p530
      %p774 = pneg %p527
      %p775 = pneg %p551
      %p776 = pneg %p548
      %p777 = pneg %p577
      %p778 = pneg %p574
      %p779 = scmp.lt.s32.totalorder %s37, 1
      %s780 = scalar_select %p779, %s37, 1
      %s781 = smul.addr %s780, 8
      %s782 = scalar_lea.vmem %s24, %s781
      %p783 = pneg %p603
      %p784 = pneg %p600
      %p785 = scmp.lt.s32.totalorder %s37, 1
      %s786 = scalar_select %p785, %s37, 1
      %s787 = smul.addr %s786, 8
      %s788 = smul.addr %s787, 8
      %s789 = scalar_lea.vmem %s25, %s788
      %p790 = scmp.lt.s32.totalorder %s37, 1
      %s791 = scalar_select %p790, %s37, 1
      %s792 = smul.addr %s791, 8
      %s793 = scalar_lea.vmem %s0, %s792
      %p794 = scmp.lt.s32.totalorder %s37, 1
      %s795 = scalar_select %p794, %s37, 1
      %s796 = smul.addr %s795, 8
      %s797 = smul.addr %s796, 8
      %s798 = scalar_lea.vmem %s1, %s797
      %p799 = scmp.lt.s32.totalorder %s37, 1
      %s800 = scalar_select %p799, %s37, 1
      %s801 = smul.addr %s800, 8
      %s802 = smul.addr %s801, 8
      %s803 = scalar_lea.vmem %s2, %s802
      %p804 = scmp.lt.s32.totalorder %s37, 1
      %s805 = scalar_select %p804, %s37, 1
      %s806 = smul.addr %s805, 8
      %s807 = scalar_lea.vmem %s24, %s806
      %p808 = scmp.lt.s32.totalorder %s37, 1
      %s809 = scalar_select %p808, %s37, 1
      %s810 = smul.addr %s809, 8
      %s811 = smul.addr %s810, 8
      %s812 = scalar_lea.vmem %s25, %s811
      %v813 = vld [vmem:[%s793] sm:$0xff]
      %v814 = vld [vmem:[%s8] sm:$0xff]
      %v815 = vld [vmem:[%s8 + $0x8] sm:$0xff]
      %v816 = vld [vmem:[%s8 + $0x10] sm:$0xff]
      %v817 = vld [vmem:[%s8 + $0x18] sm:$0xff]
      %v818 = vld [vmem:[%s8 + $0x20] sm:$0xff]
      %v819 = vld [vmem:[%s8 + $0x28] sm:$0xff]
      %v820 = vld [vmem:[%s8 + $0x30] sm:$0xff]
      %v821 = vld [vmem:[%s9] sm:$0x1]
      %v823 = vlaneseq
      %v824 = vshrl.u32 %v823, 7
      %v825 = vsub.s32 0, %v824
      %v826 = vrot.slane %v821, %v825
      %vm828 = vcmask 457728
      %v830 = vsel %vm828, %v813, 0
      %832 = vmatprep.subr.mxu0 0.0
      %833 = vmatpush1.msra.mxu0 %v814
      %834 = vmatprep.subr.mxu0 0.0
      %835 = vmatpush1.msra.mxu0 %v815
      %836 = vmatprep.subr.mxu0 0.0
      %837 = vmatpush1.msra.mxu0 %v816
      %838 = vmatprep.subr.mxu0 0.0
      %839 = vmatpush1.msra.mxu0 %v817
      %840 = vmatprep.subr.mxu0 0.0
      %841 = vmatpush1.msra.mxu0 %v818
      %842 = vmatprep.subr.mxu0 0.0
      %843 = vmatpush1.msra.mxu0 %v819
      %844 = vmatprep.subr.mxu0 0.0
      %845 = vmatpush1.msra.mxu0 %v820
      %846 = vmatprep.subr.mxu0 0.0
      %847 = vmatpush1.msra.mxu0 0.0
      %848 = vmatprep.subr.mxu0 0.0
      %849 = vmatpush1.msra.mxu0 0.0
      %850 = vmatprep.subr.mxu0 0.0
      %851 = vmatpush1.msra.mxu0 0.0
      %852 = vmatprep.subr.mxu0 0.0
      %853 = vmatpush1.msra.mxu0 0.0
      %854 = vmatprep.subr.mxu0 0.0
      %855 = vmatpush1.msra.mxu0 0.0
      %856 = vmatprep.subr.mxu0 0.0
      %857 = vmatpush1.msra.mxu0 0.0
      %858 = vmatprep.subr.mxu0 0.0
      %859 = vmatpush1.msra.mxu0 0.0
      %860 = vmatprep.subr.mxu0 0.0
      %861 = vmatpush1.msra.mxu0 0.0
      %862 = vmatprep.subr.mxu0 0.0
      %863 = vmatpush1.msra.mxu0 0.0
      %864 = vmatprep.subr.mxu0 0.0
      %865 = vmatpush1.msra.mxu0 0.0
      %866 = vmatprep.subr.mxu0 0.0
      %867 = vmatpush1.msra.mxu0 0.0
      %868 = vmatprep.subr.mxu0 0.0
      %869 = vmatpush1.msra.mxu0 0.0
      %870 = vmatprep.subr.mxu0 0.0
      %871 = vmatpush1.msra.mxu0 0.0
      %872 = vmatprep.subr.mxu0 0.0
      %873 = vmatpush1.msra.mxu0 0.0
      %874 = vmatprep.subr.mxu0 0.0
      %875 = vmatpush1.msra.mxu0 0.0
      %876 = vmatprep.subr.mxu0 0.0
      %877 = vmatpush1.msra.mxu0 0.0
      %878 = vmatprep.subr.mxu0 0.0
      %879 = vmatpush1.msra.mxu0 0.0
      %880 = vmatprep.subr.mxu0 0.0
      %881 = vmatpush1.msra.mxu0 0.0
      %882 = vmatprep.subr.mxu0 0.0
      %883 = vmatpush1.msra.mxu0 0.0
      %884 = vmatprep.subr.mxu0 0.0
      %885 = vmatpush1.msra.mxu0 0.0
      %886 = vmatprep.subr.mxu0 0.0
      %887 = vmatpush1.msra.mxu0 0.0
      %888 = vmatprep.subr.mxu0 0.0
      %889 = vmatpush1.msra.mxu0 0.0
      %890 = vmatprep.subr.mxu0 0.0
      %891 = vmatpush1.msra.mxu0 0.0
      %892 = vmatprep.subr.mxu0 0.0
      %893 = vmatpush1.msra.mxu0 0.0
      %894 = vmatprep.subr.mxu0 0.0
      %895 = vmatpush1.msra.mxu0 0.0
      %896 = vmatprep.mubr.f32.mxu0 0.0
      %897 = vmatmul.mubr.f32.gmra.mrb[0].mxu0 %v830
      %v898 = vpop.f32.mrb[0].mxu0
      %v899 = vadd.f32 %v826, %v898
      %v900 = vpop.f32.mrb[0].mxu0
      %901 = vdwg.mxu0
      %v902 = vxor.u32 %v899, 2147483648
      %v903 = vmul.f32 %v902, 1.442695
      %v904 = vpow.pop %v903
      %v905 = vadd.f32 %v904, 1.0
      %v906 = vrcp.pop %v905
      %v907 = vmul.f32 1.0, %v906
      %v908 = vmul.f32 %v899, %v907
      %v909 = vld [vmem:[%s798] sm:$0xff]
      %v910 = vld [vmem:[%s798 + $0x8] sm:$0xff]
      %v911 = vld [vmem:[%s798 + $0x10] sm:$0xff]
      %v912 = vld [vmem:[%s798 + $0x18] sm:$0xff]
      %v913 = vld [vmem:[%s798 + $0x20] sm:$0xff]
      %v914 = vld [vmem:[%s798 + $0x28] sm:$0xff]
      %v915 = vld [vmem:[%s798 + $0x30] sm:$0xff]
      %v916 = vld [vmem:[%s798 + $0x38] sm:$0xff]
      %v917 = vld [vmem:[%s10] sm:$0xff]
      %v918 = vld [vmem:[%s10 + $0x8] sm:$0xff]
      %v919 = vld [vmem:[%s10 + $0x10] sm:$0xff]
      %v920 = vld [vmem:[%s10 + $0x18] sm:$0xff]
      %v921 = vld [vmem:[%s10 + $0x20] sm:$0xff]
      %v922 = vld [vmem:[%s10 + $0x28] sm:$0xff]
      %v923 = vld [vmem:[%s10 + $0x30] sm:$0xff]
      %v924 = vld [vmem:[%s10 + $0x38] sm:$0xff]
      %v925 = vld [vmem:[%s10 + $0x40] sm:$0xff]
      %v926 = vld [vmem:[%s11] sm:$0x1]
      %v928 = vlaneseq
      %v929 = vshrl.u32 %v928, 7
      %v930 = vsub.s32 0, %v929
      %v931 = vrot.slane %v926, %v930
      %vm933 = vcmask 588800
      %v935 = vsel %vm933, %v909, 0
      %v938 = vsel %vm933, %v910, 0
      %v941 = vsel %vm933, %v911, 0
      %v944 = vsel %vm933, %v912, 0
      %v947 = vsel %vm933, %v913, 0
      %v950 = vsel %vm933, %v914, 0
      %v953 = vsel %vm933, %v915, 0
      %v956 = vsel %vm933, %v916, 0
      %958 = vmatprep.subr.mxu0 0.0
      %959 = vmatpush1.msra.mxu0 %v917
      %960 = vmatprep.subr.mxu0 0.0
      %961 = vmatpush1.msra.mxu0 %v918
      %962 = vmatprep.subr.mxu0 0.0
      %963 = vmatpush1.msra.mxu0 %v919
      %964 = vmatprep.subr.mxu0 0.0
      %965 = vmatpush1.msra.mxu0 %v920
      %966 = vmatprep.subr.mxu0 0.0
      %967 = vmatpush1.msra.mxu0 %v921
      %968 = vmatprep.subr.mxu0 0.0
      %969 = vmatpush1.msra.mxu0 %v922
      %970 = vmatprep.subr.mxu0 0.0
      %971 = vmatpush1.msra.mxu0 %v923
      %972 = vmatprep.subr.mxu0 0.0
      %973 = vmatpush1.msra.mxu0 %v924
      %974 = vmatprep.subr.mxu0 0.0
      %975 = vmatpush1.msra.mxu0 %v925
      %976 = vmatprep.subr.mxu0 0.0
      %977 = vmatpush1.msra.mxu0 0.0
      %978 = vmatprep.subr.mxu0 0.0
      %979 = vmatpush1.msra.mxu0 0.0
      %980 = vmatprep.subr.mxu0 0.0
      %981 = vmatpush1.msra.mxu0 0.0
      %982 = vmatprep.subr.mxu0 0.0
      %983 = vmatpush1.msra.mxu0 0.0
      %984 = vmatprep.subr.mxu0 0.0
      %985 = vmatpush1.msra.mxu0 0.0
      %986 = vmatprep.subr.mxu0 0.0
      %987 = vmatpush1.msra.mxu0 0.0
      %988 = vmatprep.subr.mxu0 0.0
      %989 = vmatpush1.msra.mxu0 0.0
      %990 = vmatprep.subr.mxu0 0.0
      %991 = vmatpush1.msra.mxu0 0.0
      %992 = vmatprep.subr.mxu0 0.0
      %993 = vmatpush1.msra.mxu0 0.0
      %994 = vmatprep.subr.mxu0 0.0
      %995 = vmatpush1.msra.mxu0 0.0
      %996 = vmatprep.subr.mxu0 0.0
      %997 = vmatpush1.msra.mxu0 0.0
      %998 = vmatprep.subr.mxu0 0.0
      %999 = vmatpush1.msra.mxu0 0.0
      %1000 = vmatprep.subr.mxu0 0.0
      %1001 = vmatpush1.msra.mxu0 0.0
      %1002 = vmatprep.subr.mxu0 0.0
      %1003 = vmatpush1.msra.mxu0 0.0
      %1004 = vmatprep.subr.mxu0 0.0
      %1005 = vmatpush1.msra.mxu0 0.0
      %1006 = vmatprep.subr.mxu0 0.0
      %1007 = vmatpush1.msra.mxu0 0.0
      %1008 = vmatprep.subr.mxu0 0.0
      %1009 = vmatpush1.msra.mxu0 0.0
      %1010 = vmatprep.subr.mxu0 0.0
      %1011 = vmatpush1.msra.mxu0 0.0
      %1012 = vmatprep.subr.mxu0 0.0
      %1013 = vmatpush1.msra.mxu0 0.0
      %1014 = vmatprep.subr.mxu0 0.0
      %1015 = vmatpush1.msra.mxu0 0.0
      %1016 = vmatprep.subr.mxu0 0.0
      %1017 = vmatpush1.msra.mxu0 0.0
      %1018 = vmatprep.subr.mxu0 0.0
      %1019 = vmatpush1.msra.mxu0 0.0
      %1020 = vmatprep.subr.mxu0 0.0
      %1021 = vmatpush1.msra.mxu0 0.0
      %1022 = vmatprep.mubr.f32.mxu0 0.0
      %1023 = vmatmul.mubr.f32.gmra.mrb[0].mxu0 %v935
      %v1024 = vpop.f32.mrb[0].mxu0
      %v1025 = vadd.f32 %v931, %v1024
      %v1026 = vpop.f32.mrb[0].mxu0
      %1027 = vmatprep.mubr.f32.mxu0 0.0
      %1028 = vmatmul.mubr.f32.gmra.mrb[0].mxu0 %v938
      %v1029 = vpop.f32.mrb[0].mxu0
      %v1030 = vadd.f32 %v931, %v1029
      %v1031 = vpop.f32.mrb[0].mxu0
      %1032 = vmatprep.mubr.f32.mxu0 0.0
      %1033 = vmatmul.mubr.f32.gmra.mrb[0].mxu0 %v941
      %v1034 = vpop.f32.mrb[0].mxu0
      %v1035 = vadd.f32 %v931, %v1034
      %v1036 = vpop.f32.mrb[0].mxu0
      %1037 = vmatprep.mubr.f32.mxu0 0.0
      %1038 = vmatmul.mubr.f32.gmra.mrb[0].mxu0 %v944
      %v1039 = vpop.f32.mrb[0].mxu0
      %v1040 = vadd.f32 %v931, %v1039
      %v1041 = vpop.f32.mrb[0].mxu0
      %1042 = vmatprep.mubr.f32.mxu0 0.0
      %1043 = vmatmul.mubr.f32.gmra.mrb[0].mxu0 %v947
      %v1044 = vpop.f32.mrb[0].mxu0
      %v1045 = vadd.f32 %v931, %v1044
      %v1046 = vpop.f32.mrb[0].mxu0
      %1047 = vmatprep.mubr.f32.mxu0 0.0
      %1048 = vmatmul.mubr.f32.gmra.mrb[0].mxu0 %v950
      %v1049 = vpop.f32.mrb[0].mxu0
      %v1050 = vadd.f32 %v931, %v1049
      %v1051 = vpop.f32.mrb[0].mxu0
      %1052 = vmatprep.mubr.f32.mxu0 0.0
      %1053 = vmatmul.mubr.f32.gmra.mrb[0].mxu0 %v953
      %v1054 = vpop.f32.mrb[0].mxu0
      %v1055 = vadd.f32 %v931, %v1054
      %v1056 = vpop.f32.mrb[0].mxu0
      %1057 = vmatprep.mubr.f32.mxu0 0.0
      %1058 = vmatmul.mubr.f32.gmra.mrb[0].mxu0 %v956
      %v1059 = vpop.f32.mrb[0].mxu0
      %v1060 = vadd.f32 %v931, %v1059
      %v1061 = vpop.f32.mrb[0].mxu0
      %1062 = vdwg.mxu0
      %v1063 = vxor.u32 %v1025, 2147483648
      %v1064 = vxor.u32 %v1030, 2147483648
      %v1065 = vxor.u32 %v1035, 2147483648
      %v1066 = vxor.u32 %v1040, 2147483648
      %v1067 = vxor.u32 %v1045, 2147483648
      %v1068 = vxor.u32 %v1050, 2147483648
      %v1069 = vxor.u32 %v1055, 2147483648
      %v1070 = vxor.u32 %v1060, 2147483648
      %v1071 = vmul.f32 %v1063, 1.442695
      %v1072 = vpow.pop %v1071
      %v1073 = vmul.f32 %v1064, 1.442695
      %v1074 = vpow.pop %v1073
      %v1075 = vmul.f32 %v1065, 1.442695
      %v1076 = vpow.pop %v1075
      %v1077 = vmul.f32 %v1066, 1.442695
      %v1078 = vpow.pop %v1077
      %v1079 = vmul.f32 %v1067, 1.442695
      %v1080 = vpow.pop %v1079
      %v1081 = vmul.f32 %v1068, 1.442695
      %v1082 = vpow.pop %v1081
      %v1083 = vmul.f32 %v1069, 1.442695
      %v1084 = vpow.pop %v1083
      %v1085 = vmul.f32 %v1070, 1.442695
      %v1086 = vpow.pop %v1085
      %v1087 = vadd.f32 %v1072, 1.0
      %v1088 = vadd.f32 %v1074, 1.0
      %v1089 = vadd.f32 %v1076, 1.0
      %v1090 = vadd.f32 %v1078, 1.0
      %v1091 = vadd.f32 %v1080, 1.0
      %v1092 = vadd.f32 %v1082, 1.0
      %v1093 = vadd.f32 %v1084, 1.0
      %v1094 = vadd.f32 %v1086, 1.0
      %v1095 = vrcp.pop %v1087
      %v1096 = vmul.f32 1.0, %v1095
      %v1097 = vrcp.pop %v1088
      %v1098 = vmul.f32 1.0, %v1097
      %v1099 = vrcp.pop %v1089
      %v1100 = vmul.f32 1.0, %v1099
      %v1101 = vrcp.pop %v1090
      %v1102 = vmul.f32 1.0, %v1101
      %v1103 = vrcp.pop %v1091
      %v1104 = vmul.f32 1.0, %v1103
      %v1105 = vrcp.pop %v1092
      %v1106 = vmul.f32 1.0, %v1105
      %v1107 = vrcp.pop %v1093
      %v1108 = vmul.f32 1.0, %v1107
      %v1109 = vrcp.pop %v1094
      %v1110 = vmul.f32 1.0, %v1109
      %v1111 = vmul.f32 %v1025, %v1096
      %v1112 = vmul.f32 %v1030, %v1098
      %v1113 = vmul.f32 %v1035, %v1100
      %v1114 = vmul.f32 %v1040, %v1102
      %v1115 = vmul.f32 %v1045, %v1104
      %v1116 = vmul.f32 %v1050, %v1106
      %v1117 = vmul.f32 %v1055, %v1108
      %v1118 = vmul.f32 %v1060, %v1110
      %v1119 = vld [vmem:[%s3] sm:$0xff]
      %v1120 = vld [vmem:[%s3 + $0x8] sm:$0xff]
      %v1121 = vld [vmem:[%s3 + $0x10] sm:$0xff]
      %v1122 = vld [vmem:[%s3 + $0x18] sm:$0xff]
      %v1123 = vld [vmem:[%s3 + $0x20] sm:$0xff]
      %v1124 = vld [vmem:[%s3 + $0x28] sm:$0xff]
      %v1125 = vld [vmem:[%s3 + $0x30] sm:$0xff]
      %v1126 = vld [vmem:[%s3 + $0x38] sm:$0xff]
      %v1127 = vld [vmem:[%s4] sm:$0xff]
      %v1128 = vld [vmem:[%s4 + $0x8] sm:$0xff]
      %v1129 = vld [vmem:[%s4 + $0x10] sm:$0xff]
      %v1130 = vld [vmem:[%s4 + $0x18] sm:$0xff]
      %v1131 = vld [vmem:[%s4 + $0x20] sm:$0xff]
      %v1132 = vld [vmem:[%s4 + $0x28] sm:$0xff]
      %v1133 = vld [vmem:[%s4 + $0x30] sm:$0xff]
      %v1134 = vld [vmem:[%s4 + $0x38] sm:$0xff]
      %v1135 = vld [vmem:[%s12] sm:$0xff]
      %v1136 = vld [vmem:[%s12 + $0x8] sm:$0xff]
      %v1137 = vld [vmem:[%s12 + $0x10] sm:$0xff]
      %v1138 = vld [vmem:[%s12 + $0x18] sm:$0xff]
      %v1139 = vld [vmem:[%s12 + $0x20] sm:$0xff]
      %v1140 = vld [vmem:[%s12 + $0x28] sm:$0xff]
      %v1141 = vld [vmem:[%s12 + $0x30] sm:$0xff]
      %v1142 = vld [vmem:[%s12 + $0x38] sm:$0xff]
      %v1143 = vld [vmem:[%s12 + $0x40] sm:$0xff]
      %v1144 = vld [vmem:[%s12 + $0x48] sm:$0xff]
      %v1145 = vld [vmem:[%s12 + $0x50] sm:$0xff]
      %v1146 = vld [vmem:[%s12 + $0x58] sm:$0xff]
      %v1147 = vld [vmem:[%s12 + $0x60] sm:$0xff]
      %v1148 = vld [vmem:[%s12 + $0x68] sm:$0xff]
      %v1149 = vld [vmem:[%s12 + $0x70] sm:$0xff]
      %v1150 = vld [vmem:[%s12 + $0x78] sm:$0xff]
      %vm1151 = vcmask 261120
      %v1153 = vsel %vm1151, %v908, 0
      %1155 = vmatprep.subr.mxu0 0.0
      %1156 = vmatpush1.msra.mxu0 %v1135
      %1157 = vmatprep.subr.mxu0 0.0
      %1158 = vmatpush1.msra.mxu0 %v1136
      %1159 = vmatprep.subr.mxu0 0.0
      %1160 = vmatpush1.msra.mxu0 %v1137
      %1161 = vmatprep.subr.mxu0 0.0
      %1162 = vmatpush1.msra.mxu0 %v1138
      %1163 = vmatprep.subr.mxu0 0.0
      %1164 = vmatpush1.msra.mxu0 0.0
      %1165 = vmatprep.subr.mxu0 0.0
      %1166 = vmatpush1.msra.mxu0 0.0
      %1167 = vmatprep.subr.mxu0 0.0
      %1168 = vmatpush1.msra.mxu0 0.0
      %1169 = vmatprep.subr.mxu0 0.0
      %1170 = vmatpush1.msra.mxu0 0.0
      %1171 = vmatprep.subr.mxu0 0.0
      %1172 = vmatpush1.msra.mxu0 0.0
      %1173 = vmatprep.subr.mxu0 0.0
      %1174 = vmatpush1.msra.mxu0 0.0
      %1175 = vmatprep.subr.mxu0 0.0
      %1176 = vmatpush1.msra.mxu0 0.0
      %1177 = vmatprep.subr.mxu0 0.0
      %1178 = vmatpush1.msra.mxu0 0.0
      %1179 = vmatprep.subr.mxu0 0.0
      %1180 = vmatpush1.msra.mxu0 0.0
      %1181 = vmatprep.subr.mxu0 0.0
      %1182 = vmatpush1.msra.mxu0 0.0
      %1183 = vmatprep.subr.mxu0 0.0
      %1184 = vmatpush1.msra.mxu0 0.0
      %1185 = vmatprep.subr.mxu0 0.0
      %1186 = vmatpush1.msra.mxu0 0.0
      %1187 = vmatprep.subr.mxu0 0.0
      %1188 = vmatpush1.msra.mxu0 0.0
      %1189 = vmatprep.subr.mxu0 0.0
      %1190 = vmatpush1.msra.mxu0 0.0
      %1191 = vmatprep.subr.mxu0 0.0
      %1192 = vmatpush1.msra.mxu0 0.0
      %1193 = vmatprep.subr.mxu0 0.0
      %1194 = vmatpush1.msra.mxu0 0.0
      %1195 = vmatprep.subr.mxu0 0.0
      %1196 = vmatpush1.msra.mxu0 0.0
      %1197 = vmatprep.subr.mxu0 0.0
      %1198 = vmatpush1.msra.mxu0 0.0
      %1199 = vmatprep.subr.mxu0 0.0
      %1200 = vmatpush1.msra.mxu0 0.0
      %1201 = vmatprep.subr.mxu0 0.0
      %1202 = vmatpush1.msra.mxu0 0.0
      %1203 = vmatprep.subr.mxu0 0.0
      %1204 = vmatpush1.msra.mxu0 0.0
      %1205 = vmatprep.subr.mxu0 0.0
      %1206 = vmatpush1.msra.mxu0 0.0
      %1207 = vmatprep.subr.mxu0 0.0
      %1208 = vmatpush1.msra.mxu0 0.0
      %1209 = vmatprep.subr.mxu0 0.0
      %1210 = vmatpush1.msra.mxu0 0.0
      %1211 = vmatprep.subr.mxu0 0.0
      %1212 = vmatpush1.msra.mxu0 0.0
      %1213 = vmatprep.subr.mxu0 0.0
      %1214 = vmatpush1.msra.mxu0 0.0
      %1215 = vmatprep.subr.mxu0 0.0
      %1216 = vmatpush1.msra.mxu0 0.0
      %1217 = vmatprep.subr.mxu0 0.0
      %1218 = vmatpush1.msra.mxu0 0.0
      %1219 = vmatprep.mubr.f32.mxu0 0.0
      %1220 = vmatmul.mubr.f32.gmra.mrb[0].mxu0 %v1153
      %v1221 = vpop.f32.mrb[0].mxu0
      %v1222 = vadd.f32 0.0, %v1221
      %v1223 = vpop.f32.mrb[0].mxu0
      %1224 = vdwg.mxu0
      %1225 = vmatprep.subr.mxu0 0.0
      %1226 = vmatpush1.msra.mxu0 %v1139
      %1227 = vmatprep.subr.mxu0 0.0
      %1228 = vmatpush1.msra.mxu0 %v1140
      %1229 = vmatprep.subr.mxu0 0.0
      %1230 = vmatpush1.msra.mxu0 %v1141
      %1231 = vmatprep.subr.mxu0 0.0
      %1232 = vmatpush1.msra.mxu0 %v1142
      %1233 = vmatprep.subr.mxu0 0.0
      %1234 = vmatpush1.msra.mxu0 0.0
      %1235 = vmatprep.subr.mxu0 0.0
      %1236 = vmatpush1.msra.mxu0 0.0
      %1237 = vmatprep.subr.mxu0 0.0
      %1238 = vmatpush1.msra.mxu0 0.0
      %1239 = vmatprep.subr.mxu0 0.0
      %1240 = vmatpush1.msra.mxu0 0.0
      %1241 = vmatprep.subr.mxu0 0.0
      %1242 = vmatpush1.msra.mxu0 0.0
      %1243 = vmatprep.subr.mxu0 0.0
      %1244 = vmatpush1.msra.mxu0 0.0
      %1245 = vmatprep.subr.mxu0 0.0
      %1246 = vmatpush1.msra.mxu0 0.0
      %1247 = vmatprep.subr.mxu0 0.0
      %1248 = vmatpush1.msra.mxu0 0.0
      %1249 = vmatprep.subr.mxu0 0.0
      %1250 = vmatpush1.msra.mxu0 0.0
      %1251 = vmatprep.subr.mxu0 0.0
      %1252 = vmatpush1.msra.mxu0 0.0
      %1253 = vmatprep.subr.mxu0 0.0
      %1254 = vmatpush1.msra.mxu0 0.0
      %1255 = vmatprep.subr.mxu0 0.0
      %1256 = vmatpush1.msra.mxu0 0.0
      %1257 = vmatprep.subr.mxu0 0.0
      %1258 = vmatpush1.msra.mxu0 0.0
      %1259 = vmatprep.subr.mxu0 0.0
      %1260 = vmatpush1.msra.mxu0 0.0
      %1261 = vmatprep.subr.mxu0 0.0
      %1262 = vmatpush1.msra.mxu0 0.0
      %1263 = vmatprep.subr.mxu0 0.0
      %1264 = vmatpush1.msra.mxu0 0.0
      %1265 = vmatprep.subr.mxu0 0.0
      %1266 = vmatpush1.msra.mxu0 0.0
      %1267 = vmatprep.subr.mxu0 0.0
      %1268 = vmatpush1.msra.mxu0 0.0
      %1269 = vmatprep.subr.mxu0 0.0
      %1270 = vmatpush1.msra.mxu0 0.0
      %1271 = vmatprep.subr.mxu0 0.0
      %1272 = vmatpush1.msra.mxu0 0.0
      %1273 = vmatprep.subr.mxu0 0.0
      %1274 = vmatpush1.msra.mxu0 0.0
      %1275 = vmatprep.subr.mxu0 0.0
      %1276 = vmatpush1.msra.mxu0 0.0
      %1277 = vmatprep.subr.mxu0 0.0
      %1278 = vmatpush1.msra.mxu0 0.0
      %1279 = vmatprep.subr.mxu0 0.0
      %1280 = vmatpush1.msra.mxu0 0.0
      %1281 = vmatprep.subr.mxu0 0.0
      %1282 = vmatpush1.msra.mxu0 0.0
      %1283 = vmatprep.subr.mxu0 0.0
      %1284 = vmatpush1.msra.mxu0 0.0
      %1285 = vmatprep.subr.mxu0 0.0
      %1286 = vmatpush1.msra.mxu0 0.0
      %1287 = vmatprep.subr.mxu0 0.0
      %1288 = vmatpush1.msra.mxu0 0.0
      %1289 = vmatprep.mubr.f32.mxu0 0.0
      %1290 = vmatmul.mubr.f32.gmra.mrb[0].mxu0 %v1153
      %v1291 = vpop.f32.mrb[0].mxu0
      %v1292 = vadd.f32 0.0, %v1291
      %v1293 = vpop.f32.mrb[0].mxu0
      %1294 = vdwg.mxu0
      %vm1295 = vcmask 64512
      %v1297 = vsel %vm1295, %v1127, 0
      %v1300 = vsel %vm1295, %v1128, 0
      %v1303 = vsel %vm1295, %v1129, 0
      %v1306 = vsel %vm1295, %v1130, 0
      %v1309 = vsel %vm1295, %v1131, 0
      %v1312 = vsel %vm1295, %v1132, 0
      %v1315 = vsel %vm1295, %v1133, 0
      %v1318 = vsel %vm1295, %v1134, 0
      %1320 = vmatprep.subr.mxu0 0.0
      %1321 = vmatpush1.msra.mxu0 %v1292
      %1322 = vmatprep.subr.mxu0 0.0
      %1323 = vmatpush1.msra.mxu0 0.0
      %1324 = vmatprep.subr.mxu0 0.0
      %1325 = vmatpush1.msra.mxu0 0.0
      %1326 = vmatprep.subr.mxu0 0.0
      %1327 = vmatpush1.msra.mxu0 0.0
      %1328 = vmatprep.subr.mxu0 0.0
      %1329 = vmatpush1.msra.mxu0 0.0
      %1330 = vmatprep.subr.mxu0 0.0
      %1331 = vmatpush1.msra.mxu0 0.0
      %1332 = vmatprep.subr.mxu0 0.0
      %1333 = vmatpush1.msra.mxu0 0.0
      %1334 = vmatprep.subr.mxu0 0.0
      %1335 = vmatpush1.msra.mxu0 0.0
      %1336 = vmatprep.subr.mxu0 0.0
      %1337 = vmatpush1.msra.mxu0 0.0
      %1338 = vmatprep.subr.mxu0 0.0
      %1339 = vmatpush1.msra.mxu0 0.0
      %1340 = vmatprep.subr.mxu0 0.0
      %1341 = vmatpush1.msra.mxu0 0.0
      %1342 = vmatprep.subr.mxu0 0.0
      %1343 = vmatpush1.msra.mxu0 0.0
      %1344 = vmatprep.subr.mxu0 0.0
      %1345 = vmatpush1.msra.mxu0 0.0
      %1346 = vmatprep.subr.mxu0 0.0
      %1347 = vmatpush1.msra.mxu0 0.0
      %1348 = vmatprep.subr.mxu0 0.0
      %1349 = vmatpush1.msra.mxu0 0.0
      %1350 = vmatprep.subr.mxu0 0.0
      %1351 = vmatpush1.msra.mxu0 0.0
      %1352 = vmatprep.subr.mxu0 0.0
      %1353 = vmatpush1.msra.mxu0 0.0
      %1354 = vmatprep.subr.mxu0 0.0
      %1355 = vmatpush1.msra.mxu0 0.0
      %1356 = vmatprep.subr.mxu0 0.0
      %1357 = vmatpush1.msra.mxu0 0.0
      %1358 = vmatprep.subr.mxu0 0.0
      %1359 = vmatpush1.msra.mxu0 0.0
      %1360 = vmatprep.subr.mxu0 0.0
      %1361 = vmatpush1.msra.mxu0 0.0
      %1362 = vmatprep.subr.mxu0 0.0
      %1363 = vmatpush1.msra.mxu0 0.0
      %1364 = vmatprep.subr.mxu0 0.0
      %1365 = vmatpush1.msra.mxu0 0.0
      %1366 = vmatprep.subr.mxu0 0.0
      %1367 = vmatpush1.msra.mxu0 0.0
      %1368 = vmatprep.subr.mxu0 0.0
      %1369 = vmatpush1.msra.mxu0 0.0
      %1370 = vmatprep.subr.mxu0 0.0
      %1371 = vmatpush1.msra.mxu0 0.0
      %1372 = vmatprep.subr.mxu0 0.0
      %1373 = vmatpush1.msra.mxu0 0.0
      %1374 = vmatprep.subr.mxu0 0.0
      %1375 = vmatpush1.msra.mxu0 0.0
      %1376 = vmatprep.subr.mxu0 0.0
      %1377 = vmatpush1.msra.mxu0 0.0
      %1378 = vmatprep.subr.mxu0 0.0
      %1379 = vmatpush1.msra.mxu0 0.0
      %1380 = vmatprep.subr.mxu0 0.0
      %1381 = vmatpush1.msra.mxu0 0.0
      %1382 = vmatprep.subr.mxu0 0.0
      %1383 = vmatpush1.msra.mxu0 0.0
      %1384 = vmatprep.mubr.f32.mxu0 0.0
      %1385 = vmatmul.mubr.f32.gmra.mrb[0].mxu0 %v1297
      %v1386 = vpop.f32.mrb[0].mxu0
      %v1387 = vadd.f32 0.0, %v1386
      %v1388 = vpop.f32.mrb[0].mxu0
      %1389 = vmatprep.mubr.f32.mxu0 0.0
      %1390 = vmatmul.mubr.f32.gmra.mrb[0].mxu0 %v1300
      %v1391 = vpop.f32.mrb[0].mxu0
      %v1392 = vadd.f32 0.0, %v1391
      %v1393 = vpop.f32.mrb[0].mxu0
      %1394 = vmatprep.mubr.f32.mxu0 0.0
      %1395 = vmatmul.mubr.f32.gmra.mrb[0].mxu0 %v1303
      %v1396 = vpop.f32.mrb[0].mxu0
      %v1397 = vadd.f32 0.0, %v1396
      %v1398 = vpop.f32.mrb[0].mxu0
      %1399 = vmatprep.mubr.f32.mxu0 0.0
      %1400 = vmatmul.mubr.f32.gmra.mrb[0].mxu0 %v1306
      %v1401 = vpop.f32.mrb[0].mxu0
      %v1402 = vadd.f32 0.0, %v1401
      %v1403 = vpop.f32.mrb[0].mxu0
      %1404 = vmatprep.mubr.f32.mxu0 0.0
      %1405 = vmatmul.mubr.f32.gmra.mrb[0].mxu0 %v1309
      %v1406 = vpop.f32.mrb[0].mxu0
      %v1407 = vadd.f32 0.0, %v1406
      %v1408 = vpop.f32.mrb[0].mxu0
      %1409 = vmatprep.mubr.f32.mxu0 0.0
      %1410 = vmatmul.mubr.f32.gmra.mrb[0].mxu0 %v1312
      %v1411 = vpop.f32.mrb[0].mxu0
      %v1412 = vadd.f32 0.0, %v1411
      %v1413 = vpop.f32.mrb[0].mxu0
      %1414 = vmatprep.mubr.f32.mxu0 0.0
      %1415 = vmatmul.mubr.f32.gmra.mrb[0].mxu0 %v1315
      %v1416 = vpop.f32.mrb[0].mxu0
      %v1417 = vadd.f32 0.0, %v1416
      %v1418 = vpop.f32.mrb[0].mxu0
      %1419 = vmatprep.mubr.f32.mxu0 0.0
      %1420 = vmatmul.mubr.f32.gmra.mrb[0].mxu0 %v1318
      %v1421 = vpop.f32.mrb[0].mxu0
      %v1422 = vadd.f32 0.0, %v1421
      %v1423 = vpop.f32.mrb[0].mxu0
      %1424 = vdwg.mxu0
      %v1426 = vsel %vm1295, %v1119, 0
      %v1429 = vsel %vm1295, %v1120, 0
      %v1432 = vsel %vm1295, %v1121, 0
      %v1435 = vsel %vm1295, %v1122, 0
      %v1438 = vsel %vm1295, %v1123, 0
      %v1441 = vsel %vm1295, %v1124, 0
      %v1444 = vsel %vm1295, %v1125, 0
      %v1447 = vsel %vm1295, %v1126, 0
      %1449 = vmatprep.subr.mxu0 0.0
      %1450 = vmatpush1.msra.mxu0 %v1222
      %1451 = vmatprep.subr.mxu0 0.0
      %1452 = vmatpush1.msra.mxu0 0.0
      %1453 = vmatprep.subr.mxu0 0.0
      %1454 = vmatpush1.msra.mxu0 0.0
      %1455 = vmatprep.subr.mxu0 0.0
      %1456 = vmatpush1.msra.mxu0 0.0
      %1457 = vmatprep.subr.mxu0 0.0
      %1458 = vmatpush1.msra.mxu0 0.0
      %1459 = vmatprep.subr.mxu0 0.0
      %1460 = vmatpush1.msra.mxu0 0.0
      %1461 = vmatprep.subr.mxu0 0.0
      %1462 = vmatpush1.msra.mxu0 0.0
      %1463 = vmatprep.subr.mxu0 0.0
      %1464 = vmatpush1.msra.mxu0 0.0
      %1465 = vmatprep.subr.mxu0 0.0
      %1466 = vmatpush1.msra.mxu0 0.0
      %1467 = vmatprep.subr.mxu0 0.0
      %1468 = vmatpush1.msra.mxu0 0.0
      %1469 = vmatprep.subr.mxu0 0.0
      %1470 = vmatpush1.msra.mxu0 0.0
      %1471 = vmatprep.subr.mxu0 0.0
      %1472 = vmatpush1.msra.mxu0 0.0
      %1473 = vmatprep.subr.mxu0 0.0
      %1474 = vmatpush1.msra.mxu0 0.0
      %1475 = vmatprep.subr.mxu0 0.0
      %1476 = vmatpush1.msra.mxu0 0.0
      %1477 = vmatprep.subr.mxu0 0.0
      %1478 = vmatpush1.msra.mxu0 0.0
      %1479 = vmatprep.subr.mxu0 0.0
      %1480 = vmatpush1.msra.mxu0 0.0
      %1481 = vmatprep.subr.mxu0 0.0
      %1482 = vmatpush1.msra.mxu0 0.0
      %1483 = vmatprep.subr.mxu0 0.0
      %1484 = vmatpush1.msra.mxu0 0.0
      %1485 = vmatprep.subr.mxu0 0.0
      %1486 = vmatpush1.msra.mxu0 0.0
      %1487 = vmatprep.subr.mxu0 0.0
      %1488 = vmatpush1.msra.mxu0 0.0
      %1489 = vmatprep.subr.mxu0 0.0
      %1490 = vmatpush1.msra.mxu0 0.0
      %1491 = vmatprep.subr.mxu0 0.0
      %1492 = vmatpush1.msra.mxu0 0.0
      %1493 = vmatprep.subr.mxu0 0.0
      %1494 = vmatpush1.msra.mxu0 0.0
      %1495 = vmatprep.subr.mxu0 0.0
      %1496 = vmatpush1.msra.mxu0 0.0
      %1497 = vmatprep.subr.mxu0 0.0
      %1498 = vmatpush1.msra.mxu0 0.0
      %1499 = vmatprep.subr.mxu0 0.0
      %1500 = vmatpush1.msra.mxu0 0.0
      %1501 = vmatprep.subr.mxu0 0.0
      %1502 = vmatpush1.msra.mxu0 0.0
      %1503 = vmatprep.subr.mxu0 0.0
      %1504 = vmatpush1.msra.mxu0 0.0
      %1505 = vmatprep.subr.mxu0 0.0
      %1506 = vmatpush1.msra.mxu0 0.0
      %1507 = vmatprep.subr.mxu0 0.0
      %1508 = vmatpush1.msra.mxu0 0.0
      %1509 = vmatprep.subr.mxu0 0.0
      %1510 = vmatpush1.msra.mxu0 0.0
      %1511 = vmatprep.subr.mxu0 0.0
      %1512 = vmatpush1.msra.mxu0 0.0
      %1513 = vmatprep.mubr.f32.mxu0 0.0
      %1514 = vmatmul.mubr.f32.gmra.mrb[0].mxu0 %v1426
      %v1515 = vpop.f32.mrb[0].mxu0
      %v1516 = vadd.f32 %v1387, %v1515
      %v1517 = vpop.f32.mrb[0].mxu0
      %1518 = vmatprep.mubr.f32.mxu0 0.0
      %1519 = vmatmul.mubr.f32.gmra.mrb[0].mxu0 %v1429
      %v1520 = vpop.f32.mrb[0].mxu0
      %v1521 = vadd.f32 %v1392, %v1520
      %v1522 = vpop.f32.mrb[0].mxu0
      %1523 = vmatprep.mubr.f32.mxu0 0.0
      %1524 = vmatmul.mubr.f32.gmra.mrb[0].mxu0 %v1432
      %v1525 = vpop.f32.mrb[0].mxu0
      %v1526 = vadd.f32 %v1397, %v1525
      %v1527 = vpop.f32.mrb[0].mxu0
      %1528 = vmatprep.mubr.f32.mxu0 0.0
      %1529 = vmatmul.mubr.f32.gmra.mrb[0].mxu0 %v1435
      %v1530 = vpop.f32.mrb[0].mxu0
      %v1531 = vadd.f32 %v1402, %v1530
      %v1532 = vpop.f32.mrb[0].mxu0
      %1533 = vmatprep.mubr.f32.mxu0 0.0
      %1534 = vmatmul.mubr.f32.gmra.mrb[0].mxu0 %v1438
      %v1535 = vpop.f32.mrb[0].mxu0
      %v1536 = vadd.f32 %v1407, %v1535
      %v1537 = vpop.f32.mrb[0].mxu0
      %1538 = vmatprep.mubr.f32.mxu0 0.0
      %1539 = vmatmul.mubr.f32.gmra.mrb[0].mxu0 %v1441
      %v1540 = vpop.f32.mrb[0].mxu0
      %v1541 = vadd.f32 %v1412, %v1540
      %v1542 = vpop.f32.mrb[0].mxu0
      %1543 = vmatprep.mubr.f32.mxu0 0.0
      %1544 = vmatmul.mubr.f32.gmra.mrb[0].mxu0 %v1444
      %v1545 = vpop.f32.mrb[0].mxu0
      %v1546 = vadd.f32 %v1417, %v1545
      %v1547 = vpop.f32.mrb[0].mxu0
      %1548 = vmatprep.mubr.f32.mxu0 0.0
      %1549 = vmatmul.mubr.f32.gmra.mrb[0].mxu0 %v1447
      %v1550 = vpop.f32.mrb[0].mxu0
      %v1551 = vadd.f32 %v1422, %v1550
      %v1552 = vpop.f32.mrb[0].mxu0
      %1553 = vdwg.mxu0
      %vm1554 = vcmask 523264
      %v1556 = vsel %vm1554, %v1111, 0
      %v1559 = vsel %vm1554, %v1112, 0
      %v1562 = vsel %vm1554, %v1113, 0
      %v1565 = vsel %vm1554, %v1114, 0
      %v1568 = vsel %vm1554, %v1115, 0
      %v1571 = vsel %vm1554, %v1116, 0
      %v1574 = vsel %vm1554, %v1117, 0
      %v1577 = vsel %vm1554, %v1118, 0
      %1579 = vmatprep.subr.mxu0 0.0
      %1580 = vmatpush1.msra.mxu0 %v1143
      %1581 = vmatprep.subr.mxu0 0.0
      %1582 = vmatpush1.msra.mxu0 %v1144
      %1583 = vmatprep.subr.mxu0 0.0
      %1584 = vmatpush1.msra.mxu0 %v1145
      %1585 = vmatprep.subr.mxu0 0.0
      %1586 = vmatpush1.msra.mxu0 %v1146
      %1587 = vmatprep.subr.mxu0 0.0
      %1588 = vmatpush1.msra.mxu0 %v1147
      %1589 = vmatprep.subr.mxu0 0.0
      %1590 = vmatpush1.msra.mxu0 %v1148
      %1591 = vmatprep.subr.mxu0 0.0
      %1592 = vmatpush1.msra.mxu0 %v1149
      %1593 = vmatprep.subr.mxu0 0.0
      %1594 = vmatpush1.msra.mxu0 %v1150
      %1595 = vmatprep.subr.mxu0 0.0
      %1596 = vmatpush1.msra.mxu0 0.0
      %1597 = vmatprep.subr.mxu0 0.0
      %1598 = vmatpush1.msra.mxu0 0.0
      %1599 = vmatprep.subr.mxu0 0.0
      %1600 = vmatpush1.msra.mxu0 0.0
      %1601 = vmatprep.subr.mxu0 0.0
      %1602 = vmatpush1.msra.mxu0 0.0
      %1603 = vmatprep.subr.mxu0 0.0
      %1604 = vmatpush1.msra.mxu0 0.0
      %1605 = vmatprep.subr.mxu0 0.0
      %1606 = vmatpush1.msra.mxu0 0.0
      %1607 = vmatprep.subr.mxu0 0.0
      %1608 = vmatpush1.msra.mxu0 0.0
      %1609 = vmatprep.subr.mxu0 0.0
      %1610 = vmatpush1.msra.mxu0 0.0
      %1611 = vmatprep.subr.mxu0 0.0
      %1612 = vmatpush1.msra.mxu0 0.0
      %1613 = vmatprep.subr.mxu0 0.0
      %1614 = vmatpush1.msra.mxu0 0.0
      %1615 = vmatprep.subr.mxu0 0.0
      %1616 = vmatpush1.msra.mxu0 0.0
      %1617 = vmatprep.subr.mxu0 0.0
      %1618 = vmatpush1.msra.mxu0 0.0
      %1619 = vmatprep.subr.mxu0 0.0
      %1620 = vmatpush1.msra.mxu0 0.0
      %1621 = vmatprep.subr.mxu0 0.0
      %1622 = vmatpush1.msra.mxu0 0.0
      %1623 = vmatprep.subr.mxu0 0.0
      %1624 = vmatpush1.msra.mxu0 0.0
      %1625 = vmatprep.subr.mxu0 0.0
      %1626 = vmatpush1.msra.mxu0 0.0
      %1627 = vmatprep.subr.mxu0 0.0
      %1628 = vmatpush1.msra.mxu0 0.0
      %1629 = vmatprep.subr.mxu0 0.0
      %1630 = vmatpush1.msra.mxu0 0.0
      %1631 = vmatprep.subr.mxu0 0.0
      %1632 = vmatpush1.msra.mxu0 0.0
      %1633 = vmatprep.subr.mxu0 0.0
      %1634 = vmatpush1.msra.mxu0 0.0
      %1635 = vmatprep.subr.mxu0 0.0
      %1636 = vmatpush1.msra.mxu0 0.0
      %1637 = vmatprep.subr.mxu0 0.0
      %1638 = vmatpush1.msra.mxu0 0.0
      %1639 = vmatprep.subr.mxu0 0.0
      %1640 = vmatpush1.msra.mxu0 0.0
      %1641 = vmatprep.subr.mxu0 0.0
      %1642 = vmatpush1.msra.mxu0 0.0
      %1643 = vmatprep.mubr.f32.mxu0 0.0
      %1644 = vmatmul.mubr.f32.gmra.mrb[0].mxu0 %v1556
      %v1645 = vpop.f32.mrb[0].mxu0
      %v1646 = vadd.f32 0.0, %v1645
      %v1647 = vpop.f32.mrb[0].mxu0
      %1648 = vmatprep.mubr.f32.mxu0 0.0
      %1649 = vmatmul.mubr.f32.gmra.mrb[0].mxu0 %v1559
      %v1650 = vpop.f32.mrb[0].mxu0
      %v1651 = vadd.f32 0.0, %v1650
      %v1652 = vpop.f32.mrb[0].mxu0
      %1653 = vmatprep.mubr.f32.mxu0 0.0
      %1654 = vmatmul.mubr.f32.gmra.mrb[0].mxu0 %v1562
      %v1655 = vpop.f32.mrb[0].mxu0
      %v1656 = vadd.f32 0.0, %v1655
      %v1657 = vpop.f32.mrb[0].mxu0
      %1658 = vmatprep.mubr.f32.mxu0 0.0
      %1659 = vmatmul.mubr.f32.gmra.mrb[0].mxu0 %v1565
      %v1660 = vpop.f32.mrb[0].mxu0
      %v1661 = vadd.f32 0.0, %v1660
      %v1662 = vpop.f32.mrb[0].mxu0
      %1663 = vmatprep.mubr.f32.mxu0 0.0
      %1664 = vmatmul.mubr.f32.gmra.mrb[0].mxu0 %v1568
      %v1665 = vpop.f32.mrb[0].mxu0
      %v1666 = vadd.f32 0.0, %v1665
      %v1667 = vpop.f32.mrb[0].mxu0
      %1668 = vmatprep.mubr.f32.mxu0 0.0
      %1669 = vmatmul.mubr.f32.gmra.mrb[0].mxu0 %v1571
      %v1670 = vpop.f32.mrb[0].mxu0
      %v1671 = vadd.f32 0.0, %v1670
      %v1672 = vpop.f32.mrb[0].mxu0
      %1673 = vmatprep.mubr.f32.mxu0 0.0
      %1674 = vmatmul.mubr.f32.gmra.mrb[0].mxu0 %v1574
      %v1675 = vpop.f32.mrb[0].mxu0
      %v1676 = vadd.f32 0.0, %v1675
      %v1677 = vpop.f32.mrb[0].mxu0
      %1678 = vmatprep.mubr.f32.mxu0 0.0
      %1679 = vmatmul.mubr.f32.gmra.mrb[0].mxu0 %v1577
      %v1680 = vpop.f32.mrb[0].mxu0
      %v1681 = vadd.f32 0.0, %v1680
      %v1682 = vpop.f32.mrb[0].mxu0
      %1683 = vdwg.mxu0
      %v1684 = vadd.f32 %v1516, %v1646
      %v1685 = vadd.f32 %v1521, %v1651
      %v1686 = vadd.f32 %v1526, %v1656
      %v1687 = vadd.f32 %v1531, %v1661
      %v1688 = vadd.f32 %v1536, %v1666
      %v1689 = vadd.f32 %v1541, %v1671
      %v1690 = vadd.f32 %v1546, %v1676
      %v1691 = vadd.f32 %v1551, %v1681
      %v1692 = vld [vmem:[%s13] sm:$0x1]
      %v1694 = vlaneseq
      %v1695 = vshrl.u32 %v1694, 7
      %v1696 = vsub.s32 0, %v1695
      %v1697 = vrot.slane %v1692, %v1696
      %v1699 = vadd.f32 %v1684, %v1697
      %v1700 = vadd.f32 %v1685, %v1697
      %v1701 = vadd.f32 %v1686, %v1697
      %v1702 = vadd.f32 %v1687, %v1697
      %v1703 = vadd.f32 %v1688, %v1697
      %v1704 = vadd.f32 %v1689, %v1697
      %v1705 = vadd.f32 %v1690, %v1697
      %v1706 = vadd.f32 %v1691, %v1697
      %v1707 = vxor.u32 %v1699, 2147483648
      %v1708 = vxor.u32 %v1700, 2147483648
      %v1709 = vxor.u32 %v1701, 2147483648
      %v1710 = vxor.u32 %v1702, 2147483648
      %v1711 = vxor.u32 %v1703, 2147483648
      %v1712 = vxor.u32 %v1704, 2147483648
      %v1713 = vxor.u32 %v1705, 2147483648
      %v1714 = vxor.u32 %v1706, 2147483648
      %v1715 = vmul.f32 %v1707, 1.442695
      %v1716 = vpow.pop %v1715
      %v1717 = vmul.f32 %v1708, 1.442695
      %v1718 = vpow.pop %v1717
      %v1719 = vmul.f32 %v1709, 1.442695
      %v1720 = vpow.pop %v1719
      %v1721 = vmul.f32 %v1710, 1.442695
      %v1722 = vpow.pop %v1721
      %v1723 = vmul.f32 %v1711, 1.442695
      %v1724 = vpow.pop %v1723
      %v1725 = vmul.f32 %v1712, 1.442695
      %v1726 = vpow.pop %v1725
      %v1727 = vmul.f32 %v1713, 1.442695
      %v1728 = vpow.pop %v1727
      %v1729 = vmul.f32 %v1714, 1.442695
      %v1730 = vpow.pop %v1729
      %v1731 = vadd.f32 %v1716, 1.0
      %v1732 = vadd.f32 %v1718, 1.0
      %v1733 = vadd.f32 %v1720, 1.0
      %v1734 = vadd.f32 %v1722, 1.0
      %v1735 = vadd.f32 %v1724, 1.0
      %v1736 = vadd.f32 %v1726, 1.0
      %v1737 = vadd.f32 %v1728, 1.0
      %v1738 = vadd.f32 %v1730, 1.0
      %v1739 = vrcp.pop %v1731
      %v1740 = vmul.f32 1.0, %v1739
      %v1741 = vrcp.pop %v1732
      %v1742 = vmul.f32 1.0, %v1741
      %v1743 = vrcp.pop %v1733
      %v1744 = vmul.f32 1.0, %v1743
      %v1745 = vrcp.pop %v1734
      %v1746 = vmul.f32 1.0, %v1745
      %v1747 = vrcp.pop %v1735
      %v1748 = vmul.f32 1.0, %v1747
      %v1749 = vrcp.pop %v1736
      %v1750 = vmul.f32 1.0, %v1749
      %v1751 = vrcp.pop %v1737
      %v1752 = vmul.f32 1.0, %v1751
      %v1753 = vrcp.pop %v1738
      %v1754 = vmul.f32 1.0, %v1753
      %v1755 = vmul.f32 %v1699, %v1740
      %v1756 = vmul.f32 %v1700, %v1742
      %v1757 = vmul.f32 %v1701, %v1744
      %v1758 = vmul.f32 %v1702, %v1746
      %v1759 = vmul.f32 %v1703, %v1748
      %v1760 = vmul.f32 %v1704, %v1750
      %v1761 = vmul.f32 %v1705, %v1752
      %v1762 = vmul.f32 %v1706, %v1754
      %v1763 = vld [vmem:[%s14] sm:$0xff]
      %v1764 = vld [vmem:[%s14 + $0x8] sm:$0xff]
      %v1765 = vld [vmem:[%s14 + $0x10] sm:$0xff]
      %v1766 = vld [vmem:[%s14 + $0x18] sm:$0xff]
      %v1767 = vld [vmem:[%s14 + $0x20] sm:$0xff]
      %v1768 = vld [vmem:[%s14 + $0x28] sm:$0xff]
      %v1769 = vld [vmem:[%s14 + $0x30] sm:$0xff]
      %v1770 = vld [vmem:[%s14 + $0x38] sm:$0xff]
      %v1771 = vld [vmem:[%s15] sm:$0x1]
      %v1773 = vlaneseq
      %v1774 = vshrl.u32 %v1773, 7
      %v1775 = vsub.s32 0, %v1774
      %v1776 = vrot.slane %v1771, %v1775
      %v1779 = vsel %vm1554, %v1755, 0
      %v1782 = vsel %vm1554, %v1756, 0
      %v1785 = vsel %vm1554, %v1757, 0
      %v1788 = vsel %vm1554, %v1758, 0
      %v1791 = vsel %vm1554, %v1759, 0
      %v1794 = vsel %vm1554, %v1760, 0
      %v1797 = vsel %vm1554, %v1761, 0
      %v1800 = vsel %vm1554, %v1762, 0
      %1802 = vmatprep.subr.mxu0 0.0
      %1803 = vmatpush1.msra.mxu0 %v1763
      %1804 = vmatprep.subr.mxu0 0.0
      %1805 = vmatpush1.msra.mxu0 %v1764
      %1806 = vmatprep.subr.mxu0 0.0
      %1807 = vmatpush1.msra.mxu0 %v1765
      %1808 = vmatprep.subr.mxu0 0.0
      %1809 = vmatpush1.msra.mxu0 %v1766
      %1810 = vmatprep.subr.mxu0 0.0
      %1811 = vmatpush1.msra.mxu0 %v1767
      %1812 = vmatprep.subr.mxu0 0.0
      %1813 = vmatpush1.msra.mxu0 %v1768
      %1814 = vmatprep.subr.mxu0 0.0
      %1815 = vmatpush1.msra.mxu0 %v1769
      %1816 = vmatprep.subr.mxu0 0.0
      %1817 = vmatpush1.msra.mxu0 %v1770
      %1818 = vmatprep.subr.mxu0 0.0
      %1819 = vmatpush1.msra.mxu0 0.0
      %1820 = vmatprep.subr.mxu0 0.0
      %1821 = vmatpush1.msra.mxu0 0.0
      %1822 = vmatprep.subr.mxu0 0.0
      %1823 = vmatpush1.msra.mxu0 0.0
      %1824 = vmatprep.subr.mxu0 0.0
      %1825 = vmatpush1.msra.mxu0 0.0
      %1826 = vmatprep.subr.mxu0 0.0
      %1827 = vmatpush1.msra.mxu0 0.0
      %1828 = vmatprep.subr.mxu0 0.0
      %1829 = vmatpush1.msra.mxu0 0.0
      %1830 = vmatprep.subr.mxu0 0.0
      %1831 = vmatpush1.msra.mxu0 0.0
      %1832 = vmatprep.subr.mxu0 0.0
      %1833 = vmatpush1.msra.mxu0 0.0
      %1834 = vmatprep.subr.mxu0 0.0
      %1835 = vmatpush1.msra.mxu0 0.0
      %1836 = vmatprep.subr.mxu0 0.0
      %1837 = vmatpush1.msra.mxu0 0.0
      %1838 = vmatprep.subr.mxu0 0.0
      %1839 = vmatpush1.msra.mxu0 0.0
      %1840 = vmatprep.subr.mxu0 0.0
      %1841 = vmatpush1.msra.mxu0 0.0
      %1842 = vmatprep.subr.mxu0 0.0
      %1843 = vmatpush1.msra.mxu0 0.0
      %1844 = vmatprep.subr.mxu0 0.0
      %1845 = vmatpush1.msra.mxu0 0.0
      %1846 = vmatprep.subr.mxu0 0.0
      %1847 = vmatpush1.msra.mxu0 0.0
      %1848 = vmatprep.subr.mxu0 0.0
      %1849 = vmatpush1.msra.mxu0 0.0
      %1850 = vmatprep.subr.mxu0 0.0
      %1851 = vmatpush1.msra.mxu0 0.0
      %1852 = vmatprep.subr.mxu0 0.0
      %1853 = vmatpush1.msra.mxu0 0.0
      %1854 = vmatprep.subr.mxu0 0.0
      %1855 = vmatpush1.msra.mxu0 0.0
      %1856 = vmatprep.subr.mxu0 0.0
      %1857 = vmatpush1.msra.mxu0 0.0
      %1858 = vmatprep.subr.mxu0 0.0
      %1859 = vmatpush1.msra.mxu0 0.0
      %1860 = vmatprep.subr.mxu0 0.0
      %1861 = vmatpush1.msra.mxu0 0.0
      %1862 = vmatprep.subr.mxu0 0.0
      %1863 = vmatpush1.msra.mxu0 0.0
      %1864 = vmatprep.subr.mxu0 0.0
      %1865 = vmatpush1.msra.mxu0 0.0
      %1866 = vmatprep.mubr.f32.mxu0 0.0
      %1867 = vmatmul.mubr.f32.gmra.mrb[0].mxu0 %v1779
      %v1868 = vpop.f32.mrb[0].mxu0
      %v1869 = vadd.f32 %v1776, %v1868
      %v1870 = vpop.f32.mrb[0].mxu0
      %1871 = vmatprep.mubr.f32.mxu0 0.0
      %1872 = vmatmul.mubr.f32.gmra.mrb[0].mxu0 %v1782
      %v1873 = vpop.f32.mrb[0].mxu0
      %v1874 = vadd.f32 %v1776, %v1873
      %v1875 = vpop.f32.mrb[0].mxu0
      %1876 = vmatprep.mubr.f32.mxu0 0.0
      %1877 = vmatmul.mubr.f32.gmra.mrb[0].mxu0 %v1785
      %v1878 = vpop.f32.mrb[0].mxu0
      %v1879 = vadd.f32 %v1776, %v1878
      %v1880 = vpop.f32.mrb[0].mxu0
      %1881 = vmatprep.mubr.f32.mxu0 0.0
      %1882 = vmatmul.mubr.f32.gmra.mrb[0].mxu0 %v1788
      %v1883 = vpop.f32.mrb[0].mxu0
      %v1884 = vadd.f32 %v1776, %v1883
      %v1885 = vpop.f32.mrb[0].mxu0
      %1886 = vmatprep.mubr.f32.mxu0 0.0
      %1887 = vmatmul.mubr.f32.gmra.mrb[0].mxu0 %v1791
      %v1888 = vpop.f32.mrb[0].mxu0
      %v1889 = vadd.f32 %v1776, %v1888
      %v1890 = vpop.f32.mrb[0].mxu0
      %1891 = vmatprep.mubr.f32.mxu0 0.0
      %1892 = vmatmul.mubr.f32.gmra.mrb[0].mxu0 %v1794
      %v1893 = vpop.f32.mrb[0].mxu0
      %v1894 = vadd.f32 %v1776, %v1893
      %v1895 = vpop.f32.mrb[0].mxu0
      %1896 = vmatprep.mubr.f32.mxu0 0.0
      %1897 = vmatmul.mubr.f32.gmra.mrb[0].mxu0 %v1797
      %v1898 = vpop.f32.mrb[0].mxu0
      %v1899 = vadd.f32 %v1776, %v1898
      %v1900 = vpop.f32.mrb[0].mxu0
      %1901 = vmatprep.mubr.f32.mxu0 0.0
      %1902 = vmatmul.mubr.f32.gmra.mrb[0].mxu0 %v1800
      %v1903 = vpop.f32.mrb[0].mxu0
      %v1904 = vadd.f32 %v1776, %v1903
      %v1905 = vpop.f32.mrb[0].mxu0
      %1906 = vdwg.mxu0
      %v1907 = vld [vmem:[%s16] sm:$0xff]
      %v1908 = vld [vmem:[%s16 + $0x8] sm:$0xff]
      %v1909 = vld [vmem:[%s16 + $0x10] sm:$0xff]
      %v1910 = vld [vmem:[%s16 + $0x18] sm:$0xff]
      %v1911 = vld [vmem:[%s17] sm:$0x1]
      %v1913 = vlaneseq
      %v1914 = vshrl.u32 %v1913, 7
      %v1915 = vsub.s32 0, %v1914
      %v1916 = vrot.slane %v1911, %v1915
      %1918 = vmatprep.subr.mxu0 0.0
      %1919 = vmatpush1.msra.mxu0 %v1907
      %1920 = vmatprep.subr.mxu0 0.0
      %1921 = vmatpush1.msra.mxu0 %v1908
      %1922 = vmatprep.subr.mxu0 0.0
      %1923 = vmatpush1.msra.mxu0 %v1909
      %1924 = vmatprep.subr.mxu0 0.0
      %1925 = vmatpush1.msra.mxu0 %v1910
      %1926 = vmatprep.subr.mxu0 0.0
      %1927 = vmatpush1.msra.mxu0 0.0
      %1928 = vmatprep.subr.mxu0 0.0
      %1929 = vmatpush1.msra.mxu0 0.0
      %1930 = vmatprep.subr.mxu0 0.0
      %1931 = vmatpush1.msra.mxu0 0.0
      %1932 = vmatprep.subr.mxu0 0.0
      %1933 = vmatpush1.msra.mxu0 0.0
      %1934 = vmatprep.subr.mxu0 0.0
      %1935 = vmatpush1.msra.mxu0 0.0
      %1936 = vmatprep.subr.mxu0 0.0
      %1937 = vmatpush1.msra.mxu0 0.0
      %1938 = vmatprep.subr.mxu0 0.0
      %1939 = vmatpush1.msra.mxu0 0.0
      %1940 = vmatprep.subr.mxu0 0.0
      %1941 = vmatpush1.msra.mxu0 0.0
      %1942 = vmatprep.subr.mxu0 0.0
      %1943 = vmatpush1.msra.mxu0 0.0
      %1944 = vmatprep.subr.mxu0 0.0
      %1945 = vmatpush1.msra.mxu0 0.0
      %1946 = vmatprep.subr.mxu0 0.0
      %1947 = vmatpush1.msra.mxu0 0.0
      %1948 = vmatprep.subr.mxu0 0.0
      %1949 = vmatpush1.msra.mxu0 0.0
      %1950 = vmatprep.subr.mxu0 0.0
      %1951 = vmatpush1.msra.mxu0 0.0
      %1952 = vmatprep.subr.mxu0 0.0
      %1953 = vmatpush1.msra.mxu0 0.0
      %1954 = vmatprep.subr.mxu0 0.0
      %1955 = vmatpush1.msra.mxu0 0.0
      %1956 = vmatprep.subr.mxu0 0.0
      %1957 = vmatpush1.msra.mxu0 0.0
      %1958 = vmatprep.subr.mxu0 0.0
      %1959 = vmatpush1.msra.mxu0 0.0
      %1960 = vmatprep.subr.mxu0 0.0
      %1961 = vmatpush1.msra.mxu0 0.0
      %1962 = vmatprep.subr.mxu0 0.0
      %1963 = vmatpush1.msra.mxu0 0.0
      %1964 = vmatprep.subr.mxu0 0.0
      %1965 = vmatpush1.msra.mxu0 0.0
      %1966 = vmatprep.subr.mxu0 0.0
      %1967 = vmatpush1.msra.mxu0 0.0
      %1968 = vmatprep.subr.mxu0 0.0
      %1969 = vmatpush1.msra.mxu0 0.0
      %1970 = vmatprep.subr.mxu0 0.0
      %1971 = vmatpush1.msra.mxu0 0.0
      %1972 = vmatprep.subr.mxu0 0.0
      %1973 = vmatpush1.msra.mxu0 0.0
      %1974 = vmatprep.subr.mxu0 0.0
      %1975 = vmatpush1.msra.mxu0 0.0
      %1976 = vmatprep.subr.mxu0 0.0
      %1977 = vmatpush1.msra.mxu0 0.0
      %1978 = vmatprep.subr.mxu0 0.0
      %1979 = vmatpush1.msra.mxu0 0.0
      %1980 = vmatprep.subr.mxu0 0.0
      %1981 = vmatpush1.msra.mxu0 0.0
      %1982 = vmatprep.mubr.f32.mxu0 0.0
      %1983 = vmatmul.mubr.f32.gmra.mrb[0].mxu0 %v1153
      %v1984 = vpop.f32.mrb[0].mxu0
      %v1985 = vadd.f32 %v1916, %v1984
      %v1986 = vpop.f32.mrb[0].mxu0
      %1987 = vdwg.mxu0
      %v1988 = vld [vmem:[%s18] sm:$0xff]
      %v1989 = vld [vmem:[%s18 + $0x8] sm:$0xff]
      %v1990 = vld [vmem:[%s18 + $0x10] sm:$0xff]
      %v1991 = vld [vmem:[%s18 + $0x18] sm:$0xff]
      %v1992 = vld [vmem:[%s19] sm:$0x1]
      %v1994 = vlaneseq
      %v1995 = vshrl.u32 %v1994, 7
      %v1996 = vsub.s32 0, %v1995
      %v1997 = vrot.slane %v1992, %v1996
      %1999 = vmatprep.subr.mxu0 0.0
      %2000 = vmatpush1.msra.mxu0 %v1988
      %2001 = vmatprep.subr.mxu0 0.0
      %2002 = vmatpush1.msra.mxu0 %v1989
      %2003 = vmatprep.subr.mxu0 0.0
      %2004 = vmatpush1.msra.mxu0 %v1990
      %2005 = vmatprep.subr.mxu0 0.0
      %2006 = vmatpush1.msra.mxu0 %v1991
      %2007 = vmatprep.subr.mxu0 0.0
      %2008 = vmatpush1.msra.mxu0 0.0
      %2009 = vmatprep.subr.mxu0 0.0
      %2010 = vmatpush1.msra.mxu0 0.0
      %2011 = vmatprep.subr.mxu0 0.0
      %2012 = vmatpush1.msra.mxu0 0.0
      %2013 = vmatprep.subr.mxu0 0.0
      %2014 = vmatpush1.msra.mxu0 0.0
      %2015 = vmatprep.subr.mxu0 0.0
      %2016 = vmatpush1.msra.mxu0 0.0
      %2017 = vmatprep.subr.mxu0 0.0
      %2018 = vmatpush1.msra.mxu0 0.0
      %2019 = vmatprep.subr.mxu0 0.0
      %2020 = vmatpush1.msra.mxu0 0.0
      %2021 = vmatprep.subr.mxu0 0.0
      %2022 = vmatpush1.msra.mxu0 0.0
      %2023 = vmatprep.subr.mxu0 0.0
      %2024 = vmatpush1.msra.mxu0 0.0
      %2025 = vmatprep.subr.mxu0 0.0
      %2026 = vmatpush1.msra.mxu0 0.0
      %2027 = vmatprep.subr.mxu0 0.0
      %2028 = vmatpush1.msra.mxu0 0.0
      %2029 = vmatprep.subr.mxu0 0.0
      %2030 = vmatpush1.msra.mxu0 0.0
      %2031 = vmatprep.subr.mxu0 0.0
      %2032 = vmatpush1.msra.mxu0 0.0
      %2033 = vmatprep.subr.mxu0 0.0
      %2034 = vmatpush1.msra.mxu0 0.0
      %2035 = vmatprep.subr.mxu0 0.0
      %2036 = vmatpush1.msra.mxu0 0.0
      %2037 = vmatprep.subr.mxu0 0.0
      %2038 = vmatpush1.msra.mxu0 0.0
      %2039 = vmatprep.subr.mxu0 0.0
      %2040 = vmatpush1.msra.mxu0 0.0
      %2041 = vmatprep.subr.mxu0 0.0
      %2042 = vmatpush1.msra.mxu0 0.0
      %2043 = vmatprep.subr.mxu0 0.0
      %2044 = vmatpush1.msra.mxu0 0.0
      %2045 = vmatprep.subr.mxu0 0.0
      %2046 = vmatpush1.msra.mxu0 0.0
      %2047 = vmatprep.subr.mxu0 0.0
      %2048 = vmatpush1.msra.mxu0 0.0
      %2049 = vmatprep.subr.mxu0 0.0
      %2050 = vmatpush1.msra.mxu0 0.0
      %2051 = vmatprep.subr.mxu0 0.0
      %2052 = vmatpush1.msra.mxu0 0.0
      %2053 = vmatprep.subr.mxu0 0.0
      %2054 = vmatpush1.msra.mxu0 0.0
      %2055 = vmatprep.subr.mxu0 0.0
      %2056 = vmatpush1.msra.mxu0 0.0
      %2057 = vmatprep.subr.mxu0 0.0
      %2058 = vmatpush1.msra.mxu0 0.0
      %2059 = vmatprep.subr.mxu0 0.0
      %2060 = vmatpush1.msra.mxu0 0.0
      %2061 = vmatprep.subr.mxu0 0.0
      %2062 = vmatpush1.msra.mxu0 0.0
      %2063 = vmatprep.mubr.f32.mxu0 0.0
      %2064 = vmatmul.mubr.f32.gmra.mrb[0].mxu0 %v1153
      %v2065 = vpop.f32.mrb[0].mxu0
      %v2066 = vadd.f32 %v1997, %v2065
      %v2067 = vpop.f32.mrb[0].mxu0
      %2068 = vdwg.mxu0
      %2069 = vmatprep.subr.mxu0 0.0
      %2070 = vmatpush1.msra.mxu0 %v1985
      %2071 = vmatprep.subr.mxu0 0.0
      %2072 = vmatpush1.msra.mxu0 0.0
      %2073 = vmatprep.subr.mxu0 0.0
      %2074 = vmatpush1.msra.mxu0 0.0
      %2075 = vmatprep.subr.mxu0 0.0
      %2076 = vmatpush1.msra.mxu0 0.0
      %2077 = vmatprep.subr.mxu0 0.0
      %2078 = vmatpush1.msra.mxu0 0.0
      %2079 = vmatprep.subr.mxu0 0.0
      %2080 = vmatpush1.msra.mxu0 0.0
      %2081 = vmatprep.subr.mxu0 0.0
      %2082 = vmatpush1.msra.mxu0 0.0
      %2083 = vmatprep.subr.mxu0 0.0
      %2084 = vmatpush1.msra.mxu0 0.0
      %2085 = vmatprep.subr.mxu0 0.0
      %2086 = vmatpush1.msra.mxu0 0.0
      %2087 = vmatprep.subr.mxu0 0.0
      %2088 = vmatpush1.msra.mxu0 0.0
      %2089 = vmatprep.subr.mxu0 0.0
      %2090 = vmatpush1.msra.mxu0 0.0
      %2091 = vmatprep.subr.mxu0 0.0
      %2092 = vmatpush1.msra.mxu0 0.0
      %2093 = vmatprep.subr.mxu0 0.0
      %2094 = vmatpush1.msra.mxu0 0.0
      %2095 = vmatprep.subr.mxu0 0.0
      %2096 = vmatpush1.msra.mxu0 0.0
      %2097 = vmatprep.subr.mxu0 0.0
      %2098 = vmatpush1.msra.mxu0 0.0
      %2099 = vmatprep.subr.mxu0 0.0
      %2100 = vmatpush1.msra.mxu0 0.0
      %2101 = vmatprep.subr.mxu0 0.0
      %2102 = vmatpush1.msra.mxu0 0.0
      %2103 = vmatprep.subr.mxu0 0.0
      %2104 = vmatpush1.msra.mxu0 0.0
      %2105 = vmatprep.subr.mxu0 0.0
      %2106 = vmatpush1.msra.mxu0 0.0
      %2107 = vmatprep.subr.mxu0 0.0
      %2108 = vmatpush1.msra.mxu0 0.0
      %2109 = vmatprep.subr.mxu0 0.0
      %2110 = vmatpush1.msra.mxu0 0.0
      %2111 = vmatprep.subr.mxu0 0.0
      %2112 = vmatpush1.msra.mxu0 0.0
      %2113 = vmatprep.subr.mxu0 0.0
      %2114 = vmatpush1.msra.mxu0 0.0
      %2115 = vmatprep.subr.mxu0 0.0
      %2116 = vmatpush1.msra.mxu0 0.0
      %2117 = vmatprep.subr.mxu0 0.0
      %2118 = vmatpush1.msra.mxu0 0.0
      %2119 = vmatprep.subr.mxu0 0.0
      %2120 = vmatpush1.msra.mxu0 0.0
      %2121 = vmatprep.subr.mxu0 0.0
      %2122 = vmatpush1.msra.mxu0 0.0
      %2123 = vmatprep.subr.mxu0 0.0
      %2124 = vmatpush1.msra.mxu0 0.0
      %2125 = vmatprep.subr.mxu0 0.0
      %2126 = vmatpush1.msra.mxu0 0.0
      %2127 = vmatprep.subr.mxu0 0.0
      %2128 = vmatpush1.msra.mxu0 0.0
      %2129 = vmatprep.subr.mxu0 0.0
      %2130 = vmatpush1.msra.mxu0 0.0
      %2131 = vmatprep.subr.mxu0 0.0
      %2132 = vmatpush1.msra.mxu0 0.0
      %2133 = vmatprep.mubr.f32.mxu0 0.0
      %2134 = vmatmul.mubr.f32.gmra.mrb[0].mxu0 %v1426
      %v2135 = vpop.f32.mrb[0].mxu0
      %v2136 = vadd.f32 0.0, %v2135
      %v2137 = vpop.f32.mrb[0].mxu0
      %2138 = vmatprep.mubr.f32.mxu0 0.0
      %2139 = vmatmul.mubr.f32.gmra.mrb[0].mxu0 %v1429
      %v2140 = vpop.f32.mrb[0].mxu0
      %v2141 = vadd.f32 0.0, %v2140
      %v2142 = vpop.f32.mrb[0].mxu0
      %2143 = vmatprep.mubr.f32.mxu0 0.0
      %2144 = vmatmul.mubr.f32.gmra.mrb[0].mxu0 %v1432
      %v2145 = vpop.f32.mrb[0].mxu0
      %v2146 = vadd.f32 0.0, %v2145
      %v2147 = vpop.f32.mrb[0].mxu0
      %2148 = vmatprep.mubr.f32.mxu0 0.0
      %2149 = vmatmul.mubr.f32.gmra.mrb[0].mxu0 %v1435
      %v2150 = vpop.f32.mrb[0].mxu0
      %v2151 = vadd.f32 0.0, %v2150
      %v2152 = vpop.f32.mrb[0].mxu0
      %2153 = vmatprep.mubr.f32.mxu0 0.0
      %2154 = vmatmul.mubr.f32.gmra.mrb[0].mxu0 %v1438
      %v2155 = vpop.f32.mrb[0].mxu0
      %v2156 = vadd.f32 0.0, %v2155
      %v2157 = vpop.f32.mrb[0].mxu0
      %2158 = vmatprep.mubr.f32.mxu0 0.0
      %2159 = vmatmul.mubr.f32.gmra.mrb[0].mxu0 %v1441
      %v2160 = vpop.f32.mrb[0].mxu0
      %v2161 = vadd.f32 0.0, %v2160
      %v2162 = vpop.f32.mrb[0].mxu0
      %2163 = vmatprep.mubr.f32.mxu0 0.0
      %2164 = vmatmul.mubr.f32.gmra.mrb[0].mxu0 %v1444
      %v2165 = vpop.f32.mrb[0].mxu0
      %v2166 = vadd.f32 0.0, %v2165
      %v2167 = vpop.f32.mrb[0].mxu0
      %2168 = vmatprep.mubr.f32.mxu0 0.0
      %2169 = vmatmul.mubr.f32.gmra.mrb[0].mxu0 %v1447
      %v2170 = vpop.f32.mrb[0].mxu0
      %v2171 = vadd.f32 0.0, %v2170
      %v2172 = vpop.f32.mrb[0].mxu0
      %2173 = vdwg.mxu0
      %2174 = vmatprep.subr.mxu0 0.0
      %2175 = vmatpush1.msra.mxu0 %v2066
      %2176 = vmatprep.subr.mxu0 0.0
      %2177 = vmatpush1.msra.mxu0 0.0
      %2178 = vmatprep.subr.mxu0 0.0
      %2179 = vmatpush1.msra.mxu0 0.0
      %2180 = vmatprep.subr.mxu0 0.0
      %2181 = vmatpush1.msra.mxu0 0.0
      %2182 = vmatprep.subr.mxu0 0.0
      %2183 = vmatpush1.msra.mxu0 0.0
      %2184 = vmatprep.subr.mxu0 0.0
      %2185 = vmatpush1.msra.mxu0 0.0
      %2186 = vmatprep.subr.mxu0 0.0
      %2187 = vmatpush1.msra.mxu0 0.0
      %2188 = vmatprep.subr.mxu0 0.0
      %2189 = vmatpush1.msra.mxu0 0.0
      %2190 = vmatprep.subr.mxu0 0.0
      %2191 = vmatpush1.msra.mxu0 0.0
      %2192 = vmatprep.subr.mxu0 0.0
      %2193 = vmatpush1.msra.mxu0 0.0
      %2194 = vmatprep.subr.mxu0 0.0
      %2195 = vmatpush1.msra.mxu0 0.0
      %2196 = vmatprep.subr.mxu0 0.0
      %2197 = vmatpush1.msra.mxu0 0.0
      %2198 = vmatprep.subr.mxu0 0.0
      %2199 = vmatpush1.msra.mxu0 0.0
      %2200 = vmatprep.subr.mxu0 0.0
      %2201 = vmatpush1.msra.mxu0 0.0
      %2202 = vmatprep.subr.mxu0 0.0
      %2203 = vmatpush1.msra.mxu0 0.0
      %2204 = vmatprep.subr.mxu0 0.0
      %2205 = vmatpush1.msra.mxu0 0.0
      %2206 = vmatprep.subr.mxu0 0.0
      %2207 = vmatpush1.msra.mxu0 0.0
      %2208 = vmatprep.subr.mxu0 0.0
      %2209 = vmatpush1.msra.mxu0 0.0
      %2210 = vmatprep.subr.mxu0 0.0
      %2211 = vmatpush1.msra.mxu0 0.0
      %2212 = vmatprep.subr.mxu0 0.0
      %2213 = vmatpush1.msra.mxu0 0.0
      %2214 = vmatprep.subr.mxu0 0.0
      %2215 = vmatpush1.msra.mxu0 0.0
      %2216 = vmatprep.subr.mxu0 0.0
      %2217 = vmatpush1.msra.mxu0 0.0
      %2218 = vmatprep.subr.mxu0 0.0
      %2219 = vmatpush1.msra.mxu0 0.0
      %2220 = vmatprep.subr.mxu0 0.0
      %2221 = vmatpush1.msra.mxu0 0.0
      %2222 = vmatprep.subr.mxu0 0.0
      %2223 = vmatpush1.msra.mxu0 0.0
      %2224 = vmatprep.subr.mxu0 0.0
      %2225 = vmatpush1.msra.mxu0 0.0
      %2226 = vmatprep.subr.mxu0 0.0
      %2227 = vmatpush1.msra.mxu0 0.0
      %2228 = vmatprep.subr.mxu0 0.0
      %2229 = vmatpush1.msra.mxu0 0.0
      %2230 = vmatprep.subr.mxu0 0.0
      %2231 = vmatpush1.msra.mxu0 0.0
      %2232 = vmatprep.subr.mxu0 0.0
      %2233 = vmatpush1.msra.mxu0 0.0
      %2234 = vmatprep.subr.mxu0 0.0
      %2235 = vmatpush1.msra.mxu0 0.0
      %2236 = vmatprep.subr.mxu0 0.0
      %2237 = vmatpush1.msra.mxu0 0.0
      %2238 = vmatprep.mubr.f32.mxu0 0.0
      %2239 = vmatmul.mubr.f32.gmra.mrb[0].mxu0 %v1297
      %v2240 = vpop.f32.mrb[0].mxu0
      %v2241 = vadd.f32 0.0, %v2240
      %v2242 = vpop.f32.mrb[0].mxu0
      %2243 = vmatprep.mubr.f32.mxu0 0.0
      %2244 = vmatmul.mubr.f32.gmra.mrb[0].mxu0 %v1300
      %v2245 = vpop.f32.mrb[0].mxu0
      %v2246 = vadd.f32 0.0, %v2245
      %v2247 = vpop.f32.mrb[0].mxu0
      %2248 = vmatprep.mubr.f32.mxu0 0.0
      %2249 = vmatmul.mubr.f32.gmra.mrb[0].mxu0 %v1303
      %v2250 = vpop.f32.mrb[0].mxu0
      %v2251 = vadd.f32 0.0, %v2250
      %v2252 = vpop.f32.mrb[0].mxu0
      %2253 = vmatprep.mubr.f32.mxu0 0.0
      %2254 = vmatmul.mubr.f32.gmra.mrb[0].mxu0 %v1306
      %v2255 = vpop.f32.mrb[0].mxu0
      %v2256 = vadd.f32 0.0, %v2255
      %v2257 = vpop.f32.mrb[0].mxu0
      %2258 = vmatprep.mubr.f32.mxu0 0.0
      %2259 = vmatmul.mubr.f32.gmra.mrb[0].mxu0 %v1309
      %v2260 = vpop.f32.mrb[0].mxu0
      %v2261 = vadd.f32 0.0, %v2260
      %v2262 = vpop.f32.mrb[0].mxu0
      %2263 = vmatprep.mubr.f32.mxu0 0.0
      %2264 = vmatmul.mubr.f32.gmra.mrb[0].mxu0 %v1312
      %v2265 = vpop.f32.mrb[0].mxu0
      %v2266 = vadd.f32 0.0, %v2265
      %v2267 = vpop.f32.mrb[0].mxu0
      %2268 = vmatprep.mubr.f32.mxu0 0.0
      %2269 = vmatmul.mubr.f32.gmra.mrb[0].mxu0 %v1315
      %v2270 = vpop.f32.mrb[0].mxu0
      %v2271 = vadd.f32 0.0, %v2270
      %v2272 = vpop.f32.mrb[0].mxu0
      %2273 = vmatprep.mubr.f32.mxu0 0.0
      %2274 = vmatmul.mubr.f32.gmra.mrb[0].mxu0 %v1318
      %v2275 = vpop.f32.mrb[0].mxu0
      %v2276 = vadd.f32 0.0, %v2275
      %v2277 = vpop.f32.mrb[0].mxu0
      %2278 = vdwg.mxu0
      %v2279 = vmul.f32 %v2136, %v2241
      %v2280 = vmul.f32 %v2141, %v2246
      %v2281 = vmul.f32 %v2146, %v2251
      %v2282 = vmul.f32 %v2151, %v2256
      %v2283 = vmul.f32 %v2156, %v2261
      %v2284 = vmul.f32 %v2161, %v2266
      %v2285 = vmul.f32 %v2166, %v2271
      %v2286 = vmul.f32 %v2171, %v2276
      %v2287 = vld [vmem:[%s5] sm:$0xff]
      %v2288 = vld [vmem:[%s5 + $0x8] sm:$0xff]
      %v2289 = vld [vmem:[%s5 + $0x10] sm:$0xff]
      %v2290 = vld [vmem:[%s5 + $0x18] sm:$0xff]
      %v2291 = vld [vmem:[%s5 + $0x20] sm:$0xff]
      %v2292 = vld [vmem:[%s5 + $0x28] sm:$0xff]
      %v2293 = vld [vmem:[%s5 + $0x30] sm:$0xff]
      %v2294 = vld [vmem:[%s5 + $0x38] sm:$0xff]
      %v2296 = vsel %vm1554, %v2279, 0
      %v2299 = vsel %vm1554, %v2280, 0
      %v2302 = vsel %vm1554, %v2281, 0
      %v2305 = vsel %vm1554, %v2282, 0
      %v2308 = vsel %vm1554, %v2283, 0
      %v2311 = vsel %vm1554, %v2284, 0
      %v2314 = vsel %vm1554, %v2285, 0
      %v2317 = vsel %vm1554, %v2286, 0
      %2319 = vmatprep.subr.mxu0 0.0
      %2320 = vmatpush1.msra.mxu0 %v2287
      %2321 = vmatprep.subr.mxu0 0.0
      %2322 = vmatpush1.msra.mxu0 %v2288
      %2323 = vmatprep.subr.mxu0 0.0
      %2324 = vmatpush1.msra.mxu0 %v2289
      %2325 = vmatprep.subr.mxu0 0.0
      %2326 = vmatpush1.msra.mxu0 %v2290
      %2327 = vmatprep.subr.mxu0 0.0
      %2328 = vmatpush1.msra.mxu0 %v2291
      %2329 = vmatprep.subr.mxu0 0.0
      %2330 = vmatpush1.msra.mxu0 %v2292
      %2331 = vmatprep.subr.mxu0 0.0
      %2332 = vmatpush1.msra.mxu0 %v2293
      %2333 = vmatprep.subr.mxu0 0.0
      %2334 = vmatpush1.msra.mxu0 %v2294
      %2335 = vmatprep.subr.mxu0 0.0
      %2336 = vmatpush1.msra.mxu0 0.0
      %2337 = vmatprep.subr.mxu0 0.0
      %2338 = vmatpush1.msra.mxu0 0.0
      %2339 = vmatprep.subr.mxu0 0.0
      %2340 = vmatpush1.msra.mxu0 0.0
      %2341 = vmatprep.subr.mxu0 0.0
      %2342 = vmatpush1.msra.mxu0 0.0
      %2343 = vmatprep.subr.mxu0 0.0
      %2344 = vmatpush1.msra.mxu0 0.0
      %2345 = vmatprep.subr.mxu0 0.0
      %2346 = vmatpush1.msra.mxu0 0.0
      %2347 = vmatprep.subr.mxu0 0.0
      %2348 = vmatpush1.msra.mxu0 0.0
      %2349 = vmatprep.subr.mxu0 0.0
      %2350 = vmatpush1.msra.mxu0 0.0
      %2351 = vmatprep.subr.mxu0 0.0
      %2352 = vmatpush1.msra.mxu0 0.0
      %2353 = vmatprep.subr.mxu0 0.0
      %2354 = vmatpush1.msra.mxu0 0.0
      %2355 = vmatprep.subr.mxu0 0.0
      %2356 = vmatpush1.msra.mxu0 0.0
      %2357 = vmatprep.subr.mxu0 0.0
      %2358 = vmatpush1.msra.mxu0 0.0
      %2359 = vmatprep.subr.mxu0 0.0
      %2360 = vmatpush1.msra.mxu0 0.0
      %2361 = vmatprep.subr.mxu0 0.0
      %2362 = vmatpush1.msra.mxu0 0.0
      %2363 = vmatprep.subr.mxu0 0.0
      %2364 = vmatpush1.msra.mxu0 0.0
      %2365 = vmatprep.subr.mxu0 0.0
      %2366 = vmatpush1.msra.mxu0 0.0
      %2367 = vmatprep.subr.mxu0 0.0
      %2368 = vmatpush1.msra.mxu0 0.0
      %2369 = vmatprep.subr.mxu0 0.0
      %2370 = vmatpush1.msra.mxu0 0.0
      %2371 = vmatprep.subr.mxu0 0.0
      %2372 = vmatpush1.msra.mxu0 0.0
      %2373 = vmatprep.subr.mxu0 0.0
      %2374 = vmatpush1.msra.mxu0 0.0
      %2375 = vmatprep.subr.mxu0 0.0
      %2376 = vmatpush1.msra.mxu0 0.0
      %2377 = vmatprep.subr.mxu0 0.0
      %2378 = vmatpush1.msra.mxu0 0.0
      %2379 = vmatprep.subr.mxu0 0.0
      %2380 = vmatpush1.msra.mxu0 0.0
      %2381 = vmatprep.subr.mxu0 0.0
      %2382 = vmatpush1.msra.mxu0 0.0
      %2383 = vmatprep.mubr.f32.mxu0 0.0
      %2384 = vmatmul.mubr.f32.gmra.mrb[0].mxu0 %v2296
      %v2385 = vpop.f32.mrb[0].mxu0
      %v2386 = vadd.f32 0.0, %v2385
      %v2387 = vpop.f32.mrb[0].mxu0
      %2388 = vmatprep.mubr.f32.mxu0 0.0
      %2389 = vmatmul.mubr.f32.gmra.mrb[0].mxu0 %v2299
      %v2390 = vpop.f32.mrb[0].mxu0
      %v2391 = vadd.f32 0.0, %v2390
      %v2392 = vpop.f32.mrb[0].mxu0
      %2393 = vmatprep.mubr.f32.mxu0 0.0
      %2394 = vmatmul.mubr.f32.gmra.mrb[0].mxu0 %v2302
      %v2395 = vpop.f32.mrb[0].mxu0
      %v2396 = vadd.f32 0.0, %v2395
      %v2397 = vpop.f32.mrb[0].mxu0
      %2398 = vmatprep.mubr.f32.mxu0 0.0
      %2399 = vmatmul.mubr.f32.gmra.mrb[0].mxu0 %v2305
      %v2400 = vpop.f32.mrb[0].mxu0
      %v2401 = vadd.f32 0.0, %v2400
      %v2402 = vpop.f32.mrb[0].mxu0
      %2403 = vmatprep.mubr.f32.mxu0 0.0
      %2404 = vmatmul.mubr.f32.gmra.mrb[0].mxu0 %v2308
      %v2405 = vpop.f32.mrb[0].mxu0
      %v2406 = vadd.f32 0.0, %v2405
      %v2407 = vpop.f32.mrb[0].mxu0
      %2408 = vmatprep.mubr.f32.mxu0 0.0
      %2409 = vmatmul.mubr.f32.gmra.mrb[0].mxu0 %v2311
      %v2410 = vpop.f32.mrb[0].mxu0
      %v2411 = vadd.f32 0.0, %v2410
      %v2412 = vpop.f32.mrb[0].mxu0
      %2413 = vmatprep.mubr.f32.mxu0 0.0
      %2414 = vmatmul.mubr.f32.gmra.mrb[0].mxu0 %v2314
      %v2415 = vpop.f32.mrb[0].mxu0
      %v2416 = vadd.f32 0.0, %v2415
      %v2417 = vpop.f32.mrb[0].mxu0
      %2418 = vmatprep.mubr.f32.mxu0 0.0
      %2419 = vmatmul.mubr.f32.gmra.mrb[0].mxu0 %v2317
      %v2420 = vpop.f32.mrb[0].mxu0
      %v2421 = vadd.f32 0.0, %v2420
      %v2422 = vpop.f32.mrb[0].mxu0
      %2423 = vdwg.mxu0
      %v2424 = vmul.f32 %v2386, 0.20412415
      %v2425 = vmul.f32 %v2391, 0.20412415
      %v2426 = vmul.f32 %v2396, 0.20412415
      %v2427 = vmul.f32 %v2401, 0.20412415
      %v2428 = vmul.f32 %v2406, 0.20412415
      %v2429 = vmul.f32 %v2411, 0.20412415
      %v2430 = vmul.f32 %v2416, 0.20412415
      %v2431 = vmul.f32 %v2421, 0.20412415
      %v2432 = vxor.u32 %v2424, 2147483648
      %v2433 = vxor.u32 %v2425, 2147483648
      %v2434 = vxor.u32 %v2426, 2147483648
      %v2435 = vxor.u32 %v2427, 2147483648
      %v2436 = vxor.u32 %v2428, 2147483648
      %v2437 = vxor.u32 %v2429, 2147483648
      %v2438 = vxor.u32 %v2430, 2147483648
      %v2439 = vxor.u32 %v2431, 2147483648
      %v2440 = vmul.f32 %v2432, 1.442695
      %v2441 = vpow.pop %v2440
      %v2442 = vmul.f32 %v2433, 1.442695
      %v2443 = vpow.pop %v2442
      %v2444 = vmul.f32 %v2434, 1.442695
      %v2445 = vpow.pop %v2444
      %v2446 = vmul.f32 %v2435, 1.442695
      %v2447 = vpow.pop %v2446
      %v2448 = vmul.f32 %v2436, 1.442695
      %v2449 = vpow.pop %v2448
      %v2450 = vmul.f32 %v2437, 1.442695
      %v2451 = vpow.pop %v2450
      %v2452 = vmul.f32 %v2438, 1.442695
      %v2453 = vpow.pop %v2452
      %v2454 = vmul.f32 %v2439, 1.442695
      %v2455 = vpow.pop %v2454
      %v2456 = vadd.f32 %v2441, 1.0
      %v2457 = vadd.f32 %v2443, 1.0
      %v2458 = vadd.f32 %v2445, 1.0
      %v2459 = vadd.f32 %v2447, 1.0
      %v2460 = vadd.f32 %v2449, 1.0
      %v2461 = vadd.f32 %v2451, 1.0
      %v2462 = vadd.f32 %v2453, 1.0
      %v2463 = vadd.f32 %v2455, 1.0
      %v2464 = vrcp.pop %v2456
      %v2465 = vmul.f32 1.0, %v2464
      %v2466 = vrcp.pop %v2457
      %v2467 = vmul.f32 1.0, %v2466
      %v2468 = vrcp.pop %v2458
      %v2469 = vmul.f32 1.0, %v2468
      %v2470 = vrcp.pop %v2459
      %v2471 = vmul.f32 1.0, %v2470
      %v2472 = vrcp.pop %v2460
      %v2473 = vmul.f32 1.0, %v2472
      %v2474 = vrcp.pop %v2461
      %v2475 = vmul.f32 1.0, %v2474
      %v2476 = vrcp.pop %v2462
      %v2477 = vmul.f32 1.0, %v2476
      %v2478 = vrcp.pop %v2463
      %v2479 = vmul.f32 1.0, %v2478
      %v2480 = vld [vmem:[%s803] sm:$0xff]
      %v2481 = vld [vmem:[%s803 + $0x8] sm:$0xff]
      %v2482 = vld [vmem:[%s803 + $0x10] sm:$0xff]
      %v2483 = vld [vmem:[%s803 + $0x18] sm:$0xff]
      %v2484 = vld [vmem:[%s803 + $0x20] sm:$0xff]
      %v2485 = vld [vmem:[%s803 + $0x28] sm:$0xff]
      %v2486 = vld [vmem:[%s803 + $0x30] sm:$0xff]
      %v2487 = vld [vmem:[%s803 + $0x38] sm:$0xff]
      %2489 = vset.pattern.permute.xlu0 0
      %2490 = vperm.xlu0 %2489, %v2480
      %v2491 = vpop.permute.xlu0 %2490
      %2494 = vset.pattern.permute.xlu0 0
      %2495 = vperm.xlu0 %2494, %v2481
      %v2496 = vpop.permute.xlu0 %2495
      %2499 = vset.pattern.permute.xlu0 0
      %2500 = vperm.xlu0 %2499, %v2482
      %v2501 = vpop.permute.xlu0 %2500
      %2504 = vset.pattern.permute.xlu0 0
      %2505 = vperm.xlu0 %2504, %v2483
      %v2506 = vpop.permute.xlu0 %2505
      %2509 = vset.pattern.permute.xlu0 0
      %2510 = vperm.xlu0 %2509, %v2484
      %v2511 = vpop.permute.xlu0 %2510
      %2514 = vset.pattern.permute.xlu0 0
      %2515 = vperm.xlu0 %2514, %v2485
      %v2516 = vpop.permute.xlu0 %2515
      %2519 = vset.pattern.permute.xlu0 0
      %2520 = vperm.xlu0 %2519, %v2486
      %v2521 = vpop.permute.xlu0 %2520
      %2524 = vset.pattern.permute.xlu0 0
      %2525 = vperm.xlu0 %2524, %v2487
      %v2526 = vpop.permute.xlu0 %2525
      %v2528 = vmul.f32 %v2465, %v2491
      %v2529 = vmul.f32 %v2467, %v2496
      %v2530 = vmul.f32 %v2469, %v2501
      %v2531 = vmul.f32 %v2471, %v2506
      %v2532 = vmul.f32 %v2473, %v2511
      %v2533 = vmul.f32 %v2475, %v2516
      %v2534 = vmul.f32 %v2477, %v2521
      %v2535 = vmul.f32 %v2479, %v2526
      %v2536 = vld [vmem:[%s7] sm:$0xff]
      %v2538 = vsel %vm1554, %v2536, 0
      %2540 = vmatprep.subr.mxu0 0.0
      %2541 = vmatpush1.msra.mxu0 %v2528
      %2542 = vmatprep.subr.mxu0 0.0
      %2543 = vmatpush1.msra.mxu0 %v2529
      %2544 = vmatprep.subr.mxu0 0.0
      %2545 = vmatpush1.msra.mxu0 %v2530
      %2546 = vmatprep.subr.mxu0 0.0
      %2547 = vmatpush1.msra.mxu0 %v2531
      %2548 = vmatprep.subr.mxu0 0.0
      %2549 = vmatpush1.msra.mxu0 %v2532
      %2550 = vmatprep.subr.mxu0 0.0
      %2551 = vmatpush1.msra.mxu0 %v2533
      %2552 = vmatprep.subr.mxu0 0.0
      %2553 = vmatpush1.msra.mxu0 %v2534
      %2554 = vmatprep.subr.mxu0 0.0
      %2555 = vmatpush1.msra.mxu0 %v2535
      %2556 = vmatprep.subr.mxu0 0.0
      %2557 = vmatpush1.msra.mxu0 0.0
      %2558 = vmatprep.subr.mxu0 0.0
      %2559 = vmatpush1.msra.mxu0 0.0
      %2560 = vmatprep.subr.mxu0 0.0
      %2561 = vmatpush1.msra.mxu0 0.0
      %2562 = vmatprep.subr.mxu0 0.0
      %2563 = vmatpush1.msra.mxu0 0.0
      %2564 = vmatprep.subr.mxu0 0.0
      %2565 = vmatpush1.msra.mxu0 0.0
      %2566 = vmatprep.subr.mxu0 0.0
      %2567 = vmatpush1.msra.mxu0 0.0
      %2568 = vmatprep.subr.mxu0 0.0
      %2569 = vmatpush1.msra.mxu0 0.0
      %2570 = vmatprep.subr.mxu0 0.0
      %2571 = vmatpush1.msra.mxu0 0.0
      %2572 = vmatprep.subr.mxu0 0.0
      %2573 = vmatpush1.msra.mxu0 0.0
      %2574 = vmatprep.subr.mxu0 0.0
      %2575 = vmatpush1.msra.mxu0 0.0
      %2576 = vmatprep.subr.mxu0 0.0
      %2577 = vmatpush1.msra.mxu0 0.0
      %2578 = vmatprep.subr.mxu0 0.0
      %2579 = vmatpush1.msra.mxu0 0.0
      %2580 = vmatprep.subr.mxu0 0.0
      %2581 = vmatpush1.msra.mxu0 0.0
      %2582 = vmatprep.subr.mxu0 0.0
      %2583 = vmatpush1.msra.mxu0 0.0
      %2584 = vmatprep.subr.mxu0 0.0
      %2585 = vmatpush1.msra.mxu0 0.0
      %2586 = vmatprep.subr.mxu0 0.0
      %2587 = vmatpush1.msra.mxu0 0.0
      %2588 = vmatprep.subr.mxu0 0.0
      %2589 = vmatpush1.msra.mxu0 0.0
      %2590 = vmatprep.subr.mxu0 0.0
      %2591 = vmatpush1.msra.mxu0 0.0
      %2592 = vmatprep.subr.mxu0 0.0
      %2593 = vmatpush1.msra.mxu0 0.0
      %2594 = vmatprep.subr.mxu0 0.0
      %2595 = vmatpush1.msra.mxu0 0.0
      %2596 = vmatprep.subr.mxu0 0.0
      %2597 = vmatpush1.msra.mxu0 0.0
      %2598 = vmatprep.subr.mxu0 0.0
      %2599 = vmatpush1.msra.mxu0 0.0
      %2600 = vmatprep.subr.mxu0 0.0
      %2601 = vmatpush1.msra.mxu0 0.0
      %2602 = vmatprep.subr.mxu0 0.0
      %2603 = vmatpush1.msra.mxu0 0.0
      %2604 = vmatprep.mubr.f32.mxu0 0.0
      %2605 = vmatmul.mubr.f32.gmra.mrb[0].mxu0 %v2538
      %v2606 = vpop.f32.mrb[0].mxu0
      %v2607 = vadd.f32 0.0, %v2606
      %v2608 = vpop.f32.mrb[0].mxu0
      %2609 = vdwg.mxu0
      %2610 = vmatprep.subr.mxu0 0.0
      %2611 = vmatpush1.msra.mxu0 %v2607
      %2612 = vmatprep.subr.mxu0 0.0
      %2613 = vmatpush1.msra.mxu0 0.0
      %2614 = vmatprep.subr.mxu0 0.0
      %2615 = vmatpush1.msra.mxu0 0.0
      %2616 = vmatprep.subr.mxu0 0.0
      %2617 = vmatpush1.msra.mxu0 0.0
      %2618 = vmatprep.subr.mxu0 0.0
      %2619 = vmatpush1.msra.mxu0 0.0
      %2620 = vmatprep.subr.mxu0 0.0
      %2621 = vmatpush1.msra.mxu0 0.0
      %2622 = vmatprep.subr.mxu0 0.0
      %2623 = vmatpush1.msra.mxu0 0.0
      %2624 = vmatprep.subr.mxu0 0.0
      %2625 = vmatpush1.msra.mxu0 0.0
      %2626 = vmatprep.subr.mxu0 0.0
      %2627 = vmatpush1.msra.mxu0 0.0
      %2628 = vmatprep.subr.mxu0 0.0
      %2629 = vmatpush1.msra.mxu0 0.0
      %2630 = vmatprep.subr.mxu0 0.0
      %2631 = vmatpush1.msra.mxu0 0.0
      %2632 = vmatprep.subr.mxu0 0.0
      %2633 = vmatpush1.msra.mxu0 0.0
      %2634 = vmatprep.subr.mxu0 0.0
      %2635 = vmatpush1.msra.mxu0 0.0
      %2636 = vmatprep.subr.mxu0 0.0
      %2637 = vmatpush1.msra.mxu0 0.0
      %2638 = vmatprep.subr.mxu0 0.0
      %2639 = vmatpush1.msra.mxu0 0.0
      %2640 = vmatprep.subr.mxu0 0.0
      %2641 = vmatpush1.msra.mxu0 0.0
      %2642 = vmatprep.subr.mxu0 0.0
      %2643 = vmatpush1.msra.mxu0 0.0
      %2644 = vmatprep.subr.mxu0 0.0
      %2645 = vmatpush1.msra.mxu0 0.0
      %2646 = vmatprep.subr.mxu0 0.0
      %2647 = vmatpush1.msra.mxu0 0.0
      %2648 = vmatprep.subr.mxu0 0.0
      %2649 = vmatpush1.msra.mxu0 0.0
      %2650 = vmatprep.subr.mxu0 0.0
      %2651 = vmatpush1.msra.mxu0 0.0
      %2652 = vmatprep.subr.mxu0 0.0
      %2653 = vmatpush1.msra.mxu0 0.0
      %2654 = vmatprep.subr.mxu0 0.0
      %2655 = vmatpush1.msra.mxu0 0.0
      %2656 = vmatprep.subr.mxu0 0.0
      %2657 = vmatpush1.msra.mxu0 0.0
      %2658 = vmatprep.subr.mxu0 0.0
      %2659 = vmatpush1.msra.mxu0 0.0
      %2660 = vmatprep.subr.mxu0 0.0
      %2661 = vmatpush1.msra.mxu0 0.0
      %2662 = vmatprep.subr.mxu0 0.0
      %2663 = vmatpush1.msra.mxu0 0.0
      %2664 = vmatprep.subr.mxu0 0.0
      %2665 = vmatpush1.msra.mxu0 0.0
      %2666 = vmatprep.subr.mxu0 0.0
      %2667 = vmatpush1.msra.mxu0 0.0
      %2668 = vmatprep.subr.mxu0 0.0
      %2669 = vmatpush1.msra.mxu0 0.0
      %2670 = vmatprep.subr.mxu0 0.0
      %2671 = vmatpush1.msra.mxu0 0.0
      %2672 = vmatprep.subr.mxu0 0.0
      %2673 = vmatpush1.msra.mxu0 0.0
      %2674 = vmatprep.mubr.f32.mxu0 0.0
      %2675 = vmatmul.mubr.f32.gmra.mrb[0].mxu0 %v1426
      %v2676 = vpop.f32.mrb[0].mxu0
      %v2677 = vadd.f32 1e-06, %v2676
      %v2678 = vpop.f32.mrb[0].mxu0
      %2679 = vmatprep.mubr.f32.mxu0 0.0
      %2680 = vmatmul.mubr.f32.gmra.mrb[0].mxu0 %v1429
      %v2681 = vpop.f32.mrb[0].mxu0
      %v2682 = vadd.f32 1e-06, %v2681
      %v2683 = vpop.f32.mrb[0].mxu0
      %2684 = vmatprep.mubr.f32.mxu0 0.0
      %2685 = vmatmul.mubr.f32.gmra.mrb[0].mxu0 %v1432
      %v2686 = vpop.f32.mrb[0].mxu0
      %v2687 = vadd.f32 1e-06, %v2686
      %v2688 = vpop.f32.mrb[0].mxu0
      %2689 = vmatprep.mubr.f32.mxu0 0.0
      %2690 = vmatmul.mubr.f32.gmra.mrb[0].mxu0 %v1435
      %v2691 = vpop.f32.mrb[0].mxu0
      %v2692 = vadd.f32 1e-06, %v2691
      %v2693 = vpop.f32.mrb[0].mxu0
      %2694 = vmatprep.mubr.f32.mxu0 0.0
      %2695 = vmatmul.mubr.f32.gmra.mrb[0].mxu0 %v1438
      %v2696 = vpop.f32.mrb[0].mxu0
      %v2697 = vadd.f32 1e-06, %v2696
      %v2698 = vpop.f32.mrb[0].mxu0
      %2699 = vmatprep.mubr.f32.mxu0 0.0
      %2700 = vmatmul.mubr.f32.gmra.mrb[0].mxu0 %v1441
      %v2701 = vpop.f32.mrb[0].mxu0
      %v2702 = vadd.f32 1e-06, %v2701
      %v2703 = vpop.f32.mrb[0].mxu0
      %2704 = vmatprep.mubr.f32.mxu0 0.0
      %2705 = vmatmul.mubr.f32.gmra.mrb[0].mxu0 %v1444
      %v2706 = vpop.f32.mrb[0].mxu0
      %v2707 = vadd.f32 1e-06, %v2706
      %v2708 = vpop.f32.mrb[0].mxu0
      %2709 = vmatprep.mubr.f32.mxu0 0.0
      %2710 = vmatmul.mubr.f32.gmra.mrb[0].mxu0 %v1447
      %v2711 = vpop.f32.mrb[0].mxu0
      %v2712 = vadd.f32 1e-06, %v2711
      %v2713 = vpop.f32.mrb[0].mxu0
      %2714 = vdwg.mxu0
      %v2715 = vrcp.pop %v2677
      %v2716 = vrcp.pop %v2682
      %v2717 = vrcp.pop %v2687
      %v2718 = vrcp.pop %v2692
      %v2719 = vrcp.pop %v2697
      %v2720 = vrcp.pop %v2702
      %v2721 = vrcp.pop %v2707
      %v2722 = vrcp.pop %v2712
      %v2723 = vmul.f32 %v2528, %v2715
      %v2724 = vmul.f32 %v2529, %v2716
      %v2725 = vmul.f32 %v2530, %v2717
      %v2726 = vmul.f32 %v2531, %v2718
      %v2727 = vmul.f32 %v2532, %v2719
      %v2728 = vmul.f32 %v2533, %v2720
      %v2729 = vmul.f32 %v2534, %v2721
      %v2730 = vmul.f32 %v2535, %v2722
      %v2731 = vld [vmem:[%s6] sm:$0xff]
      %v2733 = vsel %vm1295, %v2723, 0
      %v2736 = vsel %vm1295, %v2724, 0
      %v2739 = vsel %vm1295, %v2725, 0
      %v2742 = vsel %vm1295, %v2726, 0
      %v2745 = vsel %vm1295, %v2727, 0
      %v2748 = vsel %vm1295, %v2728, 0
      %v2751 = vsel %vm1295, %v2729, 0
      %v2754 = vsel %vm1295, %v2730, 0
      %2756 = vmatprep.subr.mxu0 0.0
      %2757 = vmatpush1.msra.mxu0 %v2731
      %2758 = vmatprep.subr.mxu0 0.0
      %2759 = vmatpush1.msra.mxu0 0.0
      %2760 = vmatprep.subr.mxu0 0.0
      %2761 = vmatpush1.msra.mxu0 0.0
      %2762 = vmatprep.subr.mxu0 0.0
      %2763 = vmatpush1.msra.mxu0 0.0
      %2764 = vmatprep.subr.mxu0 0.0
      %2765 = vmatpush1.msra.mxu0 0.0
      %2766 = vmatprep.subr.mxu0 0.0
      %2767 = vmatpush1.msra.mxu0 0.0
      %2768 = vmatprep.subr.mxu0 0.0
      %2769 = vmatpush1.msra.mxu0 0.0
      %2770 = vmatprep.subr.mxu0 0.0
      %2771 = vmatpush1.msra.mxu0 0.0
      %2772 = vmatprep.subr.mxu0 0.0
      %2773 = vmatpush1.msra.mxu0 0.0
      %2774 = vmatprep.subr.mxu0 0.0
      %2775 = vmatpush1.msra.mxu0 0.0
      %2776 = vmatprep.subr.mxu0 0.0
      %2777 = vmatpush1.msra.mxu0 0.0
      %2778 = vmatprep.subr.mxu0 0.0
      %2779 = vmatpush1.msra.mxu0 0.0
      %2780 = vmatprep.subr.mxu0 0.0
      %2781 = vmatpush1.msra.mxu0 0.0
      %2782 = vmatprep.subr.mxu0 0.0
      %2783 = vmatpush1.msra.mxu0 0.0
      %2784 = vmatprep.subr.mxu0 0.0
      %2785 = vmatpush1.msra.mxu0 0.0
      %2786 = vmatprep.subr.mxu0 0.0
      %2787 = vmatpush1.msra.mxu0 0.0
      %2788 = vmatprep.subr.mxu0 0.0
      %2789 = vmatpush1.msra.mxu0 0.0
      %2790 = vmatprep.subr.mxu0 0.0
      %2791 = vmatpush1.msra.mxu0 0.0
      %2792 = vmatprep.subr.mxu0 0.0
      %2793 = vmatpush1.msra.mxu0 0.0
      %2794 = vmatprep.subr.mxu0 0.0
      %2795 = vmatpush1.msra.mxu0 0.0
      %2796 = vmatprep.subr.mxu0 0.0
      %2797 = vmatpush1.msra.mxu0 0.0
      %2798 = vmatprep.subr.mxu0 0.0
      %2799 = vmatpush1.msra.mxu0 0.0
      %2800 = vmatprep.subr.mxu0 0.0
      %2801 = vmatpush1.msra.mxu0 0.0
      %2802 = vmatprep.subr.mxu0 0.0
      %2803 = vmatpush1.msra.mxu0 0.0
      %2804 = vmatprep.subr.mxu0 0.0
      %2805 = vmatpush1.msra.mxu0 0.0
      %2806 = vmatprep.subr.mxu0 0.0
      %2807 = vmatpush1.msra.mxu0 0.0
      %2808 = vmatprep.subr.mxu0 0.0
      %2809 = vmatpush1.msra.mxu0 0.0
      %2810 = vmatprep.subr.mxu0 0.0
      %2811 = vmatpush1.msra.mxu0 0.0
      %2812 = vmatprep.subr.mxu0 0.0
      %2813 = vmatpush1.msra.mxu0 0.0
      %2814 = vmatprep.subr.mxu0 0.0
      %2815 = vmatpush1.msra.mxu0 0.0
      %2816 = vmatprep.subr.mxu0 0.0
      %2817 = vmatpush1.msra.mxu0 0.0
      %2818 = vmatprep.subr.mxu0 0.0
      %2819 = vmatpush1.msra.mxu0 0.0
      %2820 = vmatprep.mubr.f32.mxu0 0.0
      %2821 = vmatmul.mubr.f32.gmra.mrb[0].mxu0 %v2733
      %v2822 = vpop.f32.mrb[0].mxu0
      %v2823 = vadd.f32 0.0, %v2822
      %v2824 = vpop.f32.mrb[0].mxu0
      %2825 = vmatprep.mubr.f32.mxu0 0.0
      %2826 = vmatmul.mubr.f32.gmra.mrb[0].mxu0 %v2736
      %v2827 = vpop.f32.mrb[0].mxu0
      %v2828 = vadd.f32 0.0, %v2827
      %v2829 = vpop.f32.mrb[0].mxu0
      %2830 = vmatprep.mubr.f32.mxu0 0.0
      %2831 = vmatmul.mubr.f32.gmra.mrb[0].mxu0 %v2739
      %v2832 = vpop.f32.mrb[0].mxu0
      %v2833 = vadd.f32 0.0, %v2832
      %v2834 = vpop.f32.mrb[0].mxu0
      %2835 = vmatprep.mubr.f32.mxu0 0.0
      %2836 = vmatmul.mubr.f32.gmra.mrb[0].mxu0 %v2742
      %v2837 = vpop.f32.mrb[0].mxu0
      %v2838 = vadd.f32 0.0, %v2837
      %v2839 = vpop.f32.mrb[0].mxu0
      %2840 = vmatprep.mubr.f32.mxu0 0.0
      %2841 = vmatmul.mubr.f32.gmra.mrb[0].mxu0 %v2745
      %v2842 = vpop.f32.mrb[0].mxu0
      %v2843 = vadd.f32 0.0, %v2842
      %v2844 = vpop.f32.mrb[0].mxu0
      %2845 = vmatprep.mubr.f32.mxu0 0.0
      %2846 = vmatmul.mubr.f32.gmra.mrb[0].mxu0 %v2748
      %v2847 = vpop.f32.mrb[0].mxu0
      %v2848 = vadd.f32 0.0, %v2847
      %v2849 = vpop.f32.mrb[0].mxu0
      %2850 = vmatprep.mubr.f32.mxu0 0.0
      %2851 = vmatmul.mubr.f32.gmra.mrb[0].mxu0 %v2751
      %v2852 = vpop.f32.mrb[0].mxu0
      %v2853 = vadd.f32 0.0, %v2852
      %v2854 = vpop.f32.mrb[0].mxu0
      %2855 = vmatprep.mubr.f32.mxu0 0.0
      %2856 = vmatmul.mubr.f32.gmra.mrb[0].mxu0 %v2754
      %v2857 = vpop.f32.mrb[0].mxu0
      %v2858 = vadd.f32 0.0, %v2857
      %v2859 = vpop.f32.mrb[0].mxu0
      %2860 = vdwg.mxu0
      %v2861 = vmul.f32 %v2823, %v1869
      %v2862 = vmul.f32 %v2828, %v1874
      %v2863 = vmul.f32 %v2833, %v1879
      %v2864 = vmul.f32 %v2838, %v1884
      %v2865 = vmul.f32 %v2843, %v1889
      %v2866 = vmul.f32 %v2848, %v1894
      %v2867 = vmul.f32 %v2853, %v1899
      %v2868 = vmul.f32 %v2858, %v1904
      %v2869 = vld [vmem:[%s20] sm:$0xff]
      %v2870 = vld [vmem:[%s20 + $0x8] sm:$0xff]
      %v2871 = vld [vmem:[%s20 + $0x10] sm:$0xff]
      %v2872 = vld [vmem:[%s20 + $0x18] sm:$0xff]
      %v2873 = vld [vmem:[%s21] sm:$0x1]
      %v2875 = vlaneseq
      %v2876 = vshrl.u32 %v2875, 7
      %v2877 = vsub.s32 0, %v2876
      %v2878 = vrot.slane %v2873, %v2877
      %2880 = vmatprep.subr.mxu0 0.0
      %2881 = vmatpush1.msra.mxu0 %v2869
      %2882 = vmatprep.subr.mxu0 0.0
      %2883 = vmatpush1.msra.mxu0 %v2870
      %2884 = vmatprep.subr.mxu0 0.0
      %2885 = vmatpush1.msra.mxu0 %v2871
      %2886 = vmatprep.subr.mxu0 0.0
      %2887 = vmatpush1.msra.mxu0 %v2872
      %2888 = vmatprep.subr.mxu0 0.0
      %2889 = vmatpush1.msra.mxu0 0.0
      %2890 = vmatprep.subr.mxu0 0.0
      %2891 = vmatpush1.msra.mxu0 0.0
      %2892 = vmatprep.subr.mxu0 0.0
      %2893 = vmatpush1.msra.mxu0 0.0
      %2894 = vmatprep.subr.mxu0 0.0
      %2895 = vmatpush1.msra.mxu0 0.0
      %2896 = vmatprep.subr.mxu0 0.0
      %2897 = vmatpush1.msra.mxu0 0.0
      %2898 = vmatprep.subr.mxu0 0.0
      %2899 = vmatpush1.msra.mxu0 0.0
      %2900 = vmatprep.subr.mxu0 0.0
      %2901 = vmatpush1.msra.mxu0 0.0
      %2902 = vmatprep.subr.mxu0 0.0
      %2903 = vmatpush1.msra.mxu0 0.0
      %2904 = vmatprep.subr.mxu0 0.0
      %2905 = vmatpush1.msra.mxu0 0.0
      %2906 = vmatprep.subr.mxu0 0.0
      %2907 = vmatpush1.msra.mxu0 0.0
      %2908 = vmatprep.subr.mxu0 0.0
      %2909 = vmatpush1.msra.mxu0 0.0
      %2910 = vmatprep.subr.mxu0 0.0
      %2911 = vmatpush1.msra.mxu0 0.0
      %2912 = vmatprep.subr.mxu0 0.0
      %2913 = vmatpush1.msra.mxu0 0.0
      %2914 = vmatprep.subr.mxu0 0.0
      %2915 = vmatpush1.msra.mxu0 0.0
      %2916 = vmatprep.subr.mxu0 0.0
      %2917 = vmatpush1.msra.mxu0 0.0
      %2918 = vmatprep.subr.mxu0 0.0
      %2919 = vmatpush1.msra.mxu0 0.0
      %2920 = vmatprep.subr.mxu0 0.0
      %2921 = vmatpush1.msra.mxu0 0.0
      %2922 = vmatprep.subr.mxu0 0.0
      %2923 = vmatpush1.msra.mxu0 0.0
      %2924 = vmatprep.subr.mxu0 0.0
      %2925 = vmatpush1.msra.mxu0 0.0
      %2926 = vmatprep.subr.mxu0 0.0
      %2927 = vmatpush1.msra.mxu0 0.0
      %2928 = vmatprep.subr.mxu0 0.0
      %2929 = vmatpush1.msra.mxu0 0.0
      %2930 = vmatprep.subr.mxu0 0.0
      %2931 = vmatpush1.msra.mxu0 0.0
      %2932 = vmatprep.subr.mxu0 0.0
      %2933 = vmatpush1.msra.mxu0 0.0
      %2934 = vmatprep.subr.mxu0 0.0
      %2935 = vmatpush1.msra.mxu0 0.0
      %2936 = vmatprep.subr.mxu0 0.0
      %2937 = vmatpush1.msra.mxu0 0.0
      %2938 = vmatprep.subr.mxu0 0.0
      %2939 = vmatpush1.msra.mxu0 0.0
      %2940 = vmatprep.subr.mxu0 0.0
      %2941 = vmatpush1.msra.mxu0 0.0
      %2942 = vmatprep.subr.mxu0 0.0
      %2943 = vmatpush1.msra.mxu0 0.0
      %2944 = vmatprep.mubr.f32.mxu0 0.0
      %2945 = vmatmul.mubr.f32.gmra.mrb[0].mxu0 %v1153
      %v2946 = vpop.f32.mrb[0].mxu0
      %v2947 = vadd.f32 %v2878, %v2946
      %v2948 = vpop.f32.mrb[0].mxu0
      %2949 = vdwg.mxu0
      %v2950 = vxor.u32 %v2947, 2147483648
      %v2951 = vmul.f32 %v2950, 1.442695
      %v2952 = vpow.pop %v2951
      %v2953 = vadd.f32 %v2952, 1.0
      %v2954 = vrcp.pop %v2953
      %v2955 = vmul.f32 1.0, %v2954
      %v2956 = vmul.f32 %v2947, %v2955
      %2957 = vmatprep.subr.mxu0 0.0
      %2958 = vmatpush1.msra.mxu0 %v2861
      %2959 = vmatprep.subr.mxu0 0.0
      %2960 = vmatpush1.msra.mxu0 %v2862
      %2961 = vmatprep.subr.mxu0 0.0
      %2962 = vmatpush1.msra.mxu0 %v2863
      %2963 = vmatprep.subr.mxu0 0.0
      %2964 = vmatpush1.msra.mxu0 %v2864
      %2965 = vmatprep.subr.mxu0 0.0
      %2966 = vmatpush1.msra.mxu0 %v2865
      %2967 = vmatprep.subr.mxu0 0.0
      %2968 = vmatpush1.msra.mxu0 %v2866
      %2969 = vmatprep.subr.mxu0 0.0
      %2970 = vmatpush1.msra.mxu0 %v2867
      %2971 = vmatprep.subr.mxu0 0.0
      %2972 = vmatpush1.msra.mxu0 %v2868
      %2973 = vmatprep.subr.mxu0 0.0
      %2974 = vmatpush1.msra.mxu0 0.0
      %2975 = vmatprep.subr.mxu0 0.0
      %2976 = vmatpush1.msra.mxu0 0.0
      %2977 = vmatprep.subr.mxu0 0.0
      %2978 = vmatpush1.msra.mxu0 0.0
      %2979 = vmatprep.subr.mxu0 0.0
      %2980 = vmatpush1.msra.mxu0 0.0
      %2981 = vmatprep.subr.mxu0 0.0
      %2982 = vmatpush1.msra.mxu0 0.0
      %2983 = vmatprep.subr.mxu0 0.0
      %2984 = vmatpush1.msra.mxu0 0.0
      %2985 = vmatprep.subr.mxu0 0.0
      %2986 = vmatpush1.msra.mxu0 0.0
      %2987 = vmatprep.subr.mxu0 0.0
      %2988 = vmatpush1.msra.mxu0 0.0
      %2989 = vmatprep.subr.mxu0 0.0
      %2990 = vmatpush1.msra.mxu0 0.0
      %2991 = vmatprep.subr.mxu0 0.0
      %2992 = vmatpush1.msra.mxu0 0.0
      %2993 = vmatprep.subr.mxu0 0.0
      %2994 = vmatpush1.msra.mxu0 0.0
      %2995 = vmatprep.subr.mxu0 0.0
      %2996 = vmatpush1.msra.mxu0 0.0
      %2997 = vmatprep.subr.mxu0 0.0
      %2998 = vmatpush1.msra.mxu0 0.0
      %2999 = vmatprep.subr.mxu0 0.0
      %3000 = vmatpush1.msra.mxu0 0.0
      %3001 = vmatprep.subr.mxu0 0.0
      %3002 = vmatpush1.msra.mxu0 0.0
      %3003 = vmatprep.subr.mxu0 0.0
      %3004 = vmatpush1.msra.mxu0 0.0
      %3005 = vmatprep.subr.mxu0 0.0
      %3006 = vmatpush1.msra.mxu0 0.0
      %3007 = vmatprep.subr.mxu0 0.0
      %3008 = vmatpush1.msra.mxu0 0.0
      %3009 = vmatprep.subr.mxu0 0.0
      %3010 = vmatpush1.msra.mxu0 0.0
      %3011 = vmatprep.subr.mxu0 0.0
      %3012 = vmatpush1.msra.mxu0 0.0
      %3013 = vmatprep.subr.mxu0 0.0
      %3014 = vmatpush1.msra.mxu0 0.0
      %3015 = vmatprep.subr.mxu0 0.0
      %3016 = vmatpush1.msra.mxu0 0.0
      %3017 = vmatprep.subr.mxu0 0.0
      %3018 = vmatpush1.msra.mxu0 0.0
      %3019 = vmatprep.subr.mxu0 0.0
      %3020 = vmatpush1.msra.mxu0 0.0
      %3021 = vmatprep.mubr.f32.mxu0 0.0
      %3022 = vmatmul.mubr.f32.gmra.mrb[0].mxu0 %v2538
      %v3023 = vpop.f32.mrb[0].mxu0
      %v3024 = vadd.f32 %v2956, %v3023
      %v3025 = vpop.f32.mrb[0].mxu0
      %3026 = vdwg.mxu0
      %v3027 = vsel %vm1554, %v3024, -inf
      %v3028 = vrot.slane %v3027, 4
      %v3029 = vmax.f32 %v3027, %v3028
      %v3030 = vrot.slane %v3029, 2
      %v3031 = vmax.f32 %v3029, %v3030
      %v3032 = vrot.slane %v3031, 1
      %v3033 = vmax.f32 %v3031, %v3032
      %v3034 = vld [vmem:[%s22] sm:$0xff]
      %v3035 = vld [vmem:[%s22 + $0x8] sm:$0xff]
      %v3036 = vld [vmem:[%s22 + $0x10] sm:$0xff]
      %v3037 = vld [vmem:[%s22 + $0x18] sm:$0xff]
      %v3038 = vld [vmem:[%s22 + $0x20] sm:$0xff]
      %v3039 = vld [vmem:[%s22 + $0x28] sm:$0xff]
      %v3040 = vld [vmem:[%s22 + $0x30] sm:$0xff]
      %v3041 = vld [vmem:[%s22 + $0x38] sm:$0xff]
      %v3042 = vld [vmem:[%s22 + $0x40] sm:$0xff]
      %v3043 = vld [vmem:[%s22 + $0x48] sm:$0xff]
      %v3044 = vld [vmem:[%s22 + $0x50] sm:$0xff]
      %v3045 = vld [vmem:[%s22 + $0x58] sm:$0xff]
      %v3046 = vld [vmem:[%s22 + $0x60] sm:$0xff]
      %v3047 = vld [vmem:[%s22 + $0x68] sm:$0xff]
      %v3048 = vld [vmem:[%s22 + $0x70] sm:$0xff]
      %v3049 = vld [vmem:[%s22 + $0x78] sm:$0xff]
      %v3051 = vsel %vm1554, %v3033, 0
      %3053 = vmatprep.subr.mxu0 0.0
      %3054 = vmatpush1.msra.mxu0 %v3042
      %3055 = vmatprep.subr.mxu0 0.0
      %3056 = vmatpush1.msra.mxu0 %v3043
      %3057 = vmatprep.subr.mxu0 0.0
      %3058 = vmatpush1.msra.mxu0 %v3044
      %3059 = vmatprep.subr.mxu0 0.0
      %3060 = vmatpush1.msra.mxu0 %v3045
      %3061 = vmatprep.subr.mxu0 0.0
      %3062 = vmatpush1.msra.mxu0 %v3046
      %3063 = vmatprep.subr.mxu0 0.0
      %3064 = vmatpush1.msra.mxu0 %v3047
      %3065 = vmatprep.subr.mxu0 0.0
      %3066 = vmatpush1.msra.mxu0 %v3048
      %3067 = vmatprep.subr.mxu0 0.0
      %3068 = vmatpush1.msra.mxu0 %v3049
      %3069 = vmatprep.subr.mxu0 0.0
      %3070 = vmatpush1.msra.mxu0 0.0
      %3071 = vmatprep.subr.mxu0 0.0
      %3072 = vmatpush1.msra.mxu0 0.0
      %3073 = vmatprep.subr.mxu0 0.0
      %3074 = vmatpush1.msra.mxu0 0.0
      %3075 = vmatprep.subr.mxu0 0.0
      %3076 = vmatpush1.msra.mxu0 0.0
      %3077 = vmatprep.subr.mxu0 0.0
      %3078 = vmatpush1.msra.mxu0 0.0
      %3079 = vmatprep.subr.mxu0 0.0
      %3080 = vmatpush1.msra.mxu0 0.0
      %3081 = vmatprep.subr.mxu0 0.0
      %3082 = vmatpush1.msra.mxu0 0.0
      %3083 = vmatprep.subr.mxu0 0.0
      %3084 = vmatpush1.msra.mxu0 0.0
      %3085 = vmatprep.subr.mxu0 0.0
      %3086 = vmatpush1.msra.mxu0 0.0
      %3087 = vmatprep.subr.mxu0 0.0
      %3088 = vmatpush1.msra.mxu0 0.0
      %3089 = vmatprep.subr.mxu0 0.0
      %3090 = vmatpush1.msra.mxu0 0.0
      %3091 = vmatprep.subr.mxu0 0.0
      %3092 = vmatpush1.msra.mxu0 0.0
      %3093 = vmatprep.subr.mxu0 0.0
      %3094 = vmatpush1.msra.mxu0 0.0
      %3095 = vmatprep.subr.mxu0 0.0
      %3096 = vmatpush1.msra.mxu0 0.0
      %3097 = vmatprep.subr.mxu0 0.0
      %3098 = vmatpush1.msra.mxu0 0.0
      %3099 = vmatprep.subr.mxu0 0.0
      %3100 = vmatpush1.msra.mxu0 0.0
      %3101 = vmatprep.subr.mxu0 0.0
      %3102 = vmatpush1.msra.mxu0 0.0
      %3103 = vmatprep.subr.mxu0 0.0
      %3104 = vmatpush1.msra.mxu0 0.0
      %3105 = vmatprep.subr.mxu0 0.0
      %3106 = vmatpush1.msra.mxu0 0.0
      %3107 = vmatprep.subr.mxu0 0.0
      %3108 = vmatpush1.msra.mxu0 0.0
      %3109 = vmatprep.subr.mxu0 0.0
      %3110 = vmatpush1.msra.mxu0 0.0
      %3111 = vmatprep.subr.mxu0 0.0
      %3112 = vmatpush1.msra.mxu0 0.0
      %3113 = vmatprep.subr.mxu0 0.0
      %3114 = vmatpush1.msra.mxu0 0.0
      %3115 = vmatprep.subr.mxu0 0.0
      %3116 = vmatpush1.msra.mxu0 0.0
      %3117 = vmatprep.mubr.f32.mxu0 0.0
      %3118 = vmatmul.mubr.f32.gmra.mrb[0].mxu0 %v3051
      %v3119 = vpop.f32.mrb[0].mxu0
      %v3120 = vadd.f32 0.0, %v3119
      %v3121 = vpop.f32.mrb[0].mxu0
      %3122 = vdwg.mxu0
      %v3123 = vlaneseq
      %v3124 = vshrl.u32 %v3123, 7
      %v3125 = vsub.s32 0, %v3124
      %v3126 = vrot.slane %v3120, %v3125
      %v3128 = vsel %vm1554, %v3024, 0
      %3130 = vmatprep.subr.mxu0 0.0
      %3131 = vmatpush1.msra.mxu0 %v3034
      %3132 = vmatprep.subr.mxu0 0.0
      %3133 = vmatpush1.msra.mxu0 %v3035
      %3134 = vmatprep.subr.mxu0 0.0
      %3135 = vmatpush1.msra.mxu0 %v3036
      %3136 = vmatprep.subr.mxu0 0.0
      %3137 = vmatpush1.msra.mxu0 %v3037
      %3138 = vmatprep.subr.mxu0 0.0
      %3139 = vmatpush1.msra.mxu0 %v3038
      %3140 = vmatprep.subr.mxu0 0.0
      %3141 = vmatpush1.msra.mxu0 %v3039
      %3142 = vmatprep.subr.mxu0 0.0
      %3143 = vmatpush1.msra.mxu0 %v3040
      %3144 = vmatprep.subr.mxu0 0.0
      %3145 = vmatpush1.msra.mxu0 %v3041
      %3146 = vmatprep.subr.mxu0 0.0
      %3147 = vmatpush1.msra.mxu0 0.0
      %3148 = vmatprep.subr.mxu0 0.0
      %3149 = vmatpush1.msra.mxu0 0.0
      %3150 = vmatprep.subr.mxu0 0.0
      %3151 = vmatpush1.msra.mxu0 0.0
      %3152 = vmatprep.subr.mxu0 0.0
      %3153 = vmatpush1.msra.mxu0 0.0
      %3154 = vmatprep.subr.mxu0 0.0
      %3155 = vmatpush1.msra.mxu0 0.0
      %3156 = vmatprep.subr.mxu0 0.0
      %3157 = vmatpush1.msra.mxu0 0.0
      %3158 = vmatprep.subr.mxu0 0.0
      %3159 = vmatpush1.msra.mxu0 0.0
      %3160 = vmatprep.subr.mxu0 0.0
      %3161 = vmatpush1.msra.mxu0 0.0
      %3162 = vmatprep.subr.mxu0 0.0
      %3163 = vmatpush1.msra.mxu0 0.0
      %3164 = vmatprep.subr.mxu0 0.0
      %3165 = vmatpush1.msra.mxu0 0.0
      %3166 = vmatprep.subr.mxu0 0.0
      %3167 = vmatpush1.msra.mxu0 0.0
      %3168 = vmatprep.subr.mxu0 0.0
      %3169 = vmatpush1.msra.mxu0 0.0
      %3170 = vmatprep.subr.mxu0 0.0
      %3171 = vmatpush1.msra.mxu0 0.0
      %3172 = vmatprep.subr.mxu0 0.0
      %3173 = vmatpush1.msra.mxu0 0.0
      %3174 = vmatprep.subr.mxu0 0.0
      %3175 = vmatpush1.msra.mxu0 0.0
      %3176 = vmatprep.subr.mxu0 0.0
      %3177 = vmatpush1.msra.mxu0 0.0
      %3178 = vmatprep.subr.mxu0 0.0
      %3179 = vmatpush1.msra.mxu0 0.0
      %3180 = vmatprep.subr.mxu0 0.0
      %3181 = vmatpush1.msra.mxu0 0.0
      %3182 = vmatprep.subr.mxu0 0.0
      %3183 = vmatpush1.msra.mxu0 0.0
      %3184 = vmatprep.subr.mxu0 0.0
      %3185 = vmatpush1.msra.mxu0 0.0
      %3186 = vmatprep.subr.mxu0 0.0
      %3187 = vmatpush1.msra.mxu0 0.0
      %3188 = vmatprep.subr.mxu0 0.0
      %3189 = vmatpush1.msra.mxu0 0.0
      %3190 = vmatprep.subr.mxu0 0.0
      %3191 = vmatpush1.msra.mxu0 0.0
      %3192 = vmatprep.subr.mxu0 0.0
      %3193 = vmatpush1.msra.mxu0 0.0
      %3194 = vmatprep.mubr.f32.mxu0 0.0
      %3195 = vmatmul.mubr.f32.gmra.mrb[0].mxu0 %v3128
      %v3196 = vpop.f32.mrb[0].mxu0
      %v3197 = vadd.f32 %v3126, %v3196
      %v3198 = vpop.f32.mrb[0].mxu0
      %3199 = vdwg.mxu0
      %v3200 = vld [vmem:[%s23] sm:$0x1]
      %v3202 = vlaneseq
      %v3203 = vshrl.u32 %v3202, 7
      %v3204 = vsub.s32 0, %v3203
      %v3205 = vrot.slane %v3200, %v3204
      %v3207 = vadd.f32 %v3197, %v3205
      %v3208 = vxor.u32 %v3207, 2147483648
      %v3209 = vmul.f32 %v3208, 1.442695
      %v3210 = vpow.pop %v3209
      %v3211 = vadd.f32 %v3210, 1.0
      %v3212 = vrcp.pop %v3211
      %v3213 = vmul.f32 1.0, %v3212
      %v3214 = vmul.f32 %v3207, %v3213
      %vm3215 = vcmask 392192
      %3216 = vst.msk [vmem:[%s807] sm:$0xff] %vm3215, %v3214
      %3217 = vst.msk [vmem:[%s812] sm:$0xff] %vm1554, %v1869
      %3218 = vst.msk [vmem:[%s812 + $0x8] sm:$0xff] %vm1554, %v1874
      %3219 = vst.msk [vmem:[%s812 + $0x10] sm:$0xff] %vm1554, %v1879
      %3220 = vst.msk [vmem:[%s812 + $0x18] sm:$0xff] %vm1554, %v1884
      %3221 = vst.msk [vmem:[%s812 + $0x20] sm:$0xff] %vm1554, %v1889
      %3222 = vst.msk [vmem:[%s812 + $0x28] sm:$0xff] %vm1554, %v1894
      %3223 = vst.msk [vmem:[%s812 + $0x30] sm:$0xff] %vm1554, %v1899
      %3224 = vst.msk [vmem:[%s812 + $0x38] sm:$0xff] %vm1554, %v1904
      %p3225 = scmp.lt.s32.totalorder %s37, 1
      %s3226 = scalar_select %p3225, %s37, 1
      %s3227 = smul.addr %s3226, 8
      %s3228 = scalar_lea.vmem %s24, %s3227
      %p3229 = scmp.lt.s32.totalorder %s37, 1
      %s3230 = scalar_select %p3229, %s37, 1
      %s3231 = smul.addr %s3230, 8
      %s3232 = smul.addr %s3231, 8
      %s3233 = scalar_lea.vmem %s25, %s3232
      // Predicated region
      $region117: #{_lambda_.8} parent=115 // pred_check
        %p3234 = pneg %p574
      $region118: #{_lambda_.8} parent=115 // pred_check_branch
        %3236 = sbr.rel (%p3234) target = $region120
      $region119: #{_lambda_.8} parent=115 // pred_region
        _
      $region120: #{_lambda_.8} parent=115 // pred_fallthru
        _
      // Predicated region
      $region121: #{_lambda_.8} parent=115 // pred_check
        %p3237 = pneg %p600
      $region122: #{_lambda_.8} parent=115 // pred_check_branch
        %3239 = sbr.rel (%p3237) target = $region124
      $region123: #{_lambda_.8} parent=115 // pred_region
        _
      $region124: #{_lambda_.8} parent=115 // pred_fallthru
        _
    $region116: #{_lambda_.8} parent=5 // pred_fallthru
      _
    %p3240 = scmp.le.s32.totalorder 2, %s32
    // Predicated region
    $region125: #{_lambda_.8} parent=5 // pred_check
      %p3241 = pneg %p3240
    $region126: #{_lambda_.8} parent=5 // pred_check_branch
      %3243 = sbr.rel (%p3241) target = $region128
    $region127: #{_lambda_.8} parent=5 // pred_region
      %s3244 = ssub.s32 %s32, 2
      // Predicated region
      $region129: #{_lambda_.8} parent=127 // pred_check
        %p3245 = pneg %p580
      $region130: #{_lambda_.8} parent=127 // pred_check_branch
        %3247 = sbr.rel (%p3245) target = $region132
      $region131: #{_lambda_.8} parent=127 // pred_region
        %p3248 = scmp.lt.s32.totalorder %s38, 1
        %s3249 = scalar_select %p3248, %s38, 1
        %s3250 = smul.addr %s3249, 8
        %s3251 = scalar_lea.vmem %s24, %s3250
      $region132: #{_lambda_.8} parent=127 // pred_fallthru
        _
      // Predicated region
      $region133: #{_lambda_.8} parent=127 // pred_check
        %p3252 = pneg %p606
      $region134: #{_lambda_.8} parent=127 // pred_check_branch
        %3254 = sbr.rel (%p3252) target = $region136
      $region135: #{_lambda_.8} parent=127 // pred_region
        %p3255 = scmp.lt.s32.totalorder %s38, 1
        %s3256 = scalar_select %p3255, %s38, 1
        %s3257 = smul.addr %s3256, 8
        %s3258 = smul.addr %s3257, 8
        %s3259 = scalar_lea.vmem %s25, %s3258
      $region136: #{_lambda_.8} parent=127 // pred_fallthru
        _
    $region128: #{_lambda_.8} parent=5 // pred_fallthru
      _
  $region6: #{_lambda_.8} parent=0 // loop_footer
    %s36 = sadd.s32 1, %s32
  $region7: #{_lambda_.8} parent=0 // loop_footer_branch
    %31 = sbr.rel target = $region3
  $region8: #{_lambda_.8} parent=0 // loop_exit
    _

// kernel: _lambda_.11
$region0: #{_lambda_.11}
  #allocation0 [shape = 'u32[]', space=smem, size = 0x4, offset = 0x4, fixed_abs, tag = 'smem constant byte address 0x4 - core index']
  #allocation1 [shape = 'u32[144,128]{1,0:T(1,128)}', space=vmem, size = 0x12000, scoped, tag = 'internal scratch']
  %s0 = inlined_call_operand.vmem [shape: f32[56,192], index: 0, kind: input, shape index: {}]
  %s1 = inlined_call_operand.vmem [shape: f32[56,13], index: 1, kind: input, shape index: {}]
  %s2 = inlined_call_operand.vmem [shape: f32[192,64], index: 2, kind: input, shape index: {}]
  %s3 = inlined_call_operand.vmem [shape: f32[1,64], index: 3, kind: input, shape index: {}]
  %s4 = inlined_call_operand.vmem [shape: f32[64,96], index: 4, kind: input, shape index: {}]
  %s5 = inlined_call_operand.vmem [shape: f32[13,96], index: 5, kind: input, shape index: {}]
  %s6 = inlined_call_operand.vmem [shape: f32[1,96], index: 6, kind: input, shape index: {}]
  %s7 = inlined_call_operand.vmem [shape: f32[96,48], index: 7, kind: input, shape index: {}]
  %s8 = inlined_call_operand.vmem [shape: f32[1,48], index: 8, kind: input, shape index: {}]
  %s9 = inlined_call_operand.vmem [shape: f32[64,13], index: 9, kind: input, shape index: {}]
  %s10 = inlined_call_operand.vmem [shape: f32[13,13], index: 10, kind: input, shape index: {}]
  %s11 = inlined_call_operand.vmem [shape: f32[96,13], index: 11, kind: input, shape index: {}]
  %s12 = inlined_call_operand.vmem [shape: f32[48,13], index: 12, kind: input, shape index: {}]
  %s13 = inlined_call_operand.vmem [shape: f32[1,13], index: 13, kind: input, shape index: {}]
  %s14 = inlined_call_operand.vmem [shape: f32[56,13], index: 14, kind: output, shape index: {}]
  %s15 = sld [smem:[#allocation0]]
  $region66: #{_lambda_.11} parent=0
    _
  %s17 = ssub.s32 1, %s15
  %s18 = scalar_select 0, %s17, %s15
  // Predicated region
  $region2: #{_lambda_.11} parent=0 // pred_check
    _
  $region3: #{_lambda_.11} parent=0 // pred_check_branch
    %20 = sbr.rel (0) target = $region5
  $region4: #{_lambda_.11} parent=0 // pred_region
    _
  $region5: #{_lambda_.11} parent=0 // pred_fallthru
    _
  // Predicated region
  $region6: #{_lambda_.11} parent=0 // pred_check
    _
  $region7: #{_lambda_.11} parent=0 // pred_check_branch
    %22 = sbr.rel (0) target = $region9
  $region8: #{_lambda_.11} parent=0 // pred_region
    _
  $region9: #{_lambda_.11} parent=0 // pred_fallthru
    _
  // Predicated region
  $region10: #{_lambda_.11} parent=0 // pred_check
    _
  $region11: #{_lambda_.11} parent=0 // pred_check_branch
    %24 = sbr.rel (0) target = $region13
  $region12: #{_lambda_.11} parent=0 // pred_region
    _
  $region13: #{_lambda_.11} parent=0 // pred_fallthru
    _
  // Predicated region
  $region14: #{_lambda_.11} parent=0 // pred_check
    _
  $region15: #{_lambda_.11} parent=0 // pred_check_branch
    %26 = sbr.rel (0) target = $region17
  $region16: #{_lambda_.11} parent=0 // pred_region
    _
  $region17: #{_lambda_.11} parent=0 // pred_fallthru
    _
  // Predicated region
  $region18: #{_lambda_.11} parent=0 // pred_check
    _
  $region19: #{_lambda_.11} parent=0 // pred_check_branch
    %28 = sbr.rel (0) target = $region21
  $region20: #{_lambda_.11} parent=0 // pred_region
    _
  $region21: #{_lambda_.11} parent=0 // pred_fallthru
    _
  // Predicated region
  $region22: #{_lambda_.11} parent=0 // pred_check
    _
  $region23: #{_lambda_.11} parent=0 // pred_check_branch
    %30 = sbr.rel (0) target = $region25
  $region24: #{_lambda_.11} parent=0 // pred_region
    _
  $region25: #{_lambda_.11} parent=0 // pred_fallthru
    _
  // Predicated region
  $region26: #{_lambda_.11} parent=0 // pred_check
    _
  $region27: #{_lambda_.11} parent=0 // pred_check_branch
    %32 = sbr.rel (0) target = $region29
  $region28: #{_lambda_.11} parent=0 // pred_region
    _
  $region29: #{_lambda_.11} parent=0 // pred_fallthru
    _
  // Predicated region
  $region30: #{_lambda_.11} parent=0 // pred_check
    _
  $region31: #{_lambda_.11} parent=0 // pred_check_branch
    %34 = sbr.rel (0) target = $region33
  $region32: #{_lambda_.11} parent=0 // pred_region
    _
  $region33: #{_lambda_.11} parent=0 // pred_fallthru
    _
  // Predicated region
  $region34: #{_lambda_.11} parent=0 // pred_check
    _
  $region35: #{_lambda_.11} parent=0 // pred_check_branch
    %36 = sbr.rel (0) target = $region37
  $region36: #{_lambda_.11} parent=0 // pred_region
    _
  $region37: #{_lambda_.11} parent=0 // pred_fallthru
    _
  // Predicated region
  $region38: #{_lambda_.11} parent=0 // pred_check
    _
  $region39: #{_lambda_.11} parent=0 // pred_check_branch
    %38 = sbr.rel (0) target = $region41
  $region40: #{_lambda_.11} parent=0 // pred_region
    _
  $region41: #{_lambda_.11} parent=0 // pred_fallthru
    _
  // Predicated region
  $region42: #{_lambda_.11} parent=0 // pred_check
    _
  $region43: #{_lambda_.11} parent=0 // pred_check_branch
    %40 = sbr.rel (0) target = $region45
  $region44: #{_lambda_.11} parent=0 // pred_region
    _
  $region45: #{_lambda_.11} parent=0 // pred_fallthru
    _
  // Predicated region
  $region46: #{_lambda_.11} parent=0 // pred_check
    _
  $region47: #{_lambda_.11} parent=0 // pred_check_branch
    %42 = sbr.rel (0) target = $region49
  $region48: #{_lambda_.11} parent=0 // pred_region
    _
  $region49: #{_lambda_.11} parent=0 // pred_fallthru
    _
  // Predicated region
  $region50: #{_lambda_.11} parent=0 // pred_check
    _
  $region51: #{_lambda_.11} parent=0 // pred_check_branch
    %44 = sbr.rel (0) target = $region53
  $region52: #{_lambda_.11} parent=0 // pred_region
    _
  $region53: #{_lambda_.11} parent=0 // pred_fallthru
    _
  // Predicated region
  $region54: #{_lambda_.11} parent=0 // pred_check
    _
  $region55: #{_lambda_.11} parent=0 // pred_check_branch
    %46 = sbr.rel (0) target = $region57
  $region56: #{_lambda_.11} parent=0 // pred_region
    _
  $region57: #{_lambda_.11} parent=0 // pred_fallthru
    _
  %v47 = vld [vmem:[%s0] sm:$0xff]
  %v48 = vld [vmem:[%s0 + $0x8] sm:$0xff]
  %v49 = vld [vmem:[%s0 + $0x10] sm:$0xff]
  %v50 = vld [vmem:[%s0 + $0x18] sm:$0xff]
  %v51 = vld [vmem:[%s0 + $0x20] sm:$0xff]
  %v52 = vld [vmem:[%s0 + $0x28] sm:$0xff]
  %v53 = vld [vmem:[%s0 + $0x30] sm:$0xff]
  %v54 = vld [vmem:[%s0 + $0x38] sm:$0xff]
  %v55 = vld [vmem:[%s0 + $0x40] sm:$0xff]
  %v56 = vld [vmem:[%s0 + $0x48] sm:$0xff]
  %v57 = vld [vmem:[%s0 + $0x50] sm:$0xff]
  %v58 = vld [vmem:[%s0 + $0x58] sm:$0xff]
  %v59 = vld [vmem:[%s0 + $0x60] sm:$0xff]
  %v60 = vld [vmem:[%s0 + $0x68] sm:$0xff]
  %v61 = vld [vmem:[%s2] sm:$0xff]
  %v62 = vld [vmem:[%s2 + $0x8] sm:$0xff]
  %v63 = vld [vmem:[%s2 + $0x10] sm:$0xff]
  %v64 = vld [vmem:[%s2 + $0x18] sm:$0xff]
  %v65 = vld [vmem:[%s2 + $0x20] sm:$0xff]
  %v66 = vld [vmem:[%s2 + $0x28] sm:$0xff]
  %v67 = vld [vmem:[%s2 + $0x30] sm:$0xff]
  %v68 = vld [vmem:[%s2 + $0x38] sm:$0xff]
  %v69 = vld [vmem:[%s2 + $0x40] sm:$0xff]
  %v70 = vld [vmem:[%s2 + $0x48] sm:$0xff]
  %v71 = vld [vmem:[%s2 + $0x50] sm:$0xff]
  %v72 = vld [vmem:[%s2 + $0x58] sm:$0xff]
  %v73 = vld [vmem:[%s2 + $0x60] sm:$0xff]
  %v74 = vld [vmem:[%s2 + $0x68] sm:$0xff]
  %v75 = vld [vmem:[%s2 + $0x70] sm:$0xff]
  %v76 = vld [vmem:[%s2 + $0x78] sm:$0xff]
  %v77 = vld [vmem:[%s2 + $0x80] sm:$0xff]
  %v78 = vld [vmem:[%s2 + $0x88] sm:$0xff]
  %v79 = vld [vmem:[%s2 + $0x90] sm:$0xff]
  %v80 = vld [vmem:[%s2 + $0x98] sm:$0xff]
  %v81 = vld [vmem:[%s2 + $0xa0] sm:$0xff]
  %v82 = vld [vmem:[%s2 + $0xa8] sm:$0xff]
  %v83 = vld [vmem:[%s2 + $0xb0] sm:$0xff]
  %v84 = vld [vmem:[%s2 + $0xb8] sm:$0xff]
  %v85 = vld [vmem:[%s3] sm:$0x1]
  %v87 = vlaneseq
  %v88 = vshrl.u32 %v87, 7
  %v89 = vsub.s32 0, %v88
  %v90 = vrot.slane %v85, %v89
  %vm92 = vcmask 523264
  %v94 = vsel %vm92, %v48, 0
  %v97 = vsel %vm92, %v50, 0
  %v100 = vsel %vm92, %v52, 0
  %v103 = vsel %vm92, %v54, 0
  %v106 = vsel %vm92, %v56, 0
  %v109 = vsel %vm92, %v58, 0
  %v112 = vsel %vm92, %v60, 0
  %114 = vmatprep.subr.mxu0 0.0
  %115 = vmatpush1.msra.mxu0 %v61
  %116 = vmatprep.subr.mxu0 0.0
  %117 = vmatpush1.msra.mxu0 %v62
  %118 = vmatprep.subr.mxu0 0.0
  %119 = vmatpush1.msra.mxu0 %v63
  %120 = vmatprep.subr.mxu0 0.0
  %121 = vmatpush1.msra.mxu0 %v64
  %122 = vmatprep.subr.mxu0 0.0
  %123 = vmatpush1.msra.mxu0 %v65
  %124 = vmatprep.subr.mxu0 0.0
  %125 = vmatpush1.msra.mxu0 %v66
  %126 = vmatprep.subr.mxu0 0.0
  %127 = vmatpush1.msra.mxu0 %v67
  %128 = vmatprep.subr.mxu0 0.0
  %129 = vmatpush1.msra.mxu0 %v68
  %130 = vmatprep.subr.mxu0 0.0
  %131 = vmatpush1.msra.mxu0 %v69
  %132 = vmatprep.subr.mxu0 0.0
  %133 = vmatpush1.msra.mxu0 %v70
  %134 = vmatprep.subr.mxu0 0.0
  %135 = vmatpush1.msra.mxu0 %v71
  %136 = vmatprep.subr.mxu0 0.0
  %137 = vmatpush1.msra.mxu0 %v72
  %138 = vmatprep.subr.mxu0 0.0
  %139 = vmatpush1.msra.mxu0 %v73
  %140 = vmatprep.subr.mxu0 0.0
  %141 = vmatpush1.msra.mxu0 %v74
  %142 = vmatprep.subr.mxu0 0.0
  %143 = vmatpush1.msra.mxu0 %v75
  %144 = vmatprep.subr.mxu0 0.0
  %145 = vmatpush1.msra.mxu0 %v76
  %146 = vmatprep.subr.mxu0 0.0
  %147 = vmatpush1.msra.mxu0 %v77
  %148 = vmatprep.subr.mxu0 0.0
  %149 = vmatpush1.msra.mxu0 %v78
  %150 = vmatprep.subr.mxu0 0.0
  %151 = vmatpush1.msra.mxu0 %v79
  %152 = vmatprep.subr.mxu0 0.0
  %153 = vmatpush1.msra.mxu0 %v80
  %154 = vmatprep.subr.mxu0 0.0
  %155 = vmatpush1.msra.mxu0 %v81
  %156 = vmatprep.subr.mxu0 0.0
  %157 = vmatpush1.msra.mxu0 %v82
  %158 = vmatprep.subr.mxu0 0.0
  %159 = vmatpush1.msra.mxu0 %v83
  %160 = vmatprep.subr.mxu0 0.0
  %161 = vmatpush1.msra.mxu0 %v84
  %162 = vmatprep.subr.mxu0 0.0
  %163 = vmatpush1.msra.mxu0 0.0
  %164 = vmatprep.subr.mxu0 0.0
  %165 = vmatpush1.msra.mxu0 0.0
  %166 = vmatprep.subr.mxu0 0.0
  %167 = vmatpush1.msra.mxu0 0.0
  %168 = vmatprep.subr.mxu0 0.0
  %169 = vmatpush1.msra.mxu0 0.0
  %170 = vmatprep.subr.mxu0 0.0
  %171 = vmatpush1.msra.mxu0 0.0
  %172 = vmatprep.subr.mxu0 0.0
  %173 = vmatpush1.msra.mxu0 0.0
  %174 = vmatprep.subr.mxu0 0.0
  %175 = vmatpush1.msra.mxu0 0.0
  %176 = vmatprep.subr.mxu0 0.0
  %177 = vmatpush1.msra.mxu0 0.0
  %178 = vmatprep.mubr.f32.mxu0 %v94
  %179 = vmatmul.mubr.f32.gmra.mrb[0].mxu0 %v47
  %v180 = vpop.f32.mrb[0].mxu0
  %v181 = vadd.f32 %v90, %v180
  %v182 = vpop.f32.mrb[0].mxu0
  %183 = vmatprep.mubr.f32.mxu0 %v97
  %184 = vmatmul.mubr.f32.gmra.mrb[0].mxu0 %v49
  %v185 = vpop.f32.mrb[0].mxu0
  %v186 = vadd.f32 %v90, %v185
  %v187 = vpop.f32.mrb[0].mxu0
  %188 = vmatprep.mubr.f32.mxu0 %v100
  %189 = vmatmul.mubr.f32.gmra.mrb[0].mxu0 %v51
  %v190 = vpop.f32.mrb[0].mxu0
  %v191 = vadd.f32 %v90, %v190
  %v192 = vpop.f32.mrb[0].mxu0
  %193 = vmatprep.mubr.f32.mxu0 %v103
  %194 = vmatmul.mubr.f32.gmra.mrb[0].mxu0 %v53
  %v195 = vpop.f32.mrb[0].mxu0
  %v196 = vadd.f32 %v90, %v195
  %v197 = vpop.f32.mrb[0].mxu0
  %198 = vmatprep.mubr.f32.mxu0 %v106
  %199 = vmatmul.mubr.f32.gmra.mrb[0].mxu0 %v55
  %v200 = vpop.f32.mrb[0].mxu0
  %v201 = vadd.f32 %v90, %v200
  %v202 = vpop.f32.mrb[0].mxu0
  %203 = vmatprep.mubr.f32.mxu0 %v109
  %204 = vmatmul.mubr.f32.gmra.mrb[0].mxu0 %v57
  %v205 = vpop.f32.mrb[0].mxu0
  %v206 = vadd.f32 %v90, %v205
  %v207 = vpop.f32.mrb[0].mxu0
  %208 = vmatprep.mubr.f32.mxu0 %v112
  %209 = vmatmul.mubr.f32.gmra.mrb[0].mxu0 %v59
  %v210 = vpop.f32.mrb[0].mxu0
  %v211 = vadd.f32 %v90, %v210
  %v212 = vpop.f32.mrb[0].mxu0
  %213 = vdwg.mxu0
  %v214 = vld [vmem:[%s1] sm:$0xff]
  %v215 = vld [vmem:[%s1 + $0x8] sm:$0xff]
  %v216 = vld [vmem:[%s1 + $0x10] sm:$0xff]
  %v217 = vld [vmem:[%s1 + $0x18] sm:$0xff]
  %v218 = vld [vmem:[%s1 + $0x20] sm:$0xff]
  %v219 = vld [vmem:[%s1 + $0x28] sm:$0xff]
  %v220 = vld [vmem:[%s1 + $0x30] sm:$0xff]
  %v221 = vld [vmem:[%s4] sm:$0xff]
  %v222 = vld [vmem:[%s4 + $0x8] sm:$0xff]
  %v223 = vld [vmem:[%s4 + $0x10] sm:$0xff]
  %v224 = vld [vmem:[%s4 + $0x18] sm:$0xff]
  %v225 = vld [vmem:[%s4 + $0x20] sm:$0xff]
  %v226 = vld [vmem:[%s4 + $0x28] sm:$0xff]
  %v227 = vld [vmem:[%s4 + $0x30] sm:$0xff]
  %v228 = vld [vmem:[%s4 + $0x38] sm:$0xff]
  %v229 = vld [vmem:[%s5] sm:$0xff]
  %v230 = vld [vmem:[%s5 + $0x8] sm:$0x1f]
  %vm231 = vcmask 105472
  %v233 = vsel %vm231, %v214, 0
  %v236 = vsel %vm231, %v215, 0
  %v239 = vsel %vm231, %v216, 0
  %v242 = vsel %vm231, %v217, 0
  %v245 = vsel %vm231, %v218, 0
  %v248 = vsel %vm231, %v219, 0
  %v251 = vsel %vm231, %v220, 0
  %vm253 = vcmask 1044480
  %v255 = vsel %vm253, %v230, 0
  %257 = vmatprep.subr.mxu0 0.0
  %258 = vmatpush1.msra.mxu0 %v229
  %259 = vmatprep.subr.mxu0 0.0
  %260 = vmatpush1.msra.mxu0 %v255
  %261 = vmatprep.subr.mxu0 0.0
  %262 = vmatpush1.msra.mxu0 0.0
  %263 = vmatprep.subr.mxu0 0.0
  %264 = vmatpush1.msra.mxu0 0.0
  %265 = vmatprep.subr.mxu0 0.0
  %266 = vmatpush1.msra.mxu0 0.0
  %267 = vmatprep.subr.mxu0 0.0
  %268 = vmatpush1.msra.mxu0 0.0
  %269 = vmatprep.subr.mxu0 0.0
  %270 = vmatpush1.msra.mxu0 0.0
  %271 = vmatprep.subr.mxu0 0.0
  %272 = vmatpush1.msra.mxu0 0.0
  %273 = vmatprep.subr.mxu0 0.0
  %274 = vmatpush1.msra.mxu0 0.0
  %275 = vmatprep.subr.mxu0 0.0
  %276 = vmatpush1.msra.mxu0 0.0
  %277 = vmatprep.subr.mxu0 0.0
  %278 = vmatpush1.msra.mxu0 0.0
  %279 = vmatprep.subr.mxu0 0.0
  %280 = vmatpush1.msra.mxu0 0.0
  %281 = vmatprep.subr.mxu0 0.0
  %282 = vmatpush1.msra.mxu0 0.0
  %283 = vmatprep.subr.mxu0 0.0
  %284 = vmatpush1.msra.mxu0 0.0
  %285 = vmatprep.subr.mxu0 0.0
  %286 = vmatpush1.msra.mxu0 0.0
  %287 = vmatprep.subr.mxu0 0.0
  %288 = vmatpush1.msra.mxu0 0.0
  %289 = vmatprep.subr.mxu0 0.0
  %290 = vmatpush1.msra.mxu0 0.0
  %291 = vmatprep.subr.mxu0 0.0
  %292 = vmatpush1.msra.mxu0 0.0
  %293 = vmatprep.subr.mxu0 0.0
  %294 = vmatpush1.msra.mxu0 0.0
  %295 = vmatprep.subr.mxu0 0.0
  %296 = vmatpush1.msra.mxu0 0.0
  %297 = vmatprep.subr.mxu0 0.0
  %298 = vmatpush1.msra.mxu0 0.0
  %299 = vmatprep.subr.mxu0 0.0
  %300 = vmatpush1.msra.mxu0 0.0
  %301 = vmatprep.subr.mxu0 0.0
  %302 = vmatpush1.msra.mxu0 0.0
  %303 = vmatprep.subr.mxu0 0.0
  %304 = vmatpush1.msra.mxu0 0.0
  %305 = vmatprep.subr.mxu0 0.0
  %306 = vmatpush1.msra.mxu0 0.0
  %307 = vmatprep.subr.mxu0 0.0
  %308 = vmatpush1.msra.mxu0 0.0
  %309 = vmatprep.subr.mxu0 0.0
  %310 = vmatpush1.msra.mxu0 0.0
  %311 = vmatprep.subr.mxu0 0.0
  %312 = vmatpush1.msra.mxu0 0.0
  %313 = vmatprep.subr.mxu0 0.0
  %314 = vmatpush1.msra.mxu0 0.0
  %315 = vmatprep.subr.mxu0 0.0
  %316 = vmatpush1.msra.mxu0 0.0
  %317 = vmatprep.subr.mxu0 0.0
  %318 = vmatpush1.msra.mxu0 0.0
  %319 = vmatprep.subr.mxu0 0.0
  %320 = vmatpush1.msra.mxu0 0.0
  %321 = vmatprep.mubr.f32.mxu0 0.0
  %322 = vmatmul.mubr.f32.gmra.mrb[0].mxu0 %v233
  %v323 = vpop.f32.mrb[0].mxu0
  %v324 = vadd.f32 0.0, %v323
  %v325 = vpop.f32.mrb[0].mxu0
  %326 = vmatprep.mubr.f32.mxu0 0.0
  %327 = vmatmul.mubr.f32.gmra.mrb[0].mxu0 %v236
  %v328 = vpop.f32.mrb[0].mxu0
  %v329 = vadd.f32 0.0, %v328
  %v330 = vpop.f32.mrb[0].mxu0
  %331 = vmatprep.mubr.f32.mxu0 0.0
  %332 = vmatmul.mubr.f32.gmra.mrb[0].mxu0 %v239
  %v333 = vpop.f32.mrb[0].mxu0
  %v334 = vadd.f32 0.0, %v333
  %v335 = vpop.f32.mrb[0].mxu0
  %336 = vmatprep.mubr.f32.mxu0 0.0
  %337 = vmatmul.mubr.f32.gmra.mrb[0].mxu0 %v242
  %v338 = vpop.f32.mrb[0].mxu0
  %v339 = vadd.f32 0.0, %v338
  %v340 = vpop.f32.mrb[0].mxu0
  %341 = vmatprep.mubr.f32.mxu0 0.0
  %342 = vmatmul.mubr.f32.gmra.mrb[0].mxu0 %v245
  %v343 = vpop.f32.mrb[0].mxu0
  %v344 = vadd.f32 0.0, %v343
  %v345 = vpop.f32.mrb[0].mxu0
  %346 = vmatprep.mubr.f32.mxu0 0.0
  %347 = vmatmul.mubr.f32.gmra.mrb[0].mxu0 %v248
  %v348 = vpop.f32.mrb[0].mxu0
  %v349 = vadd.f32 0.0, %v348
  %v350 = vpop.f32.mrb[0].mxu0
  %351 = vmatprep.mubr.f32.mxu0 0.0
  %352 = vmatmul.mubr.f32.gmra.mrb[0].mxu0 %v251
  %v353 = vpop.f32.mrb[0].mxu0
  %v354 = vadd.f32 0.0, %v353
  %v355 = vpop.f32.mrb[0].mxu0
  %356 = vdwg.mxu0
  %v358 = vsel %vm92, %v181, 0
  %v361 = vsel %vm92, %v186, 0
  %v364 = vsel %vm92, %v191, 0
  %v367 = vsel %vm92, %v196, 0
  %v370 = vsel %vm92, %v201, 0
  %v373 = vsel %vm92, %v206, 0
  %v376 = vsel %vm92, %v211, 0
  %378 = vmatprep.subr.mxu0 0.0
  %379 = vmatpush1.msra.mxu0 %v221
  %380 = vmatprep.subr.mxu0 0.0
  %381 = vmatpush1.msra.mxu0 %v222
  %382 = vmatprep.subr.mxu0 0.0
  %383 = vmatpush1.msra.mxu0 %v223
  %384 = vmatprep.subr.mxu0 0.0
  %385 = vmatpush1.msra.mxu0 %v224
  %386 = vmatprep.subr.mxu0 0.0
  %387 = vmatpush1.msra.mxu0 %v225
  %388 = vmatprep.subr.mxu0 0.0
  %389 = vmatpush1.msra.mxu0 %v226
  %390 = vmatprep.subr.mxu0 0.0
  %391 = vmatpush1.msra.mxu0 %v227
  %392 = vmatprep.subr.mxu0 0.0
  %393 = vmatpush1.msra.mxu0 %v228
  %394 = vmatprep.subr.mxu0 0.0
  %395 = vmatpush1.msra.mxu0 0.0
  %396 = vmatprep.subr.mxu0 0.0
  %397 = vmatpush1.msra.mxu0 0.0
  %398 = vmatprep.subr.mxu0 0.0
  %399 = vmatpush1.msra.mxu0 0.0
  %400 = vmatprep.subr.mxu0 0.0
  %401 = vmatpush1.msra.mxu0 0.0
  %402 = vmatprep.subr.mxu0 0.0
  %403 = vmatpush1.msra.mxu0 0.0
  %404 = vmatprep.subr.mxu0 0.0
  %405 = vmatpush1.msra.mxu0 0.0
  %406 = vmatprep.subr.mxu0 0.0
  %407 = vmatpush1.msra.mxu0 0.0
  %408 = vmatprep.subr.mxu0 0.0
  %409 = vmatpush1.msra.mxu0 0.0
  %410 = vmatprep.subr.mxu0 0.0
  %411 = vmatpush1.msra.mxu0 0.0
  %412 = vmatprep.subr.mxu0 0.0
  %413 = vmatpush1.msra.mxu0 0.0
  %414 = vmatprep.subr.mxu0 0.0
  %415 = vmatpush1.msra.mxu0 0.0
  %416 = vmatprep.subr.mxu0 0.0
  %417 = vmatpush1.msra.mxu0 0.0
  %418 = vmatprep.subr.mxu0 0.0
  %419 = vmatpush1.msra.mxu0 0.0
  %420 = vmatprep.subr.mxu0 0.0
  %421 = vmatpush1.msra.mxu0 0.0
  %422 = vmatprep.subr.mxu0 0.0
  %423 = vmatpush1.msra.mxu0 0.0
  %424 = vmatprep.subr.mxu0 0.0
  %425 = vmatpush1.msra.mxu0 0.0
  %426 = vmatprep.subr.mxu0 0.0
  %427 = vmatpush1.msra.mxu0 0.0
  %428 = vmatprep.subr.mxu0 0.0
  %429 = vmatpush1.msra.mxu0 0.0
  %430 = vmatprep.subr.mxu0 0.0
  %431 = vmatpush1.msra.mxu0 0.0
  %432 = vmatprep.subr.mxu0 0.0
  %433 = vmatpush1.msra.mxu0 0.0
  %434 = vmatprep.subr.mxu0 0.0
  %435 = vmatpush1.msra.mxu0 0.0
  %436 = vmatprep.subr.mxu0 0.0
  %437 = vmatpush1.msra.mxu0 0.0
  %438 = vmatprep.subr.mxu0 0.0
  %439 = vmatpush1.msra.mxu0 0.0
  %440 = vmatprep.subr.mxu0 0.0
  %441 = vmatpush1.msra.mxu0 0.0
  %442 = vmatprep.mubr.f32.mxu0 0.0
  %443 = vmatmul.mubr.f32.gmra.mrb[0].mxu0 %v358
  %v444 = vpop.f32.mrb[0].mxu0
  %v445 = vadd.f32 %v324, %v444
  %v446 = vpop.f32.mrb[0].mxu0
  %447 = vmatprep.mubr.f32.mxu0 0.0
  %448 = vmatmul.mubr.f32.gmra.mrb[0].mxu0 %v361
  %v449 = vpop.f32.mrb[0].mxu0
  %v450 = vadd.f32 %v329, %v449
  %v451 = vpop.f32.mrb[0].mxu0
  %452 = vmatprep.mubr.f32.mxu0 0.0
  %453 = vmatmul.mubr.f32.gmra.mrb[0].mxu0 %v364
  %v454 = vpop.f32.mrb[0].mxu0
  %v455 = vadd.f32 %v334, %v454
  %v456 = vpop.f32.mrb[0].mxu0
  %457 = vmatprep.mubr.f32.mxu0 0.0
  %458 = vmatmul.mubr.f32.gmra.mrb[0].mxu0 %v367
  %v459 = vpop.f32.mrb[0].mxu0
  %v460 = vadd.f32 %v339, %v459
  %v461 = vpop.f32.mrb[0].mxu0
  %462 = vmatprep.mubr.f32.mxu0 0.0
  %463 = vmatmul.mubr.f32.gmra.mrb[0].mxu0 %v370
  %v464 = vpop.f32.mrb[0].mxu0
  %v465 = vadd.f32 %v344, %v464
  %v466 = vpop.f32.mrb[0].mxu0
  %467 = vmatprep.mubr.f32.mxu0 0.0
  %468 = vmatmul.mubr.f32.gmra.mrb[0].mxu0 %v373
  %v469 = vpop.f32.mrb[0].mxu0
  %v470 = vadd.f32 %v349, %v469
  %v471 = vpop.f32.mrb[0].mxu0
  %472 = vmatprep.mubr.f32.mxu0 0.0
  %473 = vmatmul.mubr.f32.gmra.mrb[0].mxu0 %v376
  %v474 = vpop.f32.mrb[0].mxu0
  %v475 = vadd.f32 %v354, %v474
  %v476 = vpop.f32.mrb[0].mxu0
  %477 = vdwg.mxu0
  %v478 = vld [vmem:[%s6] sm:$0x1]
  %v480 = vlaneseq
  %v481 = vshrl.u32 %v480, 7
  %v482 = vsub.s32 0, %v481
  %v483 = vrot.slane %v478, %v482
  %v485 = vadd.f32 %v445, %v483
  %v486 = vadd.f32 %v450, %v483
  %v487 = vadd.f32 %v455, %v483
  %v488 = vadd.f32 %v460, %v483
  %v489 = vadd.f32 %v465, %v483
  %v490 = vadd.f32 %v470, %v483
  %v491 = vadd.f32 %v475, %v483
  %vm492 = vcmp.ge.f32.partialorder %v485, 0.0
  %vm493 = vcmp.ge.f32.partialorder %v486, 0.0
  %vm494 = vcmp.ge.f32.partialorder %v487, 0.0
  %vm495 = vcmp.ge.f32.partialorder %v488, 0.0
  %vm496 = vcmp.ge.f32.partialorder %v489, 0.0
  %vm497 = vcmp.ge.f32.partialorder %v490, 0.0
  %vm498 = vcmp.ge.f32.partialorder %v491, 0.0
  %v499 = vmul.f32 %v485, 0.01
  %v500 = vmul.f32 %v486, 0.01
  %v501 = vmul.f32 %v487, 0.01
  %v502 = vmul.f32 %v488, 0.01
  %v503 = vmul.f32 %v489, 0.01
  %v504 = vmul.f32 %v490, 0.01
  %v505 = vmul.f32 %v491, 0.01
  %v506 = vsel %vm492, %v485, %v499
  %v507 = vsel %vm493, %v486, %v500
  %v508 = vsel %vm494, %v487, %v501
  %v509 = vsel %vm495, %v488, %v502
  %v510 = vsel %vm496, %v489, %v503
  %v511 = vsel %vm497, %v490, %v504
  %v512 = vsel %vm498, %v491, %v505
  %v513 = vld [vmem:[%s7] sm:$0xff]
  %v514 = vld [vmem:[%s7 + $0x8] sm:$0xff]
  %v515 = vld [vmem:[%s7 + $0x10] sm:$0xff]
  %v516 = vld [vmem:[%s7 + $0x18] sm:$0xff]
  %v517 = vld [vmem:[%s7 + $0x20] sm:$0xff]
  %v518 = vld [vmem:[%s7 + $0x28] sm:$0xff]
  %v519 = vld [vmem:[%s7 + $0x30] sm:$0xff]
  %v520 = vld [vmem:[%s7 + $0x38] sm:$0xff]
  %v521 = vld [vmem:[%s7 + $0x40] sm:$0xff]
  %v522 = vld [vmem:[%s7 + $0x48] sm:$0xff]
  %v523 = vld [vmem:[%s7 + $0x50] sm:$0xff]
  %v524 = vld [vmem:[%s7 + $0x58] sm:$0xff]
  %v525 = vld [vmem:[%s8] sm:$0x1]
  %v527 = vlaneseq
  %v528 = vshrl.u32 %v527, 7
  %v529 = vsub.s32 0, %v528
  %v530 = vrot.slane %v525, %v529
  %vm532 = vcmask 785408
  %v534 = vsel %vm532, %v506, 0
  %v537 = vsel %vm532, %v507, 0
  %v540 = vsel %vm532, %v508, 0
  %v543 = vsel %vm532, %v509, 0
  %v546 = vsel %vm532, %v510, 0
  %v549 = vsel %vm532, %v511, 0
  %v552 = vsel %vm532, %v512, 0
  %554 = vmatprep.subr.mxu0 0.0
  %555 = vmatpush1.msra.mxu0 %v513
  %556 = vmatprep.subr.mxu0 0.0
  %557 = vmatpush1.msra.mxu0 %v514
  %558 = vmatprep.subr.mxu0 0.0
  %559 = vmatpush1.msra.mxu0 %v515
  %560 = vmatprep.subr.mxu0 0.0
  %561 = vmatpush1.msra.mxu0 %v516
  %562 = vmatprep.subr.mxu0 0.0
  %563 = vmatpush1.msra.mxu0 %v517
  %564 = vmatprep.subr.mxu0 0.0
  %565 = vmatpush1.msra.mxu0 %v518
  %566 = vmatprep.subr.mxu0 0.0
  %567 = vmatpush1.msra.mxu0 %v519
  %568 = vmatprep.subr.mxu0 0.0
  %569 = vmatpush1.msra.mxu0 %v520
  %570 = vmatprep.subr.mxu0 0.0
  %571 = vmatpush1.msra.mxu0 %v521
  %572 = vmatprep.subr.mxu0 0.0
  %573 = vmatpush1.msra.mxu0 %v522
  %574 = vmatprep.subr.mxu0 0.0
  %575 = vmatpush1.msra.mxu0 %v523
  %576 = vmatprep.subr.mxu0 0.0
  %577 = vmatpush1.msra.mxu0 %v524
  %578 = vmatprep.subr.mxu0 0.0
  %579 = vmatpush1.msra.mxu0 0.0
  %580 = vmatprep.subr.mxu0 0.0
  %581 = vmatpush1.msra.mxu0 0.0
  %582 = vmatprep.subr.mxu0 0.0
  %583 = vmatpush1.msra.mxu0 0.0
  %584 = vmatprep.subr.mxu0 0.0
  %585 = vmatpush1.msra.mxu0 0.0
  %586 = vmatprep.subr.mxu0 0.0
  %587 = vmatpush1.msra.mxu0 0.0
  %588 = vmatprep.subr.mxu0 0.0
  %589 = vmatpush1.msra.mxu0 0.0
  %590 = vmatprep.subr.mxu0 0.0
  %591 = vmatpush1.msra.mxu0 0.0
  %592 = vmatprep.subr.mxu0 0.0
  %593 = vmatpush1.msra.mxu0 0.0
  %594 = vmatprep.subr.mxu0 0.0
  %595 = vmatpush1.msra.mxu0 0.0
  %596 = vmatprep.subr.mxu0 0.0
  %597 = vmatpush1.msra.mxu0 0.0
  %598 = vmatprep.subr.mxu0 0.0
  %599 = vmatpush1.msra.mxu0 0.0
  %600 = vmatprep.subr.mxu0 0.0
  %601 = vmatpush1.msra.mxu0 0.0
  %602 = vmatprep.subr.mxu0 0.0
  %603 = vmatpush1.msra.mxu0 0.0
  %604 = vmatprep.subr.mxu0 0.0
  %605 = vmatpush1.msra.mxu0 0.0
  %606 = vmatprep.subr.mxu0 0.0
  %607 = vmatpush1.msra.mxu0 0.0
  %608 = vmatprep.subr.mxu0 0.0
  %609 = vmatpush1.msra.mxu0 0.0
  %610 = vmatprep.subr.mxu0 0.0
  %611 = vmatpush1.msra.mxu0 0.0
  %612 = vmatprep.subr.mxu0 0.0
  %613 = vmatpush1.msra.mxu0 0.0
  %614 = vmatprep.subr.mxu0 0.0
  %615 = vmatpush1.msra.mxu0 0.0
  %616 = vmatprep.subr.mxu0 0.0
  %617 = vmatpush1.msra.mxu0 0.0
  %618 = vmatprep.mubr.f32.mxu0 0.0
  %619 = vmatmul.mubr.f32.gmra.mrb[0].mxu0 %v534
  %v620 = vpop.f32.mrb[0].mxu0
  %v621 = vadd.f32 %v530, %v620
  %v622 = vpop.f32.mrb[0].mxu0
  %623 = vmatprep.mubr.f32.mxu0 0.0
  %624 = vmatmul.mubr.f32.gmra.mrb[0].mxu0 %v537
  %v625 = vpop.f32.mrb[0].mxu0
  %v626 = vadd.f32 %v530, %v625
  %v627 = vpop.f32.mrb[0].mxu0
  %628 = vmatprep.mubr.f32.mxu0 0.0
  %629 = vmatmul.mubr.f32.gmra.mrb[0].mxu0 %v540
  %v630 = vpop.f32.mrb[0].mxu0
  %v631 = vadd.f32 %v530, %v630
  %v632 = vpop.f32.mrb[0].mxu0
  %633 = vmatprep.mubr.f32.mxu0 0.0
  %634 = vmatmul.mubr.f32.gmra.mrb[0].mxu0 %v543
  %v635 = vpop.f32.mrb[0].mxu0
  %v636 = vadd.f32 %v530, %v635
  %v637 = vpop.f32.mrb[0].mxu0
  %638 = vmatprep.mubr.f32.mxu0 0.0
  %639 = vmatmul.mubr.f32.gmra.mrb[0].mxu0 %v546
  %v640 = vpop.f32.mrb[0].mxu0
  %v641 = vadd.f32 %v530, %v640
  %v642 = vpop.f32.mrb[0].mxu0
  %643 = vmatprep.mubr.f32.mxu0 0.0
  %644 = vmatmul.mubr.f32.gmra.mrb[0].mxu0 %v549
  %v645 = vpop.f32.mrb[0].mxu0
  %v646 = vadd.f32 %v530, %v645
  %v647 = vpop.f32.mrb[0].mxu0
  %648 = vmatprep.mubr.f32.mxu0 0.0
  %649 = vmatmul.mubr.f32.gmra.mrb[0].mxu0 %v552
  %v650 = vpop.f32.mrb[0].mxu0
  %v651 = vadd.f32 %v530, %v650
  %v652 = vpop.f32.mrb[0].mxu0
  %653 = vdwg.mxu0
  %vm654 = vcmp.ge.f32.partialorder %v621, 0.0
  %vm655 = vcmp.ge.f32.partialorder %v626, 0.0
  %vm656 = vcmp.ge.f32.partialorder %v631, 0.0
  %vm657 = vcmp.ge.f32.partialorder %v636, 0.0
  %vm658 = vcmp.ge.f32.partialorder %v641, 0.0
  %vm659 = vcmp.ge.f32.partialorder %v646, 0.0
  %vm660 = vcmp.ge.f32.partialorder %v651, 0.0
  %v661 = vmul.f32 %v621, 0.01
  %v662 = vmul.f32 %v626, 0.01
  %v663 = vmul.f32 %v631, 0.01
  %v664 = vmul.f32 %v636, 0.01
  %v665 = vmul.f32 %v641, 0.01
  %v666 = vmul.f32 %v646, 0.01
  %v667 = vmul.f32 %v651, 0.01
  %v668 = vsel %vm654, %v621, %v661
  %v669 = vsel %vm655, %v626, %v662
  %v670 = vsel %vm656, %v631, %v663
  %v671 = vsel %vm657, %v636, %v664
  %v672 = vsel %vm658, %v641, %v665
  %v673 = vsel %vm659, %v646, %v666
  %v674 = vsel %vm660, %v651, %v667
  %v675 = vld [vmem:[%s9] sm:$0xff]
  %v676 = vld [vmem:[%s9 + $0x8] sm:$0xff]
  %v677 = vld [vmem:[%s9 + $0x10] sm:$0xff]
  %v678 = vld [vmem:[%s9 + $0x18] sm:$0xff]
  %v679 = vld [vmem:[%s9 + $0x20] sm:$0xff]
  %v680 = vld [vmem:[%s9 + $0x28] sm:$0xff]
  %v681 = vld [vmem:[%s9 + $0x30] sm:$0xff]
  %v682 = vld [vmem:[%s9 + $0x38] sm:$0xff]
  %v683 = vld [vmem:[%s10] sm:$0xff]
  %v684 = vld [vmem:[%s10 + $0x8] sm:$0x1f]
  %v686 = vsel %vm253, %v684, 0
  %688 = vmatprep.subr.mxu0 0.0
  %689 = vmatpush1.msra.mxu0 %v683
  %690 = vmatprep.subr.mxu0 0.0
  %691 = vmatpush1.msra.mxu0 %v686
  %692 = vmatprep.subr.mxu0 0.0
  %693 = vmatpush1.msra.mxu0 0.0
  %694 = vmatprep.subr.mxu0 0.0
  %695 = vmatpush1.msra.mxu0 0.0
  %696 = vmatprep.subr.mxu0 0.0
  %697 = vmatpush1.msra.mxu0 0.0
  %698 = vmatprep.subr.mxu0 0.0
  %699 = vmatpush1.msra.mxu0 0.0
  %700 = vmatprep.subr.mxu0 0.0
  %701 = vmatpush1.msra.mxu0 0.0
  %702 = vmatprep.subr.mxu0 0.0
  %703 = vmatpush1.msra.mxu0 0.0
  %704 = vmatprep.subr.mxu0 0.0
  %705 = vmatpush1.msra.mxu0 0.0
  %706 = vmatprep.subr.mxu0 0.0
  %707 = vmatpush1.msra.mxu0 0.0
  %708 = vmatprep.subr.mxu0 0.0
  %709 = vmatpush1.msra.mxu0 0.0
  %710 = vmatprep.subr.mxu0 0.0
  %711 = vmatpush1.msra.mxu0 0.0
  %712 = vmatprep.subr.mxu0 0.0
  %713 = vmatpush1.msra.mxu0 0.0
  %714 = vmatprep.subr.mxu0 0.0
  %715 = vmatpush1.msra.mxu0 0.0
  %716 = vmatprep.subr.mxu0 0.0
  %717 = vmatpush1.msra.mxu0 0.0
  %718 = vmatprep.subr.mxu0 0.0
  %719 = vmatpush1.msra.mxu0 0.0
  %720 = vmatprep.subr.mxu0 0.0
  %721 = vmatpush1.msra.mxu0 0.0
  %722 = vmatprep.subr.mxu0 0.0
  %723 = vmatpush1.msra.mxu0 0.0
  %724 = vmatprep.subr.mxu0 0.0
  %725 = vmatpush1.msra.mxu0 0.0
  %726 = vmatprep.subr.mxu0 0.0
  %727 = vmatpush1.msra.mxu0 0.0
  %728 = vmatprep.subr.mxu0 0.0
  %729 = vmatpush1.msra.mxu0 0.0
  %730 = vmatprep.subr.mxu0 0.0
  %731 = vmatpush1.msra.mxu0 0.0
  %732 = vmatprep.subr.mxu0 0.0
  %733 = vmatpush1.msra.mxu0 0.0
  %734 = vmatprep.subr.mxu0 0.0
  %735 = vmatpush1.msra.mxu0 0.0
  %736 = vmatprep.subr.mxu0 0.0
  %737 = vmatpush1.msra.mxu0 0.0
  %738 = vmatprep.subr.mxu0 0.0
  %739 = vmatpush1.msra.mxu0 0.0
  %740 = vmatprep.subr.mxu0 0.0
  %741 = vmatpush1.msra.mxu0 0.0
  %742 = vmatprep.subr.mxu0 0.0
  %743 = vmatpush1.msra.mxu0 0.0
  %744 = vmatprep.subr.mxu0 0.0
  %745 = vmatpush1.msra.mxu0 0.0
  %746 = vmatprep.subr.mxu0 0.0
  %747 = vmatpush1.msra.mxu0 0.0
  %748 = vmatprep.subr.mxu0 0.0
  %749 = vmatpush1.msra.mxu0 0.0
  %750 = vmatprep.subr.mxu0 0.0
  %751 = vmatpush1.msra.mxu0 0.0
  %752 = vmatprep.mubr.f32.mxu0 0.0
  %753 = vmatmul.mubr.f32.gmra.mrb[0].mxu0 %v233
  %v754 = vpop.f32.mrb[0].mxu0
  %v755 = vadd.f32 0.0, %v754
  %v756 = vpop.f32.mrb[0].mxu0
  %757 = vmatprep.mubr.f32.mxu0 0.0
  %758 = vmatmul.mubr.f32.gmra.mrb[0].mxu0 %v236
  %v759 = vpop.f32.mrb[0].mxu0
  %v760 = vadd.f32 0.0, %v759
  %v761 = vpop.f32.mrb[0].mxu0
  %762 = vmatprep.mubr.f32.mxu0 0.0
  %763 = vmatmul.mubr.f32.gmra.mrb[0].mxu0 %v239
  %v764 = vpop.f32.mrb[0].mxu0
  %v765 = vadd.f32 0.0, %v764
  %v766 = vpop.f32.mrb[0].mxu0
  %767 = vmatprep.mubr.f32.mxu0 0.0
  %768 = vmatmul.mubr.f32.gmra.mrb[0].mxu0 %v242
  %v769 = vpop.f32.mrb[0].mxu0
  %v770 = vadd.f32 0.0, %v769
  %v771 = vpop.f32.mrb[0].mxu0
  %772 = vmatprep.mubr.f32.mxu0 0.0
  %773 = vmatmul.mubr.f32.gmra.mrb[0].mxu0 %v245
  %v774 = vpop.f32.mrb[0].mxu0
  %v775 = vadd.f32 0.0, %v774
  %v776 = vpop.f32.mrb[0].mxu0
  %777 = vmatprep.mubr.f32.mxu0 0.0
  %778 = vmatmul.mubr.f32.gmra.mrb[0].mxu0 %v248
  %v779 = vpop.f32.mrb[0].mxu0
  %v780 = vadd.f32 0.0, %v779
  %v781 = vpop.f32.mrb[0].mxu0
  %782 = vmatprep.mubr.f32.mxu0 0.0
  %783 = vmatmul.mubr.f32.gmra.mrb[0].mxu0 %v251
  %v784 = vpop.f32.mrb[0].mxu0
  %v785 = vadd.f32 0.0, %v784
  %v786 = vpop.f32.mrb[0].mxu0
  %787 = vdwg.mxu0
  %788 = vmatprep.subr.mxu0 0.0
  %789 = vmatpush1.msra.mxu0 %v675
  %790 = vmatprep.subr.mxu0 0.0
  %791 = vmatpush1.msra.mxu0 %v676
  %792 = vmatprep.subr.mxu0 0.0
  %793 = vmatpush1.msra.mxu0 %v677
  %794 = vmatprep.subr.mxu0 0.0
  %795 = vmatpush1.msra.mxu0 %v678
  %796 = vmatprep.subr.mxu0 0.0
  %797 = vmatpush1.msra.mxu0 %v679
  %798 = vmatprep.subr.mxu0 0.0
  %799 = vmatpush1.msra.mxu0 %v680
  %800 = vmatprep.subr.mxu0 0.0
  %801 = vmatpush1.msra.mxu0 %v681
  %802 = vmatprep.subr.mxu0 0.0
  %803 = vmatpush1.msra.mxu0 %v682
  %804 = vmatprep.subr.mxu0 0.0
  %805 = vmatpush1.msra.mxu0 0.0
  %806 = vmatprep.subr.mxu0 0.0
  %807 = vmatpush1.msra.mxu0 0.0
  %808 = vmatprep.subr.mxu0 0.0
  %809 = vmatpush1.msra.mxu0 0.0
  %810 = vmatprep.subr.mxu0 0.0
  %811 = vmatpush1.msra.mxu0 0.0
  %812 = vmatprep.subr.mxu0 0.0
  %813 = vmatpush1.msra.mxu0 0.0
  %814 = vmatprep.subr.mxu0 0.0
  %815 = vmatpush1.msra.mxu0 0.0
  %816 = vmatprep.subr.mxu0 0.0
  %817 = vmatpush1.msra.mxu0 0.0
  %818 = vmatprep.subr.mxu0 0.0
  %819 = vmatpush1.msra.mxu0 0.0
  %820 = vmatprep.subr.mxu0 0.0
  %821 = vmatpush1.msra.mxu0 0.0
  %822 = vmatprep.subr.mxu0 0.0
  %823 = vmatpush1.msra.mxu0 0.0
  %824 = vmatprep.subr.mxu0 0.0
  %825 = vmatpush1.msra.mxu0 0.0
  %826 = vmatprep.subr.mxu0 0.0
  %827 = vmatpush1.msra.mxu0 0.0
  %828 = vmatprep.subr.mxu0 0.0
  %829 = vmatpush1.msra.mxu0 0.0
  %830 = vmatprep.subr.mxu0 0.0
  %831 = vmatpush1.msra.mxu0 0.0
  %832 = vmatprep.subr.mxu0 0.0
  %833 = vmatpush1.msra.mxu0 0.0
  %834 = vmatprep.subr.mxu0 0.0
  %835 = vmatpush1.msra.mxu0 0.0
  %836 = vmatprep.subr.mxu0 0.0
  %837 = vmatpush1.msra.mxu0 0.0
  %838 = vmatprep.subr.mxu0 0.0
  %839 = vmatpush1.msra.mxu0 0.0
  %840 = vmatprep.subr.mxu0 0.0
  %841 = vmatpush1.msra.mxu0 0.0
  %842 = vmatprep.subr.mxu0 0.0
  %843 = vmatpush1.msra.mxu0 0.0
  %844 = vmatprep.subr.mxu0 0.0
  %845 = vmatpush1.msra.mxu0 0.0
  %846 = vmatprep.subr.mxu0 0.0
  %847 = vmatpush1.msra.mxu0 0.0
  %848 = vmatprep.subr.mxu0 0.0
  %849 = vmatpush1.msra.mxu0 0.0
  %850 = vmatprep.subr.mxu0 0.0
  %851 = vmatpush1.msra.mxu0 0.0
  %852 = vmatprep.mubr.f32.mxu0 0.0
  %853 = vmatmul.mubr.f32.gmra.mrb[0].mxu0 %v358
  %v854 = vpop.f32.mrb[0].mxu0
  %v855 = vadd.f32 %v755, %v854
  %v856 = vpop.f32.mrb[0].mxu0
  %857 = vmatprep.mubr.f32.mxu0 0.0
  %858 = vmatmul.mubr.f32.gmra.mrb[0].mxu0 %v361
  %v859 = vpop.f32.mrb[0].mxu0
  %v860 = vadd.f32 %v760, %v859
  %v861 = vpop.f32.mrb[0].mxu0
  %862 = vmatprep.mubr.f32.mxu0 0.0
  %863 = vmatmul.mubr.f32.gmra.mrb[0].mxu0 %v364
  %v864 = vpop.f32.mrb[0].mxu0
  %v865 = vadd.f32 %v765, %v864
  %v866 = vpop.f32.mrb[0].mxu0
  %867 = vmatprep.mubr.f32.mxu0 0.0
  %868 = vmatmul.mubr.f32.gmra.mrb[0].mxu0 %v367
  %v869 = vpop.f32.mrb[0].mxu0
  %v870 = vadd.f32 %v770, %v869
  %v871 = vpop.f32.mrb[0].mxu0
  %872 = vmatprep.mubr.f32.mxu0 0.0
  %873 = vmatmul.mubr.f32.gmra.mrb[0].mxu0 %v370
  %v874 = vpop.f32.mrb[0].mxu0
  %v875 = vadd.f32 %v775, %v874
  %v876 = vpop.f32.mrb[0].mxu0
  %877 = vmatprep.mubr.f32.mxu0 0.0
  %878 = vmatmul.mubr.f32.gmra.mrb[0].mxu0 %v373
  %v879 = vpop.f32.mrb[0].mxu0
  %v880 = vadd.f32 %v780, %v879
  %v881 = vpop.f32.mrb[0].mxu0
  %882 = vmatprep.mubr.f32.mxu0 0.0
  %883 = vmatmul.mubr.f32.gmra.mrb[0].mxu0 %v376
  %v884 = vpop.f32.mrb[0].mxu0
  %v885 = vadd.f32 %v785, %v884
  %v886 = vpop.f32.mrb[0].mxu0
  %887 = vdwg.mxu0
  %v888 = vld [vmem:[%s11] sm:$0xff]
  %v889 = vld [vmem:[%s11 + $0x8] sm:$0xff]
  %v890 = vld [vmem:[%s11 + $0x10] sm:$0xff]
  %v891 = vld [vmem:[%s11 + $0x18] sm:$0xff]
  %v892 = vld [vmem:[%s11 + $0x20] sm:$0xff]
  %v893 = vld [vmem:[%s11 + $0x28] sm:$0xff]
  %v894 = vld [vmem:[%s11 + $0x30] sm:$0xff]
  %v895 = vld [vmem:[%s11 + $0x38] sm:$0xff]
  %v896 = vld [vmem:[%s11 + $0x40] sm:$0xff]
  %v897 = vld [vmem:[%s11 + $0x48] sm:$0xff]
  %v898 = vld [vmem:[%s11 + $0x50] sm:$0xff]
  %v899 = vld [vmem:[%s11 + $0x58] sm:$0xff]
  %900 = vmatprep.subr.mxu0 0.0
  %901 = vmatpush1.msra.mxu0 %v888
  %902 = vmatprep.subr.mxu0 0.0
  %903 = vmatpush1.msra.mxu0 %v889
  %904 = vmatprep.subr.mxu0 0.0
  %905 = vmatpush1.msra.mxu0 %v890
  %906 = vmatprep.subr.mxu0 0.0
  %907 = vmatpush1.msra.mxu0 %v891
  %908 = vmatprep.subr.mxu0 0.0
  %909 = vmatpush1.msra.mxu0 %v892
  %910 = vmatprep.subr.mxu0 0.0
  %911 = vmatpush1.msra.mxu0 %v893
  %912 = vmatprep.subr.mxu0 0.0
  %913 = vmatpush1.msra.mxu0 %v894
  %914 = vmatprep.subr.mxu0 0.0
  %915 = vmatpush1.msra.mxu0 %v895
  %916 = vmatprep.subr.mxu0 0.0
  %917 = vmatpush1.msra.mxu0 %v896
  %918 = vmatprep.subr.mxu0 0.0
  %919 = vmatpush1.msra.mxu0 %v897
  %920 = vmatprep.subr.mxu0 0.0
  %921 = vmatpush1.msra.mxu0 %v898
  %922 = vmatprep.subr.mxu0 0.0
  %923 = vmatpush1.msra.mxu0 %v899
  %924 = vmatprep.subr.mxu0 0.0
  %925 = vmatpush1.msra.mxu0 0.0
  %926 = vmatprep.subr.mxu0 0.0
  %927 = vmatpush1.msra.mxu0 0.0
  %928 = vmatprep.subr.mxu0 0.0
  %929 = vmatpush1.msra.mxu0 0.0
  %930 = vmatprep.subr.mxu0 0.0
  %931 = vmatpush1.msra.mxu0 0.0
  %932 = vmatprep.subr.mxu0 0.0
  %933 = vmatpush1.msra.mxu0 0.0
  %934 = vmatprep.subr.mxu0 0.0
  %935 = vmatpush1.msra.mxu0 0.0
  %936 = vmatprep.subr.mxu0 0.0
  %937 = vmatpush1.msra.mxu0 0.0
  %938 = vmatprep.subr.mxu0 0.0
  %939 = vmatpush1.msra.mxu0 0.0
  %940 = vmatprep.subr.mxu0 0.0
  %941 = vmatpush1.msra.mxu0 0.0
  %942 = vmatprep.subr.mxu0 0.0
  %943 = vmatpush1.msra.mxu0 0.0
  %944 = vmatprep.subr.mxu0 0.0
  %945 = vmatpush1.msra.mxu0 0.0
  %946 = vmatprep.subr.mxu0 0.0
  %947 = vmatpush1.msra.mxu0 0.0
  %948 = vmatprep.subr.mxu0 0.0
  %949 = vmatpush1.msra.mxu0 0.0
  %950 = vmatprep.subr.mxu0 0.0
  %951 = vmatpush1.msra.mxu0 0.0
  %952 = vmatprep.subr.mxu0 0.0
  %953 = vmatpush1.msra.mxu0 0.0
  %954 = vmatprep.subr.mxu0 0.0
  %955 = vmatpush1.msra.mxu0 0.0
  %956 = vmatprep.subr.mxu0 0.0
  %957 = vmatpush1.msra.mxu0 0.0
  %958 = vmatprep.subr.mxu0 0.0
  %959 = vmatpush1.msra.mxu0 0.0
  %960 = vmatprep.subr.mxu0 0.0
  %961 = vmatpush1.msra.mxu0 0.0
  %962 = vmatprep.subr.mxu0 0.0
  %963 = vmatpush1.msra.mxu0 0.0
  %964 = vmatprep.mubr.f32.mxu0 0.0
  %965 = vmatmul.mubr.f32.gmra.mrb[0].mxu0 %v534
  %v966 = vpop.f32.mrb[0].mxu0
  %v967 = vadd.f32 0.0, %v966
  %v968 = vpop.f32.mrb[0].mxu0
  %969 = vmatprep.mubr.f32.mxu0 0.0
  %970 = vmatmul.mubr.f32.gmra.mrb[0].mxu0 %v537
  %v971 = vpop.f32.mrb[0].mxu0
  %v972 = vadd.f32 0.0, %v971
  %v973 = vpop.f32.mrb[0].mxu0
  %974 = vmatprep.mubr.f32.mxu0 0.0
  %975 = vmatmul.mubr.f32.gmra.mrb[0].mxu0 %v540
  %v976 = vpop.f32.mrb[0].mxu0
  %v977 = vadd.f32 0.0, %v976
  %v978 = vpop.f32.mrb[0].mxu0
  %979 = vmatprep.mubr.f32.mxu0 0.0
  %980 = vmatmul.mubr.f32.gmra.mrb[0].mxu0 %v543
  %v981 = vpop.f32.mrb[0].mxu0
  %v982 = vadd.f32 0.0, %v981
  %v983 = vpop.f32.mrb[0].mxu0
  %984 = vmatprep.mubr.f32.mxu0 0.0
  %985 = vmatmul.mubr.f32.gmra.mrb[0].mxu0 %v546
  %v986 = vpop.f32.mrb[0].mxu0
  %v987 = vadd.f32 0.0, %v986
  %v988 = vpop.f32.mrb[0].mxu0
  %989 = vmatprep.mubr.f32.mxu0 0.0
  %990 = vmatmul.mubr.f32.gmra.mrb[0].mxu0 %v549
  %v991 = vpop.f32.mrb[0].mxu0
  %v992 = vadd.f32 0.0, %v991
  %v993 = vpop.f32.mrb[0].mxu0
  %994 = vmatprep.mubr.f32.mxu0 0.0
  %995 = vmatmul.mubr.f32.gmra.mrb[0].mxu0 %v552
  %v996 = vpop.f32.mrb[0].mxu0
  %v997 = vadd.f32 0.0, %v996
  %v998 = vpop.f32.mrb[0].mxu0
  %999 = vdwg.mxu0
  %v1000 = vadd.f32 %v855, %v967
  %v1001 = vadd.f32 %v860, %v972
  %v1002 = vadd.f32 %v865, %v977
  %v1003 = vadd.f32 %v870, %v982
  %v1004 = vadd.f32 %v875, %v987
  %v1005 = vadd.f32 %v880, %v992
  %v1006 = vadd.f32 %v885, %v997
  %v1007 = vld [vmem:[%s12] sm:$0xff]
  %v1008 = vld [vmem:[%s12 + $0x8] sm:$0xff]
  %v1009 = vld [vmem:[%s12 + $0x10] sm:$0xff]
  %v1010 = vld [vmem:[%s12 + $0x18] sm:$0xff]
  %v1011 = vld [vmem:[%s12 + $0x20] sm:$0xff]
  %v1012 = vld [vmem:[%s12 + $0x28] sm:$0xff]
  %vm1013 = vcmask 392192
  %v1015 = vsel %vm1013, %v668, 0
  %v1018 = vsel %vm1013, %v669, 0
  %v1021 = vsel %vm1013, %v670, 0
  %v1024 = vsel %vm1013, %v671, 0
  %v1027 = vsel %vm1013, %v672, 0
  %v1030 = vsel %vm1013, %v673, 0
  %v1033 = vsel %vm1013, %v674, 0
  %1035 = vmatprep.subr.mxu0 0.0
  %1036 = vmatpush1.msra.mxu0 %v1007
  %1037 = vmatprep.subr.mxu0 0.0
  %1038 = vmatpush1.msra.mxu0 %v1008
  %1039 = vmatprep.subr.mxu0 0.0
  %1040 = vmatpush1.msra.mxu0 %v1009
  %1041 = vmatprep.subr.mxu0 0.0
  %1042 = vmatpush1.msra.mxu0 %v1010
  %1043 = vmatprep.subr.mxu0 0.0
  %1044 = vmatpush1.msra.mxu0 %v1011
  %1045 = vmatprep.subr.mxu0 0.0
  %1046 = vmatpush1.msra.mxu0 %v1012
  %1047 = vmatprep.subr.mxu0 0.0
  %1048 = vmatpush1.msra.mxu0 0.0
  %1049 = vmatprep.subr.mxu0 0.0
  %1050 = vmatpush1.msra.mxu0 0.0
  %1051 = vmatprep.subr.mxu0 0.0
  %1052 = vmatpush1.msra.mxu0 0.0
  %1053 = vmatprep.subr.mxu0 0.0
  %1054 = vmatpush1.msra.mxu0 0.0
  %1055 = vmatprep.subr.mxu0 0.0
  %1056 = vmatpush1.msra.mxu0 0.0
  %1057 = vmatprep.subr.mxu0 0.0
  %1058 = vmatpush1.msra.mxu0 0.0
  %1059 = vmatprep.subr.mxu0 0.0
  %1060 = vmatpush1.msra.mxu0 0.0
  %1061 = vmatprep.subr.mxu0 0.0
  %1062 = vmatpush1.msra.mxu0 0.0
  %1063 = vmatprep.subr.mxu0 0.0
  %1064 = vmatpush1.msra.mxu0 0.0
  %1065 = vmatprep.subr.mxu0 0.0
  %1066 = vmatpush1.msra.mxu0 0.0
  %1067 = vmatprep.subr.mxu0 0.0
  %1068 = vmatpush1.msra.mxu0 0.0
  %1069 = vmatprep.subr.mxu0 0.0
  %1070 = vmatpush1.msra.mxu0 0.0
  %1071 = vmatprep.subr.mxu0 0.0
  %1072 = vmatpush1.msra.mxu0 0.0
  %1073 = vmatprep.subr.mxu0 0.0
  %1074 = vmatpush1.msra.mxu0 0.0
  %1075 = vmatprep.subr.mxu0 0.0
  %1076 = vmatpush1.msra.mxu0 0.0
  %1077 = vmatprep.subr.mxu0 0.0
  %1078 = vmatpush1.msra.mxu0 0.0
  %1079 = vmatprep.subr.mxu0 0.0
  %1080 = vmatpush1.msra.mxu0 0.0
  %1081 = vmatprep.subr.mxu0 0.0
  %1082 = vmatpush1.msra.mxu0 0.0
  %1083 = vmatprep.subr.mxu0 0.0
  %1084 = vmatpush1.msra.mxu0 0.0
  %1085 = vmatprep.subr.mxu0 0.0
  %1086 = vmatpush1.msra.mxu0 0.0
  %1087 = vmatprep.subr.mxu0 0.0
  %1088 = vmatpush1.msra.mxu0 0.0
  %1089 = vmatprep.subr.mxu0 0.0
  %1090 = vmatpush1.msra.mxu0 0.0
  %1091 = vmatprep.subr.mxu0 0.0
  %1092 = vmatpush1.msra.mxu0 0.0
  %1093 = vmatprep.subr.mxu0 0.0
  %1094 = vmatpush1.msra.mxu0 0.0
  %1095 = vmatprep.subr.mxu0 0.0
  %1096 = vmatpush1.msra.mxu0 0.0
  %1097 = vmatprep.subr.mxu0 0.0
  %1098 = vmatpush1.msra.mxu0 0.0
  %1099 = vmatprep.mubr.f32.mxu0 0.0
  %1100 = vmatmul.mubr.f32.gmra.mrb[0].mxu0 %v1015
  %v1101 = vpop.f32.mrb[0].mxu0
  %v1102 = vadd.f32 0.0, %v1101
  %v1103 = vpop.f32.mrb[0].mxu0
  %1104 = vmatprep.mubr.f32.mxu0 0.0
  %1105 = vmatmul.mubr.f32.gmra.mrb[0].mxu0 %v1018
  %v1106 = vpop.f32.mrb[0].mxu0
  %v1107 = vadd.f32 0.0, %v1106
  %v1108 = vpop.f32.mrb[0].mxu0
  %1109 = vmatprep.mubr.f32.mxu0 0.0
  %1110 = vmatmul.mubr.f32.gmra.mrb[0].mxu0 %v1021
  %v1111 = vpop.f32.mrb[0].mxu0
  %v1112 = vadd.f32 0.0, %v1111
  %v1113 = vpop.f32.mrb[0].mxu0
  %1114 = vmatprep.mubr.f32.mxu0 0.0
  %1115 = vmatmul.mubr.f32.gmra.mrb[0].mxu0 %v1024
  %v1116 = vpop.f32.mrb[0].mxu0
  %v1117 = vadd.f32 0.0, %v1116
  %v1118 = vpop.f32.mrb[0].mxu0
  %1119 = vmatprep.mubr.f32.mxu0 0.0
  %1120 = vmatmul.mubr.f32.gmra.mrb[0].mxu0 %v1027
  %v1121 = vpop.f32.mrb[0].mxu0
  %v1122 = vadd.f32 0.0, %v1121
  %v1123 = vpop.f32.mrb[0].mxu0
  %1124 = vmatprep.mubr.f32.mxu0 0.0
  %1125 = vmatmul.mubr.f32.gmra.mrb[0].mxu0 %v1030
  %v1126 = vpop.f32.mrb[0].mxu0
  %v1127 = vadd.f32 0.0, %v1126
  %v1128 = vpop.f32.mrb[0].mxu0
  %1129 = vmatprep.mubr.f32.mxu0 0.0
  %1130 = vmatmul.mubr.f32.gmra.mrb[0].mxu0 %v1033
  %v1131 = vpop.f32.mrb[0].mxu0
  %v1132 = vadd.f32 0.0, %v1131
  %v1133 = vpop.f32.mrb[0].mxu0
  %1134 = vdwg.mxu0
  %v1135 = vadd.f32 %v1000, %v1102
  %v1136 = vadd.f32 %v1001, %v1107
  %v1137 = vadd.f32 %v1002, %v1112
  %v1138 = vadd.f32 %v1003, %v1117
  %v1139 = vadd.f32 %v1004, %v1122
  %v1140 = vadd.f32 %v1005, %v1127
  %v1141 = vadd.f32 %v1006, %v1132
  %v1142 = vld [vmem:[%s13] sm:$0x1]
  %v1144 = vlaneseq
  %v1145 = vshrl.u32 %v1144, 7
  %v1146 = vsub.s32 0, %v1145
  %v1147 = vrot.slane %v1142, %v1146
  %v1149 = vadd.f32 %v1135, %v1147
  %v1150 = vadd.f32 %v1136, %v1147
  %v1151 = vadd.f32 %v1137, %v1147
  %v1152 = vadd.f32 %v1138, %v1147
  %v1153 = vadd.f32 %v1139, %v1147
  %v1154 = vadd.f32 %v1140, %v1147
  %v1155 = vadd.f32 %v1141, %v1147
  %1156 = vst.msk [vmem:[%s14] sm:$0xff] %vm231, %v1149
  %1157 = vst.msk [vmem:[%s14 + $0x8] sm:$0xff] %vm231, %v1150
  %1158 = vst.msk [vmem:[%s14 + $0x10] sm:$0xff] %vm231, %v1151
  %1159 = vst.msk [vmem:[%s14 + $0x18] sm:$0xff] %vm231, %v1152
  %1160 = vst.msk [vmem:[%s14 + $0x20] sm:$0xff] %vm231, %v1153
  %1161 = vst.msk [vmem:[%s14 + $0x28] sm:$0xff] %vm231, %v1154
  %1162 = vst.msk [vmem:[%s14 + $0x30] sm:$0xff] %vm231, %v1155
  // Predicated region
  $region58: #{_lambda_.11} parent=0 // pred_check
    _
  $region59: #{_lambda_.11} parent=0 // pred_check_branch
    %1164 = sbr.rel (0) target = $region61
  $region60: #{_lambda_.11} parent=0 // pred_region
    _
  $region61: #{_lambda_.11} parent=0 // pred_fallthru
    _
  // Predicated region
  $region62: #{_lambda_.11} parent=0 // pred_check
    _
  $region63: #{_lambda_.11} parent=0 // pred_check_branch
    %1166 = sbr.rel (0) target = $region65
  $region64: #{_lambda_.11} parent=0 // pred_region
    _
  $region65: #{_lambda_.11} parent=0 // pred_fallthru
    _

// kernel: _lambda_.10
$region0: #{_lambda_.10}
  #allocation0 [shape = 'u32[]', space=smem, size = 0x4, offset = 0x4, fixed_abs, tag = 'smem constant byte address 0x4 - core index']
  #allocation1 [shape = 'u32[144,128]{1,0:T(1,128)}', space=vmem, size = 0x12000, scoped, tag = 'internal scratch']
  %s0 = inlined_call_operand.vmem [shape: f32[16,112], index: 0, kind: input, shape index: {}]
  %s1 = inlined_call_operand.vmem [shape: f32[16,23], index: 1, kind: input, shape index: {}]
  %s2 = inlined_call_operand.vmem [shape: f32[112,32], index: 2, kind: input, shape index: {}]
  %s3 = inlined_call_operand.vmem [shape: f32[1,32], index: 3, kind: input, shape index: {}]
  %s4 = inlined_call_operand.vmem [shape: f32[32,128], index: 4, kind: input, shape index: {}]
  %s5 = inlined_call_operand.vmem [shape: f32[23,128], index: 5, kind: input, shape index: {}]
  %s6 = inlined_call_operand.vmem [shape: f32[1,128], index: 6, kind: input, shape index: {}]
  %s7 = inlined_call_operand.vmem [shape: f32[128,128], index: 7, kind: input, shape index: {}]
  %s8 = inlined_call_operand.vmem [shape: f32[1,128], index: 8, kind: input, shape index: {}]
  %s9 = inlined_call_operand.vmem [shape: f32[32,23], index: 9, kind: input, shape index: {}]
  %s10 = inlined_call_operand.vmem [shape: f32[23,23], index: 10, kind: input, shape index: {}]
  %s11 = inlined_call_operand.vmem [shape: f32[128,23], index: 11, kind: input, shape index: {}]
  %s12 = inlined_call_operand.vmem [shape: f32[128,23], index: 12, kind: input, shape index: {}]
  %s13 = inlined_call_operand.vmem [shape: f32[1,23], index: 13, kind: input, shape index: {}]
  %s14 = inlined_call_operand.hbm [shape: f32[16,23], index: 14, kind: output, shape index: {}]
  %s15 = sld [smem:[#allocation0]]
  $region66: #{_lambda_.10} parent=0
    _
  %s17 = ssub.s32 1, %s15
  %s18 = scalar_select 0, %s17, %s15
  $region1: #{_lambda_.10} parent=0
    #allocation2 [shape = 'u8[8192]{0}', space=vmem, size = 0x2000, scoped, tag = 'output window, operand 0, single buffered']
    #allocation3 [shape = 's32[1]{0}', space=sflag, size = 0x4, scoped, tag = 'scoped memory for _lambda_.10']
    %19 = vsyncpa [#allocation3], 0
    // Predicated region
    $region2: #{_lambda_.10} parent=1 // pred_check
      _
    $region3: #{_lambda_.10} parent=1 // pred_check_branch
      %21 = sbr.rel (0) target = $region5
    $region4: #{_lambda_.10} parent=1 // pred_region
      _
    $region5: #{_lambda_.10} parent=1 // pred_fallthru
      _
    // Predicated region
    $region6: #{_lambda_.10} parent=1 // pred_check
      _
    $region7: #{_lambda_.10} parent=1 // pred_check_branch
      %23 = sbr.rel (0) target = $region9
    $region8: #{_lambda_.10} parent=1 // pred_region
      _
    $region9: #{_lambda_.10} parent=1 // pred_fallthru
      _
    // Predicated region
    $region10: #{_lambda_.10} parent=1 // pred_check
      _
    $region11: #{_lambda_.10} parent=1 // pred_check_branch
      %25 = sbr.rel (0) target = $region13
    $region12: #{_lambda_.10} parent=1 // pred_region
      _
    $region13: #{_lambda_.10} parent=1 // pred_fallthru
      _
    // Predicated region
    $region14: #{_lambda_.10} parent=1 // pred_check
      _
    $region15: #{_lambda_.10} parent=1 // pred_check_branch
      %27 = sbr.rel (0) target = $region17
    $region16: #{_lambda_.10} parent=1 // pred_region
      _
    $region17: #{_lambda_.10} parent=1 // pred_fallthru
      _
    // Predicated region
    $region18: #{_lambda_.10} parent=1 // pred_check
      _
    $region19: #{_lambda_.10} parent=1 // pred_check_branch
      %29 = sbr.rel (0) target = $region21
    $region20: #{_lambda_.10} parent=1 // pred_region
      _
    $region21: #{_lambda_.10} parent=1 // pred_fallthru
      _
    // Predicated region
    $region22: #{_lambda_.10} parent=1 // pred_check
      _
    $region23: #{_lambda_.10} parent=1 // pred_check_branch
      %31 = sbr.rel (0) target = $region25
    $region24: #{_lambda_.10} parent=1 // pred_region
      _
    $region25: #{_lambda_.10} parent=1 // pred_fallthru
      _
    // Predicated region
    $region26: #{_lambda_.10} parent=1 // pred_check
      _
    $region27: #{_lambda_.10} parent=1 // pred_check_branch
      %33 = sbr.rel (0) target = $region29
    $region28: #{_lambda_.10} parent=1 // pred_region
      _
    $region29: #{_lambda_.10} parent=1 // pred_fallthru
      _
    // Predicated region
    $region30: #{_lambda_.10} parent=1 // pred_check
      _
    $region31: #{_lambda_.10} parent=1 // pred_check_branch
      %35 = sbr.rel (0) target = $region33
    $region32: #{_lambda_.10} parent=1 // pred_region
      _
    $region33: #{_lambda_.10} parent=1 // pred_fallthru
      _
    // Predicated region
    $region34: #{_lambda_.10} parent=1 // pred_check
      _
    $region35: #{_lambda_.10} parent=1 // pred_check_branch
      %37 = sbr.rel (0) target = $region37
    $region36: #{_lambda_.10} parent=1 // pred_region
      _
    $region37: #{_lambda_.10} parent=1 // pred_fallthru
      _
    // Predicated region
    $region38: #{_lambda_.10} parent=1 // pred_check
      _
    $region39: #{_lambda_.10} parent=1 // pred_check_branch
      %39 = sbr.rel (0) target = $region41
    $region40: #{_lambda_.10} parent=1 // pred_region
      _
    $region41: #{_lambda_.10} parent=1 // pred_fallthru
      _
    // Predicated region
    $region42: #{_lambda_.10} parent=1 // pred_check
      _
    $region43: #{_lambda_.10} parent=1 // pred_check_branch
      %41 = sbr.rel (0) target = $region45
    $region44: #{_lambda_.10} parent=1 // pred_region
      _
    $region45: #{_lambda_.10} parent=1 // pred_fallthru
      _
    // Predicated region
    $region46: #{_lambda_.10} parent=1 // pred_check
      _
    $region47: #{_lambda_.10} parent=1 // pred_check_branch
      %43 = sbr.rel (0) target = $region49
    $region48: #{_lambda_.10} parent=1 // pred_region
      _
    $region49: #{_lambda_.10} parent=1 // pred_fallthru
      _
    // Predicated region
    $region50: #{_lambda_.10} parent=1 // pred_check
      _
    $region51: #{_lambda_.10} parent=1 // pred_check_branch
      %45 = sbr.rel (0) target = $region53
    $region52: #{_lambda_.10} parent=1 // pred_region
      _
    $region53: #{_lambda_.10} parent=1 // pred_fallthru
      _
    // Predicated region
    $region54: #{_lambda_.10} parent=1 // pred_check
      _
    $region55: #{_lambda_.10} parent=1 // pred_check_branch
      %47 = sbr.rel (0) target = $region57
    $region56: #{_lambda_.10} parent=1 // pred_region
      _
    $region57: #{_lambda_.10} parent=1 // pred_fallthru
      _
    %v48 = vld [vmem:[%s0] sm:$0xff]
    %v49 = vld [vmem:[%s0 + $0x8] sm:$0xff]
    %v50 = vld [vmem:[%s2] sm:$0xff]
    %v51 = vld [vmem:[%s2 + $0x8] sm:$0xff]
    %v52 = vld [vmem:[%s2 + $0x10] sm:$0xff]
    %v53 = vld [vmem:[%s2 + $0x18] sm:$0xff]
    %v54 = vld [vmem:[%s2 + $0x20] sm:$0xff]
    %v55 = vld [vmem:[%s2 + $0x28] sm:$0xff]
    %v56 = vld [vmem:[%s2 + $0x30] sm:$0xff]
    %v57 = vld [vmem:[%s2 + $0x38] sm:$0xff]
    %v58 = vld [vmem:[%s2 + $0x40] sm:$0xff]
    %v59 = vld [vmem:[%s2 + $0x48] sm:$0xff]
    %v60 = vld [vmem:[%s2 + $0x50] sm:$0xff]
    %v61 = vld [vmem:[%s2 + $0x58] sm:$0xff]
    %v62 = vld [vmem:[%s2 + $0x60] sm:$0xff]
    %v63 = vld [vmem:[%s2 + $0x68] sm:$0xff]
    %v64 = vld [vmem:[%s3] sm:$0x1]
    %v66 = vlaneseq
    %v67 = vshrl.u32 %v66, 7
    %v68 = vsub.s32 0, %v67
    %v69 = vrot.slane %v64, %v68
    %vm71 = vcmask 916480
    %v73 = vsel %vm71, %v48, 0
    %v76 = vsel %vm71, %v49, 0
    %78 = vmatprep.subr.mxu0 0.0
    %79 = vmatpush1.msra.mxu0 %v50
    %80 = vmatprep.subr.mxu0 0.0
    %81 = vmatpush1.msra.mxu0 %v51
    %82 = vmatprep.subr.mxu0 0.0
    %83 = vmatpush1.msra.mxu0 %v52
    %84 = vmatprep.subr.mxu0 0.0
    %85 = vmatpush1.msra.mxu0 %v53
    %86 = vmatprep.subr.mxu0 0.0
    %87 = vmatpush1.msra.mxu0 %v54
    %88 = vmatprep.subr.mxu0 0.0
    %89 = vmatpush1.msra.mxu0 %v55
    %90 = vmatprep.subr.mxu0 0.0
    %91 = vmatpush1.msra.mxu0 %v56
    %92 = vmatprep.subr.mxu0 0.0
    %93 = vmatpush1.msra.mxu0 %v57
    %94 = vmatprep.subr.mxu0 0.0
    %95 = vmatpush1.msra.mxu0 %v58
    %96 = vmatprep.subr.mxu0 0.0
    %97 = vmatpush1.msra.mxu0 %v59
    %98 = vmatprep.subr.mxu0 0.0
    %99 = vmatpush1.msra.mxu0 %v60
    %100 = vmatprep.subr.mxu0 0.0
    %101 = vmatpush1.msra.mxu0 %v61
    %102 = vmatprep.subr.mxu0 0.0
    %103 = vmatpush1.msra.mxu0 %v62
    %104 = vmatprep.subr.mxu0 0.0
    %105 = vmatpush1.msra.mxu0 %v63
    %106 = vmatprep.subr.mxu0 0.0
    %107 = vmatpush1.msra.mxu0 0.0
    %108 = vmatprep.subr.mxu0 0.0
    %109 = vmatpush1.msra.mxu0 0.0
    %110 = vmatprep.subr.mxu0 0.0
    %111 = vmatpush1.msra.mxu0 0.0
    %112 = vmatprep.subr.mxu0 0.0
    %113 = vmatpush1.msra.mxu0 0.0
    %114 = vmatprep.subr.mxu0 0.0
    %115 = vmatpush1.msra.mxu0 0.0
    %116 = vmatprep.subr.mxu0 0.0
    %117 = vmatpush1.msra.mxu0 0.0
    %118 = vmatprep.subr.mxu0 0.0
    %119 = vmatpush1.msra.mxu0 0.0
    %120 = vmatprep.subr.mxu0 0.0
    %121 = vmatpush1.msra.mxu0 0.0
    %122 = vmatprep.subr.mxu0 0.0
    %123 = vmatpush1.msra.mxu0 0.0
    %124 = vmatprep.subr.mxu0 0.0
    %125 = vmatpush1.msra.mxu0 0.0
    %126 = vmatprep.subr.mxu0 0.0
    %127 = vmatpush1.msra.mxu0 0.0
    %128 = vmatprep.subr.mxu0 0.0
    %129 = vmatpush1.msra.mxu0 0.0
    %130 = vmatprep.subr.mxu0 0.0
    %131 = vmatpush1.msra.mxu0 0.0
    %132 = vmatprep.subr.mxu0 0.0
    %133 = vmatpush1.msra.mxu0 0.0
    %134 = vmatprep.subr.mxu0 0.0
    %135 = vmatpush1.msra.mxu0 0.0
    %136 = vmatprep.subr.mxu0 0.0
    %137 = vmatpush1.msra.mxu0 0.0
    %138 = vmatprep.subr.mxu0 0.0
    %139 = vmatpush1.msra.mxu0 0.0
    %140 = vmatprep.subr.mxu0 0.0
    %141 = vmatpush1.msra.mxu0 0.0
    %142 = vmatprep.mubr.f32.mxu0 0.0
    %143 = vmatmul.mubr.f32.gmra.mrb[0].mxu0 %v73
    %v144 = vpop.f32.mrb[0].mxu0
    %v145 = vadd.f32 %v69, %v144
    %v146 = vpop.f32.mrb[0].mxu0
    %147 = vmatprep.mubr.f32.mxu0 0.0
    %148 = vmatmul.mubr.f32.gmra.mrb[0].mxu0 %v76
    %v149 = vpop.f32.mrb[0].mxu0
    %v150 = vadd.f32 %v69, %v149
    %v151 = vpop.f32.mrb[0].mxu0
    %152 = vdwg.mxu0
    %v153 = vld [vmem:[%s1] sm:$0xff]
    %v154 = vld [vmem:[%s1 + $0x8] sm:$0xff]
    %v155 = vld [vmem:[%s4] sm:$0xff]
    %v156 = vld [vmem:[%s4 + $0x8] sm:$0xff]
    %v157 = vld [vmem:[%s4 + $0x10] sm:$0xff]
    %v158 = vld [vmem:[%s4 + $0x18] sm:$0xff]
    %v159 = vld [vmem:[%s5] sm:$0xff]
    %v160 = vld [vmem:[%s5 + $0x8] sm:$0xff]
    %v161 = vld [vmem:[%s5 + $0x10] sm:$0x7f]
    %vm162 = vcmask 187392
    %v164 = vsel %vm162, %v153, 0
    %v167 = vsel %vm162, %v154, 0
    %vm169 = vcmask 1046528
    %v171 = vsel %vm169, %v161, 0
    %173 = vmatprep.subr.mxu0 0.0
    %174 = vmatpush1.msra.mxu0 %v159
    %175 = vmatprep.subr.mxu0 0.0
    %176 = vmatpush1.msra.mxu0 %v160
    %177 = vmatprep.subr.mxu0 0.0
    %178 = vmatpush1.msra.mxu0 %v171
    %179 = vmatprep.subr.mxu0 0.0
    %180 = vmatpush1.msra.mxu0 0.0
    %181 = vmatprep.subr.mxu0 0.0
    %182 = vmatpush1.msra.mxu0 0.0
    %183 = vmatprep.subr.mxu0 0.0
    %184 = vmatpush1.msra.mxu0 0.0
    %185 = vmatprep.subr.mxu0 0.0
    %186 = vmatpush1.msra.mxu0 0.0
    %187 = vmatprep.subr.mxu0 0.0
    %188 = vmatpush1.msra.mxu0 0.0
    %189 = vmatprep.subr.mxu0 0.0
    %190 = vmatpush1.msra.mxu0 0.0
    %191 = vmatprep.subr.mxu0 0.0
    %192 = vmatpush1.msra.mxu0 0.0
    %193 = vmatprep.subr.mxu0 0.0
    %194 = vmatpush1.msra.mxu0 0.0
    %195 = vmatprep.subr.mxu0 0.0
    %196 = vmatpush1.msra.mxu0 0.0
    %197 = vmatprep.subr.mxu0 0.0
    %198 = vmatpush1.msra.mxu0 0.0
    %199 = vmatprep.subr.mxu0 0.0
    %200 = vmatpush1.msra.mxu0 0.0
    %201 = vmatprep.subr.mxu0 0.0
    %202 = vmatpush1.msra.mxu0 0.0
    %203 = vmatprep.subr.mxu0 0.0
    %204 = vmatpush1.msra.mxu0 0.0
    %205 = vmatprep.subr.mxu0 0.0
    %206 = vmatpush1.msra.mxu0 0.0
    %207 = vmatprep.subr.mxu0 0.0
    %208 = vmatpush1.msra.mxu0 0.0
    %209 = vmatprep.subr.mxu0 0.0
    %210 = vmatpush1.msra.mxu0 0.0
    %211 = vmatprep.subr.mxu0 0.0
    %212 = vmatpush1.msra.mxu0 0.0
    %213 = vmatprep.subr.mxu0 0.0
    %214 = vmatpush1.msra.mxu0 0.0
    %215 = vmatprep.subr.mxu0 0.0
    %216 = vmatpush1.msra.mxu0 0.0
    %217 = vmatprep.subr.mxu0 0.0
    %218 = vmatpush1.msra.mxu0 0.0
    %219 = vmatprep.subr.mxu0 0.0
    %220 = vmatpush1.msra.mxu0 0.0
    %221 = vmatprep.subr.mxu0 0.0
    %222 = vmatpush1.msra.mxu0 0.0
    %223 = vmatprep.subr.mxu0 0.0
    %224 = vmatpush1.msra.mxu0 0.0
    %225 = vmatprep.subr.mxu0 0.0
    %226 = vmatpush1.msra.mxu0 0.0
    %227 = vmatprep.subr.mxu0 0.0
    %228 = vmatpush1.msra.mxu0 0.0
    %229 = vmatprep.subr.mxu0 0.0
    %230 = vmatpush1.msra.mxu0 0.0
    %231 = vmatprep.subr.mxu0 0.0
    %232 = vmatpush1.msra.mxu0 0.0
    %233 = vmatprep.subr.mxu0 0.0
    %234 = vmatpush1.msra.mxu0 0.0
    %235 = vmatprep.subr.mxu0 0.0
    %236 = vmatpush1.msra.mxu0 0.0
    %237 = vmatprep.mubr.f32.mxu0 0.0
    %238 = vmatmul.mubr.f32.gmra.mrb[0].mxu0 %v164
    %v239 = vpop.f32.mrb[0].mxu0
    %v240 = vadd.f32 0.0, %v239
    %v241 = vpop.f32.mrb[0].mxu0
    %242 = vmatprep.mubr.f32.mxu0 0.0
    %243 = vmatmul.mubr.f32.gmra.mrb[0].mxu0 %v167
    %v244 = vpop.f32.mrb[0].mxu0
    %v245 = vadd.f32 0.0, %v244
    %v246 = vpop.f32.mrb[0].mxu0
    %247 = vdwg.mxu0
    %vm248 = vcmask 261120
    %v250 = vsel %vm248, %v145, 0
    %v253 = vsel %vm248, %v150, 0
    %255 = vmatprep.subr.mxu0 0.0
    %256 = vmatpush1.msra.mxu0 %v155
    %257 = vmatprep.subr.mxu0 0.0
    %258 = vmatpush1.msra.mxu0 %v156
    %259 = vmatprep.subr.mxu0 0.0
    %260 = vmatpush1.msra.mxu0 %v157
    %261 = vmatprep.subr.mxu0 0.0
    %262 = vmatpush1.msra.mxu0 %v158
    %263 = vmatprep.subr.mxu0 0.0
    %264 = vmatpush1.msra.mxu0 0.0
    %265 = vmatprep.subr.mxu0 0.0
    %266 = vmatpush1.msra.mxu0 0.0
    %267 = vmatprep.subr.mxu0 0.0
    %268 = vmatpush1.msra.mxu0 0.0
    %269 = vmatprep.subr.mxu0 0.0
    %270 = vmatpush1.msra.mxu0 0.0
    %271 = vmatprep.subr.mxu0 0.0
    %272 = vmatpush1.msra.mxu0 0.0
    %273 = vmatprep.subr.mxu0 0.0
    %274 = vmatpush1.msra.mxu0 0.0
    %275 = vmatprep.subr.mxu0 0.0
    %276 = vmatpush1.msra.mxu0 0.0
    %277 = vmatprep.subr.mxu0 0.0
    %278 = vmatpush1.msra.mxu0 0.0
    %279 = vmatprep.subr.mxu0 0.0
    %280 = vmatpush1.msra.mxu0 0.0
    %281 = vmatprep.subr.mxu0 0.0
    %282 = vmatpush1.msra.mxu0 0.0
    %283 = vmatprep.subr.mxu0 0.0
    %284 = vmatpush1.msra.mxu0 0.0
    %285 = vmatprep.subr.mxu0 0.0
    %286 = vmatpush1.msra.mxu0 0.0
    %287 = vmatprep.subr.mxu0 0.0
    %288 = vmatpush1.msra.mxu0 0.0
    %289 = vmatprep.subr.mxu0 0.0
    %290 = vmatpush1.msra.mxu0 0.0
    %291 = vmatprep.subr.mxu0 0.0
    %292 = vmatpush1.msra.mxu0 0.0
    %293 = vmatprep.subr.mxu0 0.0
    %294 = vmatpush1.msra.mxu0 0.0
    %295 = vmatprep.subr.mxu0 0.0
    %296 = vmatpush1.msra.mxu0 0.0
    %297 = vmatprep.subr.mxu0 0.0
    %298 = vmatpush1.msra.mxu0 0.0
    %299 = vmatprep.subr.mxu0 0.0
    %300 = vmatpush1.msra.mxu0 0.0
    %301 = vmatprep.subr.mxu0 0.0
    %302 = vmatpush1.msra.mxu0 0.0
    %303 = vmatprep.subr.mxu0 0.0
    %304 = vmatpush1.msra.mxu0 0.0
    %305 = vmatprep.subr.mxu0 0.0
    %306 = vmatpush1.msra.mxu0 0.0
    %307 = vmatprep.subr.mxu0 0.0
    %308 = vmatpush1.msra.mxu0 0.0
    %309 = vmatprep.subr.mxu0 0.0
    %310 = vmatpush1.msra.mxu0 0.0
    %311 = vmatprep.subr.mxu0 0.0
    %312 = vmatpush1.msra.mxu0 0.0
    %313 = vmatprep.subr.mxu0 0.0
    %314 = vmatpush1.msra.mxu0 0.0
    %315 = vmatprep.subr.mxu0 0.0
    %316 = vmatpush1.msra.mxu0 0.0
    %317 = vmatprep.subr.mxu0 0.0
    %318 = vmatpush1.msra.mxu0 0.0
    %319 = vmatprep.mubr.f32.mxu0 0.0
    %320 = vmatmul.mubr.f32.gmra.mrb[0].mxu0 %v250
    %v321 = vpop.f32.mrb[0].mxu0
    %v322 = vadd.f32 %v240, %v321
    %v323 = vpop.f32.mrb[0].mxu0
    %324 = vmatprep.mubr.f32.mxu0 0.0
    %325 = vmatmul.mubr.f32.gmra.mrb[0].mxu0 %v253
    %v326 = vpop.f32.mrb[0].mxu0
    %v327 = vadd.f32 %v245, %v326
    %v328 = vpop.f32.mrb[0].mxu0
    %329 = vdwg.mxu0
    %v330 = vld [vmem:[%s6] sm:$0x1]
    %v332 = vlaneseq
    %v333 = vshrl.u32 %v332, 7
    %v334 = vsub.s32 0, %v333
    %v335 = vrot.slane %v330, %v334
    %v337 = vadd.f32 %v322, %v335
    %v338 = vadd.f32 %v327, %v335
    %vm339 = vcmp.ge.f32.partialorder %v337, 0.0
    %vm340 = vcmp.ge.f32.partialorder %v338, 0.0
    %v341 = vmul.f32 %v337, 0.01
    %v342 = vmul.f32 %v338, 0.01
    %v343 = vsel %vm339, %v337, %v341
    %v344 = vsel %vm340, %v338, %v342
    %v345 = vld [vmem:[%s7] sm:$0xff]
    %v346 = vld [vmem:[%s7 + $0x8] sm:$0xff]
    %v347 = vld [vmem:[%s7 + $0x10] sm:$0xff]
    %v348 = vld [vmem:[%s7 + $0x18] sm:$0xff]
    %v349 = vld [vmem:[%s7 + $0x20] sm:$0xff]
    %v350 = vld [vmem:[%s7 + $0x28] sm:$0xff]
    %v351 = vld [vmem:[%s7 + $0x30] sm:$0xff]
    %v352 = vld [vmem:[%s7 + $0x38] sm:$0xff]
    %v353 = vld [vmem:[%s7 + $0x40] sm:$0xff]
    %v354 = vld [vmem:[%s7 + $0x48] sm:$0xff]
    %v355 = vld [vmem:[%s7 + $0x50] sm:$0xff]
    %v356 = vld [vmem:[%s7 + $0x58] sm:$0xff]
    %v357 = vld [vmem:[%s7 + $0x60] sm:$0xff]
    %v358 = vld [vmem:[%s7 + $0x68] sm:$0xff]
    %v359 = vld [vmem:[%s7 + $0x70] sm:$0xff]
    %v360 = vld [vmem:[%s7 + $0x78] sm:$0xff]
    %v361 = vld [vmem:[%s8] sm:$0x1]
    %v363 = vlaneseq
    %v364 = vshrl.u32 %v363, 7
    %v365 = vsub.s32 0, %v364
    %v366 = vrot.slane %v361, %v365
    %368 = vmatprep.subr.mxu0 0.0
    %369 = vmatpush1.msra.mxu0 %v345
    %370 = vmatprep.subr.mxu0 0.0
    %371 = vmatpush1.msra.mxu0 %v346
    %372 = vmatprep.subr.mxu0 0.0
    %373 = vmatpush1.msra.mxu0 %v347
    %374 = vmatprep.subr.mxu0 0.0
    %375 = vmatpush1.msra.mxu0 %v348
    %376 = vmatprep.subr.mxu0 0.0
    %377 = vmatpush1.msra.mxu0 %v349
    %378 = vmatprep.subr.mxu0 0.0
    %379 = vmatpush1.msra.mxu0 %v350
    %380 = vmatprep.subr.mxu0 0.0
    %381 = vmatpush1.msra.mxu0 %v351
    %382 = vmatprep.subr.mxu0 0.0
    %383 = vmatpush1.msra.mxu0 %v352
    %384 = vmatprep.subr.mxu0 0.0
    %385 = vmatpush1.msra.mxu0 %v353
    %386 = vmatprep.subr.mxu0 0.0
    %387 = vmatpush1.msra.mxu0 %v354
    %388 = vmatprep.subr.mxu0 0.0
    %389 = vmatpush1.msra.mxu0 %v355
    %390 = vmatprep.subr.mxu0 0.0
    %391 = vmatpush1.msra.mxu0 %v356
    %392 = vmatprep.subr.mxu0 0.0
    %393 = vmatpush1.msra.mxu0 %v357
    %394 = vmatprep.subr.mxu0 0.0
    %395 = vmatpush1.msra.mxu0 %v358
    %396 = vmatprep.subr.mxu0 0.0
    %397 = vmatpush1.msra.mxu0 %v359
    %398 = vmatprep.subr.mxu0 0.0
    %399 = vmatpush1.msra.mxu0 %v360
    %400 = vmatprep.subr.mxu0 0.0
    %401 = vmatpush1.msra.mxu0 0.0
    %402 = vmatprep.subr.mxu0 0.0
    %403 = vmatpush1.msra.mxu0 0.0
    %404 = vmatprep.subr.mxu0 0.0
    %405 = vmatpush1.msra.mxu0 0.0
    %406 = vmatprep.subr.mxu0 0.0
    %407 = vmatpush1.msra.mxu0 0.0
    %408 = vmatprep.subr.mxu0 0.0
    %409 = vmatpush1.msra.mxu0 0.0
    %410 = vmatprep.subr.mxu0 0.0
    %411 = vmatpush1.msra.mxu0 0.0
    %412 = vmatprep.subr.mxu0 0.0
    %413 = vmatpush1.msra.mxu0 0.0
    %414 = vmatprep.subr.mxu0 0.0
    %415 = vmatpush1.msra.mxu0 0.0
    %416 = vmatprep.subr.mxu0 0.0
    %417 = vmatpush1.msra.mxu0 0.0
    %418 = vmatprep.subr.mxu0 0.0
    %419 = vmatpush1.msra.mxu0 0.0
    %420 = vmatprep.subr.mxu0 0.0
    %421 = vmatpush1.msra.mxu0 0.0
    %422 = vmatprep.subr.mxu0 0.0
    %423 = vmatpush1.msra.mxu0 0.0
    %424 = vmatprep.subr.mxu0 0.0
    %425 = vmatpush1.msra.mxu0 0.0
    %426 = vmatprep.subr.mxu0 0.0
    %427 = vmatpush1.msra.mxu0 0.0
    %428 = vmatprep.subr.mxu0 0.0
    %429 = vmatpush1.msra.mxu0 0.0
    %430 = vmatprep.subr.mxu0 0.0
    %431 = vmatpush1.msra.mxu0 0.0
    %432 = vmatprep.mubr.f32.mxu0 0.0
    %433 = vmatmul.mubr.f32.gmra.mrb[0].mxu0 %v343
    %v434 = vpop.f32.mrb[0].mxu0
    %v435 = vadd.f32 %v366, %v434
    %v436 = vpop.f32.mrb[0].mxu0
    %437 = vmatprep.mubr.f32.mxu0 0.0
    %438 = vmatmul.mubr.f32.gmra.mrb[0].mxu0 %v344
    %v439 = vpop.f32.mrb[0].mxu0
    %v440 = vadd.f32 %v366, %v439
    %v441 = vpop.f32.mrb[0].mxu0
    %442 = vdwg.mxu0
    %vm443 = vcmp.ge.f32.partialorder %v435, 0.0
    %vm444 = vcmp.ge.f32.partialorder %v440, 0.0
    %v445 = vmul.f32 %v435, 0.01
    %v446 = vmul.f32 %v440, 0.01
    %v447 = vsel %vm443, %v435, %v445
    %v448 = vsel %vm444, %v440, %v446
    %v449 = vld [vmem:[%s9] sm:$0xff]
    %v450 = vld [vmem:[%s9 + $0x8] sm:$0xff]
    %v451 = vld [vmem:[%s9 + $0x10] sm:$0xff]
    %v452 = vld [vmem:[%s9 + $0x18] sm:$0xff]
    %v453 = vld [vmem:[%s10] sm:$0xff]
    %v454 = vld [vmem:[%s10 + $0x8] sm:$0xff]
    %v455 = vld [vmem:[%s10 + $0x10] sm:$0x7f]
    %v457 = vsel %vm169, %v455, 0
    %459 = vmatprep.subr.mxu0 0.0
    %460 = vmatpush1.msra.mxu0 %v453
    %461 = vmatprep.subr.mxu0 0.0
    %462 = vmatpush1.msra.mxu0 %v454
    %463 = vmatprep.subr.mxu0 0.0
    %464 = vmatpush1.msra.mxu0 %v457
    %465 = vmatprep.subr.mxu0 0.0
    %466 = vmatpush1.msra.mxu0 0.0
    %467 = vmatprep.subr.mxu0 0.0
    %468 = vmatpush1.msra.mxu0 0.0
    %469 = vmatprep.subr.mxu0 0.0
    %470 = vmatpush1.msra.mxu0 0.0
    %471 = vmatprep.subr.mxu0 0.0
    %472 = vmatpush1.msra.mxu0 0.0
    %473 = vmatprep.subr.mxu0 0.0
    %474 = vmatpush1.msra.mxu0 0.0
    %475 = vmatprep.subr.mxu0 0.0
    %476 = vmatpush1.msra.mxu0 0.0
    %477 = vmatprep.subr.mxu0 0.0
    %478 = vmatpush1.msra.mxu0 0.0
    %479 = vmatprep.subr.mxu0 0.0
    %480 = vmatpush1.msra.mxu0 0.0
    %481 = vmatprep.subr.mxu0 0.0
    %482 = vmatpush1.msra.mxu0 0.0
    %483 = vmatprep.subr.mxu0 0.0
    %484 = vmatpush1.msra.mxu0 0.0
    %485 = vmatprep.subr.mxu0 0.0
    %486 = vmatpush1.msra.mxu0 0.0
    %487 = vmatprep.subr.mxu0 0.0
    %488 = vmatpush1.msra.mxu0 0.0
    %489 = vmatprep.subr.mxu0 0.0
    %490 = vmatpush1.msra.mxu0 0.0
    %491 = vmatprep.subr.mxu0 0.0
    %492 = vmatpush1.msra.mxu0 0.0
    %493 = vmatprep.subr.mxu0 0.0
    %494 = vmatpush1.msra.mxu0 0.0
    %495 = vmatprep.subr.mxu0 0.0
    %496 = vmatpush1.msra.mxu0 0.0
    %497 = vmatprep.subr.mxu0 0.0
    %498 = vmatpush1.msra.mxu0 0.0
    %499 = vmatprep.subr.mxu0 0.0
    %500 = vmatpush1.msra.mxu0 0.0
    %501 = vmatprep.subr.mxu0 0.0
    %502 = vmatpush1.msra.mxu0 0.0
    %503 = vmatprep.subr.mxu0 0.0
    %504 = vmatpush1.msra.mxu0 0.0
    %505 = vmatprep.subr.mxu0 0.0
    %506 = vmatpush1.msra.mxu0 0.0
    %507 = vmatprep.subr.mxu0 0.0
    %508 = vmatpush1.msra.mxu0 0.0
    %509 = vmatprep.subr.mxu0 0.0
    %510 = vmatpush1.msra.mxu0 0.0
    %511 = vmatprep.subr.mxu0 0.0
    %512 = vmatpush1.msra.mxu0 0.0
    %513 = vmatprep.subr.mxu0 0.0
    %514 = vmatpush1.msra.mxu0 0.0
    %515 = vmatprep.subr.mxu0 0.0
    %516 = vmatpush1.msra.mxu0 0.0
    %517 = vmatprep.subr.mxu0 0.0
    %518 = vmatpush1.msra.mxu0 0.0
    %519 = vmatprep.subr.mxu0 0.0
    %520 = vmatpush1.msra.mxu0 0.0
    %521 = vmatprep.subr.mxu0 0.0
    %522 = vmatpush1.msra.mxu0 0.0
    %523 = vmatprep.mubr.f32.mxu0 0.0
    %524 = vmatmul.mubr.f32.gmra.mrb[0].mxu0 %v164
    %v525 = vpop.f32.mrb[0].mxu0
    %v526 = vadd.f32 0.0, %v525
    %v527 = vpop.f32.mrb[0].mxu0
    %528 = vmatprep.mubr.f32.mxu0 0.0
    %529 = vmatmul.mubr.f32.gmra.mrb[0].mxu0 %v167
    %v530 = vpop.f32.mrb[0].mxu0
    %v531 = vadd.f32 0.0, %v530
    %v532 = vpop.f32.mrb[0].mxu0
    %533 = vdwg.mxu0
    %534 = vmatprep.subr.mxu0 0.0
    %535 = vmatpush1.msra.mxu0 %v449
    %536 = vmatprep.subr.mxu0 0.0
    %537 = vmatpush1.msra.mxu0 %v450
    %538 = vmatprep.subr.mxu0 0.0
    %539 = vmatpush1.msra.mxu0 %v451
    %540 = vmatprep.subr.mxu0 0.0
    %541 = vmatpush1.msra.mxu0 %v452
    %542 = vmatprep.subr.mxu0 0.0
    %543 = vmatpush1.msra.mxu0 0.0
    %544 = vmatprep.subr.mxu0 0.0
    %545 = vmatpush1.msra.mxu0 0.0
    %546 = vmatprep.subr.mxu0 0.0
    %547 = vmatpush1.msra.mxu0 0.0
    %548 = vmatprep.subr.mxu0 0.0
    %549 = vmatpush1.msra.mxu0 0.0
    %550 = vmatprep.subr.mxu0 0.0
    %551 = vmatpush1.msra.mxu0 0.0
    %552 = vmatprep.subr.mxu0 0.0
    %553 = vmatpush1.msra.mxu0 0.0
    %554 = vmatprep.subr.mxu0 0.0
    %555 = vmatpush1.msra.mxu0 0.0
    %556 = vmatprep.subr.mxu0 0.0
    %557 = vmatpush1.msra.mxu0 0.0
    %558 = vmatprep.subr.mxu0 0.0
    %559 = vmatpush1.msra.mxu0 0.0
    %560 = vmatprep.subr.mxu0 0.0
    %561 = vmatpush1.msra.mxu0 0.0
    %562 = vmatprep.subr.mxu0 0.0
    %563 = vmatpush1.msra.mxu0 0.0
    %564 = vmatprep.subr.mxu0 0.0
    %565 = vmatpush1.msra.mxu0 0.0
    %566 = vmatprep.subr.mxu0 0.0
    %567 = vmatpush1.msra.mxu0 0.0
    %568 = vmatprep.subr.mxu0 0.0
    %569 = vmatpush1.msra.mxu0 0.0
    %570 = vmatprep.subr.mxu0 0.0
    %571 = vmatpush1.msra.mxu0 0.0
    %572 = vmatprep.subr.mxu0 0.0
    %573 = vmatpush1.msra.mxu0 0.0
    %574 = vmatprep.subr.mxu0 0.0
    %575 = vmatpush1.msra.mxu0 0.0
    %576 = vmatprep.subr.mxu0 0.0
    %577 = vmatpush1.msra.mxu0 0.0
    %578 = vmatprep.subr.mxu0 0.0
    %579 = vmatpush1.msra.mxu0 0.0
    %580 = vmatprep.subr.mxu0 0.0
    %581 = vmatpush1.msra.mxu0 0.0
    %582 = vmatprep.subr.mxu0 0.0
    %583 = vmatpush1.msra.mxu0 0.0
    %584 = vmatprep.subr.mxu0 0.0
    %585 = vmatpush1.msra.mxu0 0.0
    %586 = vmatprep.subr.mxu0 0.0
    %587 = vmatpush1.msra.mxu0 0.0
    %588 = vmatprep.subr.mxu0 0.0
    %589 = vmatpush1.msra.mxu0 0.0
    %590 = vmatprep.subr.mxu0 0.0
    %591 = vmatpush1.msra.mxu0 0.0
    %592 = vmatprep.subr.mxu0 0.0
    %593 = vmatpush1.msra.mxu0 0.0
    %594 = vmatprep.subr.mxu0 0.0
    %595 = vmatpush1.msra.mxu0 0.0
    %596 = vmatprep.subr.mxu0 0.0
    %597 = vmatpush1.msra.mxu0 0.0
    %598 = vmatprep.mubr.f32.mxu0 0.0
    %599 = vmatmul.mubr.f32.gmra.mrb[0].mxu0 %v250
    %v600 = vpop.f32.mrb[0].mxu0
    %v601 = vadd.f32 %v526, %v600
    %v602 = vpop.f32.mrb[0].mxu0
    %603 = vmatprep.mubr.f32.mxu0 0.0
    %604 = vmatmul.mubr.f32.gmra.mrb[0].mxu0 %v253
    %v605 = vpop.f32.mrb[0].mxu0
    %v606 = vadd.f32 %v531, %v605
    %v607 = vpop.f32.mrb[0].mxu0
    %608 = vdwg.mxu0
    %v609 = vld [vmem:[%s11] sm:$0xff]
    %v610 = vld [vmem:[%s11 + $0x8] sm:$0xff]
    %v611 = vld [vmem:[%s11 + $0x10] sm:$0xff]
    %v612 = vld [vmem:[%s11 + $0x18] sm:$0xff]
    %v613 = vld [vmem:[%s11 + $0x20] sm:$0xff]
    %v614 = vld [vmem:[%s11 + $0x28] sm:$0xff]
    %v615 = vld [vmem:[%s11 + $0x30] sm:$0xff]
    %v616 = vld [vmem:[%s11 + $0x38] sm:$0xff]
    %v617 = vld [vmem:[%s11 + $0x40] sm:$0xff]
    %v618 = vld [vmem:[%s11 + $0x48] sm:$0xff]
    %v619 = vld [vmem:[%s11 + $0x50] sm:$0xff]
    %v620 = vld [vmem:[%s11 + $0x58] sm:$0xff]
    %v621 = vld [vmem:[%s11 + $0x60] sm:$0xff]
    %v622 = vld [vmem:[%s11 + $0x68] sm:$0xff]
    %v623 = vld [vmem:[%s11 + $0x70] sm:$0xff]
    %v624 = vld [vmem:[%s11 + $0x78] sm:$0xff]
    %625 = vmatprep.subr.mxu0 0.0
    %626 = vmatpush1.msra.mxu0 %v609
    %627 = vmatprep.subr.mxu0 0.0
    %628 = vmatpush1.msra.mxu0 %v610
    %629 = vmatprep.subr.mxu0 0.0
    %630 = vmatpush1.msra.mxu0 %v611
    %631 = vmatprep.subr.mxu0 0.0
    %632 = vmatpush1.msra.mxu0 %v612
    %633 = vmatprep.subr.mxu0 0.0
    %634 = vmatpush1.msra.mxu0 %v613
    %635 = vmatprep.subr.mxu0 0.0
    %636 = vmatpush1.msra.mxu0 %v614
    %637 = vmatprep.subr.mxu0 0.0
    %638 = vmatpush1.msra.mxu0 %v615
    %639 = vmatprep.subr.mxu0 0.0
    %640 = vmatpush1.msra.mxu0 %v616
    %641 = vmatprep.subr.mxu0 0.0
    %642 = vmatpush1.msra.mxu0 %v617
    %643 = vmatprep.subr.mxu0 0.0
    %644 = vmatpush1.msra.mxu0 %v618
    %645 = vmatprep.subr.mxu0 0.0
    %646 = vmatpush1.msra.mxu0 %v619
    %647 = vmatprep.subr.mxu0 0.0
    %648 = vmatpush1.msra.mxu0 %v620
    %649 = vmatprep.subr.mxu0 0.0
    %650 = vmatpush1.msra.mxu0 %v621
    %651 = vmatprep.subr.mxu0 0.0
    %652 = vmatpush1.msra.mxu0 %v622
    %653 = vmatprep.subr.mxu0 0.0
    %654 = vmatpush1.msra.mxu0 %v623
    %655 = vmatprep.subr.mxu0 0.0
    %656 = vmatpush1.msra.mxu0 %v624
    %657 = vmatprep.subr.mxu0 0.0
    %658 = vmatpush1.msra.mxu0 0.0
    %659 = vmatprep.subr.mxu0 0.0
    %660 = vmatpush1.msra.mxu0 0.0
    %661 = vmatprep.subr.mxu0 0.0
    %662 = vmatpush1.msra.mxu0 0.0
    %663 = vmatprep.subr.mxu0 0.0
    %664 = vmatpush1.msra.mxu0 0.0
    %665 = vmatprep.subr.mxu0 0.0
    %666 = vmatpush1.msra.mxu0 0.0
    %667 = vmatprep.subr.mxu0 0.0
    %668 = vmatpush1.msra.mxu0 0.0
    %669 = vmatprep.subr.mxu0 0.0
    %670 = vmatpush1.msra.mxu0 0.0
    %671 = vmatprep.subr.mxu0 0.0
    %672 = vmatpush1.msra.mxu0 0.0
    %673 = vmatprep.subr.mxu0 0.0
    %674 = vmatpush1.msra.mxu0 0.0
    %675 = vmatprep.subr.mxu0 0.0
    %676 = vmatpush1.msra.mxu0 0.0
    %677 = vmatprep.subr.mxu0 0.0
    %678 = vmatpush1.msra.mxu0 0.0
    %679 = vmatprep.subr.mxu0 0.0
    %680 = vmatpush1.msra.mxu0 0.0
    %681 = vmatprep.subr.mxu0 0.0
    %682 = vmatpush1.msra.mxu0 0.0
    %683 = vmatprep.subr.mxu0 0.0
    %684 = vmatpush1.msra.mxu0 0.0
    %685 = vmatprep.subr.mxu0 0.0
    %686 = vmatpush1.msra.mxu0 0.0
    %687 = vmatprep.subr.mxu0 0.0
    %688 = vmatpush1.msra.mxu0 0.0
    %689 = vmatprep.mubr.f32.mxu0 0.0
    %690 = vmatmul.mubr.f32.gmra.mrb[0].mxu0 %v343
    %v691 = vpop.f32.mrb[0].mxu0
    %v692 = vadd.f32 0.0, %v691
    %v693 = vpop.f32.mrb[0].mxu0
    %694 = vmatprep.mubr.f32.mxu0 0.0
    %695 = vmatmul.mubr.f32.gmra.mrb[0].mxu0 %v344
    %v696 = vpop.f32.mrb[0].mxu0
    %v697 = vadd.f32 0.0, %v696
    %v698 = vpop.f32.mrb[0].mxu0
    %699 = vdwg.mxu0
    %v700 = vadd.f32 %v601, %v692
    %v701 = vadd.f32 %v606, %v697
    %v702 = vld [vmem:[%s12] sm:$0xff]
    %v703 = vld [vmem:[%s12 + $0x8] sm:$0xff]
    %v704 = vld [vmem:[%s12 + $0x10] sm:$0xff]
    %v705 = vld [vmem:[%s12 + $0x18] sm:$0xff]
    %v706 = vld [vmem:[%s12 + $0x20] sm:$0xff]
    %v707 = vld [vmem:[%s12 + $0x28] sm:$0xff]
    %v708 = vld [vmem:[%s12 + $0x30] sm:$0xff]
    %v709 = vld [vmem:[%s12 + $0x38] sm:$0xff]
    %v710 = vld [vmem:[%s12 + $0x40] sm:$0xff]
    %v711 = vld [vmem:[%s12 + $0x48] sm:$0xff]
    %v712 = vld [vmem:[%s12 + $0x50] sm:$0xff]
    %v713 = vld [vmem:[%s12 + $0x58] sm:$0xff]
    %v714 = vld [vmem:[%s12 + $0x60] sm:$0xff]
    %v715 = vld [vmem:[%s12 + $0x68] sm:$0xff]
    %v716 = vld [vmem:[%s12 + $0x70] sm:$0xff]
    %v717 = vld [vmem:[%s12 + $0x78] sm:$0xff]
    %718 = vmatprep.subr.mxu0 0.0
    %719 = vmatpush1.msra.mxu0 %v702
    %720 = vmatprep.subr.mxu0 0.0
    %721 = vmatpush1.msra.mxu0 %v703
    %722 = vmatprep.subr.mxu0 0.0
    %723 = vmatpush1.msra.mxu0 %v704
    %724 = vmatprep.subr.mxu0 0.0
    %725 = vmatpush1.msra.mxu0 %v705
    %726 = vmatprep.subr.mxu0 0.0
    %727 = vmatpush1.msra.mxu0 %v706
    %728 = vmatprep.subr.mxu0 0.0
    %729 = vmatpush1.msra.mxu0 %v707
    %730 = vmatprep.subr.mxu0 0.0
    %731 = vmatpush1.msra.mxu0 %v708
    %732 = vmatprep.subr.mxu0 0.0
    %733 = vmatpush1.msra.mxu0 %v709
    %734 = vmatprep.subr.mxu0 0.0
    %735 = vmatpush1.msra.mxu0 %v710
    %736 = vmatprep.subr.mxu0 0.0
    %737 = vmatpush1.msra.mxu0 %v711
    %738 = vmatprep.subr.mxu0 0.0
    %739 = vmatpush1.msra.mxu0 %v712
    %740 = vmatprep.subr.mxu0 0.0
    %741 = vmatpush1.msra.mxu0 %v713
    %742 = vmatprep.subr.mxu0 0.0
    %743 = vmatpush1.msra.mxu0 %v714
    %744 = vmatprep.subr.mxu0 0.0
    %745 = vmatpush1.msra.mxu0 %v715
    %746 = vmatprep.subr.mxu0 0.0
    %747 = vmatpush1.msra.mxu0 %v716
    %748 = vmatprep.subr.mxu0 0.0
    %749 = vmatpush1.msra.mxu0 %v717
    %750 = vmatprep.subr.mxu0 0.0
    %751 = vmatpush1.msra.mxu0 0.0
    %752 = vmatprep.subr.mxu0 0.0
    %753 = vmatpush1.msra.mxu0 0.0
    %754 = vmatprep.subr.mxu0 0.0
    %755 = vmatpush1.msra.mxu0 0.0
    %756 = vmatprep.subr.mxu0 0.0
    %757 = vmatpush1.msra.mxu0 0.0
    %758 = vmatprep.subr.mxu0 0.0
    %759 = vmatpush1.msra.mxu0 0.0
    %760 = vmatprep.subr.mxu0 0.0
    %761 = vmatpush1.msra.mxu0 0.0
    %762 = vmatprep.subr.mxu0 0.0
    %763 = vmatpush1.msra.mxu0 0.0
    %764 = vmatprep.subr.mxu0 0.0
    %765 = vmatpush1.msra.mxu0 0.0
    %766 = vmatprep.subr.mxu0 0.0
    %767 = vmatpush1.msra.mxu0 0.0
    %768 = vmatprep.subr.mxu0 0.0
    %769 = vmatpush1.msra.mxu0 0.0
    %770 = vmatprep.subr.mxu0 0.0
    %771 = vmatpush1.msra.mxu0 0.0
    %772 = vmatprep.subr.mxu0 0.0
    %773 = vmatpush1.msra.mxu0 0.0
    %774 = vmatprep.subr.mxu0 0.0
    %775 = vmatpush1.msra.mxu0 0.0
    %776 = vmatprep.subr.mxu0 0.0
    %777 = vmatpush1.msra.mxu0 0.0
    %778 = vmatprep.subr.mxu0 0.0
    %779 = vmatpush1.msra.mxu0 0.0
    %780 = vmatprep.subr.mxu0 0.0
    %781 = vmatpush1.msra.mxu0 0.0
    %782 = vmatprep.mubr.f32.mxu0 0.0
    %783 = vmatmul.mubr.f32.gmra.mrb[0].mxu0 %v447
    %v784 = vpop.f32.mrb[0].mxu0
    %v785 = vadd.f32 0.0, %v784
    %v786 = vpop.f32.mrb[0].mxu0
    %787 = vmatprep.mubr.f32.mxu0 0.0
    %788 = vmatmul.mubr.f32.gmra.mrb[0].mxu0 %v448
    %v789 = vpop.f32.mrb[0].mxu0
    %v790 = vadd.f32 0.0, %v789
    %v791 = vpop.f32.mrb[0].mxu0
    %792 = vdwg.mxu0
    %v793 = vadd.f32 %v700, %v785
    %v794 = vadd.f32 %v701, %v790
    %v795 = vld [vmem:[%s13] sm:$0x1]
    %v797 = vlaneseq
    %v798 = vshrl.u32 %v797, 7
    %v799 = vsub.s32 0, %v798
    %v800 = vrot.slane %v795, %v799
    %v802 = vadd.f32 %v793, %v800
    %v803 = vadd.f32 %v794, %v800
    %804 = vst.msk [vmem:[#allocation2] sm:$0xff] %vm162, %v802
    %805 = vst.msk [vmem:[#allocation2 + $0x8] sm:$0xff] %vm162, %v803
    // Predicated region
    $region58: #{_lambda_.10} parent=1 // pred_check
      _
    $region59: #{_lambda_.10} parent=1 // pred_check_branch
      %807 = sbr.rel (0) target = $region61
    $region60: #{_lambda_.10} parent=1 // pred_region
      %s809 = ssub.s32 256, 256
      %810 = vsyncadd [#allocation3], %s809
      %s811 = sshll.u32 [#allocation2], 4
      %s812 = int_to_ptr.vmem [resolvable:$true] %s811
      %817 = dma.vmem_to_hbm [thread:$0]  %s812, 256, %s14, [#allocation3], 128, 128, 8
    $region61: #{_lambda_.10} parent=1 // pred_fallthru
      _
    // Predicated region
    $region62: #{_lambda_.10} parent=1 // pred_check
      _
    $region63: #{_lambda_.10} parent=1 // pred_check_branch
      %819 = sbr.rel (0) target = $region65
    $region64: #{_lambda_.10} parent=1 // pred_region
      %820 = dma.done [#allocation3], 256
    $region65: #{_lambda_.10} parent=1 // pred_fallthru
      _
    %821 = vsyncpa [#allocation3], 1

</llo_original>
